<compile_context>
chip_gen: v7x
topology: tpu7x:2x2x1
jax: 0.10.0
libtpu: 0.0.40
codegen_flags: <defaults>
</compile_context>

<pallas_src>
import functools

import jax
import jax.numpy as jnp
from jax.experimental import pallas as pl
from jax.experimental.pallas import tpu as pltpu

EPS = 1e-5  # torch.nn.LayerNorm default


# ---------------------------------------------------------------- helpers ----
def _layernorm(x, gamma, beta):
    mu = jnp.mean(x, axis=-1, keepdims=True)
    var = jnp.mean(jnp.square(x - mu), axis=-1, keepdims=True)
    return (x - mu) * jax.lax.rsqrt(var + EPS) * gamma + beta


def _gelu_exact(x):
    # torch.nn.GELU() default = exact erf-based GELU
    return 0.5 * x * (1.0 + jax.lax.erf(x * 0.7071067811865476))


# ----------------------------------------------------------- fused kernel ----
def transformer_kernel(x_ref,
                       g_t, b_t, wqkv_t, wout_t, bout_t,
                       g_s, b_s, wqkv_s, wout_s, bout_s,
                       g_f, b_f, w1, b1, w2, b2,
                       o_ref, y_ref, *, T, C, D, inner, mdt):
    """grid = (B, depth).  One batch element per 'parallel' step, one layer per
    'arbitrary' step.  The running activation stays in the f32 VMEM scratch
    `y_ref`; only the current layer's weights are VMEM-resident."""
    l = pl.program_id(1)

    @pl.when(l == 0)
    def _():                                             # load the batch once
        y_ref[...] = x_ref[0].astype(jnp.float32)

    y = y_ref[...]                                       # (T*C, D), T-major

    # ---------------- temporal attention (attend over T, batch over C) -------
    h = _layernorm(y, g_t[0], b_t[0])                    # (T*C, D)
    h = jnp.transpose(h.reshape(T, C, D), (1, 0, 2)).reshape(C * T, D)
    # TODO(synk): with D=32 this relayout repacks sublanes (not a free view);
    # at real 128-aligned sizes use pltpu.einshape / verify no copy in MLIR.
    qkv = jnp.dot(h.astype(mdt), wqkv_t[0],
                  preferred_element_type=jnp.float32).reshape(C, T, 3 * inner)
    # TODO(synk): inner=32 puts the qkv slice boundaries off the 128-lane
    # tile; at real sizes make `inner` a multiple of 128.
    q = qkv[..., :inner].astype(mdt)          # attention scale folded into W_q
    k = qkv[..., inner:2 * inner].astype(mdt)
    v = qkv[..., 2 * inner:].astype(mdt)
    s = jnp.einsum('ctd,csd->cts', q, k, preferred_element_type=jnp.float32)
    p = jnp.exp(s - jnp.max(s, axis=-1, keepdims=True))
    attn = p * pl.reciprocal(jnp.sum(p, axis=-1, keepdims=True), approx=False)
    out = jnp.einsum('cts,csd->ctd', attn.astype(mdt), v,
                     preferred_element_type=jnp.float32)           # (C,T,i)
    out = jnp.dot(out.reshape(C * T, inner).astype(mdt), wout_t[0],
                  preferred_element_type=jnp.float32) + bout_t[0]  # C-major

    # ---------------- spatial attention (attend over C, batch over T) --------
    h = _layernorm(out, g_s[0], b_s[0])                  # (C*T, D), C-major
    h = jnp.transpose(h.reshape(C, T, D), (1, 0, 2)).reshape(T * C, D)
    qkv = jnp.dot(h.astype(mdt), wqkv_s[0],
                  preferred_element_type=jnp.float32).reshape(T, C, 3 * inner)
    q = qkv[..., :inner].astype(mdt)
    k = qkv[..., inner:2 * inner].astype(mdt)
    v = qkv[..., 2 * inner:].astype(mdt)
    s = jnp.einsum('tcd,ted->tce', q, k, preferred_element_type=jnp.float32)
    p = jnp.exp(s - jnp.max(s, axis=-1, keepdims=True))
    attn = p * pl.reciprocal(jnp.sum(p, axis=-1, keepdims=True), approx=False)
    out = jnp.einsum('tce,ted->tcd', attn.astype(mdt), v,
                     preferred_element_type=jnp.float32)           # (T,C,i)
    out = jnp.dot(out.reshape(T * C, inner).astype(mdt), wout_s[0],
                  preferred_element_type=jnp.float32) + bout_s[0]  # T-major
    y = out + y                                          # attention residual

    # ---------------- feed-forward --------------------------------------------
    h = _layernorm(y, g_f[0], b_f[0])
    h = jnp.dot(h.astype(mdt), w1[0], preferred_element_type=jnp.float32) + b1[0]
    h = _gelu_exact(h)
    h = jnp.dot(h.astype(mdt), w2[0], preferred_element_type=jnp.float32) + b2[0]
    y = h + y                                            # feed-forward residual

    y_ref[...] = y

    @pl.when(l == pl.num_programs(1) - 1)
    def _():
        o_ref[0] = y.astype(o_ref.dtype)


_PARAM_NAMES = ('g_t', 'b_t', 'wqkv_t', 'wout_t', 'bout_t',
                'g_s', 'b_s', 'wqkv_s', 'wout_s', 'bout_s',
                'g_f', 'b_f', 'w1', 'b1', 'w2', 'b2')
_MATMUL_WEIGHTS = ('wqkv_t', 'wout_t', 'wqkv_s', 'wout_s', 'w1', 'w2')


def prepare_params(params, scale, matmul_dtype=jnp.bfloat16):
    """Fold the attention scale into the W_q columns and cast the matmul
    weights to the MXU input dtype (halves their DMA/VMEM footprint)."""
    p = dict(params)

    def fold(w):
        inner = w.shape[-1] // 3
        return jnp.concatenate([w[..., :inner] * scale, w[..., inner:]], axis=-1)

    p['wqkv_t'] = fold(p['wqkv_t'])
    p['wqkv_s'] = fold(p['wqkv_s'])
    for n in _MATMUL_WEIGHTS:
        p[n] = p[n].astype(matmul_dtype)
    return p


def transformer_forward(x, params, scale, matmul_dtype=jnp.bfloat16):
    B, T, C, D = x.shape
    depth = params['wqkv_t'].shape[0]
    inner = params['wqkv_t'].shape[-1] // 3
    mlp = params['w1'].shape[-1]
    TC = T * C

    pp = prepare_params(params, scale, matmul_dtype)
    xf = x.reshape(B, TC, D)               # free XLA reshape; T-major rows
    # TODO(synk): D=32 minor dim => masked stores / sparse lanes; real configs
    # should use D (and inner/mlp) as multiples of 128 for lane-dense layout.

    def layer_spec(shape):                 # one layer's slice of a (depth, ...) param
        blk = (1,) + tuple(shape[1:])
        return pl.BlockSpec(blk, lambda b, l: (l,) + (0,) * (len(shape) - 1))

    kernel = functools.partial(transformer_kernel, T=T, C=C, D=D,
                               inner=inner, mdt=matmul_dtype)

    # Rough roofline hint for XLA's scheduler around the fused call.
    flops = int(B * depth * (2 * TC * D * 3 * inner * 2          # qkv projections
                             + 2 * TC * inner * D * 2            # output projections
                             + 4 * inner * (C * T * T + T * C * C)  # qk^T + a@v
                             + 2 * TC * D * mlp * 2))            # feed-forward
    transcendentals = int(B * depth * (C * T * T + T * C * C + TC * mlp))
    bytes_accessed = int(x.size * x.dtype.itemsize * 2
                         + sum(v.size * v.dtype.itemsize for v in pp.values()))

    out = pl.pallas_call(
        kernel,
        out_shape=jax.ShapeDtypeStruct((B, TC, D), x.dtype),
        grid_spec=pltpu.PrefetchScalarGridSpec(
            num_scalar_prefetch=0,
            grid=(B, depth),               # depth innermost, pipelined per layer
            in_specs=[pl.BlockSpec((1, TC, D), lambda b, l: (b, 0, 0))]
                     + [layer_spec(pp[n].shape) for n in _PARAM_NAMES],
            out_specs=pl.BlockSpec((1, TC, D), lambda b, l: (b, 0, 0)),
            scratch_shapes=[pltpu.VMEM((TC, D), jnp.float32)]),
        compiler_params=pltpu.CompilerParams(
            dimension_semantics=("parallel", "arbitrary"),
            # 64 MiB scoped VMEM is valid on every generation (v7x = 64 MiB/TC
            # physical); at these shapes the kernel needs far less.
            vmem_limit_bytes=64 * 1024 * 1024),
        cost_estimate=pl.CostEstimate(flops=flops,
                                      transcendentals=transcendentals,
                                      bytes_accessed=bytes_accessed),
    )(xf, *[pp[n] for n in _PARAM_NAMES])
    # TODO(synk): for large D/C/T configs additionally tile the attention over
    # C (temporal) / T (spatial) rows (pltpu.emit_pipeline or a 3rd grid axis)
    # so the (C,T,T)/(T,C,C) score tensors stay bounded within v7x's 64 MiB.
    return out.reshape(B, T, C, D)


# -------------------------------------------------- pure-JAX references ------
def ref_transformer(x, p, scale):
    """PyTorch-faithful f32 reference (vanilla_forward, eval mode)."""
    depth = p['wqkv_t'].shape[0]
    inner = p['wqkv_t'].shape[-1] // 3
    for l in range(depth):
        # temporal attention
        h = _layernorm(x, p['g_t'][l], p['b_t'][l])
        qkv = h @ p['wqkv_t'][l]
        q, k, v = qkv[..., :inner], qkv[..., inner:2 * inner], qkv[..., 2 * inner:]
        q, k, v = (jnp.swapaxes(a, 1, 2) for a in (q, k, v))      # (B,C,T,i)
        attn = jax.nn.softmax(jnp.einsum('bctd,bcsd->bcts', q, k) * scale, -1)
        out = jnp.einsum('bcts,bcsd->bctd', attn, v)
        out = out @ p['wout_t'][l] + p['bout_t'][l]               # (B,C,T,D)
        # spatial attention
        h = _layernorm(out, p['g_s'][l], p['b_s'][l])
        qkv = h @ p['wqkv_s'][l]
        q, k, v = qkv[..., :inner], qkv[..., inner:2 * inner], qkv[..., 2 * inner:]
        q, k, v = (jnp.swapaxes(a, 1, 2) for a in (q, k, v))      # (B,T,C,i)
        attn = jax.nn.softmax(jnp.einsum('btcd,bted->btce', q, k) * scale, -1)
        out = jnp.einsum('btce,bted->btcd', attn, v)
        out = out @ p['wout_s'][l] + p['bout_s'][l]               # (B,T,C,D)
        x = out + x
        # feed-forward
        h = _layernorm(x, p['g_f'][l], p['b_f'][l])
        h = _gelu_exact(h @ p['w1'][l] + p['b1'][l])
        x = h @ p['w2'][l] + p['b2'][l] + x
    return x


def ref_transformer_mirror(x, pp, mdt=jnp.bfloat16):
    """Mirrors the kernel arithmetic exactly (folded scale, low-precision
    matmul inputs, f32 accumulation) for a tight structural check."""
    depth = pp['wqkv_t'].shape[0]
    inner = pp['wqkv_t'].shape[-1] // 3
    for l in range(depth):
        # temporal attention
        h = _layernorm(x, pp['g_t'][l], pp['b_t'][l])
        h = jnp.swapaxes(h, 1, 2)                                 # (B,C,T,D)
        qkv = jnp.einsum('bctd,de->bcte', h.astype(mdt), pp['wqkv_t'][l],
                         preferred_element_type=jnp.float32)
        q = qkv[..., :inner].astype(mdt)
        k = qkv[..., inner:2 * inner].astype(mdt)
        v = qkv[..., 2 * inner:].astype(mdt)
        s = jnp.einsum('bctd,bcsd->bcts', q, k, preferred_element_type=jnp.float32)
        pr = jnp.exp(s - jnp.max(s, -1, keepdims=True))
        attn = pr * (1.0 / jnp.sum(pr, -1, keepdims=True))
        out = jnp.einsum('bcts,bcsd->bctd', attn.astype(mdt), v,
                         preferred_element_type=jnp.float32)
        out = jnp.einsum('bcti,id->bctd', out.astype(mdt), pp['wout_t'][l],
                         preferred_element_type=jnp.float32) + pp['bout_t'][l]
        # spatial attention
        h = _layernorm(out, pp['g_s'][l], pp['b_s'][l])
        h = jnp.swapaxes(h, 1, 2)                                 # (B,T,C,D)
        qkv = jnp.einsum('btcd,de->btce', h.astype(mdt), pp['wqkv_s'][l],
                         preferred_element_type=jnp.float32)
        q = qkv[..., :inner].astype(mdt)
        k = qkv[..., inner:2 * inner].astype(mdt)
        v = qkv[..., 2 * inner:].astype(mdt)
        s = jnp.einsum('btcd,bted->btce', q, k, preferred_element_type=jnp.float32)
        pr = jnp.exp(s - jnp.max(s, -1, keepdims=True))
        attn = pr * (1.0 / jnp.sum(pr, -1, keepdims=True))
        out = jnp.einsum('btce,bted->btcd', attn.astype(mdt), v,
                         preferred_element_type=jnp.float32)
        out = jnp.einsum('btci,id->btcd', out.astype(mdt), pp['wout_s'][l],
                         preferred_element_type=jnp.float32) + pp['bout_s'][l]
        x = out + x
        # feed-forward
        h = _layernorm(x, pp['g_f'][l], pp['b_f'][l])
        h = jnp.einsum('btcd,dm->btcm', h.astype(mdt), pp['w1'][l],
                       preferred_element_type=jnp.float32) + pp['b1'][l]
        h = _gelu_exact(h)
        h = jnp.einsum('btcm,md->btcd', h.astype(mdt), pp['w2'][l],
                       preferred_element_type=jnp.float32) + pp['b2'][l]
        x = h + x
    return x


# --------------------------------------------------------------- params ------
def init_params(key, depth, D, inner, mlp):
    ks = jax.random.split(key, 16)
    w = lambda k, s, sc=0.1: (sc * jax.random.normal(k, s)).astype(jnp.float32)
    g = lambda k, s: (1.0 + 0.1 * jax.random.normal(k, s)).astype(jnp.float32)
    return dict(
        g_t=g(ks[0], (depth, 1, D)), b_t=w(ks[1], (depth, 1, D)),
        wqkv_t=w(ks[2], (depth, D, 3 * inner)),
        wout_t=w(ks[3], (depth, inner, D)), bout_t=w(ks[4], (depth, 1, D)),
        g_s=g(ks[5], (depth, 1, D)), b_s=w(ks[6], (depth, 1, D)),
        wqkv_s=w(ks[7], (depth, D, 3 * inner)),
        wout_s=w(ks[8], (depth, inner, D)), bout_s=w(ks[9], (depth, 1, D)),
        g_f=g(ks[10], (depth, 1, D)), b_f=w(ks[11], (depth, 1, D)),
        w1=w(ks[12], (depth, D, mlp)), b1=w(ks[13], (depth, 1, mlp)),
        w2=w(ks[14], (depth, mlp, D)), b2=w(ks[15], (depth, 1, D)),
    )


# ----------------------------------------------------------------- main ------
if __name__ == "__main__":
    B, T, C = 2, 8, 16
    dim, heads, dim_head, mlp_dim, depth = 32, 4, 8, 64, 2
    inner = heads * dim_head
    scale = dim_head ** -0.5

    key = jax.random.PRNGKey(0)
    key, xkey, pkey = jax.random.split(key, 3)
    x = jax.random.normal(xkey, (B, T, C, dim), dtype=jnp.float32)
    params = init_params(pkey, depth, dim, inner, mlp_dim)

    out = jax.block_until_ready(transformer_forward(x, params, scale))

    prepared = prepare_params(params, scale, jnp.bfloat16)
    mirror = jax.block_until_ready(ref_transformer_mirror(x, prepared, jnp.bfloat16))
    exact = jax.block_until_ready(ref_transformer(x, params, scale))

    assert out.shape == x.shape and out.dtype == x.dtype
    err_mirror = float(jnp.max(jnp.abs(out - mirror)))
    err_exact = float(jnp.max(jnp.abs(out - exact)))
    # Tight structural check against the bf16-mirroring reference.
    if not bool(jnp.allclose(out, mirror, atol=5e-3, rtol=5e-3)):
        raise AssertionError(f"Pallas vs bf16-mirror mismatch, max abs err = {err_mirror}")
    # Loose fidelity check against the exact-f32 PyTorch-faithful reference
    # (bf16 matmul inputs with f32 accumulation => small expected drift).
    if not bool(jnp.allclose(out, exact, atol=1e-1, rtol=1e-1)):
        raise AssertionError(f"Pallas vs f32 reference mismatch, max abs err = {err_exact}")
    print("KERNEL_OK")
</pallas_src>

<mosaic_0001>
module attributes {stable_mosaic.version = 11 : i64} {
  func.func @transformer_kernel(%arg0: i32, %arg1: i32, %arg2: memref<1x128x32xf32, #tpu.memory_space<vmem>>, %arg3: memref<1x1x32xf32, #tpu.memory_space<vmem>>, %arg4: memref<1x1x32xf32, #tpu.memory_space<vmem>>, %arg5: memref<1x32x96xbf16, #tpu.memory_space<vmem>>, %arg6: memref<1x32x32xbf16, #tpu.memory_space<vmem>>, %arg7: memref<1x1x32xf32, #tpu.memory_space<vmem>>, %arg8: memref<1x1x32xf32, #tpu.memory_space<vmem>>, %arg9: memref<1x1x32xf32, #tpu.memory_space<vmem>>, %arg10: memref<1x32x96xbf16, #tpu.memory_space<vmem>>, %arg11: memref<1x32x32xbf16, #tpu.memory_space<vmem>>, %arg12: memref<1x1x32xf32, #tpu.memory_space<vmem>>, %arg13: memref<1x1x32xf32, #tpu.memory_space<vmem>>, %arg14: memref<1x1x32xf32, #tpu.memory_space<vmem>>, %arg15: memref<1x32x64xbf16, #tpu.memory_space<vmem>>, %arg16: memref<1x1x64xf32, #tpu.memory_space<vmem>>, %arg17: memref<1x64x32xbf16, #tpu.memory_space<vmem>>, %arg18: memref<1x1x32xf32, #tpu.memory_space<vmem>>, %arg19: memref<1x128x32xf32, #tpu.memory_space<vmem>>, %arg20: memref<128x32xf32, #tpu.memory_space<vmem>>) attributes {dimension_semantics = [#tpu.dimension_semantics<parallel>, #tpu.dimension_semantics<arbitrary>], iteration_bounds = array<i64: 2, 2>, scalar_prefetch = 0 : i64, scratch_operands = 1 : i64, tpu.core_type = #tpu.core_type<tc>, window_params = [{transform_indices = @transform_0, window_bounds = array<i64: 1, 128, 32>}, {transform_indices = @transform_1, window_bounds = array<i64: 1, 1, 32>}, {transform_indices = @transform_2, window_bounds = array<i64: 1, 1, 32>}, {transform_indices = @transform_3, window_bounds = array<i64: 1, 32, 96>}, {transform_indices = @transform_4, window_bounds = array<i64: 1, 32, 32>}, {transform_indices = @transform_5, window_bounds = array<i64: 1, 1, 32>}, {transform_indices = @transform_6, window_bounds = array<i64: 1, 1, 32>}, {transform_indices = @transform_7, window_bounds = array<i64: 1, 1, 32>}, {transform_indices = @transform_8, window_bounds = array<i64: 1, 32, 96>}, {transform_indices = @transform_9, window_bounds = array<i64: 1, 32, 32>}, {transform_indices = @transform_10, window_bounds = array<i64: 1, 1, 32>}, {transform_indices = @transform_11, window_bounds = array<i64: 1, 1, 32>}, {transform_indices = @transform_12, window_bounds = array<i64: 1, 1, 32>}, {transform_indices = @transform_13, window_bounds = array<i64: 1, 32, 64>}, {transform_indices = @transform_14, window_bounds = array<i64: 1, 1, 64>}, {transform_indices = @transform_15, window_bounds = array<i64: 1, 64, 32>}, {transform_indices = @transform_16, window_bounds = array<i64: 1, 1, 32>}, {transform_indices = @transform_17, window_bounds = array<i64: 1, 128, 32>}]} {
    %c0_i32 = arith.constant 0 : i32
    %0 = arith.cmpi eq, %arg1, %c0_i32 : i32
    %1 = arith.extui %0 : i1 to i32
    %c0_i32_0 = arith.constant 0 : i32
    %2 = arith.cmpi ne, %1, %c0_i32_0 : i32
    scf.if %2 {
      %c0_84 = arith.constant 0 : index
      %c0_85 = arith.constant 0 : index
      %c0_86 = arith.constant 0 : index
      %184 = vector.load %arg2[%c0_84, %c0_85, %c0_86] : memref<1x128x32xf32, #tpu.memory_space<vmem>>, vector<1x128x32xf32>
      %185 = vector.shape_cast %184 : vector<1x128x32xf32> to vector<128x32xf32>
      %c0_87 = arith.constant 0 : index
      %c0_88 = arith.constant 0 : index
      %186 = vector.load %arg20[%c0_87, %c0_88] : memref<128x32xf32, #tpu.memory_space<vmem>>, vector<128x32xf32>
      tpu.vector_store %arg20[%c0_87, %c0_88], %185 {strides = array<i32>} : memref<128x32xf32, #tpu.memory_space<vmem>>, vector<128x32xf32>,
    } else {
    }
    %c0 = arith.constant 0 : index
    %c0_1 = arith.constant 0 : index
    %3 = vector.load %arg20[%c0, %c0_1] : memref<128x32xf32, #tpu.memory_space<vmem>>, vector<128x32xf32>
    %c0_2 = arith.constant 0 : index
    %c0_3 = arith.constant 0 : index
    %c0_4 = arith.constant 0 : index
    %4 = vector.load %arg3[%c0_2, %c0_3, %c0_4] : memref<1x1x32xf32, #tpu.memory_space<vmem>>, vector<1x1x32xf32>
    %5 = vector.shape_cast %4 : vector<1x1x32xf32> to vector<1x32xf32>
    %c0_5 = arith.constant 0 : index
    %c0_6 = arith.constant 0 : index
    %c0_7 = arith.constant 0 : index
    %6 = vector.load %arg4[%c0_5, %c0_6, %c0_7] : memref<1x1x32xf32, #tpu.memory_space<vmem>>, vector<1x1x32xf32>
    %7 = vector.shape_cast %6 : vector<1x1x32xf32> to vector<1x32xf32>
    %cst = arith.constant dense<0.000000e+00> : vector<128xf32>
    %8 = vector.multi_reduction <add>, %3, %cst [1] : vector<128x32xf32> to vector<128xf32>
    %9 = vector.shape_cast %8 : vector<128xf32> to vector<128x1xf32>
    %cst_8 = arith.constant 3.200000e+01 : f32
    %10 = vector.broadcast %cst_8 : f32 to vector<128x1xf32>
    %11 = arith.divf %9, %10 : vector<128x1xf32>
    %12 = vector.broadcast %11 : vector<128x1xf32> to vector<128x32xf32>
    %13 = arith.subf %3, %12 : vector<128x32xf32>
    %14 = arith.mulf %13, %13 : vector<128x32xf32>
    %cst_9 = arith.constant dense<0.000000e+00> : vector<128xf32>
    %15 = vector.multi_reduction <add>, %14, %cst_9 [1] : vector<128x32xf32> to vector<128xf32>
    %16 = vector.shape_cast %15 : vector<128xf32> to vector<128x1xf32>
    %cst_10 = arith.constant 3.200000e+01 : f32
    %17 = vector.broadcast %cst_10 : f32 to vector<128x1xf32>
    %18 = arith.divf %16, %17 : vector<128x1xf32>
    %19 = vector.broadcast %11 : vector<128x1xf32> to vector<128x32xf32>
    %20 = arith.subf %3, %19 : vector<128x32xf32>
    %cst_11 = arith.constant 9.99999974E-6 : f32
    %21 = vector.broadcast %cst_11 : f32 to vector<128x1xf32>
    %22 = arith.addf %18, %21 : vector<128x1xf32>
    %23 = math.rsqrt %22 : vector<128x1xf32>
    %24 = vector.broadcast %23 : vector<128x1xf32> to vector<128x32xf32>
    %25 = arith.mulf %20, %24 : vector<128x32xf32>
    %26 = vector.broadcast %5 : vector<1x32xf32> to vector<128x32xf32>
    %27 = arith.mulf %25, %26 : vector<128x32xf32>
    %28 = vector.broadcast %7 : vector<1x32xf32> to vector<128x32xf32>
    %29 = arith.addf %27, %28 : vector<128x32xf32>
    %30 = vector.shape_cast %29 : vector<128x32xf32> to vector<8x16x32xf32>
    %31 = tpu.transpose %30, [1, 0, 2] : vector<8x16x32xf32> -> vector<16x8x32xf32>
    %32 = vector.shape_cast %31 : vector<16x8x32xf32> to vector<128x32xf32>
    %33 = arith.truncf %32 : vector<128x32xf32> to vector<128x32xbf16>
    %c0_12 = arith.constant 0 : index
    %c0_13 = arith.constant 0 : index
    %c0_14 = arith.constant 0 : index
    %34 = vector.load %arg5[%c0_12, %c0_13, %c0_14] : memref<1x32x96xbf16, #tpu.memory_space<vmem>>, vector<1x32x96xbf16>
    %35 = vector.shape_cast %34 : vector<1x32x96xbf16> to vector<32x96xbf16>
    %cst_15 = arith.constant dense<0.000000e+00> : vector<128x96xf32>
    %36 = tpu.matmul %33, %35, %cst_15 {dimension_numbers = #tpu.dot_dimension_numbers<[1], [0], [0], [1], [0, 0, 1, 1], [], []>} : vector<128x32xbf16>, vector<32x96xbf16>, vector<128x96xf32> -> vector<128x96xf32>
    %37 = vector.shape_cast %36 : vector<128x96xf32> to vector<16x8x96xf32>
    %38 = vector.extract_strided_slice %37 {offsets = [0, 0, 0], sizes = [16, 8, 32], strides = [1, 1, 1]} : vector<16x8x96xf32> to vector<16x8x32xf32>
    %39 = arith.truncf %38 : vector<16x8x32xf32> to vector<16x8x32xbf16>
    %40 = vector.extract_strided_slice %37 {offsets = [0, 0, 32], sizes = [16, 8, 32], strides = [1, 1, 1]} : vector<16x8x96xf32> to vector<16x8x32xf32>
    %41 = arith.truncf %40 : vector<16x8x32xf32> to vector<16x8x32xbf16>
    %42 = vector.extract_strided_slice %37 {offsets = [0, 0, 64], sizes = [16, 8, 32], strides = [1, 1, 1]} : vector<16x8x96xf32> to vector<16x8x32xf32>
    %43 = arith.truncf %42 : vector<16x8x32xf32> to vector<16x8x32xbf16>
    "tpu.trace_start"() <{level = 10 : i32, message = "ctd,csd->cts"}> : () -> ()
    %cst_16 = arith.constant dense<0.000000e+00> : vector<16x8x8xf32>
    %44 = tpu.matmul %39, %41, %cst_16 {dimension_numbers = #tpu.dot_dimension_numbers<[2], [2], [1], [1], [0, 0, 0, 1, 1, 1], [0], [0]>} : vector<16x8x32xbf16>, vector<16x8x32xbf16>, vector<16x8x8xf32> -> vector<16x8x8xf32>
    "tpu.trace_stop"() : () -> ()
    %cst_17 = arith.constant dense<0xFF800000> : vector<16x8xf32>
    %45 = vector.multi_reduction <maximumf>, %44, %cst_17 [2] : vector<16x8x8xf32> to vector<16x8xf32>
    %46 = vector.shape_cast %45 : vector<16x8xf32> to vector<16x8x1xf32>
    %47 = vector.broadcast %46 : vector<16x8x1xf32> to vector<16x8x8xf32>
    %48 = arith.subf %44, %47 : vector<16x8x8xf32>
    %49 = math.exp %48 : vector<16x8x8xf32>
    %cst_18 = arith.constant dense<0.000000e+00> : vector<16x8xf32>
    %50 = vector.multi_reduction <add>, %49, %cst_18 [2] : vector<16x8x8xf32> to vector<16x8xf32>
    %51 = vector.shape_cast %50 : vector<16x8xf32> to vector<16x8x1xf32>
    %52 = tpu.reciprocal %51 : vector<16x8x1xf32> -> vector<16x8x1xf32>
    %53 = vector.broadcast %52 : vector<16x8x1xf32> to vector<16x8x8xf32>
    %54 = arith.mulf %49, %53 : vector<16x8x8xf32>
    %55 = arith.truncf %54 : vector<16x8x8xf32> to vector<16x8x8xbf16>
    "tpu.trace_start"() <{level = 10 : i32, message = "cts,csd->ctd"}> : () -> ()
    %cst_19 = arith.constant dense<0.000000e+00> : vector<16x8x32xf32>
    %56 = tpu.matmul %55, %43, %cst_19 {dimension_numbers = #tpu.dot_dimension_numbers<[2], [1], [1], [2], [0, 0, 0, 1, 1, 2], [0], [0]>} : vector<16x8x8xbf16>, vector<16x8x32xbf16>, vector<16x8x32xf32> -> vector<16x8x32xf32>
    "tpu.trace_stop"() : () -> ()
    %57 = vector.shape_cast %56 : vector<16x8x32xf32> to vector<128x32xf32>
    %58 = arith.truncf %57 : vector<128x32xf32> to vector<128x32xbf16>
    %c0_20 = arith.constant 0 : index
    %c0_21 = arith.constant 0 : index
    %c0_22 = arith.constant 0 : index
    %59 = vector.load %arg6[%c0_20, %c0_21, %c0_22] : memref<1x32x32xbf16, #tpu.memory_space<vmem>>, vector<1x32x32xbf16>
    %60 = vector.shape_cast %59 : vector<1x32x32xbf16> to vector<32x32xbf16>
    %cst_23 = arith.constant dense<0.000000e+00> : vector<128x32xf32>
    %61 = tpu.matmul %58, %60, %cst_23 {dimension_numbers = #tpu.dot_dimension_numbers<[1], [0], [0], [1], [0, 0, 1, 1], [], []>} : vector<128x32xbf16>, vector<32x32xbf16>, vector<128x32xf32> -> vector<128x32xf32>
    %c0_24 = arith.constant 0 : index
    %c0_25 = arith.constant 0 : index
    %c0_26 = arith.constant 0 : index
    %62 = vector.load %arg7[%c0_24, %c0_25, %c0_26] : memref<1x1x32xf32, #tpu.memory_space<vmem>>, vector<1x1x32xf32>
    %63 = vector.shape_cast %62 : vector<1x1x32xf32> to vector<1x32xf32>
    %64 = vector.broadcast %63 : vector<1x32xf32> to vector<128x32xf32>
    %65 = arith.addf %61, %64 : vector<128x32xf32>
    %c0_27 = arith.constant 0 : index
    %c0_28 = arith.constant 0 : index
    %c0_29 = arith.constant 0 : index
    %66 = vector.load %arg8[%c0_27, %c0_28, %c0_29] : memref<1x1x32xf32, #tpu.memory_space<vmem>>, vector<1x1x32xf32>
    %67 = vector.shape_cast %66 : vector<1x1x32xf32> to vector<1x32xf32>
    %c0_30 = arith.constant 0 : index
    %c0_31 = arith.constant 0 : index
    %c0_32 = arith.constant 0 : index
    %68 = vector.load %arg9[%c0_30, %c0_31, %c0_32] : memref<1x1x32xf32, #tpu.memory_space<vmem>>, vector<1x1x32xf32>
    %69 = vector.shape_cast %68 : vector<1x1x32xf32> to vector<1x32xf32>
    %cst_33 = arith.constant dense<0.000000e+00> : vector<128xf32>
    %70 = vector.multi_reduction <add>, %65, %cst_33 [1] : vector<128x32xf32> to vector<128xf32>
    %71 = vector.shape_cast %70 : vector<128xf32> to vector<128x1xf32>
    %cst_34 = arith.constant 3.200000e+01 : f32
    %72 = vector.broadcast %cst_34 : f32 to vector<128x1xf32>
    %73 = arith.divf %71, %72 : vector<128x1xf32>
    %74 = vector.broadcast %73 : vector<128x1xf32> to vector<128x32xf32>
    %75 = arith.subf %65, %74 : vector<128x32xf32>
    %76 = arith.mulf %75, %75 : vector<128x32xf32>
    %cst_35 = arith.constant dense<0.000000e+00> : vector<128xf32>
    %77 = vector.multi_reduction <add>, %76, %cst_35 [1] : vector<128x32xf32> to vector<128xf32>
    %78 = vector.shape_cast %77 : vector<128xf32> to vector<128x1xf32>
    %cst_36 = arith.constant 3.200000e+01 : f32
    %79 = vector.broadcast %cst_36 : f32 to vector<128x1xf32>
    %80 = arith.divf %78, %79 : vector<128x1xf32>
    %81 = vector.broadcast %73 : vector<128x1xf32> to vector<128x32xf32>
    %82 = arith.subf %65, %81 : vector<128x32xf32>
    %cst_37 = arith.constant 9.99999974E-6 : f32
    %83 = vector.broadcast %cst_37 : f32 to vector<128x1xf32>
    %84 = arith.addf %80, %83 : vector<128x1xf32>
    %85 = math.rsqrt %84 : vector<128x1xf32>
    %86 = vector.broadcast %85 : vector<128x1xf32> to vector<128x32xf32>
    %87 = arith.mulf %82, %86 : vector<128x32xf32>
    %88 = vector.broadcast %67 : vector<1x32xf32> to vector<128x32xf32>
    %89 = arith.mulf %87, %88 : vector<128x32xf32>
    %90 = vector.broadcast %69 : vector<1x32xf32> to vector<128x32xf32>
    %91 = arith.addf %89, %90 : vector<128x32xf32>
    %92 = vector.shape_cast %91 : vector<128x32xf32> to vector<16x8x32xf32>
    %93 = tpu.transpose %92, [1, 0, 2] : vector<16x8x32xf32> -> vector<8x16x32xf32>
    %94 = vector.shape_cast %93 : vector<8x16x32xf32> to vector<128x32xf32>
    %95 = arith.truncf %94 : vector<128x32xf32> to vector<128x32xbf16>
    %c0_38 = arith.constant 0 : index
    %c0_39 = arith.constant 0 : index
    %c0_40 = arith.constant 0 : index
    %96 = vector.load %arg10[%c0_38, %c0_39, %c0_40] : memref<1x32x96xbf16, #tpu.memory_space<vmem>>, vector<1x32x96xbf16>
    %97 = vector.shape_cast %96 : vector<1x32x96xbf16> to vector<32x96xbf16>
    %cst_41 = arith.constant dense<0.000000e+00> : vector<128x96xf32>
    %98 = tpu.matmul %95, %97, %cst_41 {dimension_numbers = #tpu.dot_dimension_numbers<[1], [0], [0], [1], [0, 0, 1, 1], [], []>} : vector<128x32xbf16>, vector<32x96xbf16>, vector<128x96xf32> -> vector<128x96xf32>
    %99 = vector.shape_cast %98 : vector<128x96xf32> to vector<8x16x96xf32>
    %100 = vector.extract_strided_slice %99 {offsets = [0, 0, 0], sizes = [8, 16, 32], strides = [1, 1, 1]} : vector<8x16x96xf32> to vector<8x16x32xf32>
    %101 = arith.truncf %100 : vector<8x16x32xf32> to vector<8x16x32xbf16>
    %102 = vector.extract_strided_slice %99 {offsets = [0, 0, 32], sizes = [8, 16, 32], strides = [1, 1, 1]} : vector<8x16x96xf32> to vector<8x16x32xf32>
    %103 = arith.truncf %102 : vector<8x16x32xf32> to vector<8x16x32xbf16>
    %104 = vector.extract_strided_slice %99 {offsets = [0, 0, 64], sizes = [8, 16, 32], strides = [1, 1, 1]} : vector<8x16x96xf32> to vector<8x16x32xf32>
    %105 = arith.truncf %104 : vector<8x16x32xf32> to vector<8x16x32xbf16>
    "tpu.trace_start"() <{level = 10 : i32, message = "tcd,ted->tce"}> : () -> ()
    %cst_42 = arith.constant dense<0.000000e+00> : vector<8x16x16xf32>
    %106 = tpu.matmul %101, %103, %cst_42 {dimension_numbers = #tpu.dot_dimension_numbers<[2], [2], [1], [1], [0, 0, 0, 1, 1, 1], [0], [0]>} : vector<8x16x32xbf16>, vector<8x16x32xbf16>, vector<8x16x16xf32> -> vector<8x16x16xf32>
    "tpu.trace_stop"() : () -> ()
    %cst_43 = arith.constant dense<0xFF800000> : vector<8x16xf32>
    %107 = vector.multi_reduction <maximumf>, %106, %cst_43 [2] : vector<8x16x16xf32> to vector<8x16xf32>
    %108 = vector.shape_cast %107 : vector<8x16xf32> to vector<8x16x1xf32>
    %109 = vector.broadcast %108 : vector<8x16x1xf32> to vector<8x16x16xf32>
    %110 = arith.subf %106, %109 : vector<8x16x16xf32>
    %111 = math.exp %110 : vector<8x16x16xf32>
    %cst_44 = arith.constant dense<0.000000e+00> : vector<8x16xf32>
    %112 = vector.multi_reduction <add>, %111, %cst_44 [2] : vector<8x16x16xf32> to vector<8x16xf32>
    %113 = vector.shape_cast %112 : vector<8x16xf32> to vector<8x16x1xf32>
    %114 = tpu.reciprocal %113 : vector<8x16x1xf32> -> vector<8x16x1xf32>
    %115 = vector.broadcast %114 : vector<8x16x1xf32> to vector<8x16x16xf32>
    %116 = arith.mulf %111, %115 : vector<8x16x16xf32>
    %117 = arith.truncf %116 : vector<8x16x16xf32> to vector<8x16x16xbf16>
    "tpu.trace_start"() <{level = 10 : i32, message = "tce,ted->tcd"}> : () -> ()
    %cst_45 = arith.constant dense<0.000000e+00> : vector<8x16x32xf32>
    %118 = tpu.matmul %117, %105, %cst_45 {dimension_numbers = #tpu.dot_dimension_numbers<[2], [1], [1], [2], [0, 0, 0, 1, 1, 2], [0], [0]>} : vector<8x16x16xbf16>, vector<8x16x32xbf16>, vector<8x16x32xf32> -> vector<8x16x32xf32>
    "tpu.trace_stop"() : () -> ()
    %119 = vector.shape_cast %118 : vector<8x16x32xf32> to vector<128x32xf32>
    %120 = arith.truncf %119 : vector<128x32xf32> to vector<128x32xbf16>
    %c0_46 = arith.constant 0 : index
    %c0_47 = arith.constant 0 : index
    %c0_48 = arith.constant 0 : index
    %121 = vector.load %arg11[%c0_46, %c0_47, %c0_48] : memref<1x32x32xbf16, #tpu.memory_space<vmem>>, vector<1x32x32xbf16>
    %122 = vector.shape_cast %121 : vector<1x32x32xbf16> to vector<32x32xbf16>
    %cst_49 = arith.constant dense<0.000000e+00> : vector<128x32xf32>
    %123 = tpu.matmul %120, %122, %cst_49 {dimension_numbers = #tpu.dot_dimension_numbers<[1], [0], [0], [1], [0, 0, 1, 1], [], []>} : vector<128x32xbf16>, vector<32x32xbf16>, vector<128x32xf32> -> vector<128x32xf32>
    %c0_50 = arith.constant 0 : index
    %c0_51 = arith.constant 0 : index
    %c0_52 = arith.constant 0 : index
    %124 = vector.load %arg12[%c0_50, %c0_51, %c0_52] : memref<1x1x32xf32, #tpu.memory_space<vmem>>, vector<1x1x32xf32>
    %125 = vector.shape_cast %124 : vector<1x1x32xf32> to vector<1x32xf32>
    %126 = vector.broadcast %125 : vector<1x32xf32> to vector<128x32xf32>
    %127 = arith.addf %123, %126 : vector<128x32xf32>
    %128 = arith.addf %127, %3 : vector<128x32xf32>
    %c0_53 = arith.constant 0 : index
    %c0_54 = arith.constant 0 : index
    %c0_55 = arith.constant 0 : index
    %129 = vector.load %arg13[%c0_53, %c0_54, %c0_55] : memref<1x1x32xf32, #tpu.memory_space<vmem>>, vector<1x1x32xf32>
    %130 = vector.shape_cast %129 : vector<1x1x32xf32> to vector<1x32xf32>
    %c0_56 = arith.constant 0 : index
    %c0_57 = arith.constant 0 : index
    %c0_58 = arith.constant 0 : index
    %131 = vector.load %arg14[%c0_56, %c0_57, %c0_58] : memref<1x1x32xf32, #tpu.memory_space<vmem>>, vector<1x1x32xf32>
    %132 = vector.shape_cast %131 : vector<1x1x32xf32> to vector<1x32xf32>
    %cst_59 = arith.constant dense<0.000000e+00> : vector<128xf32>
    %133 = vector.multi_reduction <add>, %128, %cst_59 [1] : vector<128x32xf32> to vector<128xf32>
    %134 = vector.shape_cast %133 : vector<128xf32> to vector<128x1xf32>
    %cst_60 = arith.constant 3.200000e+01 : f32
    %135 = vector.broadcast %cst_60 : f32 to vector<128x1xf32>
    %136 = arith.divf %134, %135 : vector<128x1xf32>
    %137 = vector.broadcast %136 : vector<128x1xf32> to vector<128x32xf32>
    %138 = arith.subf %128, %137 : vector<128x32xf32>
    %139 = arith.mulf %138, %138 : vector<128x32xf32>
    %cst_61 = arith.constant dense<0.000000e+00> : vector<128xf32>
    %140 = vector.multi_reduction <add>, %139, %cst_61 [1] : vector<128x32xf32> to vector<128xf32>
    %141 = vector.shape_cast %140 : vector<128xf32> to vector<128x1xf32>
    %cst_62 = arith.constant 3.200000e+01 : f32
    %142 = vector.broadcast %cst_62 : f32 to vector<128x1xf32>
    %143 = arith.divf %141, %142 : vector<128x1xf32>
    %144 = vector.broadcast %136 : vector<128x1xf32> to vector<128x32xf32>
    %145 = arith.subf %128, %144 : vector<128x32xf32>
    %cst_63 = arith.constant 9.99999974E-6 : f32
    %146 = vector.broadcast %cst_63 : f32 to vector<128x1xf32>
    %147 = arith.addf %143, %146 : vector<128x1xf32>
    %148 = math.rsqrt %147 : vector<128x1xf32>
    %149 = vector.broadcast %148 : vector<128x1xf32> to vector<128x32xf32>
    %150 = arith.mulf %145, %149 : vector<128x32xf32>
    %151 = vector.broadcast %130 : vector<1x32xf32> to vector<128x32xf32>
    %152 = arith.mulf %150, %151 : vector<128x32xf32>
    %153 = vector.broadcast %132 : vector<1x32xf32> to vector<128x32xf32>
    %154 = arith.addf %152, %153 : vector<128x32xf32>
    %155 = arith.truncf %154 : vector<128x32xf32> to vector<128x32xbf16>
    %c0_64 = arith.constant 0 : index
    %c0_65 = arith.constant 0 : index
    %c0_66 = arith.constant 0 : index
    %156 = vector.load %arg15[%c0_64, %c0_65, %c0_66] : memref<1x32x64xbf16, #tpu.memory_space<vmem>>, vector<1x32x64xbf16>
    %157 = vector.shape_cast %156 : vector<1x32x64xbf16> to vector<32x64xbf16>
    %cst_67 = arith.constant dense<0.000000e+00> : vector<128x64xf32>
    %158 = tpu.matmul %155, %157, %cst_67 {dimension_numbers = #tpu.dot_dimension_numbers<[1], [0], [0], [1], [0, 0, 1, 1], [], []>} : vector<128x32xbf16>, vector<32x64xbf16>, vector<128x64xf32> -> vector<128x64xf32>
    %c0_68 = arith.constant 0 : index
    %c0_69 = arith.constant 0 : index
    %c0_70 = arith.constant 0 : index
    %159 = vector.load %arg16[%c0_68, %c0_69, %c0_70] : memref<1x1x64xf32, #tpu.memory_space<vmem>>, vector<1x1x64xf32>
    %160 = vector.shape_cast %159 : vector<1x1x64xf32> to vector<1x64xf32>
    %161 = vector.broadcast %160 : vector<1x64xf32> to vector<128x64xf32>
    %162 = arith.addf %158, %161 : vector<128x64xf32>
    %cst_71 = arith.constant 5.000000e-01 : f32
    %163 = vector.broadcast %cst_71 : f32 to vector<128x64xf32>
    %164 = arith.mulf %163, %162 : vector<128x64xf32>
    %cst_72 = arith.constant 0.707106769 : f32
    %165 = vector.broadcast %cst_72 : f32 to vector<128x64xf32>
    %166 = arith.mulf %162, %165 : vector<128x64xf32>
    %167 = math.erf %166 : vector<128x64xf32>
    %cst_73 = arith.constant 1.000000e+00 : f32
    %168 = vector.broadcast %cst_73 : f32 to vector<128x64xf32>
    %169 = arith.addf %168, %167 : vector<128x64xf32>
    %170 = arith.mulf %164, %169 : vector<128x64xf32>
    %171 = arith.truncf %170 : vector<128x64xf32> to vector<128x64xbf16>
    %c0_74 = arith.constant 0 : index
    %c0_75 = arith.constant 0 : index
    %c0_76 = arith.constant 0 : index
    %172 = vector.load %arg17[%c0_74, %c0_75, %c0_76] : memref<1x64x32xbf16, #tpu.memory_space<vmem>>, vector<1x64x32xbf16>
    %173 = vector.shape_cast %172 : vector<1x64x32xbf16> to vector<64x32xbf16>
    %cst_77 = arith.constant dense<0.000000e+00> : vector<128x32xf32>
    %174 = tpu.matmul %171, %173, %cst_77 {dimension_numbers = #tpu.dot_dimension_numbers<[1], [0], [0], [1], [0, 0, 1, 1], [], []>} : vector<128x64xbf16>, vector<64x32xbf16>, vector<128x32xf32> -> vector<128x32xf32>
    %c0_78 = arith.constant 0 : index
    %c0_79 = arith.constant 0 : index
    %c0_80 = arith.constant 0 : index
    %175 = vector.load %arg18[%c0_78, %c0_79, %c0_80] : memref<1x1x32xf32, #tpu.memory_space<vmem>>, vector<1x1x32xf32>
    %176 = vector.shape_cast %175 : vector<1x1x32xf32> to vector<1x32xf32>
    %177 = vector.broadcast %176 : vector<1x32xf32> to vector<128x32xf32>
    %178 = arith.addf %174, %177 : vector<128x32xf32>
    %179 = arith.addf %178, %128 : vector<128x32xf32>
    %c0_81 = arith.constant 0 : index
    %c0_82 = arith.constant 0 : index
    %180 = vector.load %arg20[%c0_81, %c0_82] : memref<128x32xf32, #tpu.memory_space<vmem>>, vector<128x32xf32>
    tpu.vector_store %arg20[%c0_81, %c0_82], %179 {strides = array<i32>} : memref<128x32xf32, #tpu.memory_space<vmem>>, vector<128x32xf32>,
    %c1_i32 = arith.constant 1 : i32
    %181 = arith.cmpi eq, %arg1, %c1_i32 : i32
    %182 = arith.extui %181 : i1 to i32
    %c0_i32_83 = arith.constant 0 : i32
    %183 = arith.cmpi ne, %182, %c0_i32_83 : i32
    scf.if %183 {
      %c0_84 = arith.constant 0 : index
      %c0_85 = arith.constant 0 : index
      %c0_86 = arith.constant 0 : index
      %184 = vector.load %arg19[%c0_84, %c0_85, %c0_86] : memref<1x128x32xf32, #tpu.memory_space<vmem>>, vector<1x128x32xf32>
      %185 = vector.shape_cast %184 : vector<1x128x32xf32> to vector<128x32xf32>
      %186 = vector.shape_cast %179 : vector<128x32xf32> to vector<1x128x32xf32>
      tpu.vector_store %arg19[%c0_84, %c0_85, %c0_86], %186 {strides = array<i32>} : memref<1x128x32xf32, #tpu.memory_space<vmem>>, vector<1x128x32xf32>,
    } else {
    }
    return
  }
  func.func @transform_0(%arg0: i32, %arg1: i32) -> (i32, i32, i32) {
    %c0_i32 = arith.constant 0 : i32
    %c0_i32_0 = arith.constant 0 : i32
    %c0_i32_1 = arith.constant 0 : i32
    return %arg0, %c0_i32, %c0_i32_0 : i32, i32, i32
  }
  func.func @transform_1(%arg0: i32, %arg1: i32) -> (i32, i32, i32) {
    %c0_i32 = arith.constant 0 : i32
    %c0_i32_0 = arith.constant 0 : i32
    %c0_i32_1 = arith.constant 0 : i32
    return %arg1, %c0_i32, %c0_i32_0 : i32, i32, i32
  }
  func.func @transform_2(%arg0: i32, %arg1: i32) -> (i32, i32, i32) {
    %c0_i32 = arith.constant 0 : i32
    %c0_i32_0 = arith.constant 0 : i32
    %c0_i32_1 = arith.constant 0 : i32
    return %arg1, %c0_i32, %c0_i32_0 : i32, i32, i32
  }
  func.func @transform_3(%arg0: i32, %arg1: i32) -> (i32, i32, i32) {
    %c0_i32 = arith.constant 0 : i32
    %c0_i32_0 = arith.constant 0 : i32
    %c0_i32_1 = arith.constant 0 : i32
    return %arg1, %c0_i32, %c0_i32_0 : i32, i32, i32
  }
  func.func @transform_4(%arg0: i32, %arg1: i32) -> (i32, i32, i32) {
    %c0_i32 = arith.constant 0 : i32
    %c0_i32_0 = arith.constant 0 : i32
    %c0_i32_1 = arith.constant 0 : i32
    return %arg1, %c0_i32, %c0_i32_0 : i32, i32, i32
  }
  func.func @transform_5(%arg0: i32, %arg1: i32) -> (i32, i32, i32) {
    %c0_i32 = arith.constant 0 : i32
    %c0_i32_0 = arith.constant 0 : i32
    %c0_i32_1 = arith.constant 0 : i32
    return %arg1, %c0_i32, %c0_i32_0 : i32, i32, i32
  }
  func.func @transform_6(%arg0: i32, %arg1: i32) -> (i32, i32, i32) {
    %c0_i32 = arith.constant 0 : i32
    %c0_i32_0 = arith.constant 0 : i32
    %c0_i32_1 = arith.constant 0 : i32
    return %arg1, %c0_i32, %c0_i32_0 : i32, i32, i32
  }
  func.func @transform_7(%arg0: i32, %arg1: i32) -> (i32, i32, i32) {
    %c0_i32 = arith.constant 0 : i32
    %c0_i32_0 = arith.constant 0 : i32
    %c0_i32_1 = arith.constant 0 : i32
    return %arg1, %c0_i32, %c0_i32_0 : i32, i32, i32
  }
  func.func @transform_8(%arg0: i32, %arg1: i32) -> (i32, i32, i32) {
    %c0_i32 = arith.constant 0 : i32
    %c0_i32_0 = arith.constant 0 : i32
    %c0_i32_1 = arith.constant 0 : i32
    return %arg1, %c0_i32, %c0_i32_0 : i32, i32, i32
  }
  func.func @transform_9(%arg0: i32, %arg1: i32) -> (i32, i32, i32) {
    %c0_i32 = arith.constant 0 : i32
    %c0_i32_0 = arith.constant 0 : i32
    %c0_i32_1 = arith.constant 0 : i32
    return %arg1, %c0_i32, %c0_i32_0 : i32, i32, i32
  }
  func.func @transform_10(%arg0: i32, %arg1: i32) -> (i32, i32, i32) {
    %c0_i32 = arith.constant 0 : i32
    %c0_i32_0 = arith.constant 0 : i32
    %c0_i32_1 = arith.constant 0 : i32
    return %arg1, %c0_i32, %c0_i32_0 : i32, i32, i32
  }
  func.func @transform_11(%arg0: i32, %arg1: i32) -> (i32, i32, i32) {
    %c0_i32 = arith.constant 0 : i32
    %c0_i32_0 = arith.constant 0 : i32
    %c0_i32_1 = arith.constant 0 : i32
    return %arg1, %c0_i32, %c0_i32_0 : i32, i32, i32
  }
  func.func @transform_12(%arg0: i32, %arg1: i32) -> (i32, i32, i32) {
    %c0_i32 = arith.constant 0 : i32
    %c0_i32_0 = arith.constant 0 : i32
    %c0_i32_1 = arith.constant 0 : i32
    return %arg1, %c0_i32, %c0_i32_0 : i32, i32, i32
  }
  func.func @transform_13(%arg0: i32, %arg1: i32) -> (i32, i32, i32) {
    %c0_i32 = arith.constant 0 : i32
    %c0_i32_0 = arith.constant 0 : i32
    %c0_i32_1 = arith.constant 0 : i32
    return %arg1, %c0_i32, %c0_i32_0 : i32, i32, i32
  }
  func.func @transform_14(%arg0: i32, %arg1: i32) -> (i32, i32, i32) {
    %c0_i32 = arith.constant 0 : i32
    %c0_i32_0 = arith.constant 0 : i32
    %c0_i32_1 = arith.constant 0 : i32
    return %arg1, %c0_i32, %c0_i32_0 : i32, i32, i32
  }
  func.func @transform_15(%arg0: i32, %arg1: i32) -> (i32, i32, i32) {
    %c0_i32 = arith.constant 0 : i32
    %c0_i32_0 = arith.constant 0 : i32
    %c0_i32_1 = arith.constant 0 : i32
    return %arg1, %c0_i32, %c0_i32_0 : i32, i32, i32
  }
  func.func @transform_16(%arg0: i32, %arg1: i32) -> (i32, i32, i32) {
    %c0_i32 = arith.constant 0 : i32
    %c0_i32_0 = arith.constant 0 : i32
    %c0_i32_1 = arith.constant 0 : i32
    return %arg1, %c0_i32, %c0_i32_0 : i32, i32, i32
  }
  func.func @transform_17(%arg0: i32, %arg1: i32) -> (i32, i32, i32) {
    %c0_i32 = arith.constant 0 : i32
    %c0_i32_0 = arith.constant 0 : i32
    %c0_i32_1 = arith.constant 0 : i32
    return %arg0, %c0_i32, %c0_i32_0 : i32, i32, i32
  }
}

</mosaic_0001>

<llo_original>
// kernel: tpu_custom_call.1
$region0: #{tpu_custom_call.1}
  #allocation0 [shape = 'u32[]', space=smem, size = 0x4, offset = 0x4, fixed_abs, tag = 'smem constant byte address 0x4 - core index']
  #allocation1 [shape = 'u32[144,128]{1,0:T(1,128)}', space=vmem, size = 0x12000, scoped, tag = 'internal scratch']
  #allocation2 [shape = 'f32[128,32]{1,0:T(8,128)}', space=vmem, size = 0x10000, scoped, tag = 'scratch operand']
  %s0 = inlined_call_operand.hbm [shape: f32[2,128,32], index: 0, kind: input, shape index: {}]
  %s1 = inlined_call_operand.hbm [shape: f32[2,1,32], index: 1, kind: input, shape index: {}]
  %s2 = inlined_call_operand.hbm [shape: f32[2,1,32], index: 2, kind: input, shape index: {}]
  %s3 = inlined_call_operand.hbm [shape: bf16[2,32,96], index: 3, kind: input, shape index: {}]
  %s4 = inlined_call_operand.hbm [shape: bf16[2,32,32], index: 4, kind: input, shape index: {}]
  %s5 = inlined_call_operand.hbm [shape: f32[2,1,32], index: 5, kind: input, shape index: {}]
  %s6 = inlined_call_operand.hbm [shape: f32[2,1,32], index: 6, kind: input, shape index: {}]
  %s7 = inlined_call_operand.hbm [shape: f32[2,1,32], index: 7, kind: input, shape index: {}]
  %s8 = inlined_call_operand.hbm [shape: bf16[2,32,96], index: 8, kind: input, shape index: {}]
  %s9 = inlined_call_operand.hbm [shape: bf16[2,32,32], index: 9, kind: input, shape index: {}]
  %s10 = inlined_call_operand.hbm [shape: f32[2,1,32], index: 10, kind: input, shape index: {}]
  %s11 = inlined_call_operand.hbm [shape: f32[2,1,32], index: 11, kind: input, shape index: {}]
  %s12 = inlined_call_operand.hbm [shape: f32[2,1,32], index: 12, kind: input, shape index: {}]
  %s13 = inlined_call_operand.hbm [shape: bf16[2,32,64], index: 13, kind: input, shape index: {}]
  %s14 = inlined_call_operand.hbm [shape: f32[2,1,64], index: 14, kind: input, shape index: {}]
  %s15 = inlined_call_operand.hbm [shape: bf16[2,64,32], index: 15, kind: input, shape index: {}]
  %s16 = inlined_call_operand.hbm [shape: f32[2,1,32], index: 16, kind: input, shape index: {}]
  %s17 = inlined_call_operand.hbm [shape: f32[2,128,32], index: 17, kind: output, shape index: {}]
  %s18 = sld [smem:[#allocation0]]
  $region177: #{tpu_custom_call.1} parent=0
    _
  %s20 = ssub.s32 1, %s18
  %s21 = scalar_select 0, %s20, %s18
  $region1: #{tpu_custom_call.1} parent=0
    #allocation3 [shape = 'u8[131072]{0}', space=vmem, size = 0x20000, scoped, tag = 'input window, operand 0']
    #allocation4 [shape = 's32[2]{0}', space=sflag, size = 0x8, scoped, tag = 'scoped memory for tpu_custom_call.1']
    #allocation5 [shape = 's32[2]{0}', space=sflag, size = 0x8, scoped, tag = 'scoped memory for tpu_custom_call.1']
    #allocation6 [shape = 'u8[1024]{0}', space=vmem, size = 0x400, scoped, tag = 'input window, operand 1']
    #allocation7 [shape = 's32[2]{0}', space=sflag, size = 0x8, scoped, tag = 'scoped memory for tpu_custom_call.1']
    #allocation8 [shape = 'u8[1024]{0}', space=vmem, size = 0x400, scoped, tag = 'input window, operand 2']
    #allocation9 [shape = 'u8[16384]{0}', space=vmem, size = 0x4000, scoped, tag = 'input window, operand 3']
    #allocation10 [shape = 's32[2]{0}', space=sflag, size = 0x8, scoped, tag = 'scoped memory for tpu_custom_call.1']
    #allocation11 [shape = 'u8[16384]{0}', space=vmem, size = 0x4000, scoped, tag = 'input window, operand 4']
    #allocation12 [shape = 'u8[1024]{0}', space=vmem, size = 0x400, scoped, tag = 'input window, operand 5']
    #allocation13 [shape = 's32[2]{0}', space=sflag, size = 0x8, scoped, tag = 'scoped memory for tpu_custom_call.1']
    #allocation14 [shape = 'u8[1024]{0}', space=vmem, size = 0x400, scoped, tag = 'input window, operand 6']
    #allocation15 [shape = 'u8[1024]{0}', space=vmem, size = 0x400, scoped, tag = 'input window, operand 7']
    #allocation16 [shape = 's32[2]{0}', space=sflag, size = 0x8, scoped, tag = 'scoped memory for tpu_custom_call.1']
    #allocation17 [shape = 'u8[16384]{0}', space=vmem, size = 0x4000, scoped, tag = 'input window, operand 8']
    #allocation18 [shape = 'u8[16384]{0}', space=vmem, size = 0x4000, scoped, tag = 'input window, operand 9']
    #allocation19 [shape = 's32[2]{0}', space=sflag, size = 0x8, scoped, tag = 'scoped memory for tpu_custom_call.1']
    #allocation20 [shape = 'u8[1024]{0}', space=vmem, size = 0x400, scoped, tag = 'input window, operand 10']
    #allocation21 [shape = 'u8[1024]{0}', space=vmem, size = 0x400, scoped, tag = 'input window, operand 11']
    #allocation22 [shape = 's32[2]{0}', space=sflag, size = 0x8, scoped, tag = 'scoped memory for tpu_custom_call.1']
    #allocation23 [shape = 'u8[1024]{0}', space=vmem, size = 0x400, scoped, tag = 'input window, operand 12']
    #allocation24 [shape = 'u8[16384]{0}', space=vmem, size = 0x4000, scoped, tag = 'input window, operand 13']
    #allocation25 [shape = 's32[2]{0}', space=sflag, size = 0x8, scoped, tag = 'scoped memory for tpu_custom_call.1']
    #allocation26 [shape = 'u8[1024]{0}', space=vmem, size = 0x400, scoped, tag = 'input window, operand 14']
    #allocation27 [shape = 'u8[32768]{0}', space=vmem, size = 0x8000, scoped, tag = 'input window, operand 15']
    #allocation28 [shape = 's32[2]{0}', space=sflag, size = 0x8, scoped, tag = 'scoped memory for tpu_custom_call.1']
    #allocation29 [shape = 'u8[1024]{0}', space=vmem, size = 0x400, scoped, tag = 'input window, operand 16']
    #allocation30 [shape = 'u8[131072]{0}', space=vmem, size = 0x20000, scoped, tag = 'output window, operand 0']
    %22 = vsyncpa [#allocation4], 0
    %s23 = scalar_lea.sflag [#allocation4], 1
    %24 = vsyncpa %s23, 0
    %25 = vsyncpa [#allocation7], 0
    %s26 = scalar_lea.sflag [#allocation7], 1
    %27 = vsyncpa %s26, 0
    %28 = vsyncpa [#allocation10], 0
    %s29 = scalar_lea.sflag [#allocation10], 1
    %30 = vsyncpa %s29, 0
    %31 = vsyncpa [#allocation13], 0
    %s32 = scalar_lea.sflag [#allocation13], 1
    %33 = vsyncpa %s32, 0
    %34 = vsyncpa [#allocation16], 0
    %s35 = scalar_lea.sflag [#allocation16], 1
    %36 = vsyncpa %s35, 0
    %37 = vsyncpa [#allocation19], 0
    %s38 = scalar_lea.sflag [#allocation19], 1
    %39 = vsyncpa %s38, 0
    %40 = vsyncpa [#allocation22], 0
    %s41 = scalar_lea.sflag [#allocation22], 1
    %42 = vsyncpa %s41, 0
    %43 = vsyncpa [#allocation25], 0
    %s44 = scalar_lea.sflag [#allocation25], 1
    %45 = vsyncpa %s44, 0
    %46 = vsyncpa [#allocation28], 0
    %s47 = scalar_lea.sflag [#allocation28], 1
    %48 = vsyncpa %s47, 0
    %49 = vsyncpa [#allocation5], 0
    %s50 = scalar_lea.sflag [#allocation5], 1
    %51 = vsyncpa %s50, 0
    loop: start=0, step=1, limit=6
    $region2: #{tpu_custom_call.1} parent=1 // loop_pre_header
      _
    $region3: #{tpu_custom_call.1} parent=1 // loop_header
      %s53 = sphi 0, %s57
      %p54 = scmp.ge.s32.totalorder %s53, 6
      %s60 = sphi 0, %s72
      %s61 = sphi 0, %s68
      %s62 = sphi 0, %s60
      %s63 = sphi 0, %s61
      %s64 = sphi 0, %s62
      %s65 = sphi 0, %s63
      %s75 = sphi 0, %s77
      %s78 = sphi 0, %s75
      %s79 = sphi 0, %s78
      %s95 = sphi 0, %s79
      %s101 = sphi 0, %s103
      %s104 = sphi 0, %s101
      %s105 = sphi 0, %s104
      %s121 = sphi 0, %s105
      %s127 = sphi 0, %s129
      %s130 = sphi 0, %s127
      %s131 = sphi 0, %s130
      %s147 = sphi 0, %s131
      %s153 = sphi 0, %s155
      %s156 = sphi 0, %s153
      %s157 = sphi 0, %s156
      %s173 = sphi 0, %s157
      %s179 = sphi 0, %s181
      %s182 = sphi 0, %s179
      %s183 = sphi 0, %s182
      %s199 = sphi 0, %s183
      %s205 = sphi 0, %s207
      %s208 = sphi 0, %s205
      %s209 = sphi 0, %s208
      %s225 = sphi 0, %s209
      %s231 = sphi 0, %s233
      %s234 = sphi 0, %s231
      %s235 = sphi 0, %s234
      %s251 = sphi 0, %s235
      %s257 = sphi 0, %s259
      %s260 = sphi 0, %s257
      %s261 = sphi 0, %s260
      %s277 = sphi 0, %s261
      %s283 = sphi 0, %s285
      %s286 = sphi 0, %s283
      %s287 = sphi 0, %s286
      %s303 = sphi 0, %s287
      %s309 = sphi 0, %s311
      %s312 = sphi 0, %s309
      %s313 = sphi 0, %s312
      %s329 = sphi 0, %s313
      %s335 = sphi 0, %s337
      %s338 = sphi 0, %s335
      %s339 = sphi 0, %s338
      %s355 = sphi 0, %s339
      %s361 = sphi 0, %s363
      %s364 = sphi 0, %s361
      %s365 = sphi 0, %s364
      %s381 = sphi 0, %s365
      %s387 = sphi 0, %s389
      %s390 = sphi 0, %s387
      %s391 = sphi 0, %s390
      %s407 = sphi 0, %s391
      %s413 = sphi 0, %s415
      %s416 = sphi 0, %s413
      %s417 = sphi 0, %s416
      %s433 = sphi 0, %s417
      %s439 = sphi 0, %s441
      %s442 = sphi 0, %s439
      %s443 = sphi 0, %s442
      %s459 = sphi 0, %s443
      %s465 = sphi 0, %s467
      %s468 = sphi 0, %s465
      %s469 = sphi 0, %s468
      %s485 = sphi 0, %s469
      %s491 = sphi 0, %s493
      %s494 = sphi 0, %s491
      %s495 = sphi 0, %s494
      %s511 = sphi 0, %s495
      %s517 = sphi 0, %s519
      %s520 = sphi 0, %s517
      %s521 = sphi 0, %s520
      %s537 = sphi 0, %s521
    $region4: #{tpu_custom_call.1} parent=1 // loop_header_branch
      %56 = sbr.rel (%p54) target = $region8
    $region5: #{tpu_custom_call.1} parent=1 // loop_body
      %s58 = ssub.s32 %s53, 1
      %s59 = ssub.s32 %s53, 2
      %s66 = sadd.s32 1, %s61
      %p67 = scmp.ge.s32.totalorder %s66, 2
      %s68 = scalar_select %p67, 0, %s66
      %s69 = sadd.s32 1, %s60
      %s70 = scalar_select %p67, %s69, %s60
      %p71 = scmp.ge.s32.totalorder %s70, 2
      %s72 = scalar_select %p71, 0, %s70
      %s73 = ssub.s32 %s60, %s72
      %p74 = scmp.eq.s32.totalorder %s73, 0
      %s76 = sadd.s32 %s75, 1
      %s77 = scalar_select %p74, %s75, %s76
      %p80 = pneg %p74
      %p81 = scmp.eq.s32.totalorder %s53, 3
      %p82 = por %p80, %p81
      %p83 = scmp.ne.s32.totalorder %s75, %s78
      %p84 = scmp.eq.s32.totalorder %s53, 0
      %p85 = por %p83, %p84
      %p86 = scmp.ne.s32.totalorder %s75, %s78
      %p87 = scmp.eq.s32.totalorder %s58, 3
      %p88 = por %p86, %p87
      %p89 = scmp.ne.s32.totalorder %s78, %s79
      %p90 = scmp.eq.s32.totalorder %s58, 0
      %p91 = por %p89, %p90
      %p92 = scmp.ne.s32.totalorder %s78, %s79
      %p93 = scmp.eq.s32.totalorder %s59, 3
      %p94 = por %p92, %p93
      %p96 = scmp.ne.s32.totalorder %s79, %s95
      %p97 = scmp.eq.s32.totalorder %s59, 0
      %p98 = por %p96, %p97
      %s99 = ssub.s32 %s61, %s68
      %p100 = scmp.eq.s32.totalorder %s99, 0
      %s102 = sadd.s32 %s101, 1
      %s103 = scalar_select %p100, %s101, %s102
      %p106 = pneg %p100
      %p107 = scmp.eq.s32.totalorder %s53, 3
      %p108 = por %p106, %p107
      %p109 = scmp.ne.s32.totalorder %s101, %s104
      %p110 = scmp.eq.s32.totalorder %s53, 0
      %p111 = por %p109, %p110
      %p112 = scmp.ne.s32.totalorder %s101, %s104
      %p113 = scmp.eq.s32.totalorder %s58, 3
      %p114 = por %p112, %p113
      %p115 = scmp.ne.s32.totalorder %s104, %s105
      %p116 = scmp.eq.s32.totalorder %s58, 0
      %p117 = por %p115, %p116
      %p118 = scmp.ne.s32.totalorder %s104, %s105
      %p119 = scmp.eq.s32.totalorder %s59, 3
      %p120 = por %p118, %p119
      %p122 = scmp.ne.s32.totalorder %s105, %s121
      %p123 = scmp.eq.s32.totalorder %s59, 0
      %p124 = por %p122, %p123
      %s125 = ssub.s32 %s61, %s68
      %p126 = scmp.eq.s32.totalorder %s125, 0
      %s128 = sadd.s32 %s127, 1
      %s129 = scalar_select %p126, %s127, %s128
      %p132 = pneg %p126
      %p133 = scmp.eq.s32.totalorder %s53, 3
      %p134 = por %p132, %p133
      %p135 = scmp.ne.s32.totalorder %s127, %s130
      %p136 = scmp.eq.s32.totalorder %s53, 0
      %p137 = por %p135, %p136
      %p138 = scmp.ne.s32.totalorder %s127, %s130
      %p139 = scmp.eq.s32.totalorder %s58, 3
      %p140 = por %p138, %p139
      %p141 = scmp.ne.s32.totalorder %s130, %s131
      %p142 = scmp.eq.s32.totalorder %s58, 0
      %p143 = por %p141, %p142
      %p144 = scmp.ne.s32.totalorder %s130, %s131
      %p145 = scmp.eq.s32.totalorder %s59, 3
      %p146 = por %p144, %p145
      %p148 = scmp.ne.s32.totalorder %s131, %s147
      %p149 = scmp.eq.s32.totalorder %s59, 0
      %p150 = por %p148, %p149
      %s151 = ssub.s32 %s61, %s68
      %p152 = scmp.eq.s32.totalorder %s151, 0
      %s154 = sadd.s32 %s153, 1
      %s155 = scalar_select %p152, %s153, %s154
      %p158 = pneg %p152
      %p159 = scmp.eq.s32.totalorder %s53, 3
      %p160 = por %p158, %p159
      %p161 = scmp.ne.s32.totalorder %s153, %s156
      %p162 = scmp.eq.s32.totalorder %s53, 0
      %p163 = por %p161, %p162
      %p164 = scmp.ne.s32.totalorder %s153, %s156
      %p165 = scmp.eq.s32.totalorder %s58, 3
      %p166 = por %p164, %p165
      %p167 = scmp.ne.s32.totalorder %s156, %s157
      %p168 = scmp.eq.s32.totalorder %s58, 0
      %p169 = por %p167, %p168
      %p170 = scmp.ne.s32.totalorder %s156, %s157
      %p171 = scmp.eq.s32.totalorder %s59, 3
      %p172 = por %p170, %p171
      %p174 = scmp.ne.s32.totalorder %s157, %s173
      %p175 = scmp.eq.s32.totalorder %s59, 0
      %p176 = por %p174, %p175
      %s177 = ssub.s32 %s61, %s68
      %p178 = scmp.eq.s32.totalorder %s177, 0
      %s180 = sadd.s32 %s179, 1
      %s181 = scalar_select %p178, %s179, %s180
      %p184 = pneg %p178
      %p185 = scmp.eq.s32.totalorder %s53, 3
      %p186 = por %p184, %p185
      %p187 = scmp.ne.s32.totalorder %s179, %s182
      %p188 = scmp.eq.s32.totalorder %s53, 0
      %p189 = por %p187, %p188
      %p190 = scmp.ne.s32.totalorder %s179, %s182
      %p191 = scmp.eq.s32.totalorder %s58, 3
      %p192 = por %p190, %p191
      %p193 = scmp.ne.s32.totalorder %s182, %s183
      %p194 = scmp.eq.s32.totalorder %s58, 0
      %p195 = por %p193, %p194
      %p196 = scmp.ne.s32.totalorder %s182, %s183
      %p197 = scmp.eq.s32.totalorder %s59, 3
      %p198 = por %p196, %p197
      %p200 = scmp.ne.s32.totalorder %s183, %s199
      %p201 = scmp.eq.s32.totalorder %s59, 0
      %p202 = por %p200, %p201
      %s203 = ssub.s32 %s61, %s68
      %p204 = scmp.eq.s32.totalorder %s203, 0
      %s206 = sadd.s32 %s205, 1
      %s207 = scalar_select %p204, %s205, %s206
      %p210 = pneg %p204
      %p211 = scmp.eq.s32.totalorder %s53, 3
      %p212 = por %p210, %p211
      %p213 = scmp.ne.s32.totalorder %s205, %s208
      %p214 = scmp.eq.s32.totalorder %s53, 0
      %p215 = por %p213, %p214
      %p216 = scmp.ne.s32.totalorder %s205, %s208
      %p217 = scmp.eq.s32.totalorder %s58, 3
      %p218 = por %p216, %p217
      %p219 = scmp.ne.s32.totalorder %s208, %s209
      %p220 = scmp.eq.s32.totalorder %s58, 0
      %p221 = por %p219, %p220
      %p222 = scmp.ne.s32.totalorder %s208, %s209
      %p223 = scmp.eq.s32.totalorder %s59, 3
      %p224 = por %p222, %p223
      %p226 = scmp.ne.s32.totalorder %s209, %s225
      %p227 = scmp.eq.s32.totalorder %s59, 0
      %p228 = por %p226, %p227
      %s229 = ssub.s32 %s61, %s68
      %p230 = scmp.eq.s32.totalorder %s229, 0
      %s232 = sadd.s32 %s231, 1
      %s233 = scalar_select %p230, %s231, %s232
      %p236 = pneg %p230
      %p237 = scmp.eq.s32.totalorder %s53, 3
      %p238 = por %p236, %p237
      %p239 = scmp.ne.s32.totalorder %s231, %s234
      %p240 = scmp.eq.s32.totalorder %s53, 0
      %p241 = por %p239, %p240
      %p242 = scmp.ne.s32.totalorder %s231, %s234
      %p243 = scmp.eq.s32.totalorder %s58, 3
      %p244 = por %p242, %p243
      %p245 = scmp.ne.s32.totalorder %s234, %s235
      %p246 = scmp.eq.s32.totalorder %s58, 0
      %p247 = por %p245, %p246
      %p248 = scmp.ne.s32.totalorder %s234, %s235
      %p249 = scmp.eq.s32.totalorder %s59, 3
      %p250 = por %p248, %p249
      %p252 = scmp.ne.s32.totalorder %s235, %s251
      %p253 = scmp.eq.s32.totalorder %s59, 0
      %p254 = por %p252, %p253
      %s255 = ssub.s32 %s61, %s68
      %p256 = scmp.eq.s32.totalorder %s255, 0
      %s258 = sadd.s32 %s257, 1
      %s259 = scalar_select %p256, %s257, %s258
      %p262 = pneg %p256
      %p263 = scmp.eq.s32.totalorder %s53, 3
      %p264 = por %p262, %p263
      %p265 = scmp.ne.s32.totalorder %s257, %s260
      %p266 = scmp.eq.s32.totalorder %s53, 0
      %p267 = por %p265, %p266
      %p268 = scmp.ne.s32.totalorder %s257, %s260
      %p269 = scmp.eq.s32.totalorder %s58, 3
      %p270 = por %p268, %p269
      %p271 = scmp.ne.s32.totalorder %s260, %s261
      %p272 = scmp.eq.s32.totalorder %s58, 0
      %p273 = por %p271, %p272
      %p274 = scmp.ne.s32.totalorder %s260, %s261
      %p275 = scmp.eq.s32.totalorder %s59, 3
      %p276 = por %p274, %p275
      %p278 = scmp.ne.s32.totalorder %s261, %s277
      %p279 = scmp.eq.s32.totalorder %s59, 0
      %p280 = por %p278, %p279
      %s281 = ssub.s32 %s61, %s68
      %p282 = scmp.eq.s32.totalorder %s281, 0
      %s284 = sadd.s32 %s283, 1
      %s285 = scalar_select %p282, %s283, %s284
      %p288 = pneg %p282
      %p289 = scmp.eq.s32.totalorder %s53, 3
      %p290 = por %p288, %p289
      %p291 = scmp.ne.s32.totalorder %s283, %s286
      %p292 = scmp.eq.s32.totalorder %s53, 0
      %p293 = por %p291, %p292
      %p294 = scmp.ne.s32.totalorder %s283, %s286
      %p295 = scmp.eq.s32.totalorder %s58, 3
      %p296 = por %p294, %p295
      %p297 = scmp.ne.s32.totalorder %s286, %s287
      %p298 = scmp.eq.s32.totalorder %s58, 0
      %p299 = por %p297, %p298
      %p300 = scmp.ne.s32.totalorder %s286, %s287
      %p301 = scmp.eq.s32.totalorder %s59, 3
      %p302 = por %p300, %p301
      %p304 = scmp.ne.s32.totalorder %s287, %s303
      %p305 = scmp.eq.s32.totalorder %s59, 0
      %p306 = por %p304, %p305
      %s307 = ssub.s32 %s61, %s68
      %p308 = scmp.eq.s32.totalorder %s307, 0
      %s310 = sadd.s32 %s309, 1
      %s311 = scalar_select %p308, %s309, %s310
      %p314 = pneg %p308
      %p315 = scmp.eq.s32.totalorder %s53, 3
      %p316 = por %p314, %p315
      %p317 = scmp.ne.s32.totalorder %s309, %s312
      %p318 = scmp.eq.s32.totalorder %s53, 0
      %p319 = por %p317, %p318
      %p320 = scmp.ne.s32.totalorder %s309, %s312
      %p321 = scmp.eq.s32.totalorder %s58, 3
      %p322 = por %p320, %p321
      %p323 = scmp.ne.s32.totalorder %s312, %s313
      %p324 = scmp.eq.s32.totalorder %s58, 0
      %p325 = por %p323, %p324
      %p326 = scmp.ne.s32.totalorder %s312, %s313
      %p327 = scmp.eq.s32.totalorder %s59, 3
      %p328 = por %p326, %p327
      %p330 = scmp.ne.s32.totalorder %s313, %s329
      %p331 = scmp.eq.s32.totalorder %s59, 0
      %p332 = por %p330, %p331
      %s333 = ssub.s32 %s61, %s68
      %p334 = scmp.eq.s32.totalorder %s333, 0
      %s336 = sadd.s32 %s335, 1
      %s337 = scalar_select %p334, %s335, %s336
      %p340 = pneg %p334
      %p341 = scmp.eq.s32.totalorder %s53, 3
      %p342 = por %p340, %p341
      %p343 = scmp.ne.s32.totalorder %s335, %s338
      %p344 = scmp.eq.s32.totalorder %s53, 0
      %p345 = por %p343, %p344
      %p346 = scmp.ne.s32.totalorder %s335, %s338
      %p347 = scmp.eq.s32.totalorder %s58, 3
      %p348 = por %p346, %p347
      %p349 = scmp.ne.s32.totalorder %s338, %s339
      %p350 = scmp.eq.s32.totalorder %s58, 0
      %p351 = por %p349, %p350
      %p352 = scmp.ne.s32.totalorder %s338, %s339
      %p353 = scmp.eq.s32.totalorder %s59, 3
      %p354 = por %p352, %p353
      %p356 = scmp.ne.s32.totalorder %s339, %s355
      %p357 = scmp.eq.s32.totalorder %s59, 0
      %p358 = por %p356, %p357
      %s359 = ssub.s32 %s61, %s68
      %p360 = scmp.eq.s32.totalorder %s359, 0
      %s362 = sadd.s32 %s361, 1
      %s363 = scalar_select %p360, %s361, %s362
      %p366 = pneg %p360
      %p367 = scmp.eq.s32.totalorder %s53, 3
      %p368 = por %p366, %p367
      %p369 = scmp.ne.s32.totalorder %s361, %s364
      %p370 = scmp.eq.s32.totalorder %s53, 0
      %p371 = por %p369, %p370
      %p372 = scmp.ne.s32.totalorder %s361, %s364
      %p373 = scmp.eq.s32.totalorder %s58, 3
      %p374 = por %p372, %p373
      %p375 = scmp.ne.s32.totalorder %s364, %s365
      %p376 = scmp.eq.s32.totalorder %s58, 0
      %p377 = por %p375, %p376
      %p378 = scmp.ne.s32.totalorder %s364, %s365
      %p379 = scmp.eq.s32.totalorder %s59, 3
      %p380 = por %p378, %p379
      %p382 = scmp.ne.s32.totalorder %s365, %s381
      %p383 = scmp.eq.s32.totalorder %s59, 0
      %p384 = por %p382, %p383
      %s385 = ssub.s32 %s61, %s68
      %p386 = scmp.eq.s32.totalorder %s385, 0
      %s388 = sadd.s32 %s387, 1
      %s389 = scalar_select %p386, %s387, %s388
      %p392 = pneg %p386
      %p393 = scmp.eq.s32.totalorder %s53, 3
      %p394 = por %p392, %p393
      %p395 = scmp.ne.s32.totalorder %s387, %s390
      %p396 = scmp.eq.s32.totalorder %s53, 0
      %p397 = por %p395, %p396
      %p398 = scmp.ne.s32.totalorder %s387, %s390
      %p399 = scmp.eq.s32.totalorder %s58, 3
      %p400 = por %p398, %p399
      %p401 = scmp.ne.s32.totalorder %s390, %s391
      %p402 = scmp.eq.s32.totalorder %s58, 0
      %p403 = por %p401, %p402
      %p404 = scmp.ne.s32.totalorder %s390, %s391
      %p405 = scmp.eq.s32.totalorder %s59, 3
      %p406 = por %p404, %p405
      %p408 = scmp.ne.s32.totalorder %s391, %s407
      %p409 = scmp.eq.s32.totalorder %s59, 0
      %p410 = por %p408, %p409
      %s411 = ssub.s32 %s61, %s68
      %p412 = scmp.eq.s32.totalorder %s411, 0
      %s414 = sadd.s32 %s413, 1
      %s415 = scalar_select %p412, %s413, %s414
      %p418 = pneg %p412
      %p419 = scmp.eq.s32.totalorder %s53, 3
      %p420 = por %p418, %p419
      %p421 = scmp.ne.s32.totalorder %s413, %s416
      %p422 = scmp.eq.s32.totalorder %s53, 0
      %p423 = por %p421, %p422
      %p424 = scmp.ne.s32.totalorder %s413, %s416
      %p425 = scmp.eq.s32.totalorder %s58, 3
      %p426 = por %p424, %p425
      %p427 = scmp.ne.s32.totalorder %s416, %s417
      %p428 = scmp.eq.s32.totalorder %s58, 0
      %p429 = por %p427, %p428
      %p430 = scmp.ne.s32.totalorder %s416, %s417
      %p431 = scmp.eq.s32.totalorder %s59, 3
      %p432 = por %p430, %p431
      %p434 = scmp.ne.s32.totalorder %s417, %s433
      %p435 = scmp.eq.s32.totalorder %s59, 0
      %p436 = por %p434, %p435
      %s437 = ssub.s32 %s61, %s68
      %p438 = scmp.eq.s32.totalorder %s437, 0
      %s440 = sadd.s32 %s439, 1
      %s441 = scalar_select %p438, %s439, %s440
      %p444 = pneg %p438
      %p445 = scmp.eq.s32.totalorder %s53, 3
      %p446 = por %p444, %p445
      %p447 = scmp.ne.s32.totalorder %s439, %s442
      %p448 = scmp.eq.s32.totalorder %s53, 0
      %p449 = por %p447, %p448
      %p450 = scmp.ne.s32.totalorder %s439, %s442
      %p451 = scmp.eq.s32.totalorder %s58, 3
      %p452 = por %p450, %p451
      %p453 = scmp.ne.s32.totalorder %s442, %s443
      %p454 = scmp.eq.s32.totalorder %s58, 0
      %p455 = por %p453, %p454
      %p456 = scmp.ne.s32.totalorder %s442, %s443
      %p457 = scmp.eq.s32.totalorder %s59, 3
      %p458 = por %p456, %p457
      %p460 = scmp.ne.s32.totalorder %s443, %s459
      %p461 = scmp.eq.s32.totalorder %s59, 0
      %p462 = por %p460, %p461
      %s463 = ssub.s32 %s61, %s68
      %p464 = scmp.eq.s32.totalorder %s463, 0
      %s466 = sadd.s32 %s465, 1
      %s467 = scalar_select %p464, %s465, %s466
      %p470 = pneg %p464
      %p471 = scmp.eq.s32.totalorder %s53, 3
      %p472 = por %p470, %p471
      %p473 = scmp.ne.s32.totalorder %s465, %s468
      %p474 = scmp.eq.s32.totalorder %s53, 0
      %p475 = por %p473, %p474
      %p476 = scmp.ne.s32.totalorder %s465, %s468
      %p477 = scmp.eq.s32.totalorder %s58, 3
      %p478 = por %p476, %p477
      %p479 = scmp.ne.s32.totalorder %s468, %s469
      %p480 = scmp.eq.s32.totalorder %s58, 0
      %p481 = por %p479, %p480
      %p482 = scmp.ne.s32.totalorder %s468, %s469
      %p483 = scmp.eq.s32.totalorder %s59, 3
      %p484 = por %p482, %p483
      %p486 = scmp.ne.s32.totalorder %s469, %s485
      %p487 = scmp.eq.s32.totalorder %s59, 0
      %p488 = por %p486, %p487
      %s489 = ssub.s32 %s61, %s68
      %p490 = scmp.eq.s32.totalorder %s489, 0
      %s492 = sadd.s32 %s491, 1
      %s493 = scalar_select %p490, %s491, %s492
      %p496 = pneg %p490
      %p497 = scmp.eq.s32.totalorder %s53, 3
      %p498 = por %p496, %p497
      %p499 = scmp.ne.s32.totalorder %s491, %s494
      %p500 = scmp.eq.s32.totalorder %s53, 0
      %p501 = por %p499, %p500
      %p502 = scmp.ne.s32.totalorder %s491, %s494
      %p503 = scmp.eq.s32.totalorder %s58, 3
      %p504 = por %p502, %p503
      %p505 = scmp.ne.s32.totalorder %s494, %s495
      %p506 = scmp.eq.s32.totalorder %s58, 0
      %p507 = por %p505, %p506
      %p508 = scmp.ne.s32.totalorder %s494, %s495
      %p509 = scmp.eq.s32.totalorder %s59, 3
      %p510 = por %p508, %p509
      %p512 = scmp.ne.s32.totalorder %s495, %s511
      %p513 = scmp.eq.s32.totalorder %s59, 0
      %p514 = por %p512, %p513
      %s515 = ssub.s32 %s60, %s72
      %p516 = scmp.eq.s32.totalorder %s515, 0
      %s518 = sadd.s32 %s517, 1
      %s519 = scalar_select %p516, %s517, %s518
      %p522 = pneg %p516
      %p523 = scmp.eq.s32.totalorder %s53, 3
      %p524 = por %p522, %p523
      %p525 = scmp.ne.s32.totalorder %s517, %s520
      %p526 = scmp.eq.s32.totalorder %s53, 0
      %p527 = por %p525, %p526
      %p528 = scmp.ne.s32.totalorder %s517, %s520
      %p529 = scmp.eq.s32.totalorder %s58, 3
      %p530 = por %p528, %p529
      %p531 = scmp.ne.s32.totalorder %s520, %s521
      %p532 = scmp.eq.s32.totalorder %s58, 0
      %p533 = por %p531, %p532
      %p534 = scmp.ne.s32.totalorder %s520, %s521
      %p535 = scmp.eq.s32.totalorder %s59, 3
      %p536 = por %p534, %p535
      %p538 = scmp.ne.s32.totalorder %s521, %s537
      %p539 = scmp.eq.s32.totalorder %s59, 0
      %p540 = por %p538, %p539
      %p541 = scmp.le.s32.totalorder 1, %s53
      %p542 = scmp.lt.s32.totalorder %s53, 5
      %p543 = pnand %p541, %p542
      %p544 = pneg %p543
      // Predicated region
      $region9: #{tpu_custom_call.1} parent=5 // pred_check
        _
      $region10: #{tpu_custom_call.1} parent=5 // pred_check_branch
        %546 = sbr.rel (%p543) target = $region12
      $region11: #{tpu_custom_call.1} parent=5 // pred_region
        %s547 = ssub.s32 %s53, 1
      $region12: #{tpu_custom_call.1} parent=5 // pred_fallthru
        _
      %p548 = scmp.lt.s32.totalorder %s53, 4
      // Predicated region
      $region13: #{tpu_custom_call.1} parent=5 // pred_check
        %p549 = pneg %p548
      $region14: #{tpu_custom_call.1} parent=5 // pred_check_branch
        %551 = sbr.rel (%p549) target = $region16
      $region15: #{tpu_custom_call.1} parent=5 // pred_region
        // Predicated region
        $region17: #{tpu_custom_call.1} parent=15 // pred_check
          %p552 = pneg %p85
        $region18: #{tpu_custom_call.1} parent=15 // pred_check_branch
          %554 = sbr.rel (%p552) target = $region20
        $region19: #{tpu_custom_call.1} parent=15 // pred_region
          %s555 = sand.u32 %s75, 1
          %s556 = scalar_lea.sflag [#allocation4], %s555
          %s557 = sand.u32 %s75, 1
          %s558 = smul.addr %s557, 128
          %s559 = scalar_lea.vmem [#allocation3], %s558
          %s561 = ssub.s32 2048, 2048
          %562 = vsyncadd %s556, %s561
          %s563 = smul.addr %s60, 16
          %s564 = smul.addr %s563, 128
          %s565 = scalar_lea.hbm %s0, %s564
          %s566 = sshll.u32 %s559, 4
          %s567 = int_to_ptr.vmem [resolvable:$true] %s566
          %572 = dma.hbm_to_vmem [thread:$0]  %s565, 2048, %s567, %s556, 128, 128, 8
        $region20: #{tpu_custom_call.1} parent=15 // pred_fallthru
          _
        // Predicated region
        $region21: #{tpu_custom_call.1} parent=15 // pred_check
          %p573 = pneg %p111
        $region22: #{tpu_custom_call.1} parent=15 // pred_check_branch
          %575 = sbr.rel (%p573) target = $region24
        $region23: #{tpu_custom_call.1} parent=15 // pred_region
          %s576 = sand.u32 %s53, 1
          %s577 = scalar_lea.sflag [#allocation7], %s576
          %s578 = sand.u32 %s101, 1
          %s579 = scalar_lea.vmem [#allocation6], %s578
          %s581 = ssub.s32 16, 16
          %582 = vsyncadd %s577, %s581
          %s583 = smul.addr %s61, 16
          %s584 = scalar_lea.hbm %s1, %s583
          %s586 = sshll.u32 %s579, 4
          %s587 = int_to_ptr.vmem [resolvable:$true] %s586
          %589 = dma.hbm_to_vmem [thread:$0]  %s584, 16, %s587, %s577
        $region24: #{tpu_custom_call.1} parent=15 // pred_fallthru
          _
        // Predicated region
        $region25: #{tpu_custom_call.1} parent=15 // pred_check
          %p590 = pneg %p137
        $region26: #{tpu_custom_call.1} parent=15 // pred_check_branch
          %592 = sbr.rel (%p590) target = $region28
        $region27: #{tpu_custom_call.1} parent=15 // pred_region
          %s593 = sand.u32 %s53, 1
          %s594 = scalar_lea.sflag [#allocation7], %s593
          %s595 = sand.u32 %s127, 1
          %s596 = scalar_lea.vmem [#allocation8], %s595
          %s598 = ssub.s32 16, 16
          %599 = vsyncadd %s594, %s598
          %s600 = smul.addr %s61, 16
          %s601 = scalar_lea.hbm %s2, %s600
          %s603 = sshll.u32 %s596, 4
          %s604 = int_to_ptr.vmem [resolvable:$true] %s603
          %606 = dma.hbm_to_vmem [thread:$0]  %s601, 16, %s604, %s594
        $region28: #{tpu_custom_call.1} parent=15 // pred_fallthru
          _
        // Predicated region
        $region29: #{tpu_custom_call.1} parent=15 // pred_check
          %p607 = pneg %p163
        $region30: #{tpu_custom_call.1} parent=15 // pred_check_branch
          %609 = sbr.rel (%p607) target = $region32
        $region31: #{tpu_custom_call.1} parent=15 // pred_region
          %s610 = sand.u32 %s53, 1
          %s611 = scalar_lea.sflag [#allocation10], %s610
          %s612 = sand.u32 %s153, 1
          %s613 = smul.addr %s612, 16
          %s614 = scalar_lea.vmem [#allocation9], %s613
          %s616 = ssub.s32 256, 256
          %617 = vsyncadd %s611, %s616
          %s618 = smul.addr %s61, 4
          %s619 = smul.addr %s618, 64
          %s620 = scalar_lea.hbm %s3, %s619
          %s621 = sshll.u32 %s614, 4
          %s622 = int_to_ptr.vmem [resolvable:$true] %s621
          %627 = dma.hbm_to_vmem [thread:$0]  %s620, 256, %s622, %s611, 64, 64, 4
        $region32: #{tpu_custom_call.1} parent=15 // pred_fallthru
          _
        // Predicated region
        $region33: #{tpu_custom_call.1} parent=15 // pred_check
          %p628 = pneg %p189
        $region34: #{tpu_custom_call.1} parent=15 // pred_check_branch
          %630 = sbr.rel (%p628) target = $region36
        $region35: #{tpu_custom_call.1} parent=15 // pred_region
          %s631 = sand.u32 %s53, 1
          %s632 = scalar_lea.sflag [#allocation10], %s631
          %s633 = sand.u32 %s179, 1
          %s634 = smul.addr %s633, 16
          %s635 = scalar_lea.vmem [#allocation11], %s634
          %s637 = ssub.s32 256, 256
          %638 = vsyncadd %s632, %s637
          %s639 = smul.addr %s61, 4
          %s640 = smul.addr %s639, 64
          %s641 = scalar_lea.hbm %s4, %s640
          %s642 = sshll.u32 %s635, 4
          %s643 = int_to_ptr.vmem [resolvable:$true] %s642
          %648 = dma.hbm_to_vmem [thread:$0]  %s641, 256, %s643, %s632, 64, 64, 4
        $region36: #{tpu_custom_call.1} parent=15 // pred_fallthru
          _
        // Predicated region
        $region37: #{tpu_custom_call.1} parent=15 // pred_check
          %p649 = pneg %p215
        $region38: #{tpu_custom_call.1} parent=15 // pred_check_branch
          %651 = sbr.rel (%p649) target = $region40
        $region39: #{tpu_custom_call.1} parent=15 // pred_region
          %s652 = sand.u32 %s53, 1
          %s653 = scalar_lea.sflag [#allocation13], %s652
          %s654 = sand.u32 %s205, 1
          %s655 = scalar_lea.vmem [#allocation12], %s654
          %s657 = ssub.s32 16, 16
          %658 = vsyncadd %s653, %s657
          %s659 = smul.addr %s61, 16
          %s660 = scalar_lea.hbm %s5, %s659
          %s662 = sshll.u32 %s655, 4
          %s663 = int_to_ptr.vmem [resolvable:$true] %s662
          %665 = dma.hbm_to_vmem [thread:$0]  %s660, 16, %s663, %s653
        $region40: #{tpu_custom_call.1} parent=15 // pred_fallthru
          _
        // Predicated region
        $region41: #{tpu_custom_call.1} parent=15 // pred_check
          %p666 = pneg %p241
        $region42: #{tpu_custom_call.1} parent=15 // pred_check_branch
          %668 = sbr.rel (%p666) target = $region44
        $region43: #{tpu_custom_call.1} parent=15 // pred_region
          %s669 = sand.u32 %s53, 1
          %s670 = scalar_lea.sflag [#allocation13], %s669
          %s671 = sand.u32 %s231, 1
          %s672 = scalar_lea.vmem [#allocation14], %s671
          %s674 = ssub.s32 16, 16
          %675 = vsyncadd %s670, %s674
          %s676 = smul.addr %s61, 16
          %s677 = scalar_lea.hbm %s6, %s676
          %s679 = sshll.u32 %s672, 4
          %s680 = int_to_ptr.vmem [resolvable:$true] %s679
          %682 = dma.hbm_to_vmem [thread:$0]  %s677, 16, %s680, %s670
        $region44: #{tpu_custom_call.1} parent=15 // pred_fallthru
          _
        // Predicated region
        $region45: #{tpu_custom_call.1} parent=15 // pred_check
          %p683 = pneg %p267
        $region46: #{tpu_custom_call.1} parent=15 // pred_check_branch
          %685 = sbr.rel (%p683) target = $region48
        $region47: #{tpu_custom_call.1} parent=15 // pred_region
          %s686 = sand.u32 %s53, 1
          %s687 = scalar_lea.sflag [#allocation16], %s686
          %s688 = sand.u32 %s257, 1
          %s689 = scalar_lea.vmem [#allocation15], %s688
          %s691 = ssub.s32 16, 16
          %692 = vsyncadd %s687, %s691
          %s693 = smul.addr %s61, 16
          %s694 = scalar_lea.hbm %s7, %s693
          %s696 = sshll.u32 %s689, 4
          %s697 = int_to_ptr.vmem [resolvable:$true] %s696
          %699 = dma.hbm_to_vmem [thread:$0]  %s694, 16, %s697, %s687
        $region48: #{tpu_custom_call.1} parent=15 // pred_fallthru
          _
        // Predicated region
        $region49: #{tpu_custom_call.1} parent=15 // pred_check
          %p700 = pneg %p293
        $region50: #{tpu_custom_call.1} parent=15 // pred_check_branch
          %702 = sbr.rel (%p700) target = $region52
        $region51: #{tpu_custom_call.1} parent=15 // pred_region
          %s703 = sand.u32 %s53, 1
          %s704 = scalar_lea.sflag [#allocation16], %s703
          %s705 = sand.u32 %s283, 1
          %s706 = smul.addr %s705, 16
          %s707 = scalar_lea.vmem [#allocation17], %s706
          %s709 = ssub.s32 256, 256
          %710 = vsyncadd %s704, %s709
          %s711 = smul.addr %s61, 4
          %s712 = smul.addr %s711, 64
          %s713 = scalar_lea.hbm %s8, %s712
          %s714 = sshll.u32 %s707, 4
          %s715 = int_to_ptr.vmem [resolvable:$true] %s714
          %720 = dma.hbm_to_vmem [thread:$0]  %s713, 256, %s715, %s704, 64, 64, 4
        $region52: #{tpu_custom_call.1} parent=15 // pred_fallthru
          _
        // Predicated region
        $region53: #{tpu_custom_call.1} parent=15 // pred_check
          %p721 = pneg %p319
        $region54: #{tpu_custom_call.1} parent=15 // pred_check_branch
          %723 = sbr.rel (%p721) target = $region56
        $region55: #{tpu_custom_call.1} parent=15 // pred_region
          %s724 = sand.u32 %s53, 1
          %s725 = scalar_lea.sflag [#allocation19], %s724
          %s726 = sand.u32 %s309, 1
          %s727 = smul.addr %s726, 16
          %s728 = scalar_lea.vmem [#allocation18], %s727
          %s730 = ssub.s32 256, 256
          %731 = vsyncadd %s725, %s730
          %s732 = smul.addr %s61, 4
          %s733 = smul.addr %s732, 64
          %s734 = scalar_lea.hbm %s9, %s733
          %s735 = sshll.u32 %s728, 4
          %s736 = int_to_ptr.vmem [resolvable:$true] %s735
          %741 = dma.hbm_to_vmem [thread:$0]  %s734, 256, %s736, %s725, 64, 64, 4
        $region56: #{tpu_custom_call.1} parent=15 // pred_fallthru
          _
        // Predicated region
        $region57: #{tpu_custom_call.1} parent=15 // pred_check
          %p742 = pneg %p345
        $region58: #{tpu_custom_call.1} parent=15 // pred_check_branch
          %744 = sbr.rel (%p742) target = $region60
        $region59: #{tpu_custom_call.1} parent=15 // pred_region
          %s745 = sand.u32 %s53, 1
          %s746 = scalar_lea.sflag [#allocation19], %s745
          %s747 = sand.u32 %s335, 1
          %s748 = scalar_lea.vmem [#allocation20], %s747
          %s750 = ssub.s32 16, 16
          %751 = vsyncadd %s746, %s750
          %s752 = smul.addr %s61, 16
          %s753 = scalar_lea.hbm %s10, %s752
          %s755 = sshll.u32 %s748, 4
          %s756 = int_to_ptr.vmem [resolvable:$true] %s755
          %758 = dma.hbm_to_vmem [thread:$0]  %s753, 16, %s756, %s746
        $region60: #{tpu_custom_call.1} parent=15 // pred_fallthru
          _
        // Predicated region
        $region61: #{tpu_custom_call.1} parent=15 // pred_check
          %p759 = pneg %p371
        $region62: #{tpu_custom_call.1} parent=15 // pred_check_branch
          %761 = sbr.rel (%p759) target = $region64
        $region63: #{tpu_custom_call.1} parent=15 // pred_region
          %s762 = sand.u32 %s53, 1
          %s763 = scalar_lea.sflag [#allocation22], %s762
          %s764 = sand.u32 %s361, 1
          %s765 = scalar_lea.vmem [#allocation21], %s764
          %s767 = ssub.s32 16, 16
          %768 = vsyncadd %s763, %s767
          %s769 = smul.addr %s61, 16
          %s770 = scalar_lea.hbm %s11, %s769
          %s772 = sshll.u32 %s765, 4
          %s773 = int_to_ptr.vmem [resolvable:$true] %s772
          %775 = dma.hbm_to_vmem [thread:$0]  %s770, 16, %s773, %s763
        $region64: #{tpu_custom_call.1} parent=15 // pred_fallthru
          _
        // Predicated region
        $region65: #{tpu_custom_call.1} parent=15 // pred_check
          %p776 = pneg %p397
        $region66: #{tpu_custom_call.1} parent=15 // pred_check_branch
          %778 = sbr.rel (%p776) target = $region68
        $region67: #{tpu_custom_call.1} parent=15 // pred_region
          %s779 = sand.u32 %s53, 1
          %s780 = scalar_lea.sflag [#allocation22], %s779
          %s781 = sand.u32 %s387, 1
          %s782 = scalar_lea.vmem [#allocation23], %s781
          %s784 = ssub.s32 16, 16
          %785 = vsyncadd %s780, %s784
          %s786 = smul.addr %s61, 16
          %s787 = scalar_lea.hbm %s12, %s786
          %s789 = sshll.u32 %s782, 4
          %s790 = int_to_ptr.vmem [resolvable:$true] %s789
          %792 = dma.hbm_to_vmem [thread:$0]  %s787, 16, %s790, %s780
        $region68: #{tpu_custom_call.1} parent=15 // pred_fallthru
          _
        // Predicated region
        $region69: #{tpu_custom_call.1} parent=15 // pred_check
          %p793 = pneg %p423
        $region70: #{tpu_custom_call.1} parent=15 // pred_check_branch
          %795 = sbr.rel (%p793) target = $region72
        $region71: #{tpu_custom_call.1} parent=15 // pred_region
          %s796 = sand.u32 %s53, 1
          %s797 = scalar_lea.sflag [#allocation25], %s796
          %s798 = sand.u32 %s413, 1
          %s799 = smul.addr %s798, 16
          %s800 = scalar_lea.vmem [#allocation24], %s799
          %s802 = ssub.s32 256, 256
          %803 = vsyncadd %s797, %s802
          %s804 = smul.addr %s61, 4
          %s805 = smul.addr %s804, 64
          %s806 = scalar_lea.hbm %s13, %s805
          %s807 = sshll.u32 %s800, 4
          %s808 = int_to_ptr.vmem [resolvable:$true] %s807
          %813 = dma.hbm_to_vmem [thread:$0]  %s806, 256, %s808, %s797, 64, 64, 4
        $region72: #{tpu_custom_call.1} parent=15 // pred_fallthru
          _
        // Predicated region
        $region73: #{tpu_custom_call.1} parent=15 // pred_check
          %p814 = pneg %p449
        $region74: #{tpu_custom_call.1} parent=15 // pred_check_branch
          %816 = sbr.rel (%p814) target = $region76
        $region75: #{tpu_custom_call.1} parent=15 // pred_region
          %s817 = sand.u32 %s53, 1
          %s818 = scalar_lea.sflag [#allocation25], %s817
          %s819 = sand.u32 %s439, 1
          %s820 = scalar_lea.vmem [#allocation26], %s819
          %s822 = ssub.s32 16, 16
          %823 = vsyncadd %s818, %s822
          %s824 = smul.addr %s61, 16
          %s825 = scalar_lea.hbm %s14, %s824
          %s827 = sshll.u32 %s820, 4
          %s828 = int_to_ptr.vmem [resolvable:$true] %s827
          %830 = dma.hbm_to_vmem [thread:$0]  %s825, 16, %s828, %s818
        $region76: #{tpu_custom_call.1} parent=15 // pred_fallthru
          _
        // Predicated region
        $region77: #{tpu_custom_call.1} parent=15 // pred_check
          %p831 = pneg %p475
        $region78: #{tpu_custom_call.1} parent=15 // pred_check_branch
          %833 = sbr.rel (%p831) target = $region80
        $region79: #{tpu_custom_call.1} parent=15 // pred_region
          %s834 = sand.u32 %s53, 1
          %s835 = scalar_lea.sflag [#allocation28], %s834
          %s836 = sand.u32 %s465, 1
          %s837 = smul.addr %s836, 32
          %s838 = scalar_lea.vmem [#allocation27], %s837
          %s840 = ssub.s32 512, 512
          %841 = vsyncadd %s835, %s840
          %s842 = smul.addr %s61, 8
          %s843 = smul.addr %s842, 64
          %s844 = scalar_lea.hbm %s15, %s843
          %s845 = sshll.u32 %s838, 4
          %s846 = int_to_ptr.vmem [resolvable:$true] %s845
          %851 = dma.hbm_to_vmem [thread:$0]  %s844, 512, %s846, %s835, 64, 64, 4
        $region80: #{tpu_custom_call.1} parent=15 // pred_fallthru
          _
        // Predicated region
        $region81: #{tpu_custom_call.1} parent=15 // pred_check
          %p852 = pneg %p501
        $region82: #{tpu_custom_call.1} parent=15 // pred_check_branch
          %854 = sbr.rel (%p852) target = $region84
        $region83: #{tpu_custom_call.1} parent=15 // pred_region
          %s855 = sand.u32 %s53, 1
          %s856 = scalar_lea.sflag [#allocation28], %s855
          %s857 = sand.u32 %s491, 1
          %s858 = scalar_lea.vmem [#allocation29], %s857
          %s860 = ssub.s32 16, 16
          %861 = vsyncadd %s856, %s860
          %s862 = smul.addr %s61, 16
          %s863 = scalar_lea.hbm %s16, %s862
          %s865 = sshll.u32 %s858, 4
          %s866 = int_to_ptr.vmem [resolvable:$true] %s865
          %868 = dma.hbm_to_vmem [thread:$0]  %s863, 16, %s866, %s856
        $region84: #{tpu_custom_call.1} parent=15 // pred_fallthru
          _
      $region16: #{tpu_custom_call.1} parent=5 // pred_fallthru
        _
      %p869 = scmp.le.s32.totalorder 1, %s53
      %p870 = scmp.lt.s32.totalorder %s53, 5
      %p871 = pnand %p869, %p870
      %p872 = pneg %p871
      // Predicated region
      $region85: #{tpu_custom_call.1} parent=5 // pred_check
        _
      $region86: #{tpu_custom_call.1} parent=5 // pred_check_branch
        %874 = sbr.rel (%p871) target = $region88
      $region87: #{tpu_custom_call.1} parent=5 // pred_region
        %s875 = ssub.s32 %s53, 1
        %s876 = sand.u32 %s78, 1
        %s877 = scalar_lea.sflag [#allocation4], %s876
        %s878 = sand.u32 %s78, 1
        %s879 = smul.addr %s878, 128
        %s880 = scalar_lea.vmem [#allocation3], %s879
        // Predicated region
        $region89: #{tpu_custom_call.1} parent=87 // pred_check
          %p881 = pneg %p91
        $region90: #{tpu_custom_call.1} parent=87 // pred_check_branch
          %883 = sbr.rel (%p881) target = $region92
        $region91: #{tpu_custom_call.1} parent=87 // pred_region
          %884 = dma.done %s877, 2048
        $region92: #{tpu_custom_call.1} parent=87 // pred_fallthru
          _
        %s885 = sand.u32 %s58, 1
        %s886 = scalar_lea.sflag [#allocation7], %s885
        %s887 = sand.u32 %s104, 1
        %s888 = scalar_lea.vmem [#allocation6], %s887
        // Predicated region
        $region93: #{tpu_custom_call.1} parent=87 // pred_check
          %p889 = pneg %p117
        $region94: #{tpu_custom_call.1} parent=87 // pred_check_branch
          %891 = sbr.rel (%p889) target = $region96
        $region95: #{tpu_custom_call.1} parent=87 // pred_region
          %892 = dma.done %s886, 16
        $region96: #{tpu_custom_call.1} parent=87 // pred_fallthru
          _
        %s893 = sand.u32 %s58, 1
        %s894 = scalar_lea.sflag [#allocation7], %s893
        %s895 = sand.u32 %s130, 1
        %s896 = scalar_lea.vmem [#allocation8], %s895
        // Predicated region
        $region97: #{tpu_custom_call.1} parent=87 // pred_check
          %p897 = pneg %p143
        $region98: #{tpu_custom_call.1} parent=87 // pred_check_branch
          %899 = sbr.rel (%p897) target = $region100
        $region99: #{tpu_custom_call.1} parent=87 // pred_region
          %900 = dma.done %s894, 16
        $region100: #{tpu_custom_call.1} parent=87 // pred_fallthru
          _
        %s901 = sand.u32 %s58, 1
        %s902 = scalar_lea.sflag [#allocation10], %s901
        %s903 = sand.u32 %s156, 1
        %s904 = smul.addr %s903, 16
        %s905 = scalar_lea.vmem [#allocation9], %s904
        // Predicated region
        $region101: #{tpu_custom_call.1} parent=87 // pred_check
          %p906 = pneg %p169
        $region102: #{tpu_custom_call.1} parent=87 // pred_check_branch
          %908 = sbr.rel (%p906) target = $region104
        $region103: #{tpu_custom_call.1} parent=87 // pred_region
          %909 = dma.done %s902, 256
        $region104: #{tpu_custom_call.1} parent=87 // pred_fallthru
          _
        %s910 = sand.u32 %s58, 1
        %s911 = scalar_lea.sflag [#allocation10], %s910
        %s912 = sand.u32 %s182, 1
        %s913 = smul.addr %s912, 16
        %s914 = scalar_lea.vmem [#allocation11], %s913
        // Predicated region
        $region105: #{tpu_custom_call.1} parent=87 // pred_check
          %p915 = pneg %p195
        $region106: #{tpu_custom_call.1} parent=87 // pred_check_branch
          %917 = sbr.rel (%p915) target = $region108
        $region107: #{tpu_custom_call.1} parent=87 // pred_region
          %918 = dma.done %s911, 256
        $region108: #{tpu_custom_call.1} parent=87 // pred_fallthru
          _
        %s919 = sand.u32 %s58, 1
        %s920 = scalar_lea.sflag [#allocation13], %s919
        %s921 = sand.u32 %s208, 1
        %s922 = scalar_lea.vmem [#allocation12], %s921
        // Predicated region
        $region109: #{tpu_custom_call.1} parent=87 // pred_check
          %p923 = pneg %p221
        $region110: #{tpu_custom_call.1} parent=87 // pred_check_branch
          %925 = sbr.rel (%p923) target = $region112
        $region111: #{tpu_custom_call.1} parent=87 // pred_region
          %926 = dma.done %s920, 16
        $region112: #{tpu_custom_call.1} parent=87 // pred_fallthru
          _
        %s927 = sand.u32 %s58, 1
        %s928 = scalar_lea.sflag [#allocation13], %s927
        %s929 = sand.u32 %s234, 1
        %s930 = scalar_lea.vmem [#allocation14], %s929
        // Predicated region
        $region113: #{tpu_custom_call.1} parent=87 // pred_check
          %p931 = pneg %p247
        $region114: #{tpu_custom_call.1} parent=87 // pred_check_branch
          %933 = sbr.rel (%p931) target = $region116
        $region115: #{tpu_custom_call.1} parent=87 // pred_region
          %934 = dma.done %s928, 16
        $region116: #{tpu_custom_call.1} parent=87 // pred_fallthru
          _
        %s935 = sand.u32 %s58, 1
        %s936 = scalar_lea.sflag [#allocation16], %s935
        %s937 = sand.u32 %s260, 1
        %s938 = scalar_lea.vmem [#allocation15], %s937
        // Predicated region
        $region117: #{tpu_custom_call.1} parent=87 // pred_check
          %p939 = pneg %p273
        $region118: #{tpu_custom_call.1} parent=87 // pred_check_branch
          %941 = sbr.rel (%p939) target = $region120
        $region119: #{tpu_custom_call.1} parent=87 // pred_region
          %942 = dma.done %s936, 16
        $region120: #{tpu_custom_call.1} parent=87 // pred_fallthru
          _
        %s943 = sand.u32 %s58, 1
        %s944 = scalar_lea.sflag [#allocation16], %s943
        %s945 = sand.u32 %s286, 1
        %s946 = smul.addr %s945, 16
        %s947 = scalar_lea.vmem [#allocation17], %s946
        // Predicated region
        $region121: #{tpu_custom_call.1} parent=87 // pred_check
          %p948 = pneg %p299
        $region122: #{tpu_custom_call.1} parent=87 // pred_check_branch
          %950 = sbr.rel (%p948) target = $region124
        $region123: #{tpu_custom_call.1} parent=87 // pred_region
          %951 = dma.done %s944, 256
        $region124: #{tpu_custom_call.1} parent=87 // pred_fallthru
          _
        %s952 = sand.u32 %s58, 1
        %s953 = scalar_lea.sflag [#allocation19], %s952
        %s954 = sand.u32 %s312, 1
        %s955 = smul.addr %s954, 16
        %s956 = scalar_lea.vmem [#allocation18], %s955
        // Predicated region
        $region125: #{tpu_custom_call.1} parent=87 // pred_check
          %p957 = pneg %p325
        $region126: #{tpu_custom_call.1} parent=87 // pred_check_branch
          %959 = sbr.rel (%p957) target = $region128
        $region127: #{tpu_custom_call.1} parent=87 // pred_region
          %960 = dma.done %s953, 256
        $region128: #{tpu_custom_call.1} parent=87 // pred_fallthru
          _
        %s961 = sand.u32 %s58, 1
        %s962 = scalar_lea.sflag [#allocation19], %s961
        %s963 = sand.u32 %s338, 1
        %s964 = scalar_lea.vmem [#allocation20], %s963
        // Predicated region
        $region129: #{tpu_custom_call.1} parent=87 // pred_check
          %p965 = pneg %p351
        $region130: #{tpu_custom_call.1} parent=87 // pred_check_branch
          %967 = sbr.rel (%p965) target = $region132
        $region131: #{tpu_custom_call.1} parent=87 // pred_region
          %968 = dma.done %s962, 16
        $region132: #{tpu_custom_call.1} parent=87 // pred_fallthru
          _
        %s969 = sand.u32 %s58, 1
        %s970 = scalar_lea.sflag [#allocation22], %s969
        %s971 = sand.u32 %s364, 1
        %s972 = scalar_lea.vmem [#allocation21], %s971
        // Predicated region
        $region133: #{tpu_custom_call.1} parent=87 // pred_check
          %p973 = pneg %p377
        $region134: #{tpu_custom_call.1} parent=87 // pred_check_branch
          %975 = sbr.rel (%p973) target = $region136
        $region135: #{tpu_custom_call.1} parent=87 // pred_region
          %976 = dma.done %s970, 16
        $region136: #{tpu_custom_call.1} parent=87 // pred_fallthru
          _
        %s977 = sand.u32 %s58, 1
        %s978 = scalar_lea.sflag [#allocation22], %s977
        %s979 = sand.u32 %s390, 1
        %s980 = scalar_lea.vmem [#allocation23], %s979
        // Predicated region
        $region137: #{tpu_custom_call.1} parent=87 // pred_check
          %p981 = pneg %p403
        $region138: #{tpu_custom_call.1} parent=87 // pred_check_branch
          %983 = sbr.rel (%p981) target = $region140
        $region139: #{tpu_custom_call.1} parent=87 // pred_region
          %984 = dma.done %s978, 16
        $region140: #{tpu_custom_call.1} parent=87 // pred_fallthru
          _
        %s985 = sand.u32 %s58, 1
        %s986 = scalar_lea.sflag [#allocation25], %s985
        %s987 = sand.u32 %s416, 1
        %s988 = smul.addr %s987, 16
        %s989 = scalar_lea.vmem [#allocation24], %s988
        // Predicated region
        $region141: #{tpu_custom_call.1} parent=87 // pred_check
          %p990 = pneg %p429
        $region142: #{tpu_custom_call.1} parent=87 // pred_check_branch
          %992 = sbr.rel (%p990) target = $region144
        $region143: #{tpu_custom_call.1} parent=87 // pred_region
          %993 = dma.done %s986, 256
        $region144: #{tpu_custom_call.1} parent=87 // pred_fallthru
          _
        %s994 = sand.u32 %s58, 1
        %s995 = scalar_lea.sflag [#allocation25], %s994
        %s996 = sand.u32 %s442, 1
        %s997 = scalar_lea.vmem [#allocation26], %s996
        // Predicated region
        $region145: #{tpu_custom_call.1} parent=87 // pred_check
          %p998 = pneg %p455
        $region146: #{tpu_custom_call.1} parent=87 // pred_check_branch
          %1000 = sbr.rel (%p998) target = $region148
        $region147: #{tpu_custom_call.1} parent=87 // pred_region
          %1001 = dma.done %s995, 16
        $region148: #{tpu_custom_call.1} parent=87 // pred_fallthru
          _
        %s1002 = sand.u32 %s58, 1
        %s1003 = scalar_lea.sflag [#allocation28], %s1002
        %s1004 = sand.u32 %s468, 1
        %s1005 = smul.addr %s1004, 32
        %s1006 = scalar_lea.vmem [#allocation27], %s1005
        // Predicated region
        $region149: #{tpu_custom_call.1} parent=87 // pred_check
          %p1007 = pneg %p481
        $region150: #{tpu_custom_call.1} parent=87 // pred_check_branch
          %1009 = sbr.rel (%p1007) target = $region152
        $region151: #{tpu_custom_call.1} parent=87 // pred_region
          %1010 = dma.done %s1003, 512
        $region152: #{tpu_custom_call.1} parent=87 // pred_fallthru
          _
        %s1011 = sand.u32 %s58, 1
        %s1012 = scalar_lea.sflag [#allocation28], %s1011
        %s1013 = sand.u32 %s494, 1
        %s1014 = scalar_lea.vmem [#allocation29], %s1013
        // Predicated region
        $region153: #{tpu_custom_call.1} parent=87 // pred_check
          %p1015 = pneg %p507
        $region154: #{tpu_custom_call.1} parent=87 // pred_check_branch
          %1017 = sbr.rel (%p1015) target = $region156
        $region155: #{tpu_custom_call.1} parent=87 // pred_region
          %1018 = dma.done %s1012, 16
        $region156: #{tpu_custom_call.1} parent=87 // pred_fallthru
          _
        %s1019 = sand.u32 %s78, 1
        %s1020 = scalar_lea.sflag [#allocation4], %s1019
        %s1021 = sand.u32 %s78, 1
        %s1022 = smul.addr %s1021, 128
        %s1023 = scalar_lea.vmem [#allocation3], %s1022
        %p1024 = pneg %p91
        %p1025 = pneg %p88
        %s1026 = sand.u32 %s58, 1
        %s1027 = scalar_lea.sflag [#allocation7], %s1026
        %s1028 = sand.u32 %s104, 1
        %s1029 = scalar_lea.vmem [#allocation6], %s1028
        %p1030 = pneg %p117
        %p1031 = pneg %p114
        %s1032 = sand.u32 %s58, 1
        %s1033 = scalar_lea.sflag [#allocation7], %s1032
        %s1034 = sand.u32 %s130, 1
        %s1035 = scalar_lea.vmem [#allocation8], %s1034
        %p1036 = pneg %p143
        %p1037 = pneg %p140
        %s1038 = sand.u32 %s58, 1
        %s1039 = scalar_lea.sflag [#allocation10], %s1038
        %s1040 = sand.u32 %s156, 1
        %s1041 = smul.addr %s1040, 16
        %s1042 = scalar_lea.vmem [#allocation9], %s1041
        %p1043 = pneg %p169
        %p1044 = pneg %p166
        %s1045 = sand.u32 %s58, 1
        %s1046 = scalar_lea.sflag [#allocation10], %s1045
        %s1047 = sand.u32 %s182, 1
        %s1048 = smul.addr %s1047, 16
        %s1049 = scalar_lea.vmem [#allocation11], %s1048
        %p1050 = pneg %p195
        %p1051 = pneg %p192
        %s1052 = sand.u32 %s58, 1
        %s1053 = scalar_lea.sflag [#allocation13], %s1052
        %s1054 = sand.u32 %s208, 1
        %s1055 = scalar_lea.vmem [#allocation12], %s1054
        %p1056 = pneg %p221
        %p1057 = pneg %p218
        %s1058 = sand.u32 %s58, 1
        %s1059 = scalar_lea.sflag [#allocation13], %s1058
        %s1060 = sand.u32 %s234, 1
        %s1061 = scalar_lea.vmem [#allocation14], %s1060
        %p1062 = pneg %p247
        %p1063 = pneg %p244
        %s1064 = sand.u32 %s58, 1
        %s1065 = scalar_lea.sflag [#allocation16], %s1064
        %s1066 = sand.u32 %s260, 1
        %s1067 = scalar_lea.vmem [#allocation15], %s1066
        %p1068 = pneg %p273
        %p1069 = pneg %p270
        %s1070 = sand.u32 %s58, 1
        %s1071 = scalar_lea.sflag [#allocation16], %s1070
        %s1072 = sand.u32 %s286, 1
        %s1073 = smul.addr %s1072, 16
        %s1074 = scalar_lea.vmem [#allocation17], %s1073
        %p1075 = pneg %p299
        %p1076 = pneg %p296
        %s1077 = sand.u32 %s58, 1
        %s1078 = scalar_lea.sflag [#allocation19], %s1077
        %s1079 = sand.u32 %s312, 1
        %s1080 = smul.addr %s1079, 16
        %s1081 = scalar_lea.vmem [#allocation18], %s1080
        %p1082 = pneg %p325
        %p1083 = pneg %p322
        %s1084 = sand.u32 %s58, 1
        %s1085 = scalar_lea.sflag [#allocation19], %s1084
        %s1086 = sand.u32 %s338, 1
        %s1087 = scalar_lea.vmem [#allocation20], %s1086
        %p1088 = pneg %p351
        %p1089 = pneg %p348
        %s1090 = sand.u32 %s58, 1
        %s1091 = scalar_lea.sflag [#allocation22], %s1090
        %s1092 = sand.u32 %s364, 1
        %s1093 = scalar_lea.vmem [#allocation21], %s1092
        %p1094 = pneg %p377
        %p1095 = pneg %p374
        %s1096 = sand.u32 %s58, 1
        %s1097 = scalar_lea.sflag [#allocation22], %s1096
        %s1098 = sand.u32 %s390, 1
        %s1099 = scalar_lea.vmem [#allocation23], %s1098
        %p1100 = pneg %p403
        %p1101 = pneg %p400
        %s1102 = sand.u32 %s58, 1
        %s1103 = scalar_lea.sflag [#allocation25], %s1102
        %s1104 = sand.u32 %s416, 1
        %s1105 = smul.addr %s1104, 16
        %s1106 = scalar_lea.vmem [#allocation24], %s1105
        %p1107 = pneg %p429
        %p1108 = pneg %p426
        %s1109 = sand.u32 %s58, 1
        %s1110 = scalar_lea.sflag [#allocation25], %s1109
        %s1111 = sand.u32 %s442, 1
        %s1112 = scalar_lea.vmem [#allocation26], %s1111
        %p1113 = pneg %p455
        %p1114 = pneg %p452
        %s1115 = sand.u32 %s58, 1
        %s1116 = scalar_lea.sflag [#allocation28], %s1115
        %s1117 = sand.u32 %s468, 1
        %s1118 = smul.addr %s1117, 32
        %s1119 = scalar_lea.vmem [#allocation27], %s1118
        %p1120 = pneg %p481
        %p1121 = pneg %p478
        %s1122 = sand.u32 %s58, 1
        %s1123 = scalar_lea.sflag [#allocation28], %s1122
        %s1124 = sand.u32 %s494, 1
        %s1125 = scalar_lea.vmem [#allocation29], %s1124
        %p1126 = pneg %p507
        %p1127 = pneg %p504
        %p1128 = pneg %p533
        %p1129 = pneg %p530
        %s1130 = sand.u32 %s520, 1
        %s1131 = scalar_lea.sflag [#allocation5], %s1130
        %s1132 = sand.u32 %s520, 1
        %s1133 = smul.addr %s1132, 128
        %s1134 = scalar_lea.vmem [#allocation30], %s1133
        %p1136 = scmp.eq.s32.totalorder %s63, 0
        // Predicated region
        $region157: #{tpu_custom_call.1} parent=87 // pred_check
          %p1137 = pneg %p1136
        $region158: #{tpu_custom_call.1} parent=87 // pred_check_branch
          %1139 = sbr.rel (%p1137) target = $region160
        $region159: #{tpu_custom_call.1} parent=87 // pred_region
          %v1140 = vld [vmem:[%s880] sm:$0xff]
          %v1141 = vld [vmem:[%s880 + $0x8] sm:$0xff]
          %v1142 = vld [vmem:[%s880 + $0x10] sm:$0xff]
          %v1143 = vld [vmem:[%s880 + $0x18] sm:$0xff]
          %v1144 = vld [vmem:[%s880 + $0x20] sm:$0xff]
          %v1145 = vld [vmem:[%s880 + $0x28] sm:$0xff]
          %v1146 = vld [vmem:[%s880 + $0x30] sm:$0xff]
          %v1147 = vld [vmem:[%s880 + $0x38] sm:$0xff]
          %v1148 = vld [vmem:[%s880 + $0x40] sm:$0xff]
          %v1149 = vld [vmem:[%s880 + $0x48] sm:$0xff]
          %v1150 = vld [vmem:[%s880 + $0x50] sm:$0xff]
          %v1151 = vld [vmem:[%s880 + $0x58] sm:$0xff]
          %v1152 = vld [vmem:[%s880 + $0x60] sm:$0xff]
          %v1153 = vld [vmem:[%s880 + $0x68] sm:$0xff]
          %v1154 = vld [vmem:[%s880 + $0x70] sm:$0xff]
          %v1155 = vld [vmem:[%s880 + $0x78] sm:$0xff]
          %vm1156 = vcmask 261120
          %1157 = vst.msk [vmem:[#allocation2] sm:$0xff] %vm1156, %v1140
          %1158 = vst.msk [vmem:[#allocation2 + $0x8] sm:$0xff] %vm1156, %v1141
          %1159 = vst.msk [vmem:[#allocation2 + $0x10] sm:$0xff] %vm1156, %v1142
          %1160 = vst.msk [vmem:[#allocation2 + $0x18] sm:$0xff] %vm1156, %v1143
          %1161 = vst.msk [vmem:[#allocation2 + $0x20] sm:$0xff] %vm1156, %v1144
          %1162 = vst.msk [vmem:[#allocation2 + $0x28] sm:$0xff] %vm1156, %v1145
          %1163 = vst.msk [vmem:[#allocation2 + $0x30] sm:$0xff] %vm1156, %v1146
          %1164 = vst.msk [vmem:[#allocation2 + $0x38] sm:$0xff] %vm1156, %v1147
          %1165 = vst.msk [vmem:[#allocation2 + $0x40] sm:$0xff] %vm1156, %v1148
          %1166 = vst.msk [vmem:[#allocation2 + $0x48] sm:$0xff] %vm1156, %v1149
          %1167 = vst.msk [vmem:[#allocation2 + $0x50] sm:$0xff] %vm1156, %v1150
          %1168 = vst.msk [vmem:[#allocation2 + $0x58] sm:$0xff] %vm1156, %v1151
          %1169 = vst.msk [vmem:[#allocation2 + $0x60] sm:$0xff] %vm1156, %v1152
          %1170 = vst.msk [vmem:[#allocation2 + $0x68] sm:$0xff] %vm1156, %v1153
          %1171 = vst.msk [vmem:[#allocation2 + $0x70] sm:$0xff] %vm1156, %v1154
          %1172 = vst.msk [vmem:[#allocation2 + $0x78] sm:$0xff] %vm1156, %v1155
        $region160: #{tpu_custom_call.1} parent=87 // pred_fallthru
          _
        %v1173 = vld [vmem:[#allocation2] sm:$0xff]
        %v1174 = vld [vmem:[#allocation2 + $0x8] sm:$0xff]
        %v1175 = vld [vmem:[#allocation2 + $0x10] sm:$0xff]
        %v1176 = vld [vmem:[#allocation2 + $0x18] sm:$0xff]
        %v1177 = vld [vmem:[#allocation2 + $0x20] sm:$0xff]
        %v1178 = vld [vmem:[#allocation2 + $0x28] sm:$0xff]
        %v1179 = vld [vmem:[#allocation2 + $0x30] sm:$0xff]
        %v1180 = vld [vmem:[#allocation2 + $0x38] sm:$0xff]
        %v1181 = vld [vmem:[#allocation2 + $0x40] sm:$0xff]
        %v1182 = vld [vmem:[#allocation2 + $0x48] sm:$0xff]
        %v1183 = vld [vmem:[#allocation2 + $0x50] sm:$0xff]
        %v1184 = vld [vmem:[#allocation2 + $0x58] sm:$0xff]
        %v1185 = vld [vmem:[#allocation2 + $0x60] sm:$0xff]
        %v1186 = vld [vmem:[#allocation2 + $0x68] sm:$0xff]
        %v1187 = vld [vmem:[#allocation2 + $0x70] sm:$0xff]
        %v1188 = vld [vmem:[#allocation2 + $0x78] sm:$0xff]
        %v1189 = vld [vmem:[%s888] sm:$0x1]
        %v1190 = vld [vmem:[%s896] sm:$0x1]
        %vm1191 = vcmask 261120
        %v1192 = vsel %vm1191, %v1173, 0.0
        %1193 = vadd.xlane.f32.xlu0 %v1192
        %v1194 = vpop.xlane.xlu0 %1193
        %v1195 = vsel %vm1191, %v1174, 0.0
        %1196 = vadd.xlane.f32.xlu0 %v1195
        %v1197 = vpop.xlane.xlu0 %1196
        %v1198 = vsel %vm1191, %v1175, 0.0
        %1199 = vadd.xlane.f32.xlu0 %v1198
        %v1200 = vpop.xlane.xlu0 %1199
        %v1201 = vsel %vm1191, %v1176, 0.0
        %1202 = vadd.xlane.f32.xlu0 %v1201
        %v1203 = vpop.xlane.xlu0 %1202
        %v1204 = vsel %vm1191, %v1177, 0.0
        %1205 = vadd.xlane.f32.xlu0 %v1204
        %v1206 = vpop.xlane.xlu0 %1205
        %v1207 = vsel %vm1191, %v1178, 0.0
        %1208 = vadd.xlane.f32.xlu0 %v1207
        %v1209 = vpop.xlane.xlu0 %1208
        %v1210 = vsel %vm1191, %v1179, 0.0
        %1211 = vadd.xlane.f32.xlu0 %v1210
        %v1212 = vpop.xlane.xlu0 %1211
        %v1213 = vsel %vm1191, %v1180, 0.0
        %1214 = vadd.xlane.f32.xlu0 %v1213
        %v1215 = vpop.xlane.xlu0 %1214
        %v1216 = vsel %vm1191, %v1181, 0.0
        %1217 = vadd.xlane.f32.xlu0 %v1216
        %v1218 = vpop.xlane.xlu0 %1217
        %v1219 = vsel %vm1191, %v1182, 0.0
        %1220 = vadd.xlane.f32.xlu0 %v1219
        %v1221 = vpop.xlane.xlu0 %1220
        %v1222 = vsel %vm1191, %v1183, 0.0
        %1223 = vadd.xlane.f32.xlu0 %v1222
        %v1224 = vpop.xlane.xlu0 %1223
        %v1225 = vsel %vm1191, %v1184, 0.0
        %1226 = vadd.xlane.f32.xlu0 %v1225
        %v1227 = vpop.xlane.xlu0 %1226
        %v1228 = vsel %vm1191, %v1185, 0.0
        %1229 = vadd.xlane.f32.xlu0 %v1228
        %v1230 = vpop.xlane.xlu0 %1229
        %v1231 = vsel %vm1191, %v1186, 0.0
        %1232 = vadd.xlane.f32.xlu0 %v1231
        %v1233 = vpop.xlane.xlu0 %1232
        %v1234 = vsel %vm1191, %v1187, 0.0
        %1235 = vadd.xlane.f32.xlu0 %v1234
        %v1236 = vpop.xlane.xlu0 %1235
        %v1237 = vsel %vm1191, %v1188, 0.0
        %1238 = vadd.xlane.f32.xlu0 %v1237
        %v1239 = vpop.xlane.xlu0 %1238
        %v1240 = vrcp.pop 32.0
        %v1241 = vmul.f32 %v1194, %v1240
        %v1242 = vmul.f32 %v1197, %v1240
        %v1243 = vmul.f32 %v1200, %v1240
        %v1244 = vmul.f32 %v1203, %v1240
        %v1245 = vmul.f32 %v1206, %v1240
        %v1246 = vmul.f32 %v1209, %v1240
        %v1247 = vmul.f32 %v1212, %v1240
        %v1248 = vmul.f32 %v1215, %v1240
        %v1249 = vmul.f32 %v1218, %v1240
        %v1250 = vmul.f32 %v1221, %v1240
        %v1251 = vmul.f32 %v1224, %v1240
        %v1252 = vmul.f32 %v1227, %v1240
        %v1253 = vmul.f32 %v1230, %v1240
        %v1254 = vmul.f32 %v1233, %v1240
        %v1255 = vmul.f32 %v1236, %v1240
        %v1256 = vmul.f32 %v1239, %v1240
        %v1257 = vsub.f32 %v1173, %v1241
        %v1258 = vsub.f32 %v1174, %v1242
        %v1259 = vsub.f32 %v1175, %v1243
        %v1260 = vsub.f32 %v1176, %v1244
        %v1261 = vsub.f32 %v1177, %v1245
        %v1262 = vsub.f32 %v1178, %v1246
        %v1263 = vsub.f32 %v1179, %v1247
        %v1264 = vsub.f32 %v1180, %v1248
        %v1265 = vsub.f32 %v1181, %v1249
        %v1266 = vsub.f32 %v1182, %v1250
        %v1267 = vsub.f32 %v1183, %v1251
        %v1268 = vsub.f32 %v1184, %v1252
        %v1269 = vsub.f32 %v1185, %v1253
        %v1270 = vsub.f32 %v1186, %v1254
        %v1271 = vsub.f32 %v1187, %v1255
        %v1272 = vsub.f32 %v1188, %v1256
        %v1273 = vmul.f32 %v1257, %v1257
        %v1274 = vmul.f32 %v1258, %v1258
        %v1275 = vmul.f32 %v1259, %v1259
        %v1276 = vmul.f32 %v1260, %v1260
        %v1277 = vmul.f32 %v1261, %v1261
        %v1278 = vmul.f32 %v1262, %v1262
        %v1279 = vmul.f32 %v1263, %v1263
        %v1280 = vmul.f32 %v1264, %v1264
        %v1281 = vmul.f32 %v1265, %v1265
        %v1282 = vmul.f32 %v1266, %v1266
        %v1283 = vmul.f32 %v1267, %v1267
        %v1284 = vmul.f32 %v1268, %v1268
        %v1285 = vmul.f32 %v1269, %v1269
        %v1286 = vmul.f32 %v1270, %v1270
        %v1287 = vmul.f32 %v1271, %v1271
        %v1288 = vmul.f32 %v1272, %v1272
        %v1289 = vsel %vm1191, %v1273, 0.0
        %1290 = vadd.xlane.f32.xlu0 %v1289
        %v1291 = vpop.xlane.xlu0 %1290
        %v1292 = vsel %vm1191, %v1274, 0.0
        %1293 = vadd.xlane.f32.xlu0 %v1292
        %v1294 = vpop.xlane.xlu0 %1293
        %v1295 = vsel %vm1191, %v1275, 0.0
        %1296 = vadd.xlane.f32.xlu0 %v1295
        %v1297 = vpop.xlane.xlu0 %1296
        %v1298 = vsel %vm1191, %v1276, 0.0
        %1299 = vadd.xlane.f32.xlu0 %v1298
        %v1300 = vpop.xlane.xlu0 %1299
        %v1301 = vsel %vm1191, %v1277, 0.0
        %1302 = vadd.xlane.f32.xlu0 %v1301
        %v1303 = vpop.xlane.xlu0 %1302
        %v1304 = vsel %vm1191, %v1278, 0.0
        %1305 = vadd.xlane.f32.xlu0 %v1304
        %v1306 = vpop.xlane.xlu0 %1305
        %v1307 = vsel %vm1191, %v1279, 0.0
        %1308 = vadd.xlane.f32.xlu0 %v1307
        %v1309 = vpop.xlane.xlu0 %1308
        %v1310 = vsel %vm1191, %v1280, 0.0
        %1311 = vadd.xlane.f32.xlu0 %v1310
        %v1312 = vpop.xlane.xlu0 %1311
        %v1313 = vsel %vm1191, %v1281, 0.0
        %1314 = vadd.xlane.f32.xlu0 %v1313
        %v1315 = vpop.xlane.xlu0 %1314
        %v1316 = vsel %vm1191, %v1282, 0.0
        %1317 = vadd.xlane.f32.xlu0 %v1316
        %v1318 = vpop.xlane.xlu0 %1317
        %v1319 = vsel %vm1191, %v1283, 0.0
        %1320 = vadd.xlane.f32.xlu0 %v1319
        %v1321 = vpop.xlane.xlu0 %1320
        %v1322 = vsel %vm1191, %v1284, 0.0
        %1323 = vadd.xlane.f32.xlu0 %v1322
        %v1324 = vpop.xlane.xlu0 %1323
        %v1325 = vsel %vm1191, %v1285, 0.0
        %1326 = vadd.xlane.f32.xlu0 %v1325
        %v1327 = vpop.xlane.xlu0 %1326
        %v1328 = vsel %vm1191, %v1286, 0.0
        %1329 = vadd.xlane.f32.xlu0 %v1328
        %v1330 = vpop.xlane.xlu0 %1329
        %v1331 = vsel %vm1191, %v1287, 0.0
        %1332 = vadd.xlane.f32.xlu0 %v1331
        %v1333 = vpop.xlane.xlu0 %1332
        %v1334 = vsel %vm1191, %v1288, 0.0
        %1335 = vadd.xlane.f32.xlu0 %v1334
        %v1336 = vpop.xlane.xlu0 %1335
        %v1337 = vmul.f32 %v1291, %v1240
        %v1338 = vmul.f32 %v1294, %v1240
        %v1339 = vmul.f32 %v1297, %v1240
        %v1340 = vmul.f32 %v1300, %v1240
        %v1341 = vmul.f32 %v1303, %v1240
        %v1342 = vmul.f32 %v1306, %v1240
        %v1343 = vmul.f32 %v1309, %v1240
        %v1344 = vmul.f32 %v1312, %v1240
        %v1345 = vmul.f32 %v1315, %v1240
        %v1346 = vmul.f32 %v1318, %v1240
        %v1347 = vmul.f32 %v1321, %v1240
        %v1348 = vmul.f32 %v1324, %v1240
        %v1349 = vmul.f32 %v1327, %v1240
        %v1350 = vmul.f32 %v1330, %v1240
        %v1351 = vmul.f32 %v1333, %v1240
        %v1352 = vmul.f32 %v1336, %v1240
        %v1353 = vadd.f32 %v1337, 1e-05
        %v1354 = vadd.f32 %v1338, 1e-05
        %v1355 = vadd.f32 %v1339, 1e-05
        %v1356 = vadd.f32 %v1340, 1e-05
        %v1357 = vadd.f32 %v1341, 1e-05
        %v1358 = vadd.f32 %v1342, 1e-05
        %v1359 = vadd.f32 %v1343, 1e-05
        %v1360 = vadd.f32 %v1344, 1e-05
        %v1361 = vadd.f32 %v1345, 1e-05
        %v1362 = vadd.f32 %v1346, 1e-05
        %v1363 = vadd.f32 %v1347, 1e-05
        %v1364 = vadd.f32 %v1348, 1e-05
        %v1365 = vadd.f32 %v1349, 1e-05
        %v1366 = vadd.f32 %v1350, 1e-05
        %v1367 = vadd.f32 %v1351, 1e-05
        %v1368 = vadd.f32 %v1352, 1e-05
        %v1369 = vrsqrt.pop %v1353
        %v1370 = vrsqrt.pop %v1354
        %v1371 = vrsqrt.pop %v1355
        %v1372 = vrsqrt.pop %v1356
        %v1373 = vrsqrt.pop %v1357
        %v1374 = vrsqrt.pop %v1358
        %v1375 = vrsqrt.pop %v1359
        %v1376 = vrsqrt.pop %v1360
        %v1377 = vrsqrt.pop %v1361
        %v1378 = vrsqrt.pop %v1362
        %v1379 = vrsqrt.pop %v1363
        %v1380 = vrsqrt.pop %v1364
        %v1381 = vrsqrt.pop %v1365
        %v1382 = vrsqrt.pop %v1366
        %v1383 = vrsqrt.pop %v1367
        %v1384 = vrsqrt.pop %v1368
        %v1385 = vmul.f32 %v1257, %v1369
        %v1386 = vmul.f32 %v1258, %v1370
        %v1387 = vmul.f32 %v1259, %v1371
        %v1388 = vmul.f32 %v1260, %v1372
        %v1389 = vmul.f32 %v1261, %v1373
        %v1390 = vmul.f32 %v1262, %v1374
        %v1391 = vmul.f32 %v1263, %v1375
        %v1392 = vmul.f32 %v1264, %v1376
        %v1393 = vmul.f32 %v1265, %v1377
        %v1394 = vmul.f32 %v1266, %v1378
        %v1395 = vmul.f32 %v1267, %v1379
        %v1396 = vmul.f32 %v1268, %v1380
        %v1397 = vmul.f32 %v1269, %v1381
        %v1398 = vmul.f32 %v1270, %v1382
        %v1399 = vmul.f32 %v1271, %v1383
        %v1400 = vmul.f32 %v1272, %v1384
        %v1402 = vlaneseq
        %v1403 = vshrl.u32 %v1402, 7
        %v1404 = vsub.s32 0, %v1403
        %v1405 = vrot.slane %v1189, %v1404
        %v1407 = vmul.f32 %v1385, %v1405
        %v1408 = vmul.f32 %v1386, %v1405
        %v1409 = vmul.f32 %v1387, %v1405
        %v1410 = vmul.f32 %v1388, %v1405
        %v1411 = vmul.f32 %v1389, %v1405
        %v1412 = vmul.f32 %v1390, %v1405
        %v1413 = vmul.f32 %v1391, %v1405
        %v1414 = vmul.f32 %v1392, %v1405
        %v1415 = vmul.f32 %v1393, %v1405
        %v1416 = vmul.f32 %v1394, %v1405
        %v1417 = vmul.f32 %v1395, %v1405
        %v1418 = vmul.f32 %v1396, %v1405
        %v1419 = vmul.f32 %v1397, %v1405
        %v1420 = vmul.f32 %v1398, %v1405
        %v1421 = vmul.f32 %v1399, %v1405
        %v1422 = vmul.f32 %v1400, %v1405
        %v1424 = vlaneseq
        %v1425 = vshrl.u32 %v1424, 7
        %v1426 = vsub.s32 0, %v1425
        %v1427 = vrot.slane %v1190, %v1426
        %v1429 = vadd.f32 %v1407, %v1427
        %v1430 = vadd.f32 %v1408, %v1427
        %v1431 = vadd.f32 %v1409, %v1427
        %v1432 = vadd.f32 %v1410, %v1427
        %v1433 = vadd.f32 %v1411, %v1427
        %v1434 = vadd.f32 %v1412, %v1427
        %v1435 = vadd.f32 %v1413, %v1427
        %v1436 = vadd.f32 %v1414, %v1427
        %v1437 = vadd.f32 %v1415, %v1427
        %v1438 = vadd.f32 %v1416, %v1427
        %v1439 = vadd.f32 %v1417, %v1427
        %v1440 = vadd.f32 %v1418, %v1427
        %v1441 = vadd.f32 %v1419, %v1427
        %v1442 = vadd.f32 %v1420, %v1427
        %v1443 = vadd.f32 %v1421, %v1427
        %v1444 = vadd.f32 %v1422, %v1427
        %v1445 = vcombine.low %v1429, %v1433
        %v1446 = vcombine.high %v1429, %v1433
        %v1448 = vunpack.c.l.s4 1983009808
        %v1449 = vunpack.c.0.s8 %v1448
        %v1450 = vlaneseq
        %v1451 = vshrl.u32 %v1450, 7
        %v1452 = vsub.s32 %v1449, %v1451
        %v1453 = vrot.slane %v1445, %v1452
        %v1455 = vunpack.c.l.s4 1983009808
        %v1456 = vunpack.c.0.s8 %v1455
        %v1457 = vlaneseq
        %v1458 = vshrl.u32 %v1457, 7
        %v1459 = vsub.s32 %v1456, %v1458
        %v1460 = vrot.slane %v1446, %v1459
        %v1461 = vcombine.low %v1431, %v1435
        %v1462 = vcombine.high %v1431, %v1435
        %v1464 = vunpack.c.l.s4 1983009808
        %v1465 = vunpack.c.0.s8 %v1464
        %v1466 = vlaneseq
        %v1467 = vshrl.u32 %v1466, 7
        %v1468 = vsub.s32 %v1465, %v1467
        %v1469 = vrot.slane %v1461, %v1468
        %v1471 = vunpack.c.l.s4 1983009808
        %v1472 = vunpack.c.0.s8 %v1471
        %v1473 = vlaneseq
        %v1474 = vshrl.u32 %v1473, 7
        %v1475 = vsub.s32 %v1472, %v1474
        %v1476 = vrot.slane %v1462, %v1475
        %v1477 = vcombine.low %v1437, %v1441
        %v1478 = vcombine.high %v1437, %v1441
        %v1480 = vunpack.c.l.s4 1983009808
        %v1481 = vunpack.c.0.s8 %v1480
        %v1482 = vlaneseq
        %v1483 = vshrl.u32 %v1482, 7
        %v1484 = vsub.s32 %v1481, %v1483
        %v1485 = vrot.slane %v1477, %v1484
        %v1487 = vunpack.c.l.s4 1983009808
        %v1488 = vunpack.c.0.s8 %v1487
        %v1489 = vlaneseq
        %v1490 = vshrl.u32 %v1489, 7
        %v1491 = vsub.s32 %v1488, %v1490
        %v1492 = vrot.slane %v1478, %v1491
        %v1493 = vcombine.low %v1439, %v1443
        %v1494 = vcombine.high %v1439, %v1443
        %v1496 = vunpack.c.l.s4 1983009808
        %v1497 = vunpack.c.0.s8 %v1496
        %v1498 = vlaneseq
        %v1499 = vshrl.u32 %v1498, 7
        %v1500 = vsub.s32 %v1497, %v1499
        %v1501 = vrot.slane %v1493, %v1500
        %v1503 = vunpack.c.l.s4 1983009808
        %v1504 = vunpack.c.0.s8 %v1503
        %v1505 = vlaneseq
        %v1506 = vshrl.u32 %v1505, 7
        %v1507 = vsub.s32 %v1504, %v1506
        %v1508 = vrot.slane %v1494, %v1507
        %v1509 = vcombine.low %v1453, %v1469
        %v1510 = vcombine.high %v1453, %v1469
        %v1512 = vunpack.c.l.s4 1934713408
        %v1513 = vunpack.c.0.s8 %v1512
        %v1514 = vlaneseq
        %v1515 = vshrl.u32 %v1514, 7
        %v1516 = vsub.s32 %v1513, %v1515
        %v1517 = vrot.slane %v1509, %v1516
        %v1519 = vunpack.c.l.s4 1934713408
        %v1520 = vunpack.c.0.s8 %v1519
        %v1521 = vlaneseq
        %v1522 = vshrl.u32 %v1521, 7
        %v1523 = vsub.s32 %v1520, %v1522
        %v1524 = vrot.slane %v1510, %v1523
        %v1525 = vcombine.low %v1460, %v1476
        %v1526 = vcombine.high %v1460, %v1476
        %v1528 = vunpack.c.l.s4 1934713408
        %v1529 = vunpack.c.0.s8 %v1528
        %v1530 = vlaneseq
        %v1531 = vshrl.u32 %v1530, 7
        %v1532 = vsub.s32 %v1529, %v1531
        %v1533 = vrot.slane %v1525, %v1532
        %v1535 = vunpack.c.l.s4 1934713408
        %v1536 = vunpack.c.0.s8 %v1535
        %v1537 = vlaneseq
        %v1538 = vshrl.u32 %v1537, 7
        %v1539 = vsub.s32 %v1536, %v1538
        %v1540 = vrot.slane %v1526, %v1539
        %v1541 = vcombine.low %v1485, %v1501
        %v1542 = vcombine.high %v1485, %v1501
        %v1544 = vunpack.c.l.s4 1934713408
        %v1545 = vunpack.c.0.s8 %v1544
        %v1546 = vlaneseq
        %v1547 = vshrl.u32 %v1546, 7
        %v1548 = vsub.s32 %v1545, %v1547
        %v1549 = vrot.slane %v1541, %v1548
        %v1551 = vunpack.c.l.s4 1934713408
        %v1552 = vunpack.c.0.s8 %v1551
        %v1553 = vlaneseq
        %v1554 = vshrl.u32 %v1553, 7
        %v1555 = vsub.s32 %v1552, %v1554
        %v1556 = vrot.slane %v1542, %v1555
        %v1557 = vcombine.low %v1492, %v1508
        %v1558 = vcombine.high %v1492, %v1508
        %v1560 = vunpack.c.l.s4 1934713408
        %v1561 = vunpack.c.0.s8 %v1560
        %v1562 = vlaneseq
        %v1563 = vshrl.u32 %v1562, 7
        %v1564 = vsub.s32 %v1561, %v1563
        %v1565 = vrot.slane %v1557, %v1564
        %v1567 = vunpack.c.l.s4 1934713408
        %v1568 = vunpack.c.0.s8 %v1567
        %v1569 = vlaneseq
        %v1570 = vshrl.u32 %v1569, 7
        %v1571 = vsub.s32 %v1568, %v1570
        %v1572 = vrot.slane %v1558, %v1571
        %v1573 = vcombine.low %v1517, %v1549
        %v1574 = vcombine.high %v1517, %v1549
        %v1575 = vcombine.low %v1524, %v1556
        %v1576 = vcombine.high %v1524, %v1556
        %v1577 = vcombine.low %v1533, %v1565
        %v1578 = vcombine.high %v1533, %v1565
        %v1579 = vcombine.low %v1540, %v1572
        %v1580 = vcombine.high %v1540, %v1572
        %v1581 = vcombine.low %v1430, %v1434
        %v1582 = vcombine.high %v1430, %v1434
        %v1584 = vunpack.c.l.s4 1983009808
        %v1585 = vunpack.c.0.s8 %v1584
        %v1586 = vlaneseq
        %v1587 = vshrl.u32 %v1586, 7
        %v1588 = vsub.s32 %v1585, %v1587
        %v1589 = vrot.slane %v1581, %v1588
        %v1591 = vunpack.c.l.s4 1983009808
        %v1592 = vunpack.c.0.s8 %v1591
        %v1593 = vlaneseq
        %v1594 = vshrl.u32 %v1593, 7
        %v1595 = vsub.s32 %v1592, %v1594
        %v1596 = vrot.slane %v1582, %v1595
        %v1597 = vcombine.low %v1432, %v1436
        %v1598 = vcombine.high %v1432, %v1436
        %v1600 = vunpack.c.l.s4 1983009808
        %v1601 = vunpack.c.0.s8 %v1600
        %v1602 = vlaneseq
        %v1603 = vshrl.u32 %v1602, 7
        %v1604 = vsub.s32 %v1601, %v1603
        %v1605 = vrot.slane %v1597, %v1604
        %v1607 = vunpack.c.l.s4 1983009808
        %v1608 = vunpack.c.0.s8 %v1607
        %v1609 = vlaneseq
        %v1610 = vshrl.u32 %v1609, 7
        %v1611 = vsub.s32 %v1608, %v1610
        %v1612 = vrot.slane %v1598, %v1611
        %v1613 = vcombine.low %v1438, %v1442
        %v1614 = vcombine.high %v1438, %v1442
        %v1616 = vunpack.c.l.s4 1983009808
        %v1617 = vunpack.c.0.s8 %v1616
        %v1618 = vlaneseq
        %v1619 = vshrl.u32 %v1618, 7
        %v1620 = vsub.s32 %v1617, %v1619
        %v1621 = vrot.slane %v1613, %v1620
        %v1623 = vunpack.c.l.s4 1983009808
        %v1624 = vunpack.c.0.s8 %v1623
        %v1625 = vlaneseq
        %v1626 = vshrl.u32 %v1625, 7
        %v1627 = vsub.s32 %v1624, %v1626
        %v1628 = vrot.slane %v1614, %v1627
        %v1629 = vcombine.low %v1440, %v1444
        %v1630 = vcombine.high %v1440, %v1444
        %v1632 = vunpack.c.l.s4 1983009808
        %v1633 = vunpack.c.0.s8 %v1632
        %v1634 = vlaneseq
        %v1635 = vshrl.u32 %v1634, 7
        %v1636 = vsub.s32 %v1633, %v1635
        %v1637 = vrot.slane %v1629, %v1636
        %v1639 = vunpack.c.l.s4 1983009808
        %v1640 = vunpack.c.0.s8 %v1639
        %v1641 = vlaneseq
        %v1642 = vshrl.u32 %v1641, 7
        %v1643 = vsub.s32 %v1640, %v1642
        %v1644 = vrot.slane %v1630, %v1643
        %v1645 = vcombine.low %v1589, %v1605
        %v1646 = vcombine.high %v1589, %v1605
        %v1648 = vunpack.c.l.s4 1934713408
        %v1649 = vunpack.c.0.s8 %v1648
        %v1650 = vlaneseq
        %v1651 = vshrl.u32 %v1650, 7
        %v1652 = vsub.s32 %v1649, %v1651
        %v1653 = vrot.slane %v1645, %v1652
        %v1655 = vunpack.c.l.s4 1934713408
        %v1656 = vunpack.c.0.s8 %v1655
        %v1657 = vlaneseq
        %v1658 = vshrl.u32 %v1657, 7
        %v1659 = vsub.s32 %v1656, %v1658
        %v1660 = vrot.slane %v1646, %v1659
        %v1661 = vcombine.low %v1596, %v1612
        %v1662 = vcombine.high %v1596, %v1612
        %v1664 = vunpack.c.l.s4 1934713408
        %v1665 = vunpack.c.0.s8 %v1664
        %v1666 = vlaneseq
        %v1667 = vshrl.u32 %v1666, 7
        %v1668 = vsub.s32 %v1665, %v1667
        %v1669 = vrot.slane %v1661, %v1668
        %v1671 = vunpack.c.l.s4 1934713408
        %v1672 = vunpack.c.0.s8 %v1671
        %v1673 = vlaneseq
        %v1674 = vshrl.u32 %v1673, 7
        %v1675 = vsub.s32 %v1672, %v1674
        %v1676 = vrot.slane %v1662, %v1675
        %v1677 = vcombine.low %v1621, %v1637
        %v1678 = vcombine.high %v1621, %v1637
        %v1680 = vunpack.c.l.s4 1934713408
        %v1681 = vunpack.c.0.s8 %v1680
        %v1682 = vlaneseq
        %v1683 = vshrl.u32 %v1682, 7
        %v1684 = vsub.s32 %v1681, %v1683
        %v1685 = vrot.slane %v1677, %v1684
        %v1687 = vunpack.c.l.s4 1934713408
        %v1688 = vunpack.c.0.s8 %v1687
        %v1689 = vlaneseq
        %v1690 = vshrl.u32 %v1689, 7
        %v1691 = vsub.s32 %v1688, %v1690
        %v1692 = vrot.slane %v1678, %v1691
        %v1693 = vcombine.low %v1628, %v1644
        %v1694 = vcombine.high %v1628, %v1644
        %v1696 = vunpack.c.l.s4 1934713408
        %v1697 = vunpack.c.0.s8 %v1696
        %v1698 = vlaneseq
        %v1699 = vshrl.u32 %v1698, 7
        %v1700 = vsub.s32 %v1697, %v1699
        %v1701 = vrot.slane %v1693, %v1700
        %v1703 = vunpack.c.l.s4 1934713408
        %v1704 = vunpack.c.0.s8 %v1703
        %v1705 = vlaneseq
        %v1706 = vshrl.u32 %v1705, 7
        %v1707 = vsub.s32 %v1704, %v1706
        %v1708 = vrot.slane %v1694, %v1707
        %v1709 = vcombine.low %v1653, %v1685
        %v1710 = vcombine.high %v1653, %v1685
        %v1711 = vcombine.low %v1660, %v1692
        %v1712 = vcombine.high %v1660, %v1692
        %v1713 = vcombine.low %v1669, %v1701
        %v1714 = vcombine.high %v1669, %v1701
        %v1715 = vcombine.low %v1676, %v1708
        %v1716 = vcombine.high %v1676, %v1708
        %v1717 = vpack.c.bf16 %v1574, %v1573
        %v1718 = vpack.c.bf16 %v1576, %v1575
        %v1719 = vpack.c.bf16 %v1578, %v1577
        %v1720 = vpack.c.bf16 %v1580, %v1579
        %v1721 = vpack.c.bf16 %v1710, %v1709
        %v1722 = vpack.c.bf16 %v1712, %v1711
        %v1723 = vpack.c.bf16 %v1714, %v1713
        %v1724 = vpack.c.bf16 %v1716, %v1715
        %v1725 = vld [vmem:[%s905] sm:$0xf]
        %v1726 = vld [vmem:[%s905 + $0x4] sm:$0xf]
        %v1727 = vld [vmem:[%s905 + $0x8] sm:$0xf]
        %v1728 = vld [vmem:[%s905 + $0xc] sm:$0xf]
        %v1733 = vunpack.c.l.b16 %v1725
        %v1734 = vunpack.c.l.b16 %v1726
        %v1735 = vunpack.c.l.b16 %v1727
        %v1736 = vunpack.c.l.b16 %v1728
        %v1737 = vpack.c.b16 %v1734, %v1733
        %v1738 = vpack.c.b16 %v1736, %v1735
        %v1742 = vsel %vm1191, %v1717, 0
        %v1745 = vsel %vm1191, %v1718, 0
        %v1748 = vsel %vm1191, %v1719, 0
        %v1751 = vsel %vm1191, %v1720, 0
        %v1754 = vsel %vm1191, %v1721, 0
        %v1757 = vsel %vm1191, %v1722, 0
        %v1760 = vsel %vm1191, %v1723, 0
        %v1763 = vsel %vm1191, %v1724, 0
        %1765 = vmatprep.subr.bf16.mxu0 0
        %1766 = vmatpush1.bf16.msra.mxu0 %v1737
        %1767 = vmatprep.subr.bf16.mxu0 0
        %1768 = vmatpush1.bf16.msra.mxu0 %v1738
        %1769 = vmatprep.subr.bf16.mxu0 0
        %1770 = vmatpush1.bf16.msra.mxu0 0
        %1771 = vmatprep.subr.bf16.mxu0 0
        %1772 = vmatpush1.bf16.msra.mxu0 0
        %1773 = vmatprep.subr.bf16.mxu0 0
        %1774 = vmatpush1.bf16.msra.mxu0 0
        %1775 = vmatprep.subr.bf16.mxu0 0
        %1776 = vmatpush1.bf16.msra.mxu0 0
        %1777 = vmatprep.subr.bf16.mxu0 0
        %1778 = vmatpush1.bf16.msra.mxu0 0
        %1779 = vmatprep.subr.bf16.mxu0 0
        %1780 = vmatpush1.bf16.msra.mxu0 0
        %1781 = vmatprep.subr.bf16.mxu0 0
        %1782 = vmatpush1.bf16.msra.mxu0 0
        %1783 = vmatprep.subr.bf16.mxu0 0
        %1784 = vmatpush1.bf16.msra.mxu0 0
        %1785 = vmatprep.subr.bf16.mxu0 0
        %1786 = vmatpush1.bf16.msra.mxu0 0
        %1787 = vmatprep.subr.bf16.mxu0 0
        %1788 = vmatpush1.bf16.msra.mxu0 0
        %1789 = vmatprep.subr.bf16.mxu0 0
        %1790 = vmatpush1.bf16.msra.mxu0 0
        %1791 = vmatprep.subr.bf16.mxu0 0
        %1792 = vmatpush1.bf16.msra.mxu0 0
        %1793 = vmatprep.subr.bf16.mxu0 0
        %1794 = vmatpush1.bf16.msra.mxu0 0
        %1795 = vmatprep.subr.bf16.mxu0 0
        %1796 = vmatpush1.bf16.msra.mxu0 0
        %1797 = vmatprep.mubr.bf16.mxu0 0
        %1798 = vmatmul.mubr.bf16.gmra.mrb[0].mxu0 %v1742
        %v1799 = vpop.f32.mrb[0].mxu0
        %v1800 = vadd.f32 0.0, %v1799
        %v1801 = vpop.f32.mrb[0].mxu0
        %v1802 = vpop.f32.mrb[0].mxu0
        %v1803 = vadd.f32 0.0, %v1802
        %v1804 = vpop.f32.mrb[0].mxu0
        %1805 = vmatprep.mubr.bf16.mxu0 0
        %1806 = vmatmul.mubr.bf16.gmra.mrb[0].mxu0 %v1745
        %v1807 = vpop.f32.mrb[0].mxu0
        %v1808 = vadd.f32 0.0, %v1807
        %v1809 = vpop.f32.mrb[0].mxu0
        %v1810 = vpop.f32.mrb[0].mxu0
        %v1811 = vadd.f32 0.0, %v1810
        %v1812 = vpop.f32.mrb[0].mxu0
        %1813 = vmatprep.mubr.bf16.mxu0 0
        %1814 = vmatmul.mubr.bf16.gmra.mrb[0].mxu0 %v1748
        %v1815 = vpop.f32.mrb[0].mxu0
        %v1816 = vadd.f32 0.0, %v1815
        %v1817 = vpop.f32.mrb[0].mxu0
        %v1818 = vpop.f32.mrb[0].mxu0
        %v1819 = vadd.f32 0.0, %v1818
        %v1820 = vpop.f32.mrb[0].mxu0
        %1821 = vmatprep.mubr.bf16.mxu0 0
        %1822 = vmatmul.mubr.bf16.gmra.mrb[0].mxu0 %v1751
        %v1823 = vpop.f32.mrb[0].mxu0
        %v1824 = vadd.f32 0.0, %v1823
        %v1825 = vpop.f32.mrb[0].mxu0
        %v1826 = vpop.f32.mrb[0].mxu0
        %v1827 = vadd.f32 0.0, %v1826
        %v1828 = vpop.f32.mrb[0].mxu0
        %1829 = vmatprep.mubr.bf16.mxu0 0
        %1830 = vmatmul.mubr.bf16.gmra.mrb[0].mxu0 %v1754
        %v1831 = vpop.f32.mrb[0].mxu0
        %v1832 = vadd.f32 0.0, %v1831
        %v1833 = vpop.f32.mrb[0].mxu0
        %v1834 = vpop.f32.mrb[0].mxu0
        %v1835 = vadd.f32 0.0, %v1834
        %v1836 = vpop.f32.mrb[0].mxu0
        %1837 = vmatprep.mubr.bf16.mxu0 0
        %1838 = vmatmul.mubr.bf16.gmra.mrb[0].mxu0 %v1757
        %v1839 = vpop.f32.mrb[0].mxu0
        %v1840 = vadd.f32 0.0, %v1839
        %v1841 = vpop.f32.mrb[0].mxu0
        %v1842 = vpop.f32.mrb[0].mxu0
        %v1843 = vadd.f32 0.0, %v1842
        %v1844 = vpop.f32.mrb[0].mxu0
        %1845 = vmatprep.mubr.bf16.mxu0 0
        %1846 = vmatmul.mubr.bf16.gmra.mrb[0].mxu0 %v1760
        %v1847 = vpop.f32.mrb[0].mxu0
        %v1848 = vadd.f32 0.0, %v1847
        %v1849 = vpop.f32.mrb[0].mxu0
        %v1850 = vpop.f32.mrb[0].mxu0
        %v1851 = vadd.f32 0.0, %v1850
        %v1852 = vpop.f32.mrb[0].mxu0
        %1853 = vmatprep.mubr.bf16.mxu0 0
        %1854 = vmatmul.mubr.bf16.gmra.mrb[0].mxu0 %v1763
        %v1855 = vpop.f32.mrb[0].mxu0
        %v1856 = vadd.f32 0.0, %v1855
        %v1857 = vpop.f32.mrb[0].mxu0
        %v1858 = vpop.f32.mrb[0].mxu0
        %v1859 = vadd.f32 0.0, %v1858
        %v1860 = vpop.f32.mrb[0].mxu0
        %1861 = vdwg.mxu0
        %v1862 = vpack.c.bf16 %v1800, %v1800
        %v1863 = vpack.c.bf16 %v1803, %v1803
        %v1864 = vpack.c.bf16 %v1808, %v1808
        %v1865 = vpack.c.bf16 %v1811, %v1811
        %v1866 = vpack.c.bf16 %v1816, %v1816
        %v1867 = vpack.c.bf16 %v1819, %v1819
        %v1868 = vpack.c.bf16 %v1824, %v1824
        %v1869 = vpack.c.bf16 %v1827, %v1827
        %v1870 = vpack.c.bf16 %v1832, %v1832
        %v1871 = vpack.c.bf16 %v1835, %v1835
        %v1872 = vpack.c.bf16 %v1840, %v1840
        %v1873 = vpack.c.bf16 %v1843, %v1843
        %v1874 = vpack.c.bf16 %v1848, %v1848
        %v1875 = vpack.c.bf16 %v1851, %v1851
        %v1876 = vpack.c.bf16 %v1856, %v1856
        %v1877 = vpack.c.bf16 %v1859, %v1859
        %1879 = vrot.lane.b32.xlu0 %v1862, 96
        %v1880 = vpop.permute.xlu0 %1879
        %v1882 = vsel %vm1191, %v1862, 0
        %v1885 = vsel %vm1191, %v1880, 0
        %1887 = vmatprep.subr.bf16.mxu0 0
        %1888 = vmatpush1.bf16.xpose.msra.mxu0 %v1885
        %1889 = vmatprep.subr.bf16.mxu0 0
        %1890 = vmatpush1.bf16.xpose.msra.mxu0 0
        %1891 = vmatprep.subr.bf16.mxu0 0
        %1892 = vmatpush1.bf16.xpose.msra.mxu0 0
        %1893 = vmatprep.subr.bf16.mxu0 0
        %1894 = vmatpush1.bf16.xpose.msra.mxu0 0
        %1895 = vmatprep.subr.bf16.mxu0 0
        %1896 = vmatpush1.bf16.xpose.msra.mxu0 0
        %1897 = vmatprep.subr.bf16.mxu0 0
        %1898 = vmatpush1.bf16.xpose.msra.mxu0 0
        %1899 = vmatprep.subr.bf16.mxu0 0
        %1900 = vmatpush1.bf16.xpose.msra.mxu0 0
        %1901 = vmatprep.subr.bf16.mxu0 0
        %1902 = vmatpush1.bf16.xpose.msra.mxu0 0
        %1903 = vmatprep.subr.bf16.mxu0 0
        %1904 = vmatpush1.bf16.xpose.msra.mxu0 0
        %1905 = vmatprep.subr.bf16.mxu0 0
        %1906 = vmatpush1.bf16.xpose.msra.mxu0 0
        %1907 = vmatprep.subr.bf16.mxu0 0
        %1908 = vmatpush1.bf16.xpose.msra.mxu0 0
        %1909 = vmatprep.subr.bf16.mxu0 0
        %1910 = vmatpush1.bf16.xpose.msra.mxu0 0
        %1911 = vmatprep.subr.bf16.mxu0 0
        %1912 = vmatpush1.bf16.xpose.msra.mxu0 0
        %1913 = vmatprep.subr.bf16.mxu0 0
        %1914 = vmatpush1.bf16.xpose.msra.mxu0 0
        %1915 = vmatprep.subr.bf16.mxu0 0
        %1916 = vmatpush1.bf16.xpose.msra.mxu0 0
        %1917 = vmatprep.subr.bf16.mxu0 0
        %1918 = vmatpush1.bf16.xpose.msra.mxu0 0
        %1919 = vmatprep.mubr.bf16.mxu0 0
        %1920 = vmatmul.mubr.bf16.gmra.mrb[0].mxu0 %v1882
        %v1921 = vpop.f32.mrb[0].mxu0
        %v1922 = vadd.f32 0.0, %v1921
        %v1923 = vpop.f32.mrb[0].mxu0
        %v1924 = vpop.f32.mrb[0].mxu0
        %v1925 = vpop.f32.mrb[0].mxu0
        %1926 = vdwg.mxu0
        %1928 = vrot.lane.b32.xlu0 %v1863, 96
        %v1929 = vpop.permute.xlu0 %1928
        %v1931 = vsel %vm1191, %v1863, 0
        %v1934 = vsel %vm1191, %v1929, 0
        %1936 = vmatprep.subr.bf16.mxu0 0
        %1937 = vmatpush1.bf16.xpose.msra.mxu0 %v1934
        %1938 = vmatprep.subr.bf16.mxu0 0
        %1939 = vmatpush1.bf16.xpose.msra.mxu0 0
        %1940 = vmatprep.subr.bf16.mxu0 0
        %1941 = vmatpush1.bf16.xpose.msra.mxu0 0
        %1942 = vmatprep.subr.bf16.mxu0 0
        %1943 = vmatpush1.bf16.xpose.msra.mxu0 0
        %1944 = vmatprep.subr.bf16.mxu0 0
        %1945 = vmatpush1.bf16.xpose.msra.mxu0 0
        %1946 = vmatprep.subr.bf16.mxu0 0
        %1947 = vmatpush1.bf16.xpose.msra.mxu0 0
        %1948 = vmatprep.subr.bf16.mxu0 0
        %1949 = vmatpush1.bf16.xpose.msra.mxu0 0
        %1950 = vmatprep.subr.bf16.mxu0 0
        %1951 = vmatpush1.bf16.xpose.msra.mxu0 0
        %1952 = vmatprep.subr.bf16.mxu0 0
        %1953 = vmatpush1.bf16.xpose.msra.mxu0 0
        %1954 = vmatprep.subr.bf16.mxu0 0
        %1955 = vmatpush1.bf16.xpose.msra.mxu0 0
        %1956 = vmatprep.subr.bf16.mxu0 0
        %1957 = vmatpush1.bf16.xpose.msra.mxu0 0
        %1958 = vmatprep.subr.bf16.mxu0 0
        %1959 = vmatpush1.bf16.xpose.msra.mxu0 0
        %1960 = vmatprep.subr.bf16.mxu0 0
        %1961 = vmatpush1.bf16.xpose.msra.mxu0 0
        %1962 = vmatprep.subr.bf16.mxu0 0
        %1963 = vmatpush1.bf16.xpose.msra.mxu0 0
        %1964 = vmatprep.subr.bf16.mxu0 0
        %1965 = vmatpush1.bf16.xpose.msra.mxu0 0
        %1966 = vmatprep.subr.bf16.mxu0 0
        %1967 = vmatpush1.bf16.xpose.msra.mxu0 0
        %1968 = vmatprep.mubr.bf16.mxu0 0
        %1969 = vmatmul.mubr.bf16.gmra.mrb[0].mxu0 %v1931
        %v1970 = vpop.f32.mrb[0].mxu0
        %v1971 = vadd.f32 0.0, %v1970
        %v1972 = vpop.f32.mrb[0].mxu0
        %v1973 = vpop.f32.mrb[0].mxu0
        %v1974 = vpop.f32.mrb[0].mxu0
        %1975 = vdwg.mxu0
        %1977 = vrot.lane.b32.xlu0 %v1864, 96
        %v1978 = vpop.permute.xlu0 %1977
        %v1980 = vsel %vm1191, %v1864, 0
        %v1983 = vsel %vm1191, %v1978, 0
        %1985 = vmatprep.subr.bf16.mxu0 0
        %1986 = vmatpush1.bf16.xpose.msra.mxu0 %v1983
        %1987 = vmatprep.subr.bf16.mxu0 0
        %1988 = vmatpush1.bf16.xpose.msra.mxu0 0
        %1989 = vmatprep.subr.bf16.mxu0 0
        %1990 = vmatpush1.bf16.xpose.msra.mxu0 0
        %1991 = vmatprep.subr.bf16.mxu0 0
        %1992 = vmatpush1.bf16.xpose.msra.mxu0 0
        %1993 = vmatprep.subr.bf16.mxu0 0
        %1994 = vmatpush1.bf16.xpose.msra.mxu0 0
        %1995 = vmatprep.subr.bf16.mxu0 0
        %1996 = vmatpush1.bf16.xpose.msra.mxu0 0
        %1997 = vmatprep.subr.bf16.mxu0 0
        %1998 = vmatpush1.bf16.xpose.msra.mxu0 0
        %1999 = vmatprep.subr.bf16.mxu0 0
        %2000 = vmatpush1.bf16.xpose.msra.mxu0 0
        %2001 = vmatprep.subr.bf16.mxu0 0
        %2002 = vmatpush1.bf16.xpose.msra.mxu0 0
        %2003 = vmatprep.subr.bf16.mxu0 0
        %2004 = vmatpush1.bf16.xpose.msra.mxu0 0
        %2005 = vmatprep.subr.bf16.mxu0 0
        %2006 = vmatpush1.bf16.xpose.msra.mxu0 0
        %2007 = vmatprep.subr.bf16.mxu0 0
        %2008 = vmatpush1.bf16.xpose.msra.mxu0 0
        %2009 = vmatprep.subr.bf16.mxu0 0
        %2010 = vmatpush1.bf16.xpose.msra.mxu0 0
        %2011 = vmatprep.subr.bf16.mxu0 0
        %2012 = vmatpush1.bf16.xpose.msra.mxu0 0
        %2013 = vmatprep.subr.bf16.mxu0 0
        %2014 = vmatpush1.bf16.xpose.msra.mxu0 0
        %2015 = vmatprep.subr.bf16.mxu0 0
        %2016 = vmatpush1.bf16.xpose.msra.mxu0 0
        %2017 = vmatprep.mubr.bf16.mxu0 0
        %2018 = vmatmul.mubr.bf16.gmra.mrb[0].mxu0 %v1980
        %v2019 = vpop.f32.mrb[0].mxu0
        %v2020 = vadd.f32 0.0, %v2019
        %v2021 = vpop.f32.mrb[0].mxu0
        %v2022 = vpop.f32.mrb[0].mxu0
        %v2023 = vpop.f32.mrb[0].mxu0
        %2024 = vdwg.mxu0
        %2026 = vrot.lane.b32.xlu0 %v1865, 96
        %v2027 = vpop.permute.xlu0 %2026
        %v2029 = vsel %vm1191, %v1865, 0
        %v2032 = vsel %vm1191, %v2027, 0
        %2034 = vmatprep.subr.bf16.mxu0 0
        %2035 = vmatpush1.bf16.xpose.msra.mxu0 %v2032
        %2036 = vmatprep.subr.bf16.mxu0 0
        %2037 = vmatpush1.bf16.xpose.msra.mxu0 0
        %2038 = vmatprep.subr.bf16.mxu0 0
        %2039 = vmatpush1.bf16.xpose.msra.mxu0 0
        %2040 = vmatprep.subr.bf16.mxu0 0
        %2041 = vmatpush1.bf16.xpose.msra.mxu0 0
        %2042 = vmatprep.subr.bf16.mxu0 0
        %2043 = vmatpush1.bf16.xpose.msra.mxu0 0
        %2044 = vmatprep.subr.bf16.mxu0 0
        %2045 = vmatpush1.bf16.xpose.msra.mxu0 0
        %2046 = vmatprep.subr.bf16.mxu0 0
        %2047 = vmatpush1.bf16.xpose.msra.mxu0 0
        %2048 = vmatprep.subr.bf16.mxu0 0
        %2049 = vmatpush1.bf16.xpose.msra.mxu0 0
        %2050 = vmatprep.subr.bf16.mxu0 0
        %2051 = vmatpush1.bf16.xpose.msra.mxu0 0
        %2052 = vmatprep.subr.bf16.mxu0 0
        %2053 = vmatpush1.bf16.xpose.msra.mxu0 0
        %2054 = vmatprep.subr.bf16.mxu0 0
        %2055 = vmatpush1.bf16.xpose.msra.mxu0 0
        %2056 = vmatprep.subr.bf16.mxu0 0
        %2057 = vmatpush1.bf16.xpose.msra.mxu0 0
        %2058 = vmatprep.subr.bf16.mxu0 0
        %2059 = vmatpush1.bf16.xpose.msra.mxu0 0
        %2060 = vmatprep.subr.bf16.mxu0 0
        %2061 = vmatpush1.bf16.xpose.msra.mxu0 0
        %2062 = vmatprep.subr.bf16.mxu0 0
        %2063 = vmatpush1.bf16.xpose.msra.mxu0 0
        %2064 = vmatprep.subr.bf16.mxu0 0
        %2065 = vmatpush1.bf16.xpose.msra.mxu0 0
        %2066 = vmatprep.mubr.bf16.mxu0 0
        %2067 = vmatmul.mubr.bf16.gmra.mrb[0].mxu0 %v2029
        %v2068 = vpop.f32.mrb[0].mxu0
        %v2069 = vadd.f32 0.0, %v2068
        %v2070 = vpop.f32.mrb[0].mxu0
        %v2071 = vpop.f32.mrb[0].mxu0
        %v2072 = vpop.f32.mrb[0].mxu0
        %2073 = vdwg.mxu0
        %2075 = vrot.lane.b32.xlu0 %v1866, 96
        %v2076 = vpop.permute.xlu0 %2075
        %v2078 = vsel %vm1191, %v1866, 0
        %v2081 = vsel %vm1191, %v2076, 0
        %2083 = vmatprep.subr.bf16.mxu0 0
        %2084 = vmatpush1.bf16.xpose.msra.mxu0 %v2081
        %2085 = vmatprep.subr.bf16.mxu0 0
        %2086 = vmatpush1.bf16.xpose.msra.mxu0 0
        %2087 = vmatprep.subr.bf16.mxu0 0
        %2088 = vmatpush1.bf16.xpose.msra.mxu0 0
        %2089 = vmatprep.subr.bf16.mxu0 0
        %2090 = vmatpush1.bf16.xpose.msra.mxu0 0
        %2091 = vmatprep.subr.bf16.mxu0 0
        %2092 = vmatpush1.bf16.xpose.msra.mxu0 0
        %2093 = vmatprep.subr.bf16.mxu0 0
        %2094 = vmatpush1.bf16.xpose.msra.mxu0 0
        %2095 = vmatprep.subr.bf16.mxu0 0
        %2096 = vmatpush1.bf16.xpose.msra.mxu0 0
        %2097 = vmatprep.subr.bf16.mxu0 0
        %2098 = vmatpush1.bf16.xpose.msra.mxu0 0
        %2099 = vmatprep.subr.bf16.mxu0 0
        %2100 = vmatpush1.bf16.xpose.msra.mxu0 0
        %2101 = vmatprep.subr.bf16.mxu0 0
        %2102 = vmatpush1.bf16.xpose.msra.mxu0 0
        %2103 = vmatprep.subr.bf16.mxu0 0
        %2104 = vmatpush1.bf16.xpose.msra.mxu0 0
        %2105 = vmatprep.subr.bf16.mxu0 0
        %2106 = vmatpush1.bf16.xpose.msra.mxu0 0
        %2107 = vmatprep.subr.bf16.mxu0 0
        %2108 = vmatpush1.bf16.xpose.msra.mxu0 0
        %2109 = vmatprep.subr.bf16.mxu0 0
        %2110 = vmatpush1.bf16.xpose.msra.mxu0 0
        %2111 = vmatprep.subr.bf16.mxu0 0
        %2112 = vmatpush1.bf16.xpose.msra.mxu0 0
        %2113 = vmatprep.subr.bf16.mxu0 0
        %2114 = vmatpush1.bf16.xpose.msra.mxu0 0
        %2115 = vmatprep.mubr.bf16.mxu0 0
        %2116 = vmatmul.mubr.bf16.gmra.mrb[0].mxu0 %v2078
        %v2117 = vpop.f32.mrb[0].mxu0
        %v2118 = vadd.f32 0.0, %v2117
        %v2119 = vpop.f32.mrb[0].mxu0
        %v2120 = vpop.f32.mrb[0].mxu0
        %v2121 = vpop.f32.mrb[0].mxu0
        %2122 = vdwg.mxu0
        %2124 = vrot.lane.b32.xlu0 %v1867, 96
        %v2125 = vpop.permute.xlu0 %2124
        %v2127 = vsel %vm1191, %v1867, 0
        %v2130 = vsel %vm1191, %v2125, 0
        %2132 = vmatprep.subr.bf16.mxu0 0
        %2133 = vmatpush1.bf16.xpose.msra.mxu0 %v2130
        %2134 = vmatprep.subr.bf16.mxu0 0
        %2135 = vmatpush1.bf16.xpose.msra.mxu0 0
        %2136 = vmatprep.subr.bf16.mxu0 0
        %2137 = vmatpush1.bf16.xpose.msra.mxu0 0
        %2138 = vmatprep.subr.bf16.mxu0 0
        %2139 = vmatpush1.bf16.xpose.msra.mxu0 0
        %2140 = vmatprep.subr.bf16.mxu0 0
        %2141 = vmatpush1.bf16.xpose.msra.mxu0 0
        %2142 = vmatprep.subr.bf16.mxu0 0
        %2143 = vmatpush1.bf16.xpose.msra.mxu0 0
        %2144 = vmatprep.subr.bf16.mxu0 0
        %2145 = vmatpush1.bf16.xpose.msra.mxu0 0
        %2146 = vmatprep.subr.bf16.mxu0 0
        %2147 = vmatpush1.bf16.xpose.msra.mxu0 0
        %2148 = vmatprep.subr.bf16.mxu0 0
        %2149 = vmatpush1.bf16.xpose.msra.mxu0 0
        %2150 = vmatprep.subr.bf16.mxu0 0
        %2151 = vmatpush1.bf16.xpose.msra.mxu0 0
        %2152 = vmatprep.subr.bf16.mxu0 0
        %2153 = vmatpush1.bf16.xpose.msra.mxu0 0
        %2154 = vmatprep.subr.bf16.mxu0 0
        %2155 = vmatpush1.bf16.xpose.msra.mxu0 0
        %2156 = vmatprep.subr.bf16.mxu0 0
        %2157 = vmatpush1.bf16.xpose.msra.mxu0 0
        %2158 = vmatprep.subr.bf16.mxu0 0
        %2159 = vmatpush1.bf16.xpose.msra.mxu0 0
        %2160 = vmatprep.subr.bf16.mxu0 0
        %2161 = vmatpush1.bf16.xpose.msra.mxu0 0
        %2162 = vmatprep.subr.bf16.mxu0 0
        %2163 = vmatpush1.bf16.xpose.msra.mxu0 0
        %2164 = vmatprep.mubr.bf16.mxu0 0
        %2165 = vmatmul.mubr.bf16.gmra.mrb[0].mxu0 %v2127
        %v2166 = vpop.f32.mrb[0].mxu0
        %v2167 = vadd.f32 0.0, %v2166
        %v2168 = vpop.f32.mrb[0].mxu0
        %v2169 = vpop.f32.mrb[0].mxu0
        %v2170 = vpop.f32.mrb[0].mxu0
        %2171 = vdwg.mxu0
        %2173 = vrot.lane.b32.xlu0 %v1868, 96
        %v2174 = vpop.permute.xlu0 %2173
        %v2176 = vsel %vm1191, %v1868, 0
        %v2179 = vsel %vm1191, %v2174, 0
        %2181 = vmatprep.subr.bf16.mxu0 0
        %2182 = vmatpush1.bf16.xpose.msra.mxu0 %v2179
        %2183 = vmatprep.subr.bf16.mxu0 0
        %2184 = vmatpush1.bf16.xpose.msra.mxu0 0
        %2185 = vmatprep.subr.bf16.mxu0 0
        %2186 = vmatpush1.bf16.xpose.msra.mxu0 0
        %2187 = vmatprep.subr.bf16.mxu0 0
        %2188 = vmatpush1.bf16.xpose.msra.mxu0 0
        %2189 = vmatprep.subr.bf16.mxu0 0
        %2190 = vmatpush1.bf16.xpose.msra.mxu0 0
        %2191 = vmatprep.subr.bf16.mxu0 0
        %2192 = vmatpush1.bf16.xpose.msra.mxu0 0
        %2193 = vmatprep.subr.bf16.mxu0 0
        %2194 = vmatpush1.bf16.xpose.msra.mxu0 0
        %2195 = vmatprep.subr.bf16.mxu0 0
        %2196 = vmatpush1.bf16.xpose.msra.mxu0 0
        %2197 = vmatprep.subr.bf16.mxu0 0
        %2198 = vmatpush1.bf16.xpose.msra.mxu0 0
        %2199 = vmatprep.subr.bf16.mxu0 0
        %2200 = vmatpush1.bf16.xpose.msra.mxu0 0
        %2201 = vmatprep.subr.bf16.mxu0 0
        %2202 = vmatpush1.bf16.xpose.msra.mxu0 0
        %2203 = vmatprep.subr.bf16.mxu0 0
        %2204 = vmatpush1.bf16.xpose.msra.mxu0 0
        %2205 = vmatprep.subr.bf16.mxu0 0
        %2206 = vmatpush1.bf16.xpose.msra.mxu0 0
        %2207 = vmatprep.subr.bf16.mxu0 0
        %2208 = vmatpush1.bf16.xpose.msra.mxu0 0
        %2209 = vmatprep.subr.bf16.mxu0 0
        %2210 = vmatpush1.bf16.xpose.msra.mxu0 0
        %2211 = vmatprep.subr.bf16.mxu0 0
        %2212 = vmatpush1.bf16.xpose.msra.mxu0 0
        %2213 = vmatprep.mubr.bf16.mxu0 0
        %2214 = vmatmul.mubr.bf16.gmra.mrb[0].mxu0 %v2176
        %v2215 = vpop.f32.mrb[0].mxu0
        %v2216 = vadd.f32 0.0, %v2215
        %v2217 = vpop.f32.mrb[0].mxu0
        %v2218 = vpop.f32.mrb[0].mxu0
        %v2219 = vpop.f32.mrb[0].mxu0
        %2220 = vdwg.mxu0
        %2222 = vrot.lane.b32.xlu0 %v1869, 96
        %v2223 = vpop.permute.xlu0 %2222
        %v2225 = vsel %vm1191, %v1869, 0
        %v2228 = vsel %vm1191, %v2223, 0
        %2230 = vmatprep.subr.bf16.mxu0 0
        %2231 = vmatpush1.bf16.xpose.msra.mxu0 %v2228
        %2232 = vmatprep.subr.bf16.mxu0 0
        %2233 = vmatpush1.bf16.xpose.msra.mxu0 0
        %2234 = vmatprep.subr.bf16.mxu0 0
        %2235 = vmatpush1.bf16.xpose.msra.mxu0 0
        %2236 = vmatprep.subr.bf16.mxu0 0
        %2237 = vmatpush1.bf16.xpose.msra.mxu0 0
        %2238 = vmatprep.subr.bf16.mxu0 0
        %2239 = vmatpush1.bf16.xpose.msra.mxu0 0
        %2240 = vmatprep.subr.bf16.mxu0 0
        %2241 = vmatpush1.bf16.xpose.msra.mxu0 0
        %2242 = vmatprep.subr.bf16.mxu0 0
        %2243 = vmatpush1.bf16.xpose.msra.mxu0 0
        %2244 = vmatprep.subr.bf16.mxu0 0
        %2245 = vmatpush1.bf16.xpose.msra.mxu0 0
        %2246 = vmatprep.subr.bf16.mxu0 0
        %2247 = vmatpush1.bf16.xpose.msra.mxu0 0
        %2248 = vmatprep.subr.bf16.mxu0 0
        %2249 = vmatpush1.bf16.xpose.msra.mxu0 0
        %2250 = vmatprep.subr.bf16.mxu0 0
        %2251 = vmatpush1.bf16.xpose.msra.mxu0 0
        %2252 = vmatprep.subr.bf16.mxu0 0
        %2253 = vmatpush1.bf16.xpose.msra.mxu0 0
        %2254 = vmatprep.subr.bf16.mxu0 0
        %2255 = vmatpush1.bf16.xpose.msra.mxu0 0
        %2256 = vmatprep.subr.bf16.mxu0 0
        %2257 = vmatpush1.bf16.xpose.msra.mxu0 0
        %2258 = vmatprep.subr.bf16.mxu0 0
        %2259 = vmatpush1.bf16.xpose.msra.mxu0 0
        %2260 = vmatprep.subr.bf16.mxu0 0
        %2261 = vmatpush1.bf16.xpose.msra.mxu0 0
        %2262 = vmatprep.mubr.bf16.mxu0 0
        %2263 = vmatmul.mubr.bf16.gmra.mrb[0].mxu0 %v2225
        %v2264 = vpop.f32.mrb[0].mxu0
        %v2265 = vadd.f32 0.0, %v2264
        %v2266 = vpop.f32.mrb[0].mxu0
        %v2267 = vpop.f32.mrb[0].mxu0
        %v2268 = vpop.f32.mrb[0].mxu0
        %2269 = vdwg.mxu0
        %2271 = vrot.lane.b32.xlu0 %v1870, 96
        %v2272 = vpop.permute.xlu0 %2271
        %v2274 = vsel %vm1191, %v1870, 0
        %v2277 = vsel %vm1191, %v2272, 0
        %2279 = vmatprep.subr.bf16.mxu0 0
        %2280 = vmatpush1.bf16.xpose.msra.mxu0 %v2277
        %2281 = vmatprep.subr.bf16.mxu0 0
        %2282 = vmatpush1.bf16.xpose.msra.mxu0 0
        %2283 = vmatprep.subr.bf16.mxu0 0
        %2284 = vmatpush1.bf16.xpose.msra.mxu0 0
        %2285 = vmatprep.subr.bf16.mxu0 0
        %2286 = vmatpush1.bf16.xpose.msra.mxu0 0
        %2287 = vmatprep.subr.bf16.mxu0 0
        %2288 = vmatpush1.bf16.xpose.msra.mxu0 0
        %2289 = vmatprep.subr.bf16.mxu0 0
        %2290 = vmatpush1.bf16.xpose.msra.mxu0 0
        %2291 = vmatprep.subr.bf16.mxu0 0
        %2292 = vmatpush1.bf16.xpose.msra.mxu0 0
        %2293 = vmatprep.subr.bf16.mxu0 0
        %2294 = vmatpush1.bf16.xpose.msra.mxu0 0
        %2295 = vmatprep.subr.bf16.mxu0 0
        %2296 = vmatpush1.bf16.xpose.msra.mxu0 0
        %2297 = vmatprep.subr.bf16.mxu0 0
        %2298 = vmatpush1.bf16.xpose.msra.mxu0 0
        %2299 = vmatprep.subr.bf16.mxu0 0
        %2300 = vmatpush1.bf16.xpose.msra.mxu0 0
        %2301 = vmatprep.subr.bf16.mxu0 0
        %2302 = vmatpush1.bf16.xpose.msra.mxu0 0
        %2303 = vmatprep.subr.bf16.mxu0 0
        %2304 = vmatpush1.bf16.xpose.msra.mxu0 0
        %2305 = vmatprep.subr.bf16.mxu0 0
        %2306 = vmatpush1.bf16.xpose.msra.mxu0 0
        %2307 = vmatprep.subr.bf16.mxu0 0
        %2308 = vmatpush1.bf16.xpose.msra.mxu0 0
        %2309 = vmatprep.subr.bf16.mxu0 0
        %2310 = vmatpush1.bf16.xpose.msra.mxu0 0
        %2311 = vmatprep.mubr.bf16.mxu0 0
        %2312 = vmatmul.mubr.bf16.gmra.mrb[0].mxu0 %v2274
        %v2313 = vpop.f32.mrb[0].mxu0
        %v2314 = vadd.f32 0.0, %v2313
        %v2315 = vpop.f32.mrb[0].mxu0
        %v2316 = vpop.f32.mrb[0].mxu0
        %v2317 = vpop.f32.mrb[0].mxu0
        %2318 = vdwg.mxu0
        %2320 = vrot.lane.b32.xlu0 %v1871, 96
        %v2321 = vpop.permute.xlu0 %2320
        %v2323 = vsel %vm1191, %v1871, 0
        %v2326 = vsel %vm1191, %v2321, 0
        %2328 = vmatprep.subr.bf16.mxu0 0
        %2329 = vmatpush1.bf16.xpose.msra.mxu0 %v2326
        %2330 = vmatprep.subr.bf16.mxu0 0
        %2331 = vmatpush1.bf16.xpose.msra.mxu0 0
        %2332 = vmatprep.subr.bf16.mxu0 0
        %2333 = vmatpush1.bf16.xpose.msra.mxu0 0
        %2334 = vmatprep.subr.bf16.mxu0 0
        %2335 = vmatpush1.bf16.xpose.msra.mxu0 0
        %2336 = vmatprep.subr.bf16.mxu0 0
        %2337 = vmatpush1.bf16.xpose.msra.mxu0 0
        %2338 = vmatprep.subr.bf16.mxu0 0
        %2339 = vmatpush1.bf16.xpose.msra.mxu0 0
        %2340 = vmatprep.subr.bf16.mxu0 0
        %2341 = vmatpush1.bf16.xpose.msra.mxu0 0
        %2342 = vmatprep.subr.bf16.mxu0 0
        %2343 = vmatpush1.bf16.xpose.msra.mxu0 0
        %2344 = vmatprep.subr.bf16.mxu0 0
        %2345 = vmatpush1.bf16.xpose.msra.mxu0 0
        %2346 = vmatprep.subr.bf16.mxu0 0
        %2347 = vmatpush1.bf16.xpose.msra.mxu0 0
        %2348 = vmatprep.subr.bf16.mxu0 0
        %2349 = vmatpush1.bf16.xpose.msra.mxu0 0
        %2350 = vmatprep.subr.bf16.mxu0 0
        %2351 = vmatpush1.bf16.xpose.msra.mxu0 0
        %2352 = vmatprep.subr.bf16.mxu0 0
        %2353 = vmatpush1.bf16.xpose.msra.mxu0 0
        %2354 = vmatprep.subr.bf16.mxu0 0
        %2355 = vmatpush1.bf16.xpose.msra.mxu0 0
        %2356 = vmatprep.subr.bf16.mxu0 0
        %2357 = vmatpush1.bf16.xpose.msra.mxu0 0
        %2358 = vmatprep.subr.bf16.mxu0 0
        %2359 = vmatpush1.bf16.xpose.msra.mxu0 0
        %2360 = vmatprep.mubr.bf16.mxu0 0
        %2361 = vmatmul.mubr.bf16.gmra.mrb[0].mxu0 %v2323
        %v2362 = vpop.f32.mrb[0].mxu0
        %v2363 = vadd.f32 0.0, %v2362
        %v2364 = vpop.f32.mrb[0].mxu0
        %v2365 = vpop.f32.mrb[0].mxu0
        %v2366 = vpop.f32.mrb[0].mxu0
        %2367 = vdwg.mxu0
        %2369 = vrot.lane.b32.xlu0 %v1872, 96
        %v2370 = vpop.permute.xlu0 %2369
        %v2372 = vsel %vm1191, %v1872, 0
        %v2375 = vsel %vm1191, %v2370, 0
        %2377 = vmatprep.subr.bf16.mxu0 0
        %2378 = vmatpush1.bf16.xpose.msra.mxu0 %v2375
        %2379 = vmatprep.subr.bf16.mxu0 0
        %2380 = vmatpush1.bf16.xpose.msra.mxu0 0
        %2381 = vmatprep.subr.bf16.mxu0 0
        %2382 = vmatpush1.bf16.xpose.msra.mxu0 0
        %2383 = vmatprep.subr.bf16.mxu0 0
        %2384 = vmatpush1.bf16.xpose.msra.mxu0 0
        %2385 = vmatprep.subr.bf16.mxu0 0
        %2386 = vmatpush1.bf16.xpose.msra.mxu0 0
        %2387 = vmatprep.subr.bf16.mxu0 0
        %2388 = vmatpush1.bf16.xpose.msra.mxu0 0
        %2389 = vmatprep.subr.bf16.mxu0 0
        %2390 = vmatpush1.bf16.xpose.msra.mxu0 0
        %2391 = vmatprep.subr.bf16.mxu0 0
        %2392 = vmatpush1.bf16.xpose.msra.mxu0 0
        %2393 = vmatprep.subr.bf16.mxu0 0
        %2394 = vmatpush1.bf16.xpose.msra.mxu0 0
        %2395 = vmatprep.subr.bf16.mxu0 0
        %2396 = vmatpush1.bf16.xpose.msra.mxu0 0
        %2397 = vmatprep.subr.bf16.mxu0 0
        %2398 = vmatpush1.bf16.xpose.msra.mxu0 0
        %2399 = vmatprep.subr.bf16.mxu0 0
        %2400 = vmatpush1.bf16.xpose.msra.mxu0 0
        %2401 = vmatprep.subr.bf16.mxu0 0
        %2402 = vmatpush1.bf16.xpose.msra.mxu0 0
        %2403 = vmatprep.subr.bf16.mxu0 0
        %2404 = vmatpush1.bf16.xpose.msra.mxu0 0
        %2405 = vmatprep.subr.bf16.mxu0 0
        %2406 = vmatpush1.bf16.xpose.msra.mxu0 0
        %2407 = vmatprep.subr.bf16.mxu0 0
        %2408 = vmatpush1.bf16.xpose.msra.mxu0 0
        %2409 = vmatprep.mubr.bf16.mxu0 0
        %2410 = vmatmul.mubr.bf16.gmra.mrb[0].mxu0 %v2372
        %v2411 = vpop.f32.mrb[0].mxu0
        %v2412 = vadd.f32 0.0, %v2411
        %v2413 = vpop.f32.mrb[0].mxu0
        %v2414 = vpop.f32.mrb[0].mxu0
        %v2415 = vpop.f32.mrb[0].mxu0
        %2416 = vdwg.mxu0
        %2418 = vrot.lane.b32.xlu0 %v1873, 96
        %v2419 = vpop.permute.xlu0 %2418
        %v2421 = vsel %vm1191, %v1873, 0
        %v2424 = vsel %vm1191, %v2419, 0
        %2426 = vmatprep.subr.bf16.mxu0 0
        %2427 = vmatpush1.bf16.xpose.msra.mxu0 %v2424
        %2428 = vmatprep.subr.bf16.mxu0 0
        %2429 = vmatpush1.bf16.xpose.msra.mxu0 0
        %2430 = vmatprep.subr.bf16.mxu0 0
        %2431 = vmatpush1.bf16.xpose.msra.mxu0 0
        %2432 = vmatprep.subr.bf16.mxu0 0
        %2433 = vmatpush1.bf16.xpose.msra.mxu0 0
        %2434 = vmatprep.subr.bf16.mxu0 0
        %2435 = vmatpush1.bf16.xpose.msra.mxu0 0
        %2436 = vmatprep.subr.bf16.mxu0 0
        %2437 = vmatpush1.bf16.xpose.msra.mxu0 0
        %2438 = vmatprep.subr.bf16.mxu0 0
        %2439 = vmatpush1.bf16.xpose.msra.mxu0 0
        %2440 = vmatprep.subr.bf16.mxu0 0
        %2441 = vmatpush1.bf16.xpose.msra.mxu0 0
        %2442 = vmatprep.subr.bf16.mxu0 0
        %2443 = vmatpush1.bf16.xpose.msra.mxu0 0
        %2444 = vmatprep.subr.bf16.mxu0 0
        %2445 = vmatpush1.bf16.xpose.msra.mxu0 0
        %2446 = vmatprep.subr.bf16.mxu0 0
        %2447 = vmatpush1.bf16.xpose.msra.mxu0 0
        %2448 = vmatprep.subr.bf16.mxu0 0
        %2449 = vmatpush1.bf16.xpose.msra.mxu0 0
        %2450 = vmatprep.subr.bf16.mxu0 0
        %2451 = vmatpush1.bf16.xpose.msra.mxu0 0
        %2452 = vmatprep.subr.bf16.mxu0 0
        %2453 = vmatpush1.bf16.xpose.msra.mxu0 0
        %2454 = vmatprep.subr.bf16.mxu0 0
        %2455 = vmatpush1.bf16.xpose.msra.mxu0 0
        %2456 = vmatprep.subr.bf16.mxu0 0
        %2457 = vmatpush1.bf16.xpose.msra.mxu0 0
        %2458 = vmatprep.mubr.bf16.mxu0 0
        %2459 = vmatmul.mubr.bf16.gmra.mrb[0].mxu0 %v2421
        %v2460 = vpop.f32.mrb[0].mxu0
        %v2461 = vadd.f32 0.0, %v2460
        %v2462 = vpop.f32.mrb[0].mxu0
        %v2463 = vpop.f32.mrb[0].mxu0
        %v2464 = vpop.f32.mrb[0].mxu0
        %2465 = vdwg.mxu0
        %2467 = vrot.lane.b32.xlu0 %v1874, 96
        %v2468 = vpop.permute.xlu0 %2467
        %v2470 = vsel %vm1191, %v1874, 0
        %v2473 = vsel %vm1191, %v2468, 0
        %2475 = vmatprep.subr.bf16.mxu0 0
        %2476 = vmatpush1.bf16.xpose.msra.mxu0 %v2473
        %2477 = vmatprep.subr.bf16.mxu0 0
        %2478 = vmatpush1.bf16.xpose.msra.mxu0 0
        %2479 = vmatprep.subr.bf16.mxu0 0
        %2480 = vmatpush1.bf16.xpose.msra.mxu0 0
        %2481 = vmatprep.subr.bf16.mxu0 0
        %2482 = vmatpush1.bf16.xpose.msra.mxu0 0
        %2483 = vmatprep.subr.bf16.mxu0 0
        %2484 = vmatpush1.bf16.xpose.msra.mxu0 0
        %2485 = vmatprep.subr.bf16.mxu0 0
        %2486 = vmatpush1.bf16.xpose.msra.mxu0 0
        %2487 = vmatprep.subr.bf16.mxu0 0
        %2488 = vmatpush1.bf16.xpose.msra.mxu0 0
        %2489 = vmatprep.subr.bf16.mxu0 0
        %2490 = vmatpush1.bf16.xpose.msra.mxu0 0
        %2491 = vmatprep.subr.bf16.mxu0 0
        %2492 = vmatpush1.bf16.xpose.msra.mxu0 0
        %2493 = vmatprep.subr.bf16.mxu0 0
        %2494 = vmatpush1.bf16.xpose.msra.mxu0 0
        %2495 = vmatprep.subr.bf16.mxu0 0
        %2496 = vmatpush1.bf16.xpose.msra.mxu0 0
        %2497 = vmatprep.subr.bf16.mxu0 0
        %2498 = vmatpush1.bf16.xpose.msra.mxu0 0
        %2499 = vmatprep.subr.bf16.mxu0 0
        %2500 = vmatpush1.bf16.xpose.msra.mxu0 0
        %2501 = vmatprep.subr.bf16.mxu0 0
        %2502 = vmatpush1.bf16.xpose.msra.mxu0 0
        %2503 = vmatprep.subr.bf16.mxu0 0
        %2504 = vmatpush1.bf16.xpose.msra.mxu0 0
        %2505 = vmatprep.subr.bf16.mxu0 0
        %2506 = vmatpush1.bf16.xpose.msra.mxu0 0
        %2507 = vmatprep.mubr.bf16.mxu0 0
        %2508 = vmatmul.mubr.bf16.gmra.mrb[0].mxu0 %v2470
        %v2509 = vpop.f32.mrb[0].mxu0
        %v2510 = vadd.f32 0.0, %v2509
        %v2511 = vpop.f32.mrb[0].mxu0
        %v2512 = vpop.f32.mrb[0].mxu0
        %v2513 = vpop.f32.mrb[0].mxu0
        %2514 = vdwg.mxu0
        %2516 = vrot.lane.b32.xlu0 %v1875, 96
        %v2517 = vpop.permute.xlu0 %2516
        %v2519 = vsel %vm1191, %v1875, 0
        %v2522 = vsel %vm1191, %v2517, 0
        %2524 = vmatprep.subr.bf16.mxu0 0
        %2525 = vmatpush1.bf16.xpose.msra.mxu0 %v2522
        %2526 = vmatprep.subr.bf16.mxu0 0
        %2527 = vmatpush1.bf16.xpose.msra.mxu0 0
        %2528 = vmatprep.subr.bf16.mxu0 0
        %2529 = vmatpush1.bf16.xpose.msra.mxu0 0
        %2530 = vmatprep.subr.bf16.mxu0 0
        %2531 = vmatpush1.bf16.xpose.msra.mxu0 0
        %2532 = vmatprep.subr.bf16.mxu0 0
        %2533 = vmatpush1.bf16.xpose.msra.mxu0 0
        %2534 = vmatprep.subr.bf16.mxu0 0
        %2535 = vmatpush1.bf16.xpose.msra.mxu0 0
        %2536 = vmatprep.subr.bf16.mxu0 0
        %2537 = vmatpush1.bf16.xpose.msra.mxu0 0
        %2538 = vmatprep.subr.bf16.mxu0 0
        %2539 = vmatpush1.bf16.xpose.msra.mxu0 0
        %2540 = vmatprep.subr.bf16.mxu0 0
        %2541 = vmatpush1.bf16.xpose.msra.mxu0 0
        %2542 = vmatprep.subr.bf16.mxu0 0
        %2543 = vmatpush1.bf16.xpose.msra.mxu0 0
        %2544 = vmatprep.subr.bf16.mxu0 0
        %2545 = vmatpush1.bf16.xpose.msra.mxu0 0
        %2546 = vmatprep.subr.bf16.mxu0 0
        %2547 = vmatpush1.bf16.xpose.msra.mxu0 0
        %2548 = vmatprep.subr.bf16.mxu0 0
        %2549 = vmatpush1.bf16.xpose.msra.mxu0 0
        %2550 = vmatprep.subr.bf16.mxu0 0
        %2551 = vmatpush1.bf16.xpose.msra.mxu0 0
        %2552 = vmatprep.subr.bf16.mxu0 0
        %2553 = vmatpush1.bf16.xpose.msra.mxu0 0
        %2554 = vmatprep.subr.bf16.mxu0 0
        %2555 = vmatpush1.bf16.xpose.msra.mxu0 0
        %2556 = vmatprep.mubr.bf16.mxu0 0
        %2557 = vmatmul.mubr.bf16.gmra.mrb[0].mxu0 %v2519
        %v2558 = vpop.f32.mrb[0].mxu0
        %v2559 = vadd.f32 0.0, %v2558
        %v2560 = vpop.f32.mrb[0].mxu0
        %v2561 = vpop.f32.mrb[0].mxu0
        %v2562 = vpop.f32.mrb[0].mxu0
        %2563 = vdwg.mxu0
        %2565 = vrot.lane.b32.xlu0 %v1876, 96
        %v2566 = vpop.permute.xlu0 %2565
        %v2568 = vsel %vm1191, %v1876, 0
        %v2571 = vsel %vm1191, %v2566, 0
        %2573 = vmatprep.subr.bf16.mxu0 0
        %2574 = vmatpush1.bf16.xpose.msra.mxu0 %v2571
        %2575 = vmatprep.subr.bf16.mxu0 0
        %2576 = vmatpush1.bf16.xpose.msra.mxu0 0
        %2577 = vmatprep.subr.bf16.mxu0 0
        %2578 = vmatpush1.bf16.xpose.msra.mxu0 0
        %2579 = vmatprep.subr.bf16.mxu0 0
        %2580 = vmatpush1.bf16.xpose.msra.mxu0 0
        %2581 = vmatprep.subr.bf16.mxu0 0
        %2582 = vmatpush1.bf16.xpose.msra.mxu0 0
        %2583 = vmatprep.subr.bf16.mxu0 0
        %2584 = vmatpush1.bf16.xpose.msra.mxu0 0
        %2585 = vmatprep.subr.bf16.mxu0 0
        %2586 = vmatpush1.bf16.xpose.msra.mxu0 0
        %2587 = vmatprep.subr.bf16.mxu0 0
        %2588 = vmatpush1.bf16.xpose.msra.mxu0 0
        %2589 = vmatprep.subr.bf16.mxu0 0
        %2590 = vmatpush1.bf16.xpose.msra.mxu0 0
        %2591 = vmatprep.subr.bf16.mxu0 0
        %2592 = vmatpush1.bf16.xpose.msra.mxu0 0
        %2593 = vmatprep.subr.bf16.mxu0 0
        %2594 = vmatpush1.bf16.xpose.msra.mxu0 0
        %2595 = vmatprep.subr.bf16.mxu0 0
        %2596 = vmatpush1.bf16.xpose.msra.mxu0 0
        %2597 = vmatprep.subr.bf16.mxu0 0
        %2598 = vmatpush1.bf16.xpose.msra.mxu0 0
        %2599 = vmatprep.subr.bf16.mxu0 0
        %2600 = vmatpush1.bf16.xpose.msra.mxu0 0
        %2601 = vmatprep.subr.bf16.mxu0 0
        %2602 = vmatpush1.bf16.xpose.msra.mxu0 0
        %2603 = vmatprep.subr.bf16.mxu0 0
        %2604 = vmatpush1.bf16.xpose.msra.mxu0 0
        %2605 = vmatprep.mubr.bf16.mxu0 0
        %2606 = vmatmul.mubr.bf16.gmra.mrb[0].mxu0 %v2568
        %v2607 = vpop.f32.mrb[0].mxu0
        %v2608 = vadd.f32 0.0, %v2607
        %v2609 = vpop.f32.mrb[0].mxu0
        %v2610 = vpop.f32.mrb[0].mxu0
        %v2611 = vpop.f32.mrb[0].mxu0
        %2612 = vdwg.mxu0
        %2614 = vrot.lane.b32.xlu0 %v1877, 96
        %v2615 = vpop.permute.xlu0 %2614
        %v2617 = vsel %vm1191, %v1877, 0
        %v2620 = vsel %vm1191, %v2615, 0
        %2622 = vmatprep.subr.bf16.mxu0 0
        %2623 = vmatpush1.bf16.xpose.msra.mxu0 %v2620
        %2624 = vmatprep.subr.bf16.mxu0 0
        %2625 = vmatpush1.bf16.xpose.msra.mxu0 0
        %2626 = vmatprep.subr.bf16.mxu0 0
        %2627 = vmatpush1.bf16.xpose.msra.mxu0 0
        %2628 = vmatprep.subr.bf16.mxu0 0
        %2629 = vmatpush1.bf16.xpose.msra.mxu0 0
        %2630 = vmatprep.subr.bf16.mxu0 0
        %2631 = vmatpush1.bf16.xpose.msra.mxu0 0
        %2632 = vmatprep.subr.bf16.mxu0 0
        %2633 = vmatpush1.bf16.xpose.msra.mxu0 0
        %2634 = vmatprep.subr.bf16.mxu0 0
        %2635 = vmatpush1.bf16.xpose.msra.mxu0 0
        %2636 = vmatprep.subr.bf16.mxu0 0
        %2637 = vmatpush1.bf16.xpose.msra.mxu0 0
        %2638 = vmatprep.subr.bf16.mxu0 0
        %2639 = vmatpush1.bf16.xpose.msra.mxu0 0
        %2640 = vmatprep.subr.bf16.mxu0 0
        %2641 = vmatpush1.bf16.xpose.msra.mxu0 0
        %2642 = vmatprep.subr.bf16.mxu0 0
        %2643 = vmatpush1.bf16.xpose.msra.mxu0 0
        %2644 = vmatprep.subr.bf16.mxu0 0
        %2645 = vmatpush1.bf16.xpose.msra.mxu0 0
        %2646 = vmatprep.subr.bf16.mxu0 0
        %2647 = vmatpush1.bf16.xpose.msra.mxu0 0
        %2648 = vmatprep.subr.bf16.mxu0 0
        %2649 = vmatpush1.bf16.xpose.msra.mxu0 0
        %2650 = vmatprep.subr.bf16.mxu0 0
        %2651 = vmatpush1.bf16.xpose.msra.mxu0 0
        %2652 = vmatprep.subr.bf16.mxu0 0
        %2653 = vmatpush1.bf16.xpose.msra.mxu0 0
        %2654 = vmatprep.mubr.bf16.mxu0 0
        %2655 = vmatmul.mubr.bf16.gmra.mrb[0].mxu0 %v2617
        %v2656 = vpop.f32.mrb[0].mxu0
        %v2657 = vadd.f32 0.0, %v2656
        %v2658 = vpop.f32.mrb[0].mxu0
        %v2659 = vpop.f32.mrb[0].mxu0
        %v2660 = vpop.f32.mrb[0].mxu0
        %2661 = vdwg.mxu0
        %vm2662 = vcmask 64512
        %v2663 = vsel %vm2662, %v1922, -inf
        %2664 = vmax.xlane.f32.xlu0 %v2663
        %v2665 = vpop.xlane.xlu0 %2664
        %v2666 = vsel %vm2662, %v1971, -inf
        %2667 = vmax.xlane.f32.xlu0 %v2666
        %v2668 = vpop.xlane.xlu0 %2667
        %v2669 = vsel %vm2662, %v2020, -inf
        %2670 = vmax.xlane.f32.xlu0 %v2669
        %v2671 = vpop.xlane.xlu0 %2670
        %v2672 = vsel %vm2662, %v2069, -inf
        %2673 = vmax.xlane.f32.xlu0 %v2672
        %v2674 = vpop.xlane.xlu0 %2673
        %v2675 = vsel %vm2662, %v2118, -inf
        %2676 = vmax.xlane.f32.xlu0 %v2675
        %v2677 = vpop.xlane.xlu0 %2676
        %v2678 = vsel %vm2662, %v2167, -inf
        %2679 = vmax.xlane.f32.xlu0 %v2678
        %v2680 = vpop.xlane.xlu0 %2679
        %v2681 = vsel %vm2662, %v2216, -inf
        %2682 = vmax.xlane.f32.xlu0 %v2681
        %v2683 = vpop.xlane.xlu0 %2682
        %v2684 = vsel %vm2662, %v2265, -inf
        %2685 = vmax.xlane.f32.xlu0 %v2684
        %v2686 = vpop.xlane.xlu0 %2685
        %v2687 = vsel %vm2662, %v2314, -inf
        %2688 = vmax.xlane.f32.xlu0 %v2687
        %v2689 = vpop.xlane.xlu0 %2688
        %v2690 = vsel %vm2662, %v2363, -inf
        %2691 = vmax.xlane.f32.xlu0 %v2690
        %v2692 = vpop.xlane.xlu0 %2691
        %v2693 = vsel %vm2662, %v2412, -inf
        %2694 = vmax.xlane.f32.xlu0 %v2693
        %v2695 = vpop.xlane.xlu0 %2694
        %v2696 = vsel %vm2662, %v2461, -inf
        %2697 = vmax.xlane.f32.xlu0 %v2696
        %v2698 = vpop.xlane.xlu0 %2697
        %v2699 = vsel %vm2662, %v2510, -inf
        %2700 = vmax.xlane.f32.xlu0 %v2699
        %v2701 = vpop.xlane.xlu0 %2700
        %v2702 = vsel %vm2662, %v2559, -inf
        %2703 = vmax.xlane.f32.xlu0 %v2702
        %v2704 = vpop.xlane.xlu0 %2703
        %v2705 = vsel %vm2662, %v2608, -inf
        %2706 = vmax.xlane.f32.xlu0 %v2705
        %v2707 = vpop.xlane.xlu0 %2706
        %v2708 = vsel %vm2662, %v2657, -inf
        %2709 = vmax.xlane.f32.xlu0 %v2708
        %v2710 = vpop.xlane.xlu0 %2709
        %v2711 = vsub.f32 %v1922, %v2665
        %v2712 = vsub.f32 %v1971, %v2668
        %v2713 = vsub.f32 %v2020, %v2671
        %v2714 = vsub.f32 %v2069, %v2674
        %v2715 = vsub.f32 %v2118, %v2677
        %v2716 = vsub.f32 %v2167, %v2680
        %v2717 = vsub.f32 %v2216, %v2683
        %v2718 = vsub.f32 %v2265, %v2686
        %v2719 = vsub.f32 %v2314, %v2689
        %v2720 = vsub.f32 %v2363, %v2692
        %v2721 = vsub.f32 %v2412, %v2695
        %v2722 = vsub.f32 %v2461, %v2698
        %v2723 = vsub.f32 %v2510, %v2701
        %v2724 = vsub.f32 %v2559, %v2704
        %v2725 = vsub.f32 %v2608, %v2707
        %v2726 = vsub.f32 %v2657, %v2710
        %v2727 = vmul.f32 %v2711, 1.442695
        %v2728 = vpow.pop %v2727
        %v2729 = vmul.f32 %v2712, 1.442695
        %v2730 = vpow.pop %v2729
        %v2731 = vmul.f32 %v2713, 1.442695
        %v2732 = vpow.pop %v2731
        %v2733 = vmul.f32 %v2714, 1.442695
        %v2734 = vpow.pop %v2733
        %v2735 = vmul.f32 %v2715, 1.442695
        %v2736 = vpow.pop %v2735
        %v2737 = vmul.f32 %v2716, 1.442695
        %v2738 = vpow.pop %v2737
        %v2739 = vmul.f32 %v2717, 1.442695
        %v2740 = vpow.pop %v2739
        %v2741 = vmul.f32 %v2718, 1.442695
        %v2742 = vpow.pop %v2741
        %v2743 = vmul.f32 %v2719, 1.442695
        %v2744 = vpow.pop %v2743
        %v2745 = vmul.f32 %v2720, 1.442695
        %v2746 = vpow.pop %v2745
        %v2747 = vmul.f32 %v2721, 1.442695
        %v2748 = vpow.pop %v2747
        %v2749 = vmul.f32 %v2722, 1.442695
        %v2750 = vpow.pop %v2749
        %v2751 = vmul.f32 %v2723, 1.442695
        %v2752 = vpow.pop %v2751
        %v2753 = vmul.f32 %v2724, 1.442695
        %v2754 = vpow.pop %v2753
        %v2755 = vmul.f32 %v2725, 1.442695
        %v2756 = vpow.pop %v2755
        %v2757 = vmul.f32 %v2726, 1.442695
        %v2758 = vpow.pop %v2757
        %v2759 = vsel %vm2662, %v2728, 0.0
        %2760 = vadd.xlane.f32.xlu0 %v2759
        %v2761 = vpop.xlane.xlu0 %2760
        %v2762 = vsel %vm2662, %v2730, 0.0
        %2763 = vadd.xlane.f32.xlu0 %v2762
        %v2764 = vpop.xlane.xlu0 %2763
        %v2765 = vsel %vm2662, %v2732, 0.0
        %2766 = vadd.xlane.f32.xlu0 %v2765
        %v2767 = vpop.xlane.xlu0 %2766
        %v2768 = vsel %vm2662, %v2734, 0.0
        %2769 = vadd.xlane.f32.xlu0 %v2768
        %v2770 = vpop.xlane.xlu0 %2769
        %v2771 = vsel %vm2662, %v2736, 0.0
        %2772 = vadd.xlane.f32.xlu0 %v2771
        %v2773 = vpop.xlane.xlu0 %2772
        %v2774 = vsel %vm2662, %v2738, 0.0
        %2775 = vadd.xlane.f32.xlu0 %v2774
        %v2776 = vpop.xlane.xlu0 %2775
        %v2777 = vsel %vm2662, %v2740, 0.0
        %2778 = vadd.xlane.f32.xlu0 %v2777
        %v2779 = vpop.xlane.xlu0 %2778
        %v2780 = vsel %vm2662, %v2742, 0.0
        %2781 = vadd.xlane.f32.xlu0 %v2780
        %v2782 = vpop.xlane.xlu0 %2781
        %v2783 = vsel %vm2662, %v2744, 0.0
        %2784 = vadd.xlane.f32.xlu0 %v2783
        %v2785 = vpop.xlane.xlu0 %2784
        %v2786 = vsel %vm2662, %v2746, 0.0
        %2787 = vadd.xlane.f32.xlu0 %v2786
        %v2788 = vpop.xlane.xlu0 %2787
        %v2789 = vsel %vm2662, %v2748, 0.0
        %2790 = vadd.xlane.f32.xlu0 %v2789
        %v2791 = vpop.xlane.xlu0 %2790
        %v2792 = vsel %vm2662, %v2750, 0.0
        %2793 = vadd.xlane.f32.xlu0 %v2792
        %v2794 = vpop.xlane.xlu0 %2793
        %v2795 = vsel %vm2662, %v2752, 0.0
        %2796 = vadd.xlane.f32.xlu0 %v2795
        %v2797 = vpop.xlane.xlu0 %2796
        %v2798 = vsel %vm2662, %v2754, 0.0
        %2799 = vadd.xlane.f32.xlu0 %v2798
        %v2800 = vpop.xlane.xlu0 %2799
        %v2801 = vsel %vm2662, %v2756, 0.0
        %2802 = vadd.xlane.f32.xlu0 %v2801
        %v2803 = vpop.xlane.xlu0 %2802
        %v2804 = vsel %vm2662, %v2758, 0.0
        %2805 = vadd.xlane.f32.xlu0 %v2804
        %v2806 = vpop.xlane.xlu0 %2805
        %v2807 = vrcp.pop %v2761
        %v2808 = vrcp.pop %v2764
        %v2809 = vrcp.pop %v2767
        %v2810 = vrcp.pop %v2770
        %v2811 = vrcp.pop %v2773
        %v2812 = vrcp.pop %v2776
        %v2813 = vrcp.pop %v2779
        %v2814 = vrcp.pop %v2782
        %v2815 = vrcp.pop %v2785
        %v2816 = vrcp.pop %v2788
        %v2817 = vrcp.pop %v2791
        %v2818 = vrcp.pop %v2794
        %v2819 = vrcp.pop %v2797
        %v2820 = vrcp.pop %v2800
        %v2821 = vrcp.pop %v2803
        %v2822 = vrcp.pop %v2806
        %v2823 = vmul.f32 %v2728, %v2807
        %v2824 = vmul.f32 %v2730, %v2808
        %v2825 = vmul.f32 %v2732, %v2809
        %v2826 = vmul.f32 %v2734, %v2810
        %v2827 = vmul.f32 %v2736, %v2811
        %v2828 = vmul.f32 %v2738, %v2812
        %v2829 = vmul.f32 %v2740, %v2813
        %v2830 = vmul.f32 %v2742, %v2814
        %v2831 = vmul.f32 %v2744, %v2815
        %v2832 = vmul.f32 %v2746, %v2816
        %v2833 = vmul.f32 %v2748, %v2817
        %v2834 = vmul.f32 %v2750, %v2818
        %v2835 = vmul.f32 %v2752, %v2819
        %v2836 = vmul.f32 %v2754, %v2820
        %v2837 = vmul.f32 %v2756, %v2821
        %v2838 = vmul.f32 %v2758, %v2822
        %v2839 = vpack.c.bf16 %v2823, %v2823
        %v2840 = vpack.c.bf16 %v2824, %v2824
        %v2841 = vpack.c.bf16 %v2825, %v2825
        %v2842 = vpack.c.bf16 %v2826, %v2826
        %v2843 = vpack.c.bf16 %v2827, %v2827
        %v2844 = vpack.c.bf16 %v2828, %v2828
        %v2845 = vpack.c.bf16 %v2829, %v2829
        %v2846 = vpack.c.bf16 %v2830, %v2830
        %v2847 = vpack.c.bf16 %v2831, %v2831
        %v2848 = vpack.c.bf16 %v2832, %v2832
        %v2849 = vpack.c.bf16 %v2833, %v2833
        %v2850 = vpack.c.bf16 %v2834, %v2834
        %v2851 = vpack.c.bf16 %v2835, %v2835
        %v2852 = vpack.c.bf16 %v2836, %v2836
        %v2853 = vpack.c.bf16 %v2837, %v2837
        %v2854 = vpack.c.bf16 %v2838, %v2838
        %2855 = vrot.lane.b32.xlu0 %v1862, 64
        %v2856 = vpop.permute.xlu0 %2855
        %v2858 = vsel %vm2662, %v2839, 0
        %vm2860 = vcmask 1043456
        %v2862 = vsel %vm2860, %v2856, 0
        %2864 = vmatprep.subr.bf16.mxu0 0
        %2865 = vmatpush1.bf16.msra.mxu0 %v2862
        %2866 = vmatprep.subr.bf16.mxu0 0
        %2867 = vmatpush1.bf16.msra.mxu0 0
        %2868 = vmatprep.subr.bf16.mxu0 0
        %2869 = vmatpush1.bf16.msra.mxu0 0
        %2870 = vmatprep.subr.bf16.mxu0 0
        %2871 = vmatpush1.bf16.msra.mxu0 0
        %2872 = vmatprep.subr.bf16.mxu0 0
        %2873 = vmatpush1.bf16.msra.mxu0 0
        %2874 = vmatprep.subr.bf16.mxu0 0
        %2875 = vmatpush1.bf16.msra.mxu0 0
        %2876 = vmatprep.subr.bf16.mxu0 0
        %2877 = vmatpush1.bf16.msra.mxu0 0
        %2878 = vmatprep.subr.bf16.mxu0 0
        %2879 = vmatpush1.bf16.msra.mxu0 0
        %2880 = vmatprep.subr.bf16.mxu0 0
        %2881 = vmatpush1.bf16.msra.mxu0 0
        %2882 = vmatprep.subr.bf16.mxu0 0
        %2883 = vmatpush1.bf16.msra.mxu0 0
        %2884 = vmatprep.subr.bf16.mxu0 0
        %2885 = vmatpush1.bf16.msra.mxu0 0
        %2886 = vmatprep.subr.bf16.mxu0 0
        %2887 = vmatpush1.bf16.msra.mxu0 0
        %2888 = vmatprep.subr.bf16.mxu0 0
        %2889 = vmatpush1.bf16.msra.mxu0 0
        %2890 = vmatprep.subr.bf16.mxu0 0
        %2891 = vmatpush1.bf16.msra.mxu0 0
        %2892 = vmatprep.subr.bf16.mxu0 0
        %2893 = vmatpush1.bf16.msra.mxu0 0
        %2894 = vmatprep.subr.bf16.mxu0 0
        %2895 = vmatpush1.bf16.msra.mxu0 0
        %2896 = vmatprep.mubr.bf16.mxu0 0
        %2897 = vmatmul.mubr.bf16.gmra.mrb[0].mxu0 %v2858
        %v2898 = vpop.f32.mrb[0].mxu0
        %v2899 = vadd.f32 0.0, %v2898
        %v2900 = vpop.f32.mrb[0].mxu0
        %v2901 = vpop.f32.mrb[0].mxu0
        %v2902 = vpop.f32.mrb[0].mxu0
        %2903 = vdwg.mxu0
        %2904 = vrot.lane.b32.xlu0 %v1863, 64
        %v2905 = vpop.permute.xlu0 %2904
        %v2907 = vsel %vm2662, %v2840, 0
        %v2910 = vsel %vm2860, %v2905, 0
        %2912 = vmatprep.subr.bf16.mxu0 0
        %2913 = vmatpush1.bf16.msra.mxu0 %v2910
        %2914 = vmatprep.subr.bf16.mxu0 0
        %2915 = vmatpush1.bf16.msra.mxu0 0
        %2916 = vmatprep.subr.bf16.mxu0 0
        %2917 = vmatpush1.bf16.msra.mxu0 0
        %2918 = vmatprep.subr.bf16.mxu0 0
        %2919 = vmatpush1.bf16.msra.mxu0 0
        %2920 = vmatprep.subr.bf16.mxu0 0
        %2921 = vmatpush1.bf16.msra.mxu0 0
        %2922 = vmatprep.subr.bf16.mxu0 0
        %2923 = vmatpush1.bf16.msra.mxu0 0
        %2924 = vmatprep.subr.bf16.mxu0 0
        %2925 = vmatpush1.bf16.msra.mxu0 0
        %2926 = vmatprep.subr.bf16.mxu0 0
        %2927 = vmatpush1.bf16.msra.mxu0 0
        %2928 = vmatprep.subr.bf16.mxu0 0
        %2929 = vmatpush1.bf16.msra.mxu0 0
        %2930 = vmatprep.subr.bf16.mxu0 0
        %2931 = vmatpush1.bf16.msra.mxu0 0
        %2932 = vmatprep.subr.bf16.mxu0 0
        %2933 = vmatpush1.bf16.msra.mxu0 0
        %2934 = vmatprep.subr.bf16.mxu0 0
        %2935 = vmatpush1.bf16.msra.mxu0 0
        %2936 = vmatprep.subr.bf16.mxu0 0
        %2937 = vmatpush1.bf16.msra.mxu0 0
        %2938 = vmatprep.subr.bf16.mxu0 0
        %2939 = vmatpush1.bf16.msra.mxu0 0
        %2940 = vmatprep.subr.bf16.mxu0 0
        %2941 = vmatpush1.bf16.msra.mxu0 0
        %2942 = vmatprep.subr.bf16.mxu0 0
        %2943 = vmatpush1.bf16.msra.mxu0 0
        %2944 = vmatprep.mubr.bf16.mxu0 0
        %2945 = vmatmul.mubr.bf16.gmra.mrb[0].mxu0 %v2907
        %v2946 = vpop.f32.mrb[0].mxu0
        %v2947 = vadd.f32 0.0, %v2946
        %v2948 = vpop.f32.mrb[0].mxu0
        %v2949 = vpop.f32.mrb[0].mxu0
        %v2950 = vpop.f32.mrb[0].mxu0
        %2951 = vdwg.mxu0
        %2952 = vrot.lane.b32.xlu0 %v1864, 64
        %v2953 = vpop.permute.xlu0 %2952
        %v2955 = vsel %vm2662, %v2841, 0
        %v2958 = vsel %vm2860, %v2953, 0
        %2960 = vmatprep.subr.bf16.mxu0 0
        %2961 = vmatpush1.bf16.msra.mxu0 %v2958
        %2962 = vmatprep.subr.bf16.mxu0 0
        %2963 = vmatpush1.bf16.msra.mxu0 0
        %2964 = vmatprep.subr.bf16.mxu0 0
        %2965 = vmatpush1.bf16.msra.mxu0 0
        %2966 = vmatprep.subr.bf16.mxu0 0
        %2967 = vmatpush1.bf16.msra.mxu0 0
        %2968 = vmatprep.subr.bf16.mxu0 0
        %2969 = vmatpush1.bf16.msra.mxu0 0
        %2970 = vmatprep.subr.bf16.mxu0 0
        %2971 = vmatpush1.bf16.msra.mxu0 0
        %2972 = vmatprep.subr.bf16.mxu0 0
        %2973 = vmatpush1.bf16.msra.mxu0 0
        %2974 = vmatprep.subr.bf16.mxu0 0
        %2975 = vmatpush1.bf16.msra.mxu0 0
        %2976 = vmatprep.subr.bf16.mxu0 0
        %2977 = vmatpush1.bf16.msra.mxu0 0
        %2978 = vmatprep.subr.bf16.mxu0 0
        %2979 = vmatpush1.bf16.msra.mxu0 0
        %2980 = vmatprep.subr.bf16.mxu0 0
        %2981 = vmatpush1.bf16.msra.mxu0 0
        %2982 = vmatprep.subr.bf16.mxu0 0
        %2983 = vmatpush1.bf16.msra.mxu0 0
        %2984 = vmatprep.subr.bf16.mxu0 0
        %2985 = vmatpush1.bf16.msra.mxu0 0
        %2986 = vmatprep.subr.bf16.mxu0 0
        %2987 = vmatpush1.bf16.msra.mxu0 0
        %2988 = vmatprep.subr.bf16.mxu0 0
        %2989 = vmatpush1.bf16.msra.mxu0 0
        %2990 = vmatprep.subr.bf16.mxu0 0
        %2991 = vmatpush1.bf16.msra.mxu0 0
        %2992 = vmatprep.mubr.bf16.mxu0 0
        %2993 = vmatmul.mubr.bf16.gmra.mrb[0].mxu0 %v2955
        %v2994 = vpop.f32.mrb[0].mxu0
        %v2995 = vadd.f32 0.0, %v2994
        %v2996 = vpop.f32.mrb[0].mxu0
        %v2997 = vpop.f32.mrb[0].mxu0
        %v2998 = vpop.f32.mrb[0].mxu0
        %2999 = vdwg.mxu0
        %3000 = vrot.lane.b32.xlu0 %v1865, 64
        %v3001 = vpop.permute.xlu0 %3000
        %v3003 = vsel %vm2662, %v2842, 0
        %v3006 = vsel %vm2860, %v3001, 0
        %3008 = vmatprep.subr.bf16.mxu0 0
        %3009 = vmatpush1.bf16.msra.mxu0 %v3006
        %3010 = vmatprep.subr.bf16.mxu0 0
        %3011 = vmatpush1.bf16.msra.mxu0 0
        %3012 = vmatprep.subr.bf16.mxu0 0
        %3013 = vmatpush1.bf16.msra.mxu0 0
        %3014 = vmatprep.subr.bf16.mxu0 0
        %3015 = vmatpush1.bf16.msra.mxu0 0
        %3016 = vmatprep.subr.bf16.mxu0 0
        %3017 = vmatpush1.bf16.msra.mxu0 0
        %3018 = vmatprep.subr.bf16.mxu0 0
        %3019 = vmatpush1.bf16.msra.mxu0 0
        %3020 = vmatprep.subr.bf16.mxu0 0
        %3021 = vmatpush1.bf16.msra.mxu0 0
        %3022 = vmatprep.subr.bf16.mxu0 0
        %3023 = vmatpush1.bf16.msra.mxu0 0
        %3024 = vmatprep.subr.bf16.mxu0 0
        %3025 = vmatpush1.bf16.msra.mxu0 0
        %3026 = vmatprep.subr.bf16.mxu0 0
        %3027 = vmatpush1.bf16.msra.mxu0 0
        %3028 = vmatprep.subr.bf16.mxu0 0
        %3029 = vmatpush1.bf16.msra.mxu0 0
        %3030 = vmatprep.subr.bf16.mxu0 0
        %3031 = vmatpush1.bf16.msra.mxu0 0
        %3032 = vmatprep.subr.bf16.mxu0 0
        %3033 = vmatpush1.bf16.msra.mxu0 0
        %3034 = vmatprep.subr.bf16.mxu0 0
        %3035 = vmatpush1.bf16.msra.mxu0 0
        %3036 = vmatprep.subr.bf16.mxu0 0
        %3037 = vmatpush1.bf16.msra.mxu0 0
        %3038 = vmatprep.subr.bf16.mxu0 0
        %3039 = vmatpush1.bf16.msra.mxu0 0
        %3040 = vmatprep.mubr.bf16.mxu0 0
        %3041 = vmatmul.mubr.bf16.gmra.mrb[0].mxu0 %v3003
        %v3042 = vpop.f32.mrb[0].mxu0
        %v3043 = vadd.f32 0.0, %v3042
        %v3044 = vpop.f32.mrb[0].mxu0
        %v3045 = vpop.f32.mrb[0].mxu0
        %v3046 = vpop.f32.mrb[0].mxu0
        %3047 = vdwg.mxu0
        %3048 = vrot.lane.b32.xlu0 %v1866, 64
        %v3049 = vpop.permute.xlu0 %3048
        %v3051 = vsel %vm2662, %v2843, 0
        %v3054 = vsel %vm2860, %v3049, 0
        %3056 = vmatprep.subr.bf16.mxu0 0
        %3057 = vmatpush1.bf16.msra.mxu0 %v3054
        %3058 = vmatprep.subr.bf16.mxu0 0
        %3059 = vmatpush1.bf16.msra.mxu0 0
        %3060 = vmatprep.subr.bf16.mxu0 0
        %3061 = vmatpush1.bf16.msra.mxu0 0
        %3062 = vmatprep.subr.bf16.mxu0 0
        %3063 = vmatpush1.bf16.msra.mxu0 0
        %3064 = vmatprep.subr.bf16.mxu0 0
        %3065 = vmatpush1.bf16.msra.mxu0 0
        %3066 = vmatprep.subr.bf16.mxu0 0
        %3067 = vmatpush1.bf16.msra.mxu0 0
        %3068 = vmatprep.subr.bf16.mxu0 0
        %3069 = vmatpush1.bf16.msra.mxu0 0
        %3070 = vmatprep.subr.bf16.mxu0 0
        %3071 = vmatpush1.bf16.msra.mxu0 0
        %3072 = vmatprep.subr.bf16.mxu0 0
        %3073 = vmatpush1.bf16.msra.mxu0 0
        %3074 = vmatprep.subr.bf16.mxu0 0
        %3075 = vmatpush1.bf16.msra.mxu0 0
        %3076 = vmatprep.subr.bf16.mxu0 0
        %3077 = vmatpush1.bf16.msra.mxu0 0
        %3078 = vmatprep.subr.bf16.mxu0 0
        %3079 = vmatpush1.bf16.msra.mxu0 0
        %3080 = vmatprep.subr.bf16.mxu0 0
        %3081 = vmatpush1.bf16.msra.mxu0 0
        %3082 = vmatprep.subr.bf16.mxu0 0
        %3083 = vmatpush1.bf16.msra.mxu0 0
        %3084 = vmatprep.subr.bf16.mxu0 0
        %3085 = vmatpush1.bf16.msra.mxu0 0
        %3086 = vmatprep.subr.bf16.mxu0 0
        %3087 = vmatpush1.bf16.msra.mxu0 0
        %3088 = vmatprep.mubr.bf16.mxu0 0
        %3089 = vmatmul.mubr.bf16.gmra.mrb[0].mxu0 %v3051
        %v3090 = vpop.f32.mrb[0].mxu0
        %v3091 = vadd.f32 0.0, %v3090
        %v3092 = vpop.f32.mrb[0].mxu0
        %v3093 = vpop.f32.mrb[0].mxu0
        %v3094 = vpop.f32.mrb[0].mxu0
        %3095 = vdwg.mxu0
        %3096 = vrot.lane.b32.xlu0 %v1867, 64
        %v3097 = vpop.permute.xlu0 %3096
        %v3099 = vsel %vm2662, %v2844, 0
        %v3102 = vsel %vm2860, %v3097, 0
        %3104 = vmatprep.subr.bf16.mxu0 0
        %3105 = vmatpush1.bf16.msra.mxu0 %v3102
        %3106 = vmatprep.subr.bf16.mxu0 0
        %3107 = vmatpush1.bf16.msra.mxu0 0
        %3108 = vmatprep.subr.bf16.mxu0 0
        %3109 = vmatpush1.bf16.msra.mxu0 0
        %3110 = vmatprep.subr.bf16.mxu0 0
        %3111 = vmatpush1.bf16.msra.mxu0 0
        %3112 = vmatprep.subr.bf16.mxu0 0
        %3113 = vmatpush1.bf16.msra.mxu0 0
        %3114 = vmatprep.subr.bf16.mxu0 0
        %3115 = vmatpush1.bf16.msra.mxu0 0
        %3116 = vmatprep.subr.bf16.mxu0 0
        %3117 = vmatpush1.bf16.msra.mxu0 0
        %3118 = vmatprep.subr.bf16.mxu0 0
        %3119 = vmatpush1.bf16.msra.mxu0 0
        %3120 = vmatprep.subr.bf16.mxu0 0
        %3121 = vmatpush1.bf16.msra.mxu0 0
        %3122 = vmatprep.subr.bf16.mxu0 0
        %3123 = vmatpush1.bf16.msra.mxu0 0
        %3124 = vmatprep.subr.bf16.mxu0 0
        %3125 = vmatpush1.bf16.msra.mxu0 0
        %3126 = vmatprep.subr.bf16.mxu0 0
        %3127 = vmatpush1.bf16.msra.mxu0 0
        %3128 = vmatprep.subr.bf16.mxu0 0
        %3129 = vmatpush1.bf16.msra.mxu0 0
        %3130 = vmatprep.subr.bf16.mxu0 0
        %3131 = vmatpush1.bf16.msra.mxu0 0
        %3132 = vmatprep.subr.bf16.mxu0 0
        %3133 = vmatpush1.bf16.msra.mxu0 0
        %3134 = vmatprep.subr.bf16.mxu0 0
        %3135 = vmatpush1.bf16.msra.mxu0 0
        %3136 = vmatprep.mubr.bf16.mxu0 0
        %3137 = vmatmul.mubr.bf16.gmra.mrb[0].mxu0 %v3099
        %v3138 = vpop.f32.mrb[0].mxu0
        %v3139 = vadd.f32 0.0, %v3138
        %v3140 = vpop.f32.mrb[0].mxu0
        %v3141 = vpop.f32.mrb[0].mxu0
        %v3142 = vpop.f32.mrb[0].mxu0
        %3143 = vdwg.mxu0
        %3144 = vrot.lane.b32.xlu0 %v1868, 64
        %v3145 = vpop.permute.xlu0 %3144
        %v3147 = vsel %vm2662, %v2845, 0
        %v3150 = vsel %vm2860, %v3145, 0
        %3152 = vmatprep.subr.bf16.mxu0 0
        %3153 = vmatpush1.bf16.msra.mxu0 %v3150
        %3154 = vmatprep.subr.bf16.mxu0 0
        %3155 = vmatpush1.bf16.msra.mxu0 0
        %3156 = vmatprep.subr.bf16.mxu0 0
        %3157 = vmatpush1.bf16.msra.mxu0 0
        %3158 = vmatprep.subr.bf16.mxu0 0
        %3159 = vmatpush1.bf16.msra.mxu0 0
        %3160 = vmatprep.subr.bf16.mxu0 0
        %3161 = vmatpush1.bf16.msra.mxu0 0
        %3162 = vmatprep.subr.bf16.mxu0 0
        %3163 = vmatpush1.bf16.msra.mxu0 0
        %3164 = vmatprep.subr.bf16.mxu0 0
        %3165 = vmatpush1.bf16.msra.mxu0 0
        %3166 = vmatprep.subr.bf16.mxu0 0
        %3167 = vmatpush1.bf16.msra.mxu0 0
        %3168 = vmatprep.subr.bf16.mxu0 0
        %3169 = vmatpush1.bf16.msra.mxu0 0
        %3170 = vmatprep.subr.bf16.mxu0 0
        %3171 = vmatpush1.bf16.msra.mxu0 0
        %3172 = vmatprep.subr.bf16.mxu0 0
        %3173 = vmatpush1.bf16.msra.mxu0 0
        %3174 = vmatprep.subr.bf16.mxu0 0
        %3175 = vmatpush1.bf16.msra.mxu0 0
        %3176 = vmatprep.subr.bf16.mxu0 0
        %3177 = vmatpush1.bf16.msra.mxu0 0
        %3178 = vmatprep.subr.bf16.mxu0 0
        %3179 = vmatpush1.bf16.msra.mxu0 0
        %3180 = vmatprep.subr.bf16.mxu0 0
        %3181 = vmatpush1.bf16.msra.mxu0 0
        %3182 = vmatprep.subr.bf16.mxu0 0
        %3183 = vmatpush1.bf16.msra.mxu0 0
        %3184 = vmatprep.mubr.bf16.mxu0 0
        %3185 = vmatmul.mubr.bf16.gmra.mrb[0].mxu0 %v3147
        %v3186 = vpop.f32.mrb[0].mxu0
        %v3187 = vadd.f32 0.0, %v3186
        %v3188 = vpop.f32.mrb[0].mxu0
        %v3189 = vpop.f32.mrb[0].mxu0
        %v3190 = vpop.f32.mrb[0].mxu0
        %3191 = vdwg.mxu0
        %3192 = vrot.lane.b32.xlu0 %v1869, 64
        %v3193 = vpop.permute.xlu0 %3192
        %v3195 = vsel %vm2662, %v2846, 0
        %v3198 = vsel %vm2860, %v3193, 0
        %3200 = vmatprep.subr.bf16.mxu0 0
        %3201 = vmatpush1.bf16.msra.mxu0 %v3198
        %3202 = vmatprep.subr.bf16.mxu0 0
        %3203 = vmatpush1.bf16.msra.mxu0 0
        %3204 = vmatprep.subr.bf16.mxu0 0
        %3205 = vmatpush1.bf16.msra.mxu0 0
        %3206 = vmatprep.subr.bf16.mxu0 0
        %3207 = vmatpush1.bf16.msra.mxu0 0
        %3208 = vmatprep.subr.bf16.mxu0 0
        %3209 = vmatpush1.bf16.msra.mxu0 0
        %3210 = vmatprep.subr.bf16.mxu0 0
        %3211 = vmatpush1.bf16.msra.mxu0 0
        %3212 = vmatprep.subr.bf16.mxu0 0
        %3213 = vmatpush1.bf16.msra.mxu0 0
        %3214 = vmatprep.subr.bf16.mxu0 0
        %3215 = vmatpush1.bf16.msra.mxu0 0
        %3216 = vmatprep.subr.bf16.mxu0 0
        %3217 = vmatpush1.bf16.msra.mxu0 0
        %3218 = vmatprep.subr.bf16.mxu0 0
        %3219 = vmatpush1.bf16.msra.mxu0 0
        %3220 = vmatprep.subr.bf16.mxu0 0
        %3221 = vmatpush1.bf16.msra.mxu0 0
        %3222 = vmatprep.subr.bf16.mxu0 0
        %3223 = vmatpush1.bf16.msra.mxu0 0
        %3224 = vmatprep.subr.bf16.mxu0 0
        %3225 = vmatpush1.bf16.msra.mxu0 0
        %3226 = vmatprep.subr.bf16.mxu0 0
        %3227 = vmatpush1.bf16.msra.mxu0 0
        %3228 = vmatprep.subr.bf16.mxu0 0
        %3229 = vmatpush1.bf16.msra.mxu0 0
        %3230 = vmatprep.subr.bf16.mxu0 0
        %3231 = vmatpush1.bf16.msra.mxu0 0
        %3232 = vmatprep.mubr.bf16.mxu0 0
        %3233 = vmatmul.mubr.bf16.gmra.mrb[0].mxu0 %v3195
        %v3234 = vpop.f32.mrb[0].mxu0
        %v3235 = vadd.f32 0.0, %v3234
        %v3236 = vpop.f32.mrb[0].mxu0
        %v3237 = vpop.f32.mrb[0].mxu0
        %v3238 = vpop.f32.mrb[0].mxu0
        %3239 = vdwg.mxu0
        %3240 = vrot.lane.b32.xlu0 %v1870, 64
        %v3241 = vpop.permute.xlu0 %3240
        %v3243 = vsel %vm2662, %v2847, 0
        %v3246 = vsel %vm2860, %v3241, 0
        %3248 = vmatprep.subr.bf16.mxu0 0
        %3249 = vmatpush1.bf16.msra.mxu0 %v3246
        %3250 = vmatprep.subr.bf16.mxu0 0
        %3251 = vmatpush1.bf16.msra.mxu0 0
        %3252 = vmatprep.subr.bf16.mxu0 0
        %3253 = vmatpush1.bf16.msra.mxu0 0
        %3254 = vmatprep.subr.bf16.mxu0 0
        %3255 = vmatpush1.bf16.msra.mxu0 0
        %3256 = vmatprep.subr.bf16.mxu0 0
        %3257 = vmatpush1.bf16.msra.mxu0 0
        %3258 = vmatprep.subr.bf16.mxu0 0
        %3259 = vmatpush1.bf16.msra.mxu0 0
        %3260 = vmatprep.subr.bf16.mxu0 0
        %3261 = vmatpush1.bf16.msra.mxu0 0
        %3262 = vmatprep.subr.bf16.mxu0 0
        %3263 = vmatpush1.bf16.msra.mxu0 0
        %3264 = vmatprep.subr.bf16.mxu0 0
        %3265 = vmatpush1.bf16.msra.mxu0 0
        %3266 = vmatprep.subr.bf16.mxu0 0
        %3267 = vmatpush1.bf16.msra.mxu0 0
        %3268 = vmatprep.subr.bf16.mxu0 0
        %3269 = vmatpush1.bf16.msra.mxu0 0
        %3270 = vmatprep.subr.bf16.mxu0 0
        %3271 = vmatpush1.bf16.msra.mxu0 0
        %3272 = vmatprep.subr.bf16.mxu0 0
        %3273 = vmatpush1.bf16.msra.mxu0 0
        %3274 = vmatprep.subr.bf16.mxu0 0
        %3275 = vmatpush1.bf16.msra.mxu0 0
        %3276 = vmatprep.subr.bf16.mxu0 0
        %3277 = vmatpush1.bf16.msra.mxu0 0
        %3278 = vmatprep.subr.bf16.mxu0 0
        %3279 = vmatpush1.bf16.msra.mxu0 0
        %3280 = vmatprep.mubr.bf16.mxu0 0
        %3281 = vmatmul.mubr.bf16.gmra.mrb[0].mxu0 %v3243
        %v3282 = vpop.f32.mrb[0].mxu0
        %v3283 = vadd.f32 0.0, %v3282
        %v3284 = vpop.f32.mrb[0].mxu0
        %v3285 = vpop.f32.mrb[0].mxu0
        %v3286 = vpop.f32.mrb[0].mxu0
        %3287 = vdwg.mxu0
        %3288 = vrot.lane.b32.xlu0 %v1871, 64
        %v3289 = vpop.permute.xlu0 %3288
        %v3291 = vsel %vm2662, %v2848, 0
        %v3294 = vsel %vm2860, %v3289, 0
        %3296 = vmatprep.subr.bf16.mxu0 0
        %3297 = vmatpush1.bf16.msra.mxu0 %v3294
        %3298 = vmatprep.subr.bf16.mxu0 0
        %3299 = vmatpush1.bf16.msra.mxu0 0
        %3300 = vmatprep.subr.bf16.mxu0 0
        %3301 = vmatpush1.bf16.msra.mxu0 0
        %3302 = vmatprep.subr.bf16.mxu0 0
        %3303 = vmatpush1.bf16.msra.mxu0 0
        %3304 = vmatprep.subr.bf16.mxu0 0
        %3305 = vmatpush1.bf16.msra.mxu0 0
        %3306 = vmatprep.subr.bf16.mxu0 0
        %3307 = vmatpush1.bf16.msra.mxu0 0
        %3308 = vmatprep.subr.bf16.mxu0 0
        %3309 = vmatpush1.bf16.msra.mxu0 0
        %3310 = vmatprep.subr.bf16.mxu0 0
        %3311 = vmatpush1.bf16.msra.mxu0 0
        %3312 = vmatprep.subr.bf16.mxu0 0
        %3313 = vmatpush1.bf16.msra.mxu0 0
        %3314 = vmatprep.subr.bf16.mxu0 0
        %3315 = vmatpush1.bf16.msra.mxu0 0
        %3316 = vmatprep.subr.bf16.mxu0 0
        %3317 = vmatpush1.bf16.msra.mxu0 0
        %3318 = vmatprep.subr.bf16.mxu0 0
        %3319 = vmatpush1.bf16.msra.mxu0 0
        %3320 = vmatprep.subr.bf16.mxu0 0
        %3321 = vmatpush1.bf16.msra.mxu0 0
        %3322 = vmatprep.subr.bf16.mxu0 0
        %3323 = vmatpush1.bf16.msra.mxu0 0
        %3324 = vmatprep.subr.bf16.mxu0 0
        %3325 = vmatpush1.bf16.msra.mxu0 0
        %3326 = vmatprep.subr.bf16.mxu0 0
        %3327 = vmatpush1.bf16.msra.mxu0 0
        %3328 = vmatprep.mubr.bf16.mxu0 0
        %3329 = vmatmul.mubr.bf16.gmra.mrb[0].mxu0 %v3291
        %v3330 = vpop.f32.mrb[0].mxu0
        %v3331 = vadd.f32 0.0, %v3330
        %v3332 = vpop.f32.mrb[0].mxu0
        %v3333 = vpop.f32.mrb[0].mxu0
        %v3334 = vpop.f32.mrb[0].mxu0
        %3335 = vdwg.mxu0
        %3336 = vrot.lane.b32.xlu0 %v1872, 64
        %v3337 = vpop.permute.xlu0 %3336
        %v3339 = vsel %vm2662, %v2849, 0
        %v3342 = vsel %vm2860, %v3337, 0
        %3344 = vmatprep.subr.bf16.mxu0 0
        %3345 = vmatpush1.bf16.msra.mxu0 %v3342
        %3346 = vmatprep.subr.bf16.mxu0 0
        %3347 = vmatpush1.bf16.msra.mxu0 0
        %3348 = vmatprep.subr.bf16.mxu0 0
        %3349 = vmatpush1.bf16.msra.mxu0 0
        %3350 = vmatprep.subr.bf16.mxu0 0
        %3351 = vmatpush1.bf16.msra.mxu0 0
        %3352 = vmatprep.subr.bf16.mxu0 0
        %3353 = vmatpush1.bf16.msra.mxu0 0
        %3354 = vmatprep.subr.bf16.mxu0 0
        %3355 = vmatpush1.bf16.msra.mxu0 0
        %3356 = vmatprep.subr.bf16.mxu0 0
        %3357 = vmatpush1.bf16.msra.mxu0 0
        %3358 = vmatprep.subr.bf16.mxu0 0
        %3359 = vmatpush1.bf16.msra.mxu0 0
        %3360 = vmatprep.subr.bf16.mxu0 0
        %3361 = vmatpush1.bf16.msra.mxu0 0
        %3362 = vmatprep.subr.bf16.mxu0 0
        %3363 = vmatpush1.bf16.msra.mxu0 0
        %3364 = vmatprep.subr.bf16.mxu0 0
        %3365 = vmatpush1.bf16.msra.mxu0 0
        %3366 = vmatprep.subr.bf16.mxu0 0
        %3367 = vmatpush1.bf16.msra.mxu0 0
        %3368 = vmatprep.subr.bf16.mxu0 0
        %3369 = vmatpush1.bf16.msra.mxu0 0
        %3370 = vmatprep.subr.bf16.mxu0 0
        %3371 = vmatpush1.bf16.msra.mxu0 0
        %3372 = vmatprep.subr.bf16.mxu0 0
        %3373 = vmatpush1.bf16.msra.mxu0 0
        %3374 = vmatprep.subr.bf16.mxu0 0
        %3375 = vmatpush1.bf16.msra.mxu0 0
        %3376 = vmatprep.mubr.bf16.mxu0 0
        %3377 = vmatmul.mubr.bf16.gmra.mrb[0].mxu0 %v3339
        %v3378 = vpop.f32.mrb[0].mxu0
        %v3379 = vadd.f32 0.0, %v3378
        %v3380 = vpop.f32.mrb[0].mxu0
        %v3381 = vpop.f32.mrb[0].mxu0
        %v3382 = vpop.f32.mrb[0].mxu0
        %3383 = vdwg.mxu0
        %3384 = vrot.lane.b32.xlu0 %v1873, 64
        %v3385 = vpop.permute.xlu0 %3384
        %v3387 = vsel %vm2662, %v2850, 0
        %v3390 = vsel %vm2860, %v3385, 0
        %3392 = vmatprep.subr.bf16.mxu0 0
        %3393 = vmatpush1.bf16.msra.mxu0 %v3390
        %3394 = vmatprep.subr.bf16.mxu0 0
        %3395 = vmatpush1.bf16.msra.mxu0 0
        %3396 = vmatprep.subr.bf16.mxu0 0
        %3397 = vmatpush1.bf16.msra.mxu0 0
        %3398 = vmatprep.subr.bf16.mxu0 0
        %3399 = vmatpush1.bf16.msra.mxu0 0
        %3400 = vmatprep.subr.bf16.mxu0 0
        %3401 = vmatpush1.bf16.msra.mxu0 0
        %3402 = vmatprep.subr.bf16.mxu0 0
        %3403 = vmatpush1.bf16.msra.mxu0 0
        %3404 = vmatprep.subr.bf16.mxu0 0
        %3405 = vmatpush1.bf16.msra.mxu0 0
        %3406 = vmatprep.subr.bf16.mxu0 0
        %3407 = vmatpush1.bf16.msra.mxu0 0
        %3408 = vmatprep.subr.bf16.mxu0 0
        %3409 = vmatpush1.bf16.msra.mxu0 0
        %3410 = vmatprep.subr.bf16.mxu0 0
        %3411 = vmatpush1.bf16.msra.mxu0 0
        %3412 = vmatprep.subr.bf16.mxu0 0
        %3413 = vmatpush1.bf16.msra.mxu0 0
        %3414 = vmatprep.subr.bf16.mxu0 0
        %3415 = vmatpush1.bf16.msra.mxu0 0
        %3416 = vmatprep.subr.bf16.mxu0 0
        %3417 = vmatpush1.bf16.msra.mxu0 0
        %3418 = vmatprep.subr.bf16.mxu0 0
        %3419 = vmatpush1.bf16.msra.mxu0 0
        %3420 = vmatprep.subr.bf16.mxu0 0
        %3421 = vmatpush1.bf16.msra.mxu0 0
        %3422 = vmatprep.subr.bf16.mxu0 0
        %3423 = vmatpush1.bf16.msra.mxu0 0
        %3424 = vmatprep.mubr.bf16.mxu0 0
        %3425 = vmatmul.mubr.bf16.gmra.mrb[0].mxu0 %v3387
        %v3426 = vpop.f32.mrb[0].mxu0
        %v3427 = vadd.f32 0.0, %v3426
        %v3428 = vpop.f32.mrb[0].mxu0
        %v3429 = vpop.f32.mrb[0].mxu0
        %v3430 = vpop.f32.mrb[0].mxu0
        %3431 = vdwg.mxu0
        %3432 = vrot.lane.b32.xlu0 %v1874, 64
        %v3433 = vpop.permute.xlu0 %3432
        %v3435 = vsel %vm2662, %v2851, 0
        %v3438 = vsel %vm2860, %v3433, 0
        %3440 = vmatprep.subr.bf16.mxu0 0
        %3441 = vmatpush1.bf16.msra.mxu0 %v3438
        %3442 = vmatprep.subr.bf16.mxu0 0
        %3443 = vmatpush1.bf16.msra.mxu0 0
        %3444 = vmatprep.subr.bf16.mxu0 0
        %3445 = vmatpush1.bf16.msra.mxu0 0
        %3446 = vmatprep.subr.bf16.mxu0 0
        %3447 = vmatpush1.bf16.msra.mxu0 0
        %3448 = vmatprep.subr.bf16.mxu0 0
        %3449 = vmatpush1.bf16.msra.mxu0 0
        %3450 = vmatprep.subr.bf16.mxu0 0
        %3451 = vmatpush1.bf16.msra.mxu0 0
        %3452 = vmatprep.subr.bf16.mxu0 0
        %3453 = vmatpush1.bf16.msra.mxu0 0
        %3454 = vmatprep.subr.bf16.mxu0 0
        %3455 = vmatpush1.bf16.msra.mxu0 0
        %3456 = vmatprep.subr.bf16.mxu0 0
        %3457 = vmatpush1.bf16.msra.mxu0 0
        %3458 = vmatprep.subr.bf16.mxu0 0
        %3459 = vmatpush1.bf16.msra.mxu0 0
        %3460 = vmatprep.subr.bf16.mxu0 0
        %3461 = vmatpush1.bf16.msra.mxu0 0
        %3462 = vmatprep.subr.bf16.mxu0 0
        %3463 = vmatpush1.bf16.msra.mxu0 0
        %3464 = vmatprep.subr.bf16.mxu0 0
        %3465 = vmatpush1.bf16.msra.mxu0 0
        %3466 = vmatprep.subr.bf16.mxu0 0
        %3467 = vmatpush1.bf16.msra.mxu0 0
        %3468 = vmatprep.subr.bf16.mxu0 0
        %3469 = vmatpush1.bf16.msra.mxu0 0
        %3470 = vmatprep.subr.bf16.mxu0 0
        %3471 = vmatpush1.bf16.msra.mxu0 0
        %3472 = vmatprep.mubr.bf16.mxu0 0
        %3473 = vmatmul.mubr.bf16.gmra.mrb[0].mxu0 %v3435
        %v3474 = vpop.f32.mrb[0].mxu0
        %v3475 = vadd.f32 0.0, %v3474
        %v3476 = vpop.f32.mrb[0].mxu0
        %v3477 = vpop.f32.mrb[0].mxu0
        %v3478 = vpop.f32.mrb[0].mxu0
        %3479 = vdwg.mxu0
        %3480 = vrot.lane.b32.xlu0 %v1875, 64
        %v3481 = vpop.permute.xlu0 %3480
        %v3483 = vsel %vm2662, %v2852, 0
        %v3486 = vsel %vm2860, %v3481, 0
        %3488 = vmatprep.subr.bf16.mxu0 0
        %3489 = vmatpush1.bf16.msra.mxu0 %v3486
        %3490 = vmatprep.subr.bf16.mxu0 0
        %3491 = vmatpush1.bf16.msra.mxu0 0
        %3492 = vmatprep.subr.bf16.mxu0 0
        %3493 = vmatpush1.bf16.msra.mxu0 0
        %3494 = vmatprep.subr.bf16.mxu0 0
        %3495 = vmatpush1.bf16.msra.mxu0 0
        %3496 = vmatprep.subr.bf16.mxu0 0
        %3497 = vmatpush1.bf16.msra.mxu0 0
        %3498 = vmatprep.subr.bf16.mxu0 0
        %3499 = vmatpush1.bf16.msra.mxu0 0
        %3500 = vmatprep.subr.bf16.mxu0 0
        %3501 = vmatpush1.bf16.msra.mxu0 0
        %3502 = vmatprep.subr.bf16.mxu0 0
        %3503 = vmatpush1.bf16.msra.mxu0 0
        %3504 = vmatprep.subr.bf16.mxu0 0
        %3505 = vmatpush1.bf16.msra.mxu0 0
        %3506 = vmatprep.subr.bf16.mxu0 0
        %3507 = vmatpush1.bf16.msra.mxu0 0
        %3508 = vmatprep.subr.bf16.mxu0 0
        %3509 = vmatpush1.bf16.msra.mxu0 0
        %3510 = vmatprep.subr.bf16.mxu0 0
        %3511 = vmatpush1.bf16.msra.mxu0 0
        %3512 = vmatprep.subr.bf16.mxu0 0
        %3513 = vmatpush1.bf16.msra.mxu0 0
        %3514 = vmatprep.subr.bf16.mxu0 0
        %3515 = vmatpush1.bf16.msra.mxu0 0
        %3516 = vmatprep.subr.bf16.mxu0 0
        %3517 = vmatpush1.bf16.msra.mxu0 0
        %3518 = vmatprep.subr.bf16.mxu0 0
        %3519 = vmatpush1.bf16.msra.mxu0 0
        %3520 = vmatprep.mubr.bf16.mxu0 0
        %3521 = vmatmul.mubr.bf16.gmra.mrb[0].mxu0 %v3483
        %v3522 = vpop.f32.mrb[0].mxu0
        %v3523 = vadd.f32 0.0, %v3522
        %v3524 = vpop.f32.mrb[0].mxu0
        %v3525 = vpop.f32.mrb[0].mxu0
        %v3526 = vpop.f32.mrb[0].mxu0
        %3527 = vdwg.mxu0
        %3528 = vrot.lane.b32.xlu0 %v1876, 64
        %v3529 = vpop.permute.xlu0 %3528
        %v3531 = vsel %vm2662, %v2853, 0
        %v3534 = vsel %vm2860, %v3529, 0
        %3536 = vmatprep.subr.bf16.mxu0 0
        %3537 = vmatpush1.bf16.msra.mxu0 %v3534
        %3538 = vmatprep.subr.bf16.mxu0 0
        %3539 = vmatpush1.bf16.msra.mxu0 0
        %3540 = vmatprep.subr.bf16.mxu0 0
        %3541 = vmatpush1.bf16.msra.mxu0 0
        %3542 = vmatprep.subr.bf16.mxu0 0
        %3543 = vmatpush1.bf16.msra.mxu0 0
        %3544 = vmatprep.subr.bf16.mxu0 0
        %3545 = vmatpush1.bf16.msra.mxu0 0
        %3546 = vmatprep.subr.bf16.mxu0 0
        %3547 = vmatpush1.bf16.msra.mxu0 0
        %3548 = vmatprep.subr.bf16.mxu0 0
        %3549 = vmatpush1.bf16.msra.mxu0 0
        %3550 = vmatprep.subr.bf16.mxu0 0
        %3551 = vmatpush1.bf16.msra.mxu0 0
        %3552 = vmatprep.subr.bf16.mxu0 0
        %3553 = vmatpush1.bf16.msra.mxu0 0
        %3554 = vmatprep.subr.bf16.mxu0 0
        %3555 = vmatpush1.bf16.msra.mxu0 0
        %3556 = vmatprep.subr.bf16.mxu0 0
        %3557 = vmatpush1.bf16.msra.mxu0 0
        %3558 = vmatprep.subr.bf16.mxu0 0
        %3559 = vmatpush1.bf16.msra.mxu0 0
        %3560 = vmatprep.subr.bf16.mxu0 0
        %3561 = vmatpush1.bf16.msra.mxu0 0
        %3562 = vmatprep.subr.bf16.mxu0 0
        %3563 = vmatpush1.bf16.msra.mxu0 0
        %3564 = vmatprep.subr.bf16.mxu0 0
        %3565 = vmatpush1.bf16.msra.mxu0 0
        %3566 = vmatprep.subr.bf16.mxu0 0
        %3567 = vmatpush1.bf16.msra.mxu0 0
        %3568 = vmatprep.mubr.bf16.mxu0 0
        %3569 = vmatmul.mubr.bf16.gmra.mrb[0].mxu0 %v3531
        %v3570 = vpop.f32.mrb[0].mxu0
        %v3571 = vadd.f32 0.0, %v3570
        %v3572 = vpop.f32.mrb[0].mxu0
        %v3573 = vpop.f32.mrb[0].mxu0
        %v3574 = vpop.f32.mrb[0].mxu0
        %3575 = vdwg.mxu0
        %3576 = vrot.lane.b32.xlu0 %v1877, 64
        %v3577 = vpop.permute.xlu0 %3576
        %v3579 = vsel %vm2662, %v2854, 0
        %v3582 = vsel %vm2860, %v3577, 0
        %3584 = vmatprep.subr.bf16.mxu0 0
        %3585 = vmatpush1.bf16.msra.mxu0 %v3582
        %3586 = vmatprep.subr.bf16.mxu0 0
        %3587 = vmatpush1.bf16.msra.mxu0 0
        %3588 = vmatprep.subr.bf16.mxu0 0
        %3589 = vmatpush1.bf16.msra.mxu0 0
        %3590 = vmatprep.subr.bf16.mxu0 0
        %3591 = vmatpush1.bf16.msra.mxu0 0
        %3592 = vmatprep.subr.bf16.mxu0 0
        %3593 = vmatpush1.bf16.msra.mxu0 0
        %3594 = vmatprep.subr.bf16.mxu0 0
        %3595 = vmatpush1.bf16.msra.mxu0 0
        %3596 = vmatprep.subr.bf16.mxu0 0
        %3597 = vmatpush1.bf16.msra.mxu0 0
        %3598 = vmatprep.subr.bf16.mxu0 0
        %3599 = vmatpush1.bf16.msra.mxu0 0
        %3600 = vmatprep.subr.bf16.mxu0 0
        %3601 = vmatpush1.bf16.msra.mxu0 0
        %3602 = vmatprep.subr.bf16.mxu0 0
        %3603 = vmatpush1.bf16.msra.mxu0 0
        %3604 = vmatprep.subr.bf16.mxu0 0
        %3605 = vmatpush1.bf16.msra.mxu0 0
        %3606 = vmatprep.subr.bf16.mxu0 0
        %3607 = vmatpush1.bf16.msra.mxu0 0
        %3608 = vmatprep.subr.bf16.mxu0 0
        %3609 = vmatpush1.bf16.msra.mxu0 0
        %3610 = vmatprep.subr.bf16.mxu0 0
        %3611 = vmatpush1.bf16.msra.mxu0 0
        %3612 = vmatprep.subr.bf16.mxu0 0
        %3613 = vmatpush1.bf16.msra.mxu0 0
        %3614 = vmatprep.subr.bf16.mxu0 0
        %3615 = vmatpush1.bf16.msra.mxu0 0
        %3616 = vmatprep.mubr.bf16.mxu0 0
        %3617 = vmatmul.mubr.bf16.gmra.mrb[0].mxu0 %v3579
        %v3618 = vpop.f32.mrb[0].mxu0
        %v3619 = vadd.f32 0.0, %v3618
        %v3620 = vpop.f32.mrb[0].mxu0
        %v3621 = vpop.f32.mrb[0].mxu0
        %v3622 = vpop.f32.mrb[0].mxu0
        %3623 = vdwg.mxu0
        %v3624 = vpack.c.bf16 %v2947, %v2899
        %v3625 = vpack.c.bf16 %v3043, %v2995
        %v3626 = vpack.c.bf16 %v3139, %v3091
        %v3627 = vpack.c.bf16 %v3235, %v3187
        %v3628 = vpack.c.bf16 %v3331, %v3283
        %v3629 = vpack.c.bf16 %v3427, %v3379
        %v3630 = vpack.c.bf16 %v3523, %v3475
        %v3631 = vpack.c.bf16 %v3619, %v3571
        %v3632 = vld [vmem:[%s914] sm:$0xf]
        %v3633 = vld [vmem:[%s914 + $0x4] sm:$0xf]
        %v3634 = vld [vmem:[%s914 + $0x8] sm:$0xf]
        %v3635 = vld [vmem:[%s914 + $0xc] sm:$0xf]
        %v3636 = vld [vmem:[%s922] sm:$0x1]
        %v3638 = vlaneseq
        %v3639 = vshrl.u32 %v3638, 7
        %v3640 = vsub.s32 0, %v3639
        %v3641 = vrot.slane %v3636, %v3640
        %v3647 = vunpack.c.l.b16 %v3632
        %v3648 = vunpack.c.l.b16 %v3633
        %v3649 = vunpack.c.l.b16 %v3634
        %v3650 = vunpack.c.l.b16 %v3635
        %v3651 = vpack.c.b16 %v3648, %v3647
        %v3652 = vpack.c.b16 %v3650, %v3649
        %v3656 = vsel %vm1191, %v3624, 0
        %v3659 = vsel %vm1191, %v3625, 0
        %v3662 = vsel %vm1191, %v3626, 0
        %v3665 = vsel %vm1191, %v3627, 0
        %v3668 = vsel %vm1191, %v3628, 0
        %v3671 = vsel %vm1191, %v3629, 0
        %v3674 = vsel %vm1191, %v3630, 0
        %v3677 = vsel %vm1191, %v3631, 0
        %3679 = vmatprep.subr.bf16.mxu0 0
        %3680 = vmatpush1.bf16.msra.mxu0 %v3651
        %3681 = vmatprep.subr.bf16.mxu0 0
        %3682 = vmatpush1.bf16.msra.mxu0 %v3652
        %3683 = vmatprep.subr.bf16.mxu0 0
        %3684 = vmatpush1.bf16.msra.mxu0 0
        %3685 = vmatprep.subr.bf16.mxu0 0
        %3686 = vmatpush1.bf16.msra.mxu0 0
        %3687 = vmatprep.subr.bf16.mxu0 0
        %3688 = vmatpush1.bf16.msra.mxu0 0
        %3689 = vmatprep.subr.bf16.mxu0 0
        %3690 = vmatpush1.bf16.msra.mxu0 0
        %3691 = vmatprep.subr.bf16.mxu0 0
        %3692 = vmatpush1.bf16.msra.mxu0 0
        %3693 = vmatprep.subr.bf16.mxu0 0
        %3694 = vmatpush1.bf16.msra.mxu0 0
        %3695 = vmatprep.subr.bf16.mxu0 0
        %3696 = vmatpush1.bf16.msra.mxu0 0
        %3697 = vmatprep.subr.bf16.mxu0 0
        %3698 = vmatpush1.bf16.msra.mxu0 0
        %3699 = vmatprep.subr.bf16.mxu0 0
        %3700 = vmatpush1.bf16.msra.mxu0 0
        %3701 = vmatprep.subr.bf16.mxu0 0
        %3702 = vmatpush1.bf16.msra.mxu0 0
        %3703 = vmatprep.subr.bf16.mxu0 0
        %3704 = vmatpush1.bf16.msra.mxu0 0
        %3705 = vmatprep.subr.bf16.mxu0 0
        %3706 = vmatpush1.bf16.msra.mxu0 0
        %3707 = vmatprep.subr.bf16.mxu0 0
        %3708 = vmatpush1.bf16.msra.mxu0 0
        %3709 = vmatprep.subr.bf16.mxu0 0
        %3710 = vmatpush1.bf16.msra.mxu0 0
        %3711 = vmatprep.mubr.bf16.mxu0 0
        %3712 = vmatmul.mubr.bf16.gmra.mrb[0].mxu0 %v3656
        %v3713 = vpop.f32.mrb[0].mxu0
        %v3714 = vadd.f32 %v3641, %v3713
        %v3715 = vpop.f32.mrb[0].mxu0
        %v3716 = vpop.f32.mrb[0].mxu0
        %v3717 = vadd.f32 %v3641, %v3716
        %v3718 = vpop.f32.mrb[0].mxu0
        %3719 = vmatprep.mubr.bf16.mxu0 0
        %3720 = vmatmul.mubr.bf16.gmra.mrb[0].mxu0 %v3659
        %v3721 = vpop.f32.mrb[0].mxu0
        %v3722 = vadd.f32 %v3641, %v3721
        %v3723 = vpop.f32.mrb[0].mxu0
        %v3724 = vpop.f32.mrb[0].mxu0
        %v3725 = vadd.f32 %v3641, %v3724
        %v3726 = vpop.f32.mrb[0].mxu0
        %3727 = vmatprep.mubr.bf16.mxu0 0
        %3728 = vmatmul.mubr.bf16.gmra.mrb[0].mxu0 %v3662
        %v3729 = vpop.f32.mrb[0].mxu0
        %v3730 = vadd.f32 %v3641, %v3729
        %v3731 = vpop.f32.mrb[0].mxu0
        %v3732 = vpop.f32.mrb[0].mxu0
        %v3733 = vadd.f32 %v3641, %v3732
        %v3734 = vpop.f32.mrb[0].mxu0
        %3735 = vmatprep.mubr.bf16.mxu0 0
        %3736 = vmatmul.mubr.bf16.gmra.mrb[0].mxu0 %v3665
        %v3737 = vpop.f32.mrb[0].mxu0
        %v3738 = vadd.f32 %v3641, %v3737
        %v3739 = vpop.f32.mrb[0].mxu0
        %v3740 = vpop.f32.mrb[0].mxu0
        %v3741 = vadd.f32 %v3641, %v3740
        %v3742 = vpop.f32.mrb[0].mxu0
        %3743 = vmatprep.mubr.bf16.mxu0 0
        %3744 = vmatmul.mubr.bf16.gmra.mrb[0].mxu0 %v3668
        %v3745 = vpop.f32.mrb[0].mxu0
        %v3746 = vadd.f32 %v3641, %v3745
        %v3747 = vpop.f32.mrb[0].mxu0
        %v3748 = vpop.f32.mrb[0].mxu0
        %v3749 = vadd.f32 %v3641, %v3748
        %v3750 = vpop.f32.mrb[0].mxu0
        %3751 = vmatprep.mubr.bf16.mxu0 0
        %3752 = vmatmul.mubr.bf16.gmra.mrb[0].mxu0 %v3671
        %v3753 = vpop.f32.mrb[0].mxu0
        %v3754 = vadd.f32 %v3641, %v3753
        %v3755 = vpop.f32.mrb[0].mxu0
        %v3756 = vpop.f32.mrb[0].mxu0
        %v3757 = vadd.f32 %v3641, %v3756
        %v3758 = vpop.f32.mrb[0].mxu0
        %3759 = vmatprep.mubr.bf16.mxu0 0
        %3760 = vmatmul.mubr.bf16.gmra.mrb[0].mxu0 %v3674
        %v3761 = vpop.f32.mrb[0].mxu0
        %v3762 = vadd.f32 %v3641, %v3761
        %v3763 = vpop.f32.mrb[0].mxu0
        %v3764 = vpop.f32.mrb[0].mxu0
        %v3765 = vadd.f32 %v3641, %v3764
        %v3766 = vpop.f32.mrb[0].mxu0
        %3767 = vmatprep.mubr.bf16.mxu0 0
        %3768 = vmatmul.mubr.bf16.gmra.mrb[0].mxu0 %v3677
        %v3769 = vpop.f32.mrb[0].mxu0
        %v3770 = vadd.f32 %v3641, %v3769
        %v3771 = vpop.f32.mrb[0].mxu0
        %v3772 = vpop.f32.mrb[0].mxu0
        %v3773 = vadd.f32 %v3641, %v3772
        %v3774 = vpop.f32.mrb[0].mxu0
        %3775 = vdwg.mxu0
        %v3776 = vld [vmem:[%s930] sm:$0x1]
        %v3777 = vld [vmem:[%s938] sm:$0x1]
        %v3778 = vsel %vm1191, %v3714, 0.0
        %3779 = vadd.xlane.f32.xlu0 %v3778
        %v3780 = vpop.xlane.xlu0 %3779
        %v3781 = vsel %vm1191, %v3717, 0.0
        %3782 = vadd.xlane.f32.xlu0 %v3781
        %v3783 = vpop.xlane.xlu0 %3782
        %v3784 = vsel %vm1191, %v3722, 0.0
        %3785 = vadd.xlane.f32.xlu0 %v3784
        %v3786 = vpop.xlane.xlu0 %3785
        %v3787 = vsel %vm1191, %v3725, 0.0
        %3788 = vadd.xlane.f32.xlu0 %v3787
        %v3789 = vpop.xlane.xlu0 %3788
        %v3790 = vsel %vm1191, %v3730, 0.0
        %3791 = vadd.xlane.f32.xlu0 %v3790
        %v3792 = vpop.xlane.xlu0 %3791
        %v3793 = vsel %vm1191, %v3733, 0.0
        %3794 = vadd.xlane.f32.xlu0 %v3793
        %v3795 = vpop.xlane.xlu0 %3794
        %v3796 = vsel %vm1191, %v3738, 0.0
        %3797 = vadd.xlane.f32.xlu0 %v3796
        %v3798 = vpop.xlane.xlu0 %3797
        %v3799 = vsel %vm1191, %v3741, 0.0
        %3800 = vadd.xlane.f32.xlu0 %v3799
        %v3801 = vpop.xlane.xlu0 %3800
        %v3802 = vsel %vm1191, %v3746, 0.0
        %3803 = vadd.xlane.f32.xlu0 %v3802
        %v3804 = vpop.xlane.xlu0 %3803
        %v3805 = vsel %vm1191, %v3749, 0.0
        %3806 = vadd.xlane.f32.xlu0 %v3805
        %v3807 = vpop.xlane.xlu0 %3806
        %v3808 = vsel %vm1191, %v3754, 0.0
        %3809 = vadd.xlane.f32.xlu0 %v3808
        %v3810 = vpop.xlane.xlu0 %3809
        %v3811 = vsel %vm1191, %v3757, 0.0
        %3812 = vadd.xlane.f32.xlu0 %v3811
        %v3813 = vpop.xlane.xlu0 %3812
        %v3814 = vsel %vm1191, %v3762, 0.0
        %3815 = vadd.xlane.f32.xlu0 %v3814
        %v3816 = vpop.xlane.xlu0 %3815
        %v3817 = vsel %vm1191, %v3765, 0.0
        %3818 = vadd.xlane.f32.xlu0 %v3817
        %v3819 = vpop.xlane.xlu0 %3818
        %v3820 = vsel %vm1191, %v3770, 0.0
        %3821 = vadd.xlane.f32.xlu0 %v3820
        %v3822 = vpop.xlane.xlu0 %3821
        %v3823 = vsel %vm1191, %v3773, 0.0
        %3824 = vadd.xlane.f32.xlu0 %v3823
        %v3825 = vpop.xlane.xlu0 %3824
        %v3826 = vmul.f32 %v3780, %v1240
        %v3827 = vmul.f32 %v3783, %v1240
        %v3828 = vmul.f32 %v3786, %v1240
        %v3829 = vmul.f32 %v3789, %v1240
        %v3830 = vmul.f32 %v3792, %v1240
        %v3831 = vmul.f32 %v3795, %v1240
        %v3832 = vmul.f32 %v3798, %v1240
        %v3833 = vmul.f32 %v3801, %v1240
        %v3834 = vmul.f32 %v3804, %v1240
        %v3835 = vmul.f32 %v3807, %v1240
        %v3836 = vmul.f32 %v3810, %v1240
        %v3837 = vmul.f32 %v3813, %v1240
        %v3838 = vmul.f32 %v3816, %v1240
        %v3839 = vmul.f32 %v3819, %v1240
        %v3840 = vmul.f32 %v3822, %v1240
        %v3841 = vmul.f32 %v3825, %v1240
        %v3842 = vsub.f32 %v3714, %v3826
        %v3843 = vsub.f32 %v3717, %v3827
        %v3844 = vsub.f32 %v3722, %v3828
        %v3845 = vsub.f32 %v3725, %v3829
        %v3846 = vsub.f32 %v3730, %v3830
        %v3847 = vsub.f32 %v3733, %v3831
        %v3848 = vsub.f32 %v3738, %v3832
        %v3849 = vsub.f32 %v3741, %v3833
        %v3850 = vsub.f32 %v3746, %v3834
        %v3851 = vsub.f32 %v3749, %v3835
        %v3852 = vsub.f32 %v3754, %v3836
        %v3853 = vsub.f32 %v3757, %v3837
        %v3854 = vsub.f32 %v3762, %v3838
        %v3855 = vsub.f32 %v3765, %v3839
        %v3856 = vsub.f32 %v3770, %v3840
        %v3857 = vsub.f32 %v3773, %v3841
        %v3858 = vmul.f32 %v3842, %v3842
        %v3859 = vmul.f32 %v3843, %v3843
        %v3860 = vmul.f32 %v3844, %v3844
        %v3861 = vmul.f32 %v3845, %v3845
        %v3862 = vmul.f32 %v3846, %v3846
        %v3863 = vmul.f32 %v3847, %v3847
        %v3864 = vmul.f32 %v3848, %v3848
        %v3865 = vmul.f32 %v3849, %v3849
        %v3866 = vmul.f32 %v3850, %v3850
        %v3867 = vmul.f32 %v3851, %v3851
        %v3868 = vmul.f32 %v3852, %v3852
        %v3869 = vmul.f32 %v3853, %v3853
        %v3870 = vmul.f32 %v3854, %v3854
        %v3871 = vmul.f32 %v3855, %v3855
        %v3872 = vmul.f32 %v3856, %v3856
        %v3873 = vmul.f32 %v3857, %v3857
        %v3874 = vsel %vm1191, %v3858, 0.0
        %3875 = vadd.xlane.f32.xlu0 %v3874
        %v3876 = vpop.xlane.xlu0 %3875
        %v3877 = vsel %vm1191, %v3859, 0.0
        %3878 = vadd.xlane.f32.xlu0 %v3877
        %v3879 = vpop.xlane.xlu0 %3878
        %v3880 = vsel %vm1191, %v3860, 0.0
        %3881 = vadd.xlane.f32.xlu0 %v3880
        %v3882 = vpop.xlane.xlu0 %3881
        %v3883 = vsel %vm1191, %v3861, 0.0
        %3884 = vadd.xlane.f32.xlu0 %v3883
        %v3885 = vpop.xlane.xlu0 %3884
        %v3886 = vsel %vm1191, %v3862, 0.0
        %3887 = vadd.xlane.f32.xlu0 %v3886
        %v3888 = vpop.xlane.xlu0 %3887
        %v3889 = vsel %vm1191, %v3863, 0.0
        %3890 = vadd.xlane.f32.xlu0 %v3889
        %v3891 = vpop.xlane.xlu0 %3890
        %v3892 = vsel %vm1191, %v3864, 0.0
        %3893 = vadd.xlane.f32.xlu0 %v3892
        %v3894 = vpop.xlane.xlu0 %3893
        %v3895 = vsel %vm1191, %v3865, 0.0
        %3896 = vadd.xlane.f32.xlu0 %v3895
        %v3897 = vpop.xlane.xlu0 %3896
        %v3898 = vsel %vm1191, %v3866, 0.0
        %3899 = vadd.xlane.f32.xlu0 %v3898
        %v3900 = vpop.xlane.xlu0 %3899
        %v3901 = vsel %vm1191, %v3867, 0.0
        %3902 = vadd.xlane.f32.xlu0 %v3901
        %v3903 = vpop.xlane.xlu0 %3902
        %v3904 = vsel %vm1191, %v3868, 0.0
        %3905 = vadd.xlane.f32.xlu0 %v3904
        %v3906 = vpop.xlane.xlu0 %3905
        %v3907 = vsel %vm1191, %v3869, 0.0
        %3908 = vadd.xlane.f32.xlu0 %v3907
        %v3909 = vpop.xlane.xlu0 %3908
        %v3910 = vsel %vm1191, %v3870, 0.0
        %3911 = vadd.xlane.f32.xlu0 %v3910
        %v3912 = vpop.xlane.xlu0 %3911
        %v3913 = vsel %vm1191, %v3871, 0.0
        %3914 = vadd.xlane.f32.xlu0 %v3913
        %v3915 = vpop.xlane.xlu0 %3914
        %v3916 = vsel %vm1191, %v3872, 0.0
        %3917 = vadd.xlane.f32.xlu0 %v3916
        %v3918 = vpop.xlane.xlu0 %3917
        %v3919 = vsel %vm1191, %v3873, 0.0
        %3920 = vadd.xlane.f32.xlu0 %v3919
        %v3921 = vpop.xlane.xlu0 %3920
        %v3922 = vmul.f32 %v3876, %v1240
        %v3923 = vmul.f32 %v3879, %v1240
        %v3924 = vmul.f32 %v3882, %v1240
        %v3925 = vmul.f32 %v3885, %v1240
        %v3926 = vmul.f32 %v3888, %v1240
        %v3927 = vmul.f32 %v3891, %v1240
        %v3928 = vmul.f32 %v3894, %v1240
        %v3929 = vmul.f32 %v3897, %v1240
        %v3930 = vmul.f32 %v3900, %v1240
        %v3931 = vmul.f32 %v3903, %v1240
        %v3932 = vmul.f32 %v3906, %v1240
        %v3933 = vmul.f32 %v3909, %v1240
        %v3934 = vmul.f32 %v3912, %v1240
        %v3935 = vmul.f32 %v3915, %v1240
        %v3936 = vmul.f32 %v3918, %v1240
        %v3937 = vmul.f32 %v3921, %v1240
        %v3938 = vadd.f32 %v3922, 1e-05
        %v3939 = vadd.f32 %v3923, 1e-05
        %v3940 = vadd.f32 %v3924, 1e-05
        %v3941 = vadd.f32 %v3925, 1e-05
        %v3942 = vadd.f32 %v3926, 1e-05
        %v3943 = vadd.f32 %v3927, 1e-05
        %v3944 = vadd.f32 %v3928, 1e-05
        %v3945 = vadd.f32 %v3929, 1e-05
        %v3946 = vadd.f32 %v3930, 1e-05
        %v3947 = vadd.f32 %v3931, 1e-05
        %v3948 = vadd.f32 %v3932, 1e-05
        %v3949 = vadd.f32 %v3933, 1e-05
        %v3950 = vadd.f32 %v3934, 1e-05
        %v3951 = vadd.f32 %v3935, 1e-05
        %v3952 = vadd.f32 %v3936, 1e-05
        %v3953 = vadd.f32 %v3937, 1e-05
        %v3954 = vrsqrt.pop %v3938
        %v3955 = vrsqrt.pop %v3939
        %v3956 = vrsqrt.pop %v3940
        %v3957 = vrsqrt.pop %v3941
        %v3958 = vrsqrt.pop %v3942
        %v3959 = vrsqrt.pop %v3943
        %v3960 = vrsqrt.pop %v3944
        %v3961 = vrsqrt.pop %v3945
        %v3962 = vrsqrt.pop %v3946
        %v3963 = vrsqrt.pop %v3947
        %v3964 = vrsqrt.pop %v3948
        %v3965 = vrsqrt.pop %v3949
        %v3966 = vrsqrt.pop %v3950
        %v3967 = vrsqrt.pop %v3951
        %v3968 = vrsqrt.pop %v3952
        %v3969 = vrsqrt.pop %v3953
        %v3970 = vmul.f32 %v3842, %v3954
        %v3971 = vmul.f32 %v3843, %v3955
        %v3972 = vmul.f32 %v3844, %v3956
        %v3973 = vmul.f32 %v3845, %v3957
        %v3974 = vmul.f32 %v3846, %v3958
        %v3975 = vmul.f32 %v3847, %v3959
        %v3976 = vmul.f32 %v3848, %v3960
        %v3977 = vmul.f32 %v3849, %v3961
        %v3978 = vmul.f32 %v3850, %v3962
        %v3979 = vmul.f32 %v3851, %v3963
        %v3980 = vmul.f32 %v3852, %v3964
        %v3981 = vmul.f32 %v3853, %v3965
        %v3982 = vmul.f32 %v3854, %v3966
        %v3983 = vmul.f32 %v3855, %v3967
        %v3984 = vmul.f32 %v3856, %v3968
        %v3985 = vmul.f32 %v3857, %v3969
        %v3987 = vlaneseq
        %v3988 = vshrl.u32 %v3987, 7
        %v3989 = vsub.s32 0, %v3988
        %v3990 = vrot.slane %v3776, %v3989
        %v3992 = vmul.f32 %v3970, %v3990
        %v3993 = vmul.f32 %v3971, %v3990
        %v3994 = vmul.f32 %v3972, %v3990
        %v3995 = vmul.f32 %v3973, %v3990
        %v3996 = vmul.f32 %v3974, %v3990
        %v3997 = vmul.f32 %v3975, %v3990
        %v3998 = vmul.f32 %v3976, %v3990
        %v3999 = vmul.f32 %v3977, %v3990
        %v4000 = vmul.f32 %v3978, %v3990
        %v4001 = vmul.f32 %v3979, %v3990
        %v4002 = vmul.f32 %v3980, %v3990
        %v4003 = vmul.f32 %v3981, %v3990
        %v4004 = vmul.f32 %v3982, %v3990
        %v4005 = vmul.f32 %v3983, %v3990
        %v4006 = vmul.f32 %v3984, %v3990
        %v4007 = vmul.f32 %v3985, %v3990
        %v4009 = vlaneseq
        %v4010 = vshrl.u32 %v4009, 7
        %v4011 = vsub.s32 0, %v4010
        %v4012 = vrot.slane %v3777, %v4011
        %v4014 = vadd.f32 %v3992, %v4012
        %v4015 = vadd.f32 %v3993, %v4012
        %v4016 = vadd.f32 %v3994, %v4012
        %v4017 = vadd.f32 %v3995, %v4012
        %v4018 = vadd.f32 %v3996, %v4012
        %v4019 = vadd.f32 %v3997, %v4012
        %v4020 = vadd.f32 %v3998, %v4012
        %v4021 = vadd.f32 %v3999, %v4012
        %v4022 = vadd.f32 %v4000, %v4012
        %v4023 = vadd.f32 %v4001, %v4012
        %v4024 = vadd.f32 %v4002, %v4012
        %v4025 = vadd.f32 %v4003, %v4012
        %v4026 = vadd.f32 %v4004, %v4012
        %v4027 = vadd.f32 %v4005, %v4012
        %v4028 = vadd.f32 %v4006, %v4012
        %v4029 = vadd.f32 %v4007, %v4012
        %v4030 = vcombine.low %v4014, %v4016
        %v4031 = vcombine.high %v4014, %v4016
        %v4033 = vunpack.c.l.s4 1983009808
        %v4034 = vunpack.c.0.s8 %v4033
        %v4035 = vlaneseq
        %v4036 = vshrl.u32 %v4035, 7
        %v4037 = vsub.s32 %v4034, %v4036
        %v4038 = vrot.slane %v4030, %v4037
        %v4040 = vunpack.c.l.s4 1983009808
        %v4041 = vunpack.c.0.s8 %v4040
        %v4042 = vlaneseq
        %v4043 = vshrl.u32 %v4042, 7
        %v4044 = vsub.s32 %v4041, %v4043
        %v4045 = vrot.slane %v4031, %v4044
        %v4046 = vcombine.low %v4015, %v4017
        %v4047 = vcombine.high %v4015, %v4017
        %v4049 = vunpack.c.l.s4 1983009808
        %v4050 = vunpack.c.0.s8 %v4049
        %v4051 = vlaneseq
        %v4052 = vshrl.u32 %v4051, 7
        %v4053 = vsub.s32 %v4050, %v4052
        %v4054 = vrot.slane %v4046, %v4053
        %v4056 = vunpack.c.l.s4 1983009808
        %v4057 = vunpack.c.0.s8 %v4056
        %v4058 = vlaneseq
        %v4059 = vshrl.u32 %v4058, 7
        %v4060 = vsub.s32 %v4057, %v4059
        %v4061 = vrot.slane %v4047, %v4060
        %v4062 = vcombine.low %v4018, %v4020
        %v4063 = vcombine.high %v4018, %v4020
        %v4065 = vunpack.c.l.s4 1983009808
        %v4066 = vunpack.c.0.s8 %v4065
        %v4067 = vlaneseq
        %v4068 = vshrl.u32 %v4067, 7
        %v4069 = vsub.s32 %v4066, %v4068
        %v4070 = vrot.slane %v4062, %v4069
        %v4072 = vunpack.c.l.s4 1983009808
        %v4073 = vunpack.c.0.s8 %v4072
        %v4074 = vlaneseq
        %v4075 = vshrl.u32 %v4074, 7
        %v4076 = vsub.s32 %v4073, %v4075
        %v4077 = vrot.slane %v4063, %v4076
        %v4078 = vcombine.low %v4019, %v4021
        %v4079 = vcombine.high %v4019, %v4021
        %v4081 = vunpack.c.l.s4 1983009808
        %v4082 = vunpack.c.0.s8 %v4081
        %v4083 = vlaneseq
        %v4084 = vshrl.u32 %v4083, 7
        %v4085 = vsub.s32 %v4082, %v4084
        %v4086 = vrot.slane %v4078, %v4085
        %v4088 = vunpack.c.l.s4 1983009808
        %v4089 = vunpack.c.0.s8 %v4088
        %v4090 = vlaneseq
        %v4091 = vshrl.u32 %v4090, 7
        %v4092 = vsub.s32 %v4089, %v4091
        %v4093 = vrot.slane %v4079, %v4092
        %v4094 = vcombine.low %v4038, %v4054
        %v4095 = vcombine.high %v4038, %v4054
        %v4097 = vunpack.c.l.s4 1934713408
        %v4098 = vunpack.c.0.s8 %v4097
        %v4099 = vlaneseq
        %v4100 = vshrl.u32 %v4099, 7
        %v4101 = vsub.s32 %v4098, %v4100
        %v4102 = vrot.slane %v4094, %v4101
        %v4104 = vunpack.c.l.s4 1934713408
        %v4105 = vunpack.c.0.s8 %v4104
        %v4106 = vlaneseq
        %v4107 = vshrl.u32 %v4106, 7
        %v4108 = vsub.s32 %v4105, %v4107
        %v4109 = vrot.slane %v4095, %v4108
        %v4110 = vcombine.low %v4045, %v4061
        %v4111 = vcombine.high %v4045, %v4061
        %v4113 = vunpack.c.l.s4 1934713408
        %v4114 = vunpack.c.0.s8 %v4113
        %v4115 = vlaneseq
        %v4116 = vshrl.u32 %v4115, 7
        %v4117 = vsub.s32 %v4114, %v4116
        %v4118 = vrot.slane %v4110, %v4117
        %v4120 = vunpack.c.l.s4 1934713408
        %v4121 = vunpack.c.0.s8 %v4120
        %v4122 = vlaneseq
        %v4123 = vshrl.u32 %v4122, 7
        %v4124 = vsub.s32 %v4121, %v4123
        %v4125 = vrot.slane %v4111, %v4124
        %v4126 = vcombine.low %v4070, %v4086
        %v4127 = vcombine.high %v4070, %v4086
        %v4129 = vunpack.c.l.s4 1934713408
        %v4130 = vunpack.c.0.s8 %v4129
        %v4131 = vlaneseq
        %v4132 = vshrl.u32 %v4131, 7
        %v4133 = vsub.s32 %v4130, %v4132
        %v4134 = vrot.slane %v4126, %v4133
        %v4136 = vunpack.c.l.s4 1934713408
        %v4137 = vunpack.c.0.s8 %v4136
        %v4138 = vlaneseq
        %v4139 = vshrl.u32 %v4138, 7
        %v4140 = vsub.s32 %v4137, %v4139
        %v4141 = vrot.slane %v4127, %v4140
        %v4142 = vcombine.low %v4077, %v4093
        %v4143 = vcombine.high %v4077, %v4093
        %v4145 = vunpack.c.l.s4 1934713408
        %v4146 = vunpack.c.0.s8 %v4145
        %v4147 = vlaneseq
        %v4148 = vshrl.u32 %v4147, 7
        %v4149 = vsub.s32 %v4146, %v4148
        %v4150 = vrot.slane %v4142, %v4149
        %v4152 = vunpack.c.l.s4 1934713408
        %v4153 = vunpack.c.0.s8 %v4152
        %v4154 = vlaneseq
        %v4155 = vshrl.u32 %v4154, 7
        %v4156 = vsub.s32 %v4153, %v4155
        %v4157 = vrot.slane %v4143, %v4156
        %v4158 = vcombine.low %v4102, %v4134
        %v4159 = vcombine.high %v4102, %v4134
        %v4160 = vcombine.low %v4109, %v4141
        %v4161 = vcombine.high %v4109, %v4141
        %v4162 = vcombine.low %v4118, %v4150
        %v4163 = vcombine.high %v4118, %v4150
        %v4164 = vcombine.low %v4125, %v4157
        %v4165 = vcombine.high %v4125, %v4157
        %v4166 = vcombine.low %v4022, %v4024
        %v4167 = vcombine.high %v4022, %v4024
        %v4169 = vunpack.c.l.s4 1983009808
        %v4170 = vunpack.c.0.s8 %v4169
        %v4171 = vlaneseq
        %v4172 = vshrl.u32 %v4171, 7
        %v4173 = vsub.s32 %v4170, %v4172
        %v4174 = vrot.slane %v4166, %v4173
        %v4176 = vunpack.c.l.s4 1983009808
        %v4177 = vunpack.c.0.s8 %v4176
        %v4178 = vlaneseq
        %v4179 = vshrl.u32 %v4178, 7
        %v4180 = vsub.s32 %v4177, %v4179
        %v4181 = vrot.slane %v4167, %v4180
        %v4182 = vcombine.low %v4023, %v4025
        %v4183 = vcombine.high %v4023, %v4025
        %v4185 = vunpack.c.l.s4 1983009808
        %v4186 = vunpack.c.0.s8 %v4185
        %v4187 = vlaneseq
        %v4188 = vshrl.u32 %v4187, 7
        %v4189 = vsub.s32 %v4186, %v4188
        %v4190 = vrot.slane %v4182, %v4189
        %v4192 = vunpack.c.l.s4 1983009808
        %v4193 = vunpack.c.0.s8 %v4192
        %v4194 = vlaneseq
        %v4195 = vshrl.u32 %v4194, 7
        %v4196 = vsub.s32 %v4193, %v4195
        %v4197 = vrot.slane %v4183, %v4196
        %v4198 = vcombine.low %v4026, %v4028
        %v4199 = vcombine.high %v4026, %v4028
        %v4201 = vunpack.c.l.s4 1983009808
        %v4202 = vunpack.c.0.s8 %v4201
        %v4203 = vlaneseq
        %v4204 = vshrl.u32 %v4203, 7
        %v4205 = vsub.s32 %v4202, %v4204
        %v4206 = vrot.slane %v4198, %v4205
        %v4208 = vunpack.c.l.s4 1983009808
        %v4209 = vunpack.c.0.s8 %v4208
        %v4210 = vlaneseq
        %v4211 = vshrl.u32 %v4210, 7
        %v4212 = vsub.s32 %v4209, %v4211
        %v4213 = vrot.slane %v4199, %v4212
        %v4214 = vcombine.low %v4027, %v4029
        %v4215 = vcombine.high %v4027, %v4029
        %v4217 = vunpack.c.l.s4 1983009808
        %v4218 = vunpack.c.0.s8 %v4217
        %v4219 = vlaneseq
        %v4220 = vshrl.u32 %v4219, 7
        %v4221 = vsub.s32 %v4218, %v4220
        %v4222 = vrot.slane %v4214, %v4221
        %v4224 = vunpack.c.l.s4 1983009808
        %v4225 = vunpack.c.0.s8 %v4224
        %v4226 = vlaneseq
        %v4227 = vshrl.u32 %v4226, 7
        %v4228 = vsub.s32 %v4225, %v4227
        %v4229 = vrot.slane %v4215, %v4228
        %v4230 = vcombine.low %v4174, %v4190
        %v4231 = vcombine.high %v4174, %v4190
        %v4233 = vunpack.c.l.s4 1934713408
        %v4234 = vunpack.c.0.s8 %v4233
        %v4235 = vlaneseq
        %v4236 = vshrl.u32 %v4235, 7
        %v4237 = vsub.s32 %v4234, %v4236
        %v4238 = vrot.slane %v4230, %v4237
        %v4240 = vunpack.c.l.s4 1934713408
        %v4241 = vunpack.c.0.s8 %v4240
        %v4242 = vlaneseq
        %v4243 = vshrl.u32 %v4242, 7
        %v4244 = vsub.s32 %v4241, %v4243
        %v4245 = vrot.slane %v4231, %v4244
        %v4246 = vcombine.low %v4181, %v4197
        %v4247 = vcombine.high %v4181, %v4197
        %v4249 = vunpack.c.l.s4 1934713408
        %v4250 = vunpack.c.0.s8 %v4249
        %v4251 = vlaneseq
        %v4252 = vshrl.u32 %v4251, 7
        %v4253 = vsub.s32 %v4250, %v4252
        %v4254 = vrot.slane %v4246, %v4253
        %v4256 = vunpack.c.l.s4 1934713408
        %v4257 = vunpack.c.0.s8 %v4256
        %v4258 = vlaneseq
        %v4259 = vshrl.u32 %v4258, 7
        %v4260 = vsub.s32 %v4257, %v4259
        %v4261 = vrot.slane %v4247, %v4260
        %v4262 = vcombine.low %v4206, %v4222
        %v4263 = vcombine.high %v4206, %v4222
        %v4265 = vunpack.c.l.s4 1934713408
        %v4266 = vunpack.c.0.s8 %v4265
        %v4267 = vlaneseq
        %v4268 = vshrl.u32 %v4267, 7
        %v4269 = vsub.s32 %v4266, %v4268
        %v4270 = vrot.slane %v4262, %v4269
        %v4272 = vunpack.c.l.s4 1934713408
        %v4273 = vunpack.c.0.s8 %v4272
        %v4274 = vlaneseq
        %v4275 = vshrl.u32 %v4274, 7
        %v4276 = vsub.s32 %v4273, %v4275
        %v4277 = vrot.slane %v4263, %v4276
        %v4278 = vcombine.low %v4213, %v4229
        %v4279 = vcombine.high %v4213, %v4229
        %v4281 = vunpack.c.l.s4 1934713408
        %v4282 = vunpack.c.0.s8 %v4281
        %v4283 = vlaneseq
        %v4284 = vshrl.u32 %v4283, 7
        %v4285 = vsub.s32 %v4282, %v4284
        %v4286 = vrot.slane %v4278, %v4285
        %v4288 = vunpack.c.l.s4 1934713408
        %v4289 = vunpack.c.0.s8 %v4288
        %v4290 = vlaneseq
        %v4291 = vshrl.u32 %v4290, 7
        %v4292 = vsub.s32 %v4289, %v4291
        %v4293 = vrot.slane %v4279, %v4292
        %v4294 = vcombine.low %v4238, %v4270
        %v4295 = vcombine.high %v4238, %v4270
        %v4296 = vcombine.low %v4245, %v4277
        %v4297 = vcombine.high %v4245, %v4277
        %v4298 = vcombine.low %v4254, %v4286
        %v4299 = vcombine.high %v4254, %v4286
        %v4300 = vcombine.low %v4261, %v4293
        %v4301 = vcombine.high %v4261, %v4293
        %v4302 = vpack.c.bf16 %v4294, %v4158
        %v4303 = vpack.c.bf16 %v4295, %v4159
        %v4304 = vpack.c.bf16 %v4296, %v4160
        %v4305 = vpack.c.bf16 %v4297, %v4161
        %v4306 = vpack.c.bf16 %v4298, %v4162
        %v4307 = vpack.c.bf16 %v4299, %v4163
        %v4308 = vpack.c.bf16 %v4300, %v4164
        %v4309 = vpack.c.bf16 %v4301, %v4165
        %v4310 = vld [vmem:[%s947] sm:$0xf]
        %v4311 = vld [vmem:[%s947 + $0x4] sm:$0xf]
        %v4312 = vld [vmem:[%s947 + $0x8] sm:$0xf]
        %v4313 = vld [vmem:[%s947 + $0xc] sm:$0xf]
        %v4318 = vunpack.c.l.b16 %v4310
        %v4319 = vunpack.c.l.b16 %v4311
        %v4320 = vunpack.c.l.b16 %v4312
        %v4321 = vunpack.c.l.b16 %v4313
        %v4322 = vpack.c.b16 %v4319, %v4318
        %v4323 = vpack.c.b16 %v4321, %v4320
        %v4327 = vsel %vm1191, %v4302, 0
        %v4330 = vsel %vm1191, %v4303, 0
        %v4333 = vsel %vm1191, %v4304, 0
        %v4336 = vsel %vm1191, %v4305, 0
        %v4339 = vsel %vm1191, %v4306, 0
        %v4342 = vsel %vm1191, %v4307, 0
        %v4345 = vsel %vm1191, %v4308, 0
        %v4348 = vsel %vm1191, %v4309, 0
        %4350 = vmatprep.subr.bf16.mxu0 0
        %4351 = vmatpush1.bf16.msra.mxu0 %v4322
        %4352 = vmatprep.subr.bf16.mxu0 0
        %4353 = vmatpush1.bf16.msra.mxu0 %v4323
        %4354 = vmatprep.subr.bf16.mxu0 0
        %4355 = vmatpush1.bf16.msra.mxu0 0
        %4356 = vmatprep.subr.bf16.mxu0 0
        %4357 = vmatpush1.bf16.msra.mxu0 0
        %4358 = vmatprep.subr.bf16.mxu0 0
        %4359 = vmatpush1.bf16.msra.mxu0 0
        %4360 = vmatprep.subr.bf16.mxu0 0
        %4361 = vmatpush1.bf16.msra.mxu0 0
        %4362 = vmatprep.subr.bf16.mxu0 0
        %4363 = vmatpush1.bf16.msra.mxu0 0
        %4364 = vmatprep.subr.bf16.mxu0 0
        %4365 = vmatpush1.bf16.msra.mxu0 0
        %4366 = vmatprep.subr.bf16.mxu0 0
        %4367 = vmatpush1.bf16.msra.mxu0 0
        %4368 = vmatprep.subr.bf16.mxu0 0
        %4369 = vmatpush1.bf16.msra.mxu0 0
        %4370 = vmatprep.subr.bf16.mxu0 0
        %4371 = vmatpush1.bf16.msra.mxu0 0
        %4372 = vmatprep.subr.bf16.mxu0 0
        %4373 = vmatpush1.bf16.msra.mxu0 0
        %4374 = vmatprep.subr.bf16.mxu0 0
        %4375 = vmatpush1.bf16.msra.mxu0 0
        %4376 = vmatprep.subr.bf16.mxu0 0
        %4377 = vmatpush1.bf16.msra.mxu0 0
        %4378 = vmatprep.subr.bf16.mxu0 0
        %4379 = vmatpush1.bf16.msra.mxu0 0
        %4380 = vmatprep.subr.bf16.mxu0 0
        %4381 = vmatpush1.bf16.msra.mxu0 0
        %4382 = vmatprep.mubr.bf16.mxu0 0
        %4383 = vmatmul.mubr.bf16.gmra.mrb[0].mxu0 %v4327
        %v4384 = vpop.f32.mrb[0].mxu0
        %v4385 = vadd.f32 0.0, %v4384
        %v4386 = vpop.f32.mrb[0].mxu0
        %v4387 = vpop.f32.mrb[0].mxu0
        %v4388 = vadd.f32 0.0, %v4387
        %v4389 = vpop.f32.mrb[0].mxu0
        %4390 = vmatprep.mubr.bf16.mxu0 0
        %4391 = vmatmul.mubr.bf16.gmra.mrb[0].mxu0 %v4330
        %v4392 = vpop.f32.mrb[0].mxu0
        %v4393 = vadd.f32 0.0, %v4392
        %v4394 = vpop.f32.mrb[0].mxu0
        %v4395 = vpop.f32.mrb[0].mxu0
        %v4396 = vadd.f32 0.0, %v4395
        %v4397 = vpop.f32.mrb[0].mxu0
        %4398 = vmatprep.mubr.bf16.mxu0 0
        %4399 = vmatmul.mubr.bf16.gmra.mrb[0].mxu0 %v4333
        %v4400 = vpop.f32.mrb[0].mxu0
        %v4401 = vadd.f32 0.0, %v4400
        %v4402 = vpop.f32.mrb[0].mxu0
        %v4403 = vpop.f32.mrb[0].mxu0
        %v4404 = vadd.f32 0.0, %v4403
        %v4405 = vpop.f32.mrb[0].mxu0
        %4406 = vmatprep.mubr.bf16.mxu0 0
        %4407 = vmatmul.mubr.bf16.gmra.mrb[0].mxu0 %v4336
        %v4408 = vpop.f32.mrb[0].mxu0
        %v4409 = vadd.f32 0.0, %v4408
        %v4410 = vpop.f32.mrb[0].mxu0
        %v4411 = vpop.f32.mrb[0].mxu0
        %v4412 = vadd.f32 0.0, %v4411
        %v4413 = vpop.f32.mrb[0].mxu0
        %4414 = vmatprep.mubr.bf16.mxu0 0
        %4415 = vmatmul.mubr.bf16.gmra.mrb[0].mxu0 %v4339
        %v4416 = vpop.f32.mrb[0].mxu0
        %v4417 = vadd.f32 0.0, %v4416
        %v4418 = vpop.f32.mrb[0].mxu0
        %v4419 = vpop.f32.mrb[0].mxu0
        %v4420 = vadd.f32 0.0, %v4419
        %v4421 = vpop.f32.mrb[0].mxu0
        %4422 = vmatprep.mubr.bf16.mxu0 0
        %4423 = vmatmul.mubr.bf16.gmra.mrb[0].mxu0 %v4342
        %v4424 = vpop.f32.mrb[0].mxu0
        %v4425 = vadd.f32 0.0, %v4424
        %v4426 = vpop.f32.mrb[0].mxu0
        %v4427 = vpop.f32.mrb[0].mxu0
        %v4428 = vadd.f32 0.0, %v4427
        %v4429 = vpop.f32.mrb[0].mxu0
        %4430 = vmatprep.mubr.bf16.mxu0 0
        %4431 = vmatmul.mubr.bf16.gmra.mrb[0].mxu0 %v4345
        %v4432 = vpop.f32.mrb[0].mxu0
        %v4433 = vadd.f32 0.0, %v4432
        %v4434 = vpop.f32.mrb[0].mxu0
        %v4435 = vpop.f32.mrb[0].mxu0
        %v4436 = vadd.f32 0.0, %v4435
        %v4437 = vpop.f32.mrb[0].mxu0
        %4438 = vmatprep.mubr.bf16.mxu0 0
        %4439 = vmatmul.mubr.bf16.gmra.mrb[0].mxu0 %v4348
        %v4440 = vpop.f32.mrb[0].mxu0
        %v4441 = vadd.f32 0.0, %v4440
        %v4442 = vpop.f32.mrb[0].mxu0
        %v4443 = vpop.f32.mrb[0].mxu0
        %v4444 = vadd.f32 0.0, %v4443
        %v4445 = vpop.f32.mrb[0].mxu0
        %4446 = vdwg.mxu0
        %v4447 = vpack.c.bf16 %v4388, %v4385
        %v4448 = vpack.c.bf16 %v4396, %v4393
        %v4449 = vpack.c.bf16 %v4404, %v4401
        %v4450 = vpack.c.bf16 %v4412, %v4409
        %v4451 = vpack.c.bf16 %v4420, %v4417
        %v4452 = vpack.c.bf16 %v4428, %v4425
        %v4453 = vpack.c.bf16 %v4436, %v4433
        %v4454 = vpack.c.bf16 %v4444, %v4441
        %4456 = vrot.lane.b32.xlu0 %v4447, 96
        %v4457 = vpop.permute.xlu0 %4456
        %v4459 = vsel %vm1191, %v4447, 0
        %v4462 = vsel %vm1191, %v4457, 0
        %4464 = vmatprep.subr.bf16.mxu0 0
        %4465 = vmatpush1.bf16.xpose.msra.mxu0 %v4462
        %4466 = vmatprep.subr.bf16.mxu0 0
        %4467 = vmatpush1.bf16.xpose.msra.mxu0 0
        %4468 = vmatprep.subr.bf16.mxu0 0
        %4469 = vmatpush1.bf16.xpose.msra.mxu0 0
        %4470 = vmatprep.subr.bf16.mxu0 0
        %4471 = vmatpush1.bf16.xpose.msra.mxu0 0
        %4472 = vmatprep.subr.bf16.mxu0 0
        %4473 = vmatpush1.bf16.xpose.msra.mxu0 0
        %4474 = vmatprep.subr.bf16.mxu0 0
        %4475 = vmatpush1.bf16.xpose.msra.mxu0 0
        %4476 = vmatprep.subr.bf16.mxu0 0
        %4477 = vmatpush1.bf16.xpose.msra.mxu0 0
        %4478 = vmatprep.subr.bf16.mxu0 0
        %4479 = vmatpush1.bf16.xpose.msra.mxu0 0
        %4480 = vmatprep.subr.bf16.mxu0 0
        %4481 = vmatpush1.bf16.xpose.msra.mxu0 0
        %4482 = vmatprep.subr.bf16.mxu0 0
        %4483 = vmatpush1.bf16.xpose.msra.mxu0 0
        %4484 = vmatprep.subr.bf16.mxu0 0
        %4485 = vmatpush1.bf16.xpose.msra.mxu0 0
        %4486 = vmatprep.subr.bf16.mxu0 0
        %4487 = vmatpush1.bf16.xpose.msra.mxu0 0
        %4488 = vmatprep.subr.bf16.mxu0 0
        %4489 = vmatpush1.bf16.xpose.msra.mxu0 0
        %4490 = vmatprep.subr.bf16.mxu0 0
        %4491 = vmatpush1.bf16.xpose.msra.mxu0 0
        %4492 = vmatprep.subr.bf16.mxu0 0
        %4493 = vmatpush1.bf16.xpose.msra.mxu0 0
        %4494 = vmatprep.subr.bf16.mxu0 0
        %4495 = vmatpush1.bf16.xpose.msra.mxu0 0
        %4496 = vmatprep.mubr.bf16.mxu0 0
        %4497 = vmatmul.mubr.bf16.gmra.mrb[0].mxu0 %v4459
        %v4498 = vpop.f32.mrb[0].mxu0
        %v4499 = vadd.f32 0.0, %v4498
        %v4500 = vpop.f32.mrb[0].mxu0
        %v4501 = vpop.f32.mrb[0].mxu0
        %v4502 = vadd.f32 0.0, %v4501
        %v4503 = vpop.f32.mrb[0].mxu0
        %4504 = vdwg.mxu0
        %4506 = vrot.lane.b32.xlu0 %v4448, 96
        %v4507 = vpop.permute.xlu0 %4506
        %v4509 = vsel %vm1191, %v4448, 0
        %v4512 = vsel %vm1191, %v4507, 0
        %4514 = vmatprep.subr.bf16.mxu0 0
        %4515 = vmatpush1.bf16.xpose.msra.mxu0 %v4512
        %4516 = vmatprep.subr.bf16.mxu0 0
        %4517 = vmatpush1.bf16.xpose.msra.mxu0 0
        %4518 = vmatprep.subr.bf16.mxu0 0
        %4519 = vmatpush1.bf16.xpose.msra.mxu0 0
        %4520 = vmatprep.subr.bf16.mxu0 0
        %4521 = vmatpush1.bf16.xpose.msra.mxu0 0
        %4522 = vmatprep.subr.bf16.mxu0 0
        %4523 = vmatpush1.bf16.xpose.msra.mxu0 0
        %4524 = vmatprep.subr.bf16.mxu0 0
        %4525 = vmatpush1.bf16.xpose.msra.mxu0 0
        %4526 = vmatprep.subr.bf16.mxu0 0
        %4527 = vmatpush1.bf16.xpose.msra.mxu0 0
        %4528 = vmatprep.subr.bf16.mxu0 0
        %4529 = vmatpush1.bf16.xpose.msra.mxu0 0
        %4530 = vmatprep.subr.bf16.mxu0 0
        %4531 = vmatpush1.bf16.xpose.msra.mxu0 0
        %4532 = vmatprep.subr.bf16.mxu0 0
        %4533 = vmatpush1.bf16.xpose.msra.mxu0 0
        %4534 = vmatprep.subr.bf16.mxu0 0
        %4535 = vmatpush1.bf16.xpose.msra.mxu0 0
        %4536 = vmatprep.subr.bf16.mxu0 0
        %4537 = vmatpush1.bf16.xpose.msra.mxu0 0
        %4538 = vmatprep.subr.bf16.mxu0 0
        %4539 = vmatpush1.bf16.xpose.msra.mxu0 0
        %4540 = vmatprep.subr.bf16.mxu0 0
        %4541 = vmatpush1.bf16.xpose.msra.mxu0 0
        %4542 = vmatprep.subr.bf16.mxu0 0
        %4543 = vmatpush1.bf16.xpose.msra.mxu0 0
        %4544 = vmatprep.subr.bf16.mxu0 0
        %4545 = vmatpush1.bf16.xpose.msra.mxu0 0
        %4546 = vmatprep.mubr.bf16.mxu0 0
        %4547 = vmatmul.mubr.bf16.gmra.mrb[0].mxu0 %v4509
        %v4548 = vpop.f32.mrb[0].mxu0
        %v4549 = vadd.f32 0.0, %v4548
        %v4550 = vpop.f32.mrb[0].mxu0
        %v4551 = vpop.f32.mrb[0].mxu0
        %v4552 = vadd.f32 0.0, %v4551
        %v4553 = vpop.f32.mrb[0].mxu0
        %4554 = vdwg.mxu0
        %4556 = vrot.lane.b32.xlu0 %v4449, 96
        %v4557 = vpop.permute.xlu0 %4556
        %v4559 = vsel %vm1191, %v4449, 0
        %v4562 = vsel %vm1191, %v4557, 0
        %4564 = vmatprep.subr.bf16.mxu0 0
        %4565 = vmatpush1.bf16.xpose.msra.mxu0 %v4562
        %4566 = vmatprep.subr.bf16.mxu0 0
        %4567 = vmatpush1.bf16.xpose.msra.mxu0 0
        %4568 = vmatprep.subr.bf16.mxu0 0
        %4569 = vmatpush1.bf16.xpose.msra.mxu0 0
        %4570 = vmatprep.subr.bf16.mxu0 0
        %4571 = vmatpush1.bf16.xpose.msra.mxu0 0
        %4572 = vmatprep.subr.bf16.mxu0 0
        %4573 = vmatpush1.bf16.xpose.msra.mxu0 0
        %4574 = vmatprep.subr.bf16.mxu0 0
        %4575 = vmatpush1.bf16.xpose.msra.mxu0 0
        %4576 = vmatprep.subr.bf16.mxu0 0
        %4577 = vmatpush1.bf16.xpose.msra.mxu0 0
        %4578 = vmatprep.subr.bf16.mxu0 0
        %4579 = vmatpush1.bf16.xpose.msra.mxu0 0
        %4580 = vmatprep.subr.bf16.mxu0 0
        %4581 = vmatpush1.bf16.xpose.msra.mxu0 0
        %4582 = vmatprep.subr.bf16.mxu0 0
        %4583 = vmatpush1.bf16.xpose.msra.mxu0 0
        %4584 = vmatprep.subr.bf16.mxu0 0
        %4585 = vmatpush1.bf16.xpose.msra.mxu0 0
        %4586 = vmatprep.subr.bf16.mxu0 0
        %4587 = vmatpush1.bf16.xpose.msra.mxu0 0
        %4588 = vmatprep.subr.bf16.mxu0 0
        %4589 = vmatpush1.bf16.xpose.msra.mxu0 0
        %4590 = vmatprep.subr.bf16.mxu0 0
        %4591 = vmatpush1.bf16.xpose.msra.mxu0 0
        %4592 = vmatprep.subr.bf16.mxu0 0
        %4593 = vmatpush1.bf16.xpose.msra.mxu0 0
        %4594 = vmatprep.subr.bf16.mxu0 0
        %4595 = vmatpush1.bf16.xpose.msra.mxu0 0
        %4596 = vmatprep.mubr.bf16.mxu0 0
        %4597 = vmatmul.mubr.bf16.gmra.mrb[0].mxu0 %v4559
        %v4598 = vpop.f32.mrb[0].mxu0
        %v4599 = vadd.f32 0.0, %v4598
        %v4600 = vpop.f32.mrb[0].mxu0
        %v4601 = vpop.f32.mrb[0].mxu0
        %v4602 = vadd.f32 0.0, %v4601
        %v4603 = vpop.f32.mrb[0].mxu0
        %4604 = vdwg.mxu0
        %4606 = vrot.lane.b32.xlu0 %v4450, 96
        %v4607 = vpop.permute.xlu0 %4606
        %v4609 = vsel %vm1191, %v4450, 0
        %v4612 = vsel %vm1191, %v4607, 0
        %4614 = vmatprep.subr.bf16.mxu0 0
        %4615 = vmatpush1.bf16.xpose.msra.mxu0 %v4612
        %4616 = vmatprep.subr.bf16.mxu0 0
        %4617 = vmatpush1.bf16.xpose.msra.mxu0 0
        %4618 = vmatprep.subr.bf16.mxu0 0
        %4619 = vmatpush1.bf16.xpose.msra.mxu0 0
        %4620 = vmatprep.subr.bf16.mxu0 0
        %4621 = vmatpush1.bf16.xpose.msra.mxu0 0
        %4622 = vmatprep.subr.bf16.mxu0 0
        %4623 = vmatpush1.bf16.xpose.msra.mxu0 0
        %4624 = vmatprep.subr.bf16.mxu0 0
        %4625 = vmatpush1.bf16.xpose.msra.mxu0 0
        %4626 = vmatprep.subr.bf16.mxu0 0
        %4627 = vmatpush1.bf16.xpose.msra.mxu0 0
        %4628 = vmatprep.subr.bf16.mxu0 0
        %4629 = vmatpush1.bf16.xpose.msra.mxu0 0
        %4630 = vmatprep.subr.bf16.mxu0 0
        %4631 = vmatpush1.bf16.xpose.msra.mxu0 0
        %4632 = vmatprep.subr.bf16.mxu0 0
        %4633 = vmatpush1.bf16.xpose.msra.mxu0 0
        %4634 = vmatprep.subr.bf16.mxu0 0
        %4635 = vmatpush1.bf16.xpose.msra.mxu0 0
        %4636 = vmatprep.subr.bf16.mxu0 0
        %4637 = vmatpush1.bf16.xpose.msra.mxu0 0
        %4638 = vmatprep.subr.bf16.mxu0 0
        %4639 = vmatpush1.bf16.xpose.msra.mxu0 0
        %4640 = vmatprep.subr.bf16.mxu0 0
        %4641 = vmatpush1.bf16.xpose.msra.mxu0 0
        %4642 = vmatprep.subr.bf16.mxu0 0
        %4643 = vmatpush1.bf16.xpose.msra.mxu0 0
        %4644 = vmatprep.subr.bf16.mxu0 0
        %4645 = vmatpush1.bf16.xpose.msra.mxu0 0
        %4646 = vmatprep.mubr.bf16.mxu0 0
        %4647 = vmatmul.mubr.bf16.gmra.mrb[0].mxu0 %v4609
        %v4648 = vpop.f32.mrb[0].mxu0
        %v4649 = vadd.f32 0.0, %v4648
        %v4650 = vpop.f32.mrb[0].mxu0
        %v4651 = vpop.f32.mrb[0].mxu0
        %v4652 = vadd.f32 0.0, %v4651
        %v4653 = vpop.f32.mrb[0].mxu0
        %4654 = vdwg.mxu0
        %4656 = vrot.lane.b32.xlu0 %v4451, 96
        %v4657 = vpop.permute.xlu0 %4656
        %v4659 = vsel %vm1191, %v4451, 0
        %v4662 = vsel %vm1191, %v4657, 0
        %4664 = vmatprep.subr.bf16.mxu0 0
        %4665 = vmatpush1.bf16.xpose.msra.mxu0 %v4662
        %4666 = vmatprep.subr.bf16.mxu0 0
        %4667 = vmatpush1.bf16.xpose.msra.mxu0 0
        %4668 = vmatprep.subr.bf16.mxu0 0
        %4669 = vmatpush1.bf16.xpose.msra.mxu0 0
        %4670 = vmatprep.subr.bf16.mxu0 0
        %4671 = vmatpush1.bf16.xpose.msra.mxu0 0
        %4672 = vmatprep.subr.bf16.mxu0 0
        %4673 = vmatpush1.bf16.xpose.msra.mxu0 0
        %4674 = vmatprep.subr.bf16.mxu0 0
        %4675 = vmatpush1.bf16.xpose.msra.mxu0 0
        %4676 = vmatprep.subr.bf16.mxu0 0
        %4677 = vmatpush1.bf16.xpose.msra.mxu0 0
        %4678 = vmatprep.subr.bf16.mxu0 0
        %4679 = vmatpush1.bf16.xpose.msra.mxu0 0
        %4680 = vmatprep.subr.bf16.mxu0 0
        %4681 = vmatpush1.bf16.xpose.msra.mxu0 0
        %4682 = vmatprep.subr.bf16.mxu0 0
        %4683 = vmatpush1.bf16.xpose.msra.mxu0 0
        %4684 = vmatprep.subr.bf16.mxu0 0
        %4685 = vmatpush1.bf16.xpose.msra.mxu0 0
        %4686 = vmatprep.subr.bf16.mxu0 0
        %4687 = vmatpush1.bf16.xpose.msra.mxu0 0
        %4688 = vmatprep.subr.bf16.mxu0 0
        %4689 = vmatpush1.bf16.xpose.msra.mxu0 0
        %4690 = vmatprep.subr.bf16.mxu0 0
        %4691 = vmatpush1.bf16.xpose.msra.mxu0 0
        %4692 = vmatprep.subr.bf16.mxu0 0
        %4693 = vmatpush1.bf16.xpose.msra.mxu0 0
        %4694 = vmatprep.subr.bf16.mxu0 0
        %4695 = vmatpush1.bf16.xpose.msra.mxu0 0
        %4696 = vmatprep.mubr.bf16.mxu0 0
        %4697 = vmatmul.mubr.bf16.gmra.mrb[0].mxu0 %v4659
        %v4698 = vpop.f32.mrb[0].mxu0
        %v4699 = vadd.f32 0.0, %v4698
        %v4700 = vpop.f32.mrb[0].mxu0
        %v4701 = vpop.f32.mrb[0].mxu0
        %v4702 = vadd.f32 0.0, %v4701
        %v4703 = vpop.f32.mrb[0].mxu0
        %4704 = vdwg.mxu0
        %4706 = vrot.lane.b32.xlu0 %v4452, 96
        %v4707 = vpop.permute.xlu0 %4706
        %v4709 = vsel %vm1191, %v4452, 0
        %v4712 = vsel %vm1191, %v4707, 0
        %4714 = vmatprep.subr.bf16.mxu0 0
        %4715 = vmatpush1.bf16.xpose.msra.mxu0 %v4712
        %4716 = vmatprep.subr.bf16.mxu0 0
        %4717 = vmatpush1.bf16.xpose.msra.mxu0 0
        %4718 = vmatprep.subr.bf16.mxu0 0
        %4719 = vmatpush1.bf16.xpose.msra.mxu0 0
        %4720 = vmatprep.subr.bf16.mxu0 0
        %4721 = vmatpush1.bf16.xpose.msra.mxu0 0
        %4722 = vmatprep.subr.bf16.mxu0 0
        %4723 = vmatpush1.bf16.xpose.msra.mxu0 0
        %4724 = vmatprep.subr.bf16.mxu0 0
        %4725 = vmatpush1.bf16.xpose.msra.mxu0 0
        %4726 = vmatprep.subr.bf16.mxu0 0
        %4727 = vmatpush1.bf16.xpose.msra.mxu0 0
        %4728 = vmatprep.subr.bf16.mxu0 0
        %4729 = vmatpush1.bf16.xpose.msra.mxu0 0
        %4730 = vmatprep.subr.bf16.mxu0 0
        %4731 = vmatpush1.bf16.xpose.msra.mxu0 0
        %4732 = vmatprep.subr.bf16.mxu0 0
        %4733 = vmatpush1.bf16.xpose.msra.mxu0 0
        %4734 = vmatprep.subr.bf16.mxu0 0
        %4735 = vmatpush1.bf16.xpose.msra.mxu0 0
        %4736 = vmatprep.subr.bf16.mxu0 0
        %4737 = vmatpush1.bf16.xpose.msra.mxu0 0
        %4738 = vmatprep.subr.bf16.mxu0 0
        %4739 = vmatpush1.bf16.xpose.msra.mxu0 0
        %4740 = vmatprep.subr.bf16.mxu0 0
        %4741 = vmatpush1.bf16.xpose.msra.mxu0 0
        %4742 = vmatprep.subr.bf16.mxu0 0
        %4743 = vmatpush1.bf16.xpose.msra.mxu0 0
        %4744 = vmatprep.subr.bf16.mxu0 0
        %4745 = vmatpush1.bf16.xpose.msra.mxu0 0
        %4746 = vmatprep.mubr.bf16.mxu0 0
        %4747 = vmatmul.mubr.bf16.gmra.mrb[0].mxu0 %v4709
        %v4748 = vpop.f32.mrb[0].mxu0
        %v4749 = vadd.f32 0.0, %v4748
        %v4750 = vpop.f32.mrb[0].mxu0
        %v4751 = vpop.f32.mrb[0].mxu0
        %v4752 = vadd.f32 0.0, %v4751
        %v4753 = vpop.f32.mrb[0].mxu0
        %4754 = vdwg.mxu0
        %4756 = vrot.lane.b32.xlu0 %v4453, 96
        %v4757 = vpop.permute.xlu0 %4756
        %v4759 = vsel %vm1191, %v4453, 0
        %v4762 = vsel %vm1191, %v4757, 0
        %4764 = vmatprep.subr.bf16.mxu0 0
        %4765 = vmatpush1.bf16.xpose.msra.mxu0 %v4762
        %4766 = vmatprep.subr.bf16.mxu0 0
        %4767 = vmatpush1.bf16.xpose.msra.mxu0 0
        %4768 = vmatprep.subr.bf16.mxu0 0
        %4769 = vmatpush1.bf16.xpose.msra.mxu0 0
        %4770 = vmatprep.subr.bf16.mxu0 0
        %4771 = vmatpush1.bf16.xpose.msra.mxu0 0
        %4772 = vmatprep.subr.bf16.mxu0 0
        %4773 = vmatpush1.bf16.xpose.msra.mxu0 0
        %4774 = vmatprep.subr.bf16.mxu0 0
        %4775 = vmatpush1.bf16.xpose.msra.mxu0 0
        %4776 = vmatprep.subr.bf16.mxu0 0
        %4777 = vmatpush1.bf16.xpose.msra.mxu0 0
        %4778 = vmatprep.subr.bf16.mxu0 0
        %4779 = vmatpush1.bf16.xpose.msra.mxu0 0
        %4780 = vmatprep.subr.bf16.mxu0 0
        %4781 = vmatpush1.bf16.xpose.msra.mxu0 0
        %4782 = vmatprep.subr.bf16.mxu0 0
        %4783 = vmatpush1.bf16.xpose.msra.mxu0 0
        %4784 = vmatprep.subr.bf16.mxu0 0
        %4785 = vmatpush1.bf16.xpose.msra.mxu0 0
        %4786 = vmatprep.subr.bf16.mxu0 0
        %4787 = vmatpush1.bf16.xpose.msra.mxu0 0
        %4788 = vmatprep.subr.bf16.mxu0 0
        %4789 = vmatpush1.bf16.xpose.msra.mxu0 0
        %4790 = vmatprep.subr.bf16.mxu0 0
        %4791 = vmatpush1.bf16.xpose.msra.mxu0 0
        %4792 = vmatprep.subr.bf16.mxu0 0
        %4793 = vmatpush1.bf16.xpose.msra.mxu0 0
        %4794 = vmatprep.subr.bf16.mxu0 0
        %4795 = vmatpush1.bf16.xpose.msra.mxu0 0
        %4796 = vmatprep.mubr.bf16.mxu0 0
        %4797 = vmatmul.mubr.bf16.gmra.mrb[0].mxu0 %v4759
        %v4798 = vpop.f32.mrb[0].mxu0
        %v4799 = vadd.f32 0.0, %v4798
        %v4800 = vpop.f32.mrb[0].mxu0
        %v4801 = vpop.f32.mrb[0].mxu0
        %v4802 = vadd.f32 0.0, %v4801
        %v4803 = vpop.f32.mrb[0].mxu0
        %4804 = vdwg.mxu0
        %4806 = vrot.lane.b32.xlu0 %v4454, 96
        %v4807 = vpop.permute.xlu0 %4806
        %v4809 = vsel %vm1191, %v4454, 0
        %v4812 = vsel %vm1191, %v4807, 0
        %4814 = vmatprep.subr.bf16.mxu0 0
        %4815 = vmatpush1.bf16.xpose.msra.mxu0 %v4812
        %4816 = vmatprep.subr.bf16.mxu0 0
        %4817 = vmatpush1.bf16.xpose.msra.mxu0 0
        %4818 = vmatprep.subr.bf16.mxu0 0
        %4819 = vmatpush1.bf16.xpose.msra.mxu0 0
        %4820 = vmatprep.subr.bf16.mxu0 0
        %4821 = vmatpush1.bf16.xpose.msra.mxu0 0
        %4822 = vmatprep.subr.bf16.mxu0 0
        %4823 = vmatpush1.bf16.xpose.msra.mxu0 0
        %4824 = vmatprep.subr.bf16.mxu0 0
        %4825 = vmatpush1.bf16.xpose.msra.mxu0 0
        %4826 = vmatprep.subr.bf16.mxu0 0
        %4827 = vmatpush1.bf16.xpose.msra.mxu0 0
        %4828 = vmatprep.subr.bf16.mxu0 0
        %4829 = vmatpush1.bf16.xpose.msra.mxu0 0
        %4830 = vmatprep.subr.bf16.mxu0 0
        %4831 = vmatpush1.bf16.xpose.msra.mxu0 0
        %4832 = vmatprep.subr.bf16.mxu0 0
        %4833 = vmatpush1.bf16.xpose.msra.mxu0 0
        %4834 = vmatprep.subr.bf16.mxu0 0
        %4835 = vmatpush1.bf16.xpose.msra.mxu0 0
        %4836 = vmatprep.subr.bf16.mxu0 0
        %4837 = vmatpush1.bf16.xpose.msra.mxu0 0
        %4838 = vmatprep.subr.bf16.mxu0 0
        %4839 = vmatpush1.bf16.xpose.msra.mxu0 0
        %4840 = vmatprep.subr.bf16.mxu0 0
        %4841 = vmatpush1.bf16.xpose.msra.mxu0 0
        %4842 = vmatprep.subr.bf16.mxu0 0
        %4843 = vmatpush1.bf16.xpose.msra.mxu0 0
        %4844 = vmatprep.subr.bf16.mxu0 0
        %4845 = vmatpush1.bf16.xpose.msra.mxu0 0
        %4846 = vmatprep.mubr.bf16.mxu0 0
        %4847 = vmatmul.mubr.bf16.gmra.mrb[0].mxu0 %v4809
        %v4848 = vpop.f32.mrb[0].mxu0
        %v4849 = vadd.f32 0.0, %v4848
        %v4850 = vpop.f32.mrb[0].mxu0
        %v4851 = vpop.f32.mrb[0].mxu0
        %v4852 = vadd.f32 0.0, %v4851
        %v4853 = vpop.f32.mrb[0].mxu0
        %4854 = vdwg.mxu0
        %vm4855 = vcmask 130048
        %v4856 = vsel %vm4855, %v4499, -inf
        %4857 = vmax.xlane.f32.xlu0 %v4856
        %v4858 = vpop.xlane.xlu0 %4857
        %v4859 = vsel %vm4855, %v4502, -inf
        %4860 = vmax.xlane.f32.xlu0 %v4859
        %v4861 = vpop.xlane.xlu0 %4860
        %v4862 = vsel %vm4855, %v4549, -inf
        %4863 = vmax.xlane.f32.xlu0 %v4862
        %v4864 = vpop.xlane.xlu0 %4863
        %v4865 = vsel %vm4855, %v4552, -inf
        %4866 = vmax.xlane.f32.xlu0 %v4865
        %v4867 = vpop.xlane.xlu0 %4866
        %v4868 = vsel %vm4855, %v4599, -inf
        %4869 = vmax.xlane.f32.xlu0 %v4868
        %v4870 = vpop.xlane.xlu0 %4869
        %v4871 = vsel %vm4855, %v4602, -inf
        %4872 = vmax.xlane.f32.xlu0 %v4871
        %v4873 = vpop.xlane.xlu0 %4872
        %v4874 = vsel %vm4855, %v4649, -inf
        %4875 = vmax.xlane.f32.xlu0 %v4874
        %v4876 = vpop.xlane.xlu0 %4875
        %v4877 = vsel %vm4855, %v4652, -inf
        %4878 = vmax.xlane.f32.xlu0 %v4877
        %v4879 = vpop.xlane.xlu0 %4878
        %v4880 = vsel %vm4855, %v4699, -inf
        %4881 = vmax.xlane.f32.xlu0 %v4880
        %v4882 = vpop.xlane.xlu0 %4881
        %v4883 = vsel %vm4855, %v4702, -inf
        %4884 = vmax.xlane.f32.xlu0 %v4883
        %v4885 = vpop.xlane.xlu0 %4884
        %v4886 = vsel %vm4855, %v4749, -inf
        %4887 = vmax.xlane.f32.xlu0 %v4886
        %v4888 = vpop.xlane.xlu0 %4887
        %v4889 = vsel %vm4855, %v4752, -inf
        %4890 = vmax.xlane.f32.xlu0 %v4889
        %v4891 = vpop.xlane.xlu0 %4890
        %v4892 = vsel %vm4855, %v4799, -inf
        %4893 = vmax.xlane.f32.xlu0 %v4892
        %v4894 = vpop.xlane.xlu0 %4893
        %v4895 = vsel %vm4855, %v4802, -inf
        %4896 = vmax.xlane.f32.xlu0 %v4895
        %v4897 = vpop.xlane.xlu0 %4896
        %v4898 = vsel %vm4855, %v4849, -inf
        %4899 = vmax.xlane.f32.xlu0 %v4898
        %v4900 = vpop.xlane.xlu0 %4899
        %v4901 = vsel %vm4855, %v4852, -inf
        %4902 = vmax.xlane.f32.xlu0 %v4901
        %v4903 = vpop.xlane.xlu0 %4902
        %v4904 = vsub.f32 %v4499, %v4858
        %v4905 = vsub.f32 %v4502, %v4861
        %v4906 = vsub.f32 %v4549, %v4864
        %v4907 = vsub.f32 %v4552, %v4867
        %v4908 = vsub.f32 %v4599, %v4870
        %v4909 = vsub.f32 %v4602, %v4873
        %v4910 = vsub.f32 %v4649, %v4876
        %v4911 = vsub.f32 %v4652, %v4879
        %v4912 = vsub.f32 %v4699, %v4882
        %v4913 = vsub.f32 %v4702, %v4885
        %v4914 = vsub.f32 %v4749, %v4888
        %v4915 = vsub.f32 %v4752, %v4891
        %v4916 = vsub.f32 %v4799, %v4894
        %v4917 = vsub.f32 %v4802, %v4897
        %v4918 = vsub.f32 %v4849, %v4900
        %v4919 = vsub.f32 %v4852, %v4903
        %v4920 = vmul.f32 %v4904, 1.442695
        %v4921 = vpow.pop %v4920
        %v4922 = vmul.f32 %v4905, 1.442695
        %v4923 = vpow.pop %v4922
        %v4924 = vmul.f32 %v4906, 1.442695
        %v4925 = vpow.pop %v4924
        %v4926 = vmul.f32 %v4907, 1.442695
        %v4927 = vpow.pop %v4926
        %v4928 = vmul.f32 %v4908, 1.442695
        %v4929 = vpow.pop %v4928
        %v4930 = vmul.f32 %v4909, 1.442695
        %v4931 = vpow.pop %v4930
        %v4932 = vmul.f32 %v4910, 1.442695
        %v4933 = vpow.pop %v4932
        %v4934 = vmul.f32 %v4911, 1.442695
        %v4935 = vpow.pop %v4934
        %v4936 = vmul.f32 %v4912, 1.442695
        %v4937 = vpow.pop %v4936
        %v4938 = vmul.f32 %v4913, 1.442695
        %v4939 = vpow.pop %v4938
        %v4940 = vmul.f32 %v4914, 1.442695
        %v4941 = vpow.pop %v4940
        %v4942 = vmul.f32 %v4915, 1.442695
        %v4943 = vpow.pop %v4942
        %v4944 = vmul.f32 %v4916, 1.442695
        %v4945 = vpow.pop %v4944
        %v4946 = vmul.f32 %v4917, 1.442695
        %v4947 = vpow.pop %v4946
        %v4948 = vmul.f32 %v4918, 1.442695
        %v4949 = vpow.pop %v4948
        %v4950 = vmul.f32 %v4919, 1.442695
        %v4951 = vpow.pop %v4950
        %v4952 = vsel %vm4855, %v4921, 0.0
        %4953 = vadd.xlane.f32.xlu0 %v4952
        %v4954 = vpop.xlane.xlu0 %4953
        %v4955 = vsel %vm4855, %v4923, 0.0
        %4956 = vadd.xlane.f32.xlu0 %v4955
        %v4957 = vpop.xlane.xlu0 %4956
        %v4958 = vsel %vm4855, %v4925, 0.0
        %4959 = vadd.xlane.f32.xlu0 %v4958
        %v4960 = vpop.xlane.xlu0 %4959
        %v4961 = vsel %vm4855, %v4927, 0.0
        %4962 = vadd.xlane.f32.xlu0 %v4961
        %v4963 = vpop.xlane.xlu0 %4962
        %v4964 = vsel %vm4855, %v4929, 0.0
        %4965 = vadd.xlane.f32.xlu0 %v4964
        %v4966 = vpop.xlane.xlu0 %4965
        %v4967 = vsel %vm4855, %v4931, 0.0
        %4968 = vadd.xlane.f32.xlu0 %v4967
        %v4969 = vpop.xlane.xlu0 %4968
        %v4970 = vsel %vm4855, %v4933, 0.0
        %4971 = vadd.xlane.f32.xlu0 %v4970
        %v4972 = vpop.xlane.xlu0 %4971
        %v4973 = vsel %vm4855, %v4935, 0.0
        %4974 = vadd.xlane.f32.xlu0 %v4973
        %v4975 = vpop.xlane.xlu0 %4974
        %v4976 = vsel %vm4855, %v4937, 0.0
        %4977 = vadd.xlane.f32.xlu0 %v4976
        %v4978 = vpop.xlane.xlu0 %4977
        %v4979 = vsel %vm4855, %v4939, 0.0
        %4980 = vadd.xlane.f32.xlu0 %v4979
        %v4981 = vpop.xlane.xlu0 %4980
        %v4982 = vsel %vm4855, %v4941, 0.0
        %4983 = vadd.xlane.f32.xlu0 %v4982
        %v4984 = vpop.xlane.xlu0 %4983
        %v4985 = vsel %vm4855, %v4943, 0.0
        %4986 = vadd.xlane.f32.xlu0 %v4985
        %v4987 = vpop.xlane.xlu0 %4986
        %v4988 = vsel %vm4855, %v4945, 0.0
        %4989 = vadd.xlane.f32.xlu0 %v4988
        %v4990 = vpop.xlane.xlu0 %4989
        %v4991 = vsel %vm4855, %v4947, 0.0
        %4992 = vadd.xlane.f32.xlu0 %v4991
        %v4993 = vpop.xlane.xlu0 %4992
        %v4994 = vsel %vm4855, %v4949, 0.0
        %4995 = vadd.xlane.f32.xlu0 %v4994
        %v4996 = vpop.xlane.xlu0 %4995
        %v4997 = vsel %vm4855, %v4951, 0.0
        %4998 = vadd.xlane.f32.xlu0 %v4997
        %v4999 = vpop.xlane.xlu0 %4998
        %v5000 = vrcp.pop %v4954
        %v5001 = vrcp.pop %v4957
        %v5002 = vrcp.pop %v4960
        %v5003 = vrcp.pop %v4963
        %v5004 = vrcp.pop %v4966
        %v5005 = vrcp.pop %v4969
        %v5006 = vrcp.pop %v4972
        %v5007 = vrcp.pop %v4975
        %v5008 = vrcp.pop %v4978
        %v5009 = vrcp.pop %v4981
        %v5010 = vrcp.pop %v4984
        %v5011 = vrcp.pop %v4987
        %v5012 = vrcp.pop %v4990
        %v5013 = vrcp.pop %v4993
        %v5014 = vrcp.pop %v4996
        %v5015 = vrcp.pop %v4999
        %v5016 = vmul.f32 %v4921, %v5000
        %v5017 = vmul.f32 %v4923, %v5001
        %v5018 = vmul.f32 %v4925, %v5002
        %v5019 = vmul.f32 %v4927, %v5003
        %v5020 = vmul.f32 %v4929, %v5004
        %v5021 = vmul.f32 %v4931, %v5005
        %v5022 = vmul.f32 %v4933, %v5006
        %v5023 = vmul.f32 %v4935, %v5007
        %v5024 = vmul.f32 %v4937, %v5008
        %v5025 = vmul.f32 %v4939, %v5009
        %v5026 = vmul.f32 %v4941, %v5010
        %v5027 = vmul.f32 %v4943, %v5011
        %v5028 = vmul.f32 %v4945, %v5012
        %v5029 = vmul.f32 %v4947, %v5013
        %v5030 = vmul.f32 %v4949, %v5014
        %v5031 = vmul.f32 %v4951, %v5015
        %v5032 = vpack.c.bf16 %v5017, %v5016
        %v5033 = vpack.c.bf16 %v5019, %v5018
        %v5034 = vpack.c.bf16 %v5021, %v5020
        %v5035 = vpack.c.bf16 %v5023, %v5022
        %v5036 = vpack.c.bf16 %v5025, %v5024
        %v5037 = vpack.c.bf16 %v5027, %v5026
        %v5038 = vpack.c.bf16 %v5029, %v5028
        %v5039 = vpack.c.bf16 %v5031, %v5030
        %5040 = vrot.lane.b32.xlu0 %v4447, 64
        %v5041 = vpop.permute.xlu0 %5040
        %v5044 = vsel %vm4855, %v5032, 0
        %5046 = vmatprep.subr.bf16.mxu0 0
        %5047 = vmatpush1.bf16.msra.mxu0 %v5041
        %5048 = vmatprep.subr.bf16.mxu0 0
        %5049 = vmatpush1.bf16.msra.mxu0 0
        %5050 = vmatprep.subr.bf16.mxu0 0
        %5051 = vmatpush1.bf16.msra.mxu0 0
        %5052 = vmatprep.subr.bf16.mxu0 0
        %5053 = vmatpush1.bf16.msra.mxu0 0
        %5054 = vmatprep.subr.bf16.mxu0 0
        %5055 = vmatpush1.bf16.msra.mxu0 0
        %5056 = vmatprep.subr.bf16.mxu0 0
        %5057 = vmatpush1.bf16.msra.mxu0 0
        %5058 = vmatprep.subr.bf16.mxu0 0
        %5059 = vmatpush1.bf16.msra.mxu0 0
        %5060 = vmatprep.subr.bf16.mxu0 0
        %5061 = vmatpush1.bf16.msra.mxu0 0
        %5062 = vmatprep.subr.bf16.mxu0 0
        %5063 = vmatpush1.bf16.msra.mxu0 0
        %5064 = vmatprep.subr.bf16.mxu0 0
        %5065 = vmatpush1.bf16.msra.mxu0 0
        %5066 = vmatprep.subr.bf16.mxu0 0
        %5067 = vmatpush1.bf16.msra.mxu0 0
        %5068 = vmatprep.subr.bf16.mxu0 0
        %5069 = vmatpush1.bf16.msra.mxu0 0
        %5070 = vmatprep.subr.bf16.mxu0 0
        %5071 = vmatpush1.bf16.msra.mxu0 0
        %5072 = vmatprep.subr.bf16.mxu0 0
        %5073 = vmatpush1.bf16.msra.mxu0 0
        %5074 = vmatprep.subr.bf16.mxu0 0
        %5075 = vmatpush1.bf16.msra.mxu0 0
        %5076 = vmatprep.subr.bf16.mxu0 0
        %5077 = vmatpush1.bf16.msra.mxu0 0
        %5078 = vmatprep.mubr.bf16.mxu0 0
        %5079 = vmatmul.mubr.bf16.gmra.mrb[0].mxu0 %v5044
        %v5080 = vpop.f32.mrb[0].mxu0
        %v5081 = vadd.f32 0.0, %v5080
        %v5082 = vpop.f32.mrb[0].mxu0
        %v5083 = vpop.f32.mrb[0].mxu0
        %v5084 = vadd.f32 0.0, %v5083
        %v5085 = vpop.f32.mrb[0].mxu0
        %5086 = vdwg.mxu0
        %5087 = vrot.lane.b32.xlu0 %v4448, 64
        %v5088 = vpop.permute.xlu0 %5087
        %v5091 = vsel %vm4855, %v5033, 0
        %5093 = vmatprep.subr.bf16.mxu0 0
        %5094 = vmatpush1.bf16.msra.mxu0 %v5088
        %5095 = vmatprep.subr.bf16.mxu0 0
        %5096 = vmatpush1.bf16.msra.mxu0 0
        %5097 = vmatprep.subr.bf16.mxu0 0
        %5098 = vmatpush1.bf16.msra.mxu0 0
        %5099 = vmatprep.subr.bf16.mxu0 0
        %5100 = vmatpush1.bf16.msra.mxu0 0
        %5101 = vmatprep.subr.bf16.mxu0 0
        %5102 = vmatpush1.bf16.msra.mxu0 0
        %5103 = vmatprep.subr.bf16.mxu0 0
        %5104 = vmatpush1.bf16.msra.mxu0 0
        %5105 = vmatprep.subr.bf16.mxu0 0
        %5106 = vmatpush1.bf16.msra.mxu0 0
        %5107 = vmatprep.subr.bf16.mxu0 0
        %5108 = vmatpush1.bf16.msra.mxu0 0
        %5109 = vmatprep.subr.bf16.mxu0 0
        %5110 = vmatpush1.bf16.msra.mxu0 0
        %5111 = vmatprep.subr.bf16.mxu0 0
        %5112 = vmatpush1.bf16.msra.mxu0 0
        %5113 = vmatprep.subr.bf16.mxu0 0
        %5114 = vmatpush1.bf16.msra.mxu0 0
        %5115 = vmatprep.subr.bf16.mxu0 0
        %5116 = vmatpush1.bf16.msra.mxu0 0
        %5117 = vmatprep.subr.bf16.mxu0 0
        %5118 = vmatpush1.bf16.msra.mxu0 0
        %5119 = vmatprep.subr.bf16.mxu0 0
        %5120 = vmatpush1.bf16.msra.mxu0 0
        %5121 = vmatprep.subr.bf16.mxu0 0
        %5122 = vmatpush1.bf16.msra.mxu0 0
        %5123 = vmatprep.subr.bf16.mxu0 0
        %5124 = vmatpush1.bf16.msra.mxu0 0
        %5125 = vmatprep.mubr.bf16.mxu0 0
        %5126 = vmatmul.mubr.bf16.gmra.mrb[0].mxu0 %v5091
        %v5127 = vpop.f32.mrb[0].mxu0
        %v5128 = vadd.f32 0.0, %v5127
        %v5129 = vpop.f32.mrb[0].mxu0
        %v5130 = vpop.f32.mrb[0].mxu0
        %v5131 = vadd.f32 0.0, %v5130
        %v5132 = vpop.f32.mrb[0].mxu0
        %5133 = vdwg.mxu0
        %5134 = vrot.lane.b32.xlu0 %v4449, 64
        %v5135 = vpop.permute.xlu0 %5134
        %v5138 = vsel %vm4855, %v5034, 0
        %5140 = vmatprep.subr.bf16.mxu0 0
        %5141 = vmatpush1.bf16.msra.mxu0 %v5135
        %5142 = vmatprep.subr.bf16.mxu0 0
        %5143 = vmatpush1.bf16.msra.mxu0 0
        %5144 = vmatprep.subr.bf16.mxu0 0
        %5145 = vmatpush1.bf16.msra.mxu0 0
        %5146 = vmatprep.subr.bf16.mxu0 0
        %5147 = vmatpush1.bf16.msra.mxu0 0
        %5148 = vmatprep.subr.bf16.mxu0 0
        %5149 = vmatpush1.bf16.msra.mxu0 0
        %5150 = vmatprep.subr.bf16.mxu0 0
        %5151 = vmatpush1.bf16.msra.mxu0 0
        %5152 = vmatprep.subr.bf16.mxu0 0
        %5153 = vmatpush1.bf16.msra.mxu0 0
        %5154 = vmatprep.subr.bf16.mxu0 0
        %5155 = vmatpush1.bf16.msra.mxu0 0
        %5156 = vmatprep.subr.bf16.mxu0 0
        %5157 = vmatpush1.bf16.msra.mxu0 0
        %5158 = vmatprep.subr.bf16.mxu0 0
        %5159 = vmatpush1.bf16.msra.mxu0 0
        %5160 = vmatprep.subr.bf16.mxu0 0
        %5161 = vmatpush1.bf16.msra.mxu0 0
        %5162 = vmatprep.subr.bf16.mxu0 0
        %5163 = vmatpush1.bf16.msra.mxu0 0
        %5164 = vmatprep.subr.bf16.mxu0 0
        %5165 = vmatpush1.bf16.msra.mxu0 0
        %5166 = vmatprep.subr.bf16.mxu0 0
        %5167 = vmatpush1.bf16.msra.mxu0 0
        %5168 = vmatprep.subr.bf16.mxu0 0
        %5169 = vmatpush1.bf16.msra.mxu0 0
        %5170 = vmatprep.subr.bf16.mxu0 0
        %5171 = vmatpush1.bf16.msra.mxu0 0
        %5172 = vmatprep.mubr.bf16.mxu0 0
        %5173 = vmatmul.mubr.bf16.gmra.mrb[0].mxu0 %v5138
        %v5174 = vpop.f32.mrb[0].mxu0
        %v5175 = vadd.f32 0.0, %v5174
        %v5176 = vpop.f32.mrb[0].mxu0
        %v5177 = vpop.f32.mrb[0].mxu0
        %v5178 = vadd.f32 0.0, %v5177
        %v5179 = vpop.f32.mrb[0].mxu0
        %5180 = vdwg.mxu0
        %5181 = vrot.lane.b32.xlu0 %v4450, 64
        %v5182 = vpop.permute.xlu0 %5181
        %v5185 = vsel %vm4855, %v5035, 0
        %5187 = vmatprep.subr.bf16.mxu0 0
        %5188 = vmatpush1.bf16.msra.mxu0 %v5182
        %5189 = vmatprep.subr.bf16.mxu0 0
        %5190 = vmatpush1.bf16.msra.mxu0 0
        %5191 = vmatprep.subr.bf16.mxu0 0
        %5192 = vmatpush1.bf16.msra.mxu0 0
        %5193 = vmatprep.subr.bf16.mxu0 0
        %5194 = vmatpush1.bf16.msra.mxu0 0
        %5195 = vmatprep.subr.bf16.mxu0 0
        %5196 = vmatpush1.bf16.msra.mxu0 0
        %5197 = vmatprep.subr.bf16.mxu0 0
        %5198 = vmatpush1.bf16.msra.mxu0 0
        %5199 = vmatprep.subr.bf16.mxu0 0
        %5200 = vmatpush1.bf16.msra.mxu0 0
        %5201 = vmatprep.subr.bf16.mxu0 0
        %5202 = vmatpush1.bf16.msra.mxu0 0
        %5203 = vmatprep.subr.bf16.mxu0 0
        %5204 = vmatpush1.bf16.msra.mxu0 0
        %5205 = vmatprep.subr.bf16.mxu0 0
        %5206 = vmatpush1.bf16.msra.mxu0 0
        %5207 = vmatprep.subr.bf16.mxu0 0
        %5208 = vmatpush1.bf16.msra.mxu0 0
        %5209 = vmatprep.subr.bf16.mxu0 0
        %5210 = vmatpush1.bf16.msra.mxu0 0
        %5211 = vmatprep.subr.bf16.mxu0 0
        %5212 = vmatpush1.bf16.msra.mxu0 0
        %5213 = vmatprep.subr.bf16.mxu0 0
        %5214 = vmatpush1.bf16.msra.mxu0 0
        %5215 = vmatprep.subr.bf16.mxu0 0
        %5216 = vmatpush1.bf16.msra.mxu0 0
        %5217 = vmatprep.subr.bf16.mxu0 0
        %5218 = vmatpush1.bf16.msra.mxu0 0
        %5219 = vmatprep.mubr.bf16.mxu0 0
        %5220 = vmatmul.mubr.bf16.gmra.mrb[0].mxu0 %v5185
        %v5221 = vpop.f32.mrb[0].mxu0
        %v5222 = vadd.f32 0.0, %v5221
        %v5223 = vpop.f32.mrb[0].mxu0
        %v5224 = vpop.f32.mrb[0].mxu0
        %v5225 = vadd.f32 0.0, %v5224
        %v5226 = vpop.f32.mrb[0].mxu0
        %5227 = vdwg.mxu0
        %5228 = vrot.lane.b32.xlu0 %v4451, 64
        %v5229 = vpop.permute.xlu0 %5228
        %v5232 = vsel %vm4855, %v5036, 0
        %5234 = vmatprep.subr.bf16.mxu0 0
        %5235 = vmatpush1.bf16.msra.mxu0 %v5229
        %5236 = vmatprep.subr.bf16.mxu0 0
        %5237 = vmatpush1.bf16.msra.mxu0 0
        %5238 = vmatprep.subr.bf16.mxu0 0
        %5239 = vmatpush1.bf16.msra.mxu0 0
        %5240 = vmatprep.subr.bf16.mxu0 0
        %5241 = vmatpush1.bf16.msra.mxu0 0
        %5242 = vmatprep.subr.bf16.mxu0 0
        %5243 = vmatpush1.bf16.msra.mxu0 0
        %5244 = vmatprep.subr.bf16.mxu0 0
        %5245 = vmatpush1.bf16.msra.mxu0 0
        %5246 = vmatprep.subr.bf16.mxu0 0
        %5247 = vmatpush1.bf16.msra.mxu0 0
        %5248 = vmatprep.subr.bf16.mxu0 0
        %5249 = vmatpush1.bf16.msra.mxu0 0
        %5250 = vmatprep.subr.bf16.mxu0 0
        %5251 = vmatpush1.bf16.msra.mxu0 0
        %5252 = vmatprep.subr.bf16.mxu0 0
        %5253 = vmatpush1.bf16.msra.mxu0 0
        %5254 = vmatprep.subr.bf16.mxu0 0
        %5255 = vmatpush1.bf16.msra.mxu0 0
        %5256 = vmatprep.subr.bf16.mxu0 0
        %5257 = vmatpush1.bf16.msra.mxu0 0
        %5258 = vmatprep.subr.bf16.mxu0 0
        %5259 = vmatpush1.bf16.msra.mxu0 0
        %5260 = vmatprep.subr.bf16.mxu0 0
        %5261 = vmatpush1.bf16.msra.mxu0 0
        %5262 = vmatprep.subr.bf16.mxu0 0
        %5263 = vmatpush1.bf16.msra.mxu0 0
        %5264 = vmatprep.subr.bf16.mxu0 0
        %5265 = vmatpush1.bf16.msra.mxu0 0
        %5266 = vmatprep.mubr.bf16.mxu0 0
        %5267 = vmatmul.mubr.bf16.gmra.mrb[0].mxu0 %v5232
        %v5268 = vpop.f32.mrb[0].mxu0
        %v5269 = vadd.f32 0.0, %v5268
        %v5270 = vpop.f32.mrb[0].mxu0
        %v5271 = vpop.f32.mrb[0].mxu0
        %v5272 = vadd.f32 0.0, %v5271
        %v5273 = vpop.f32.mrb[0].mxu0
        %5274 = vdwg.mxu0
        %5275 = vrot.lane.b32.xlu0 %v4452, 64
        %v5276 = vpop.permute.xlu0 %5275
        %v5279 = vsel %vm4855, %v5037, 0
        %5281 = vmatprep.subr.bf16.mxu0 0
        %5282 = vmatpush1.bf16.msra.mxu0 %v5276
        %5283 = vmatprep.subr.bf16.mxu0 0
        %5284 = vmatpush1.bf16.msra.mxu0 0
        %5285 = vmatprep.subr.bf16.mxu0 0
        %5286 = vmatpush1.bf16.msra.mxu0 0
        %5287 = vmatprep.subr.bf16.mxu0 0
        %5288 = vmatpush1.bf16.msra.mxu0 0
        %5289 = vmatprep.subr.bf16.mxu0 0
        %5290 = vmatpush1.bf16.msra.mxu0 0
        %5291 = vmatprep.subr.bf16.mxu0 0
        %5292 = vmatpush1.bf16.msra.mxu0 0
        %5293 = vmatprep.subr.bf16.mxu0 0
        %5294 = vmatpush1.bf16.msra.mxu0 0
        %5295 = vmatprep.subr.bf16.mxu0 0
        %5296 = vmatpush1.bf16.msra.mxu0 0
        %5297 = vmatprep.subr.bf16.mxu0 0
        %5298 = vmatpush1.bf16.msra.mxu0 0
        %5299 = vmatprep.subr.bf16.mxu0 0
        %5300 = vmatpush1.bf16.msra.mxu0 0
        %5301 = vmatprep.subr.bf16.mxu0 0
        %5302 = vmatpush1.bf16.msra.mxu0 0
        %5303 = vmatprep.subr.bf16.mxu0 0
        %5304 = vmatpush1.bf16.msra.mxu0 0
        %5305 = vmatprep.subr.bf16.mxu0 0
        %5306 = vmatpush1.bf16.msra.mxu0 0
        %5307 = vmatprep.subr.bf16.mxu0 0
        %5308 = vmatpush1.bf16.msra.mxu0 0
        %5309 = vmatprep.subr.bf16.mxu0 0
        %5310 = vmatpush1.bf16.msra.mxu0 0
        %5311 = vmatprep.subr.bf16.mxu0 0
        %5312 = vmatpush1.bf16.msra.mxu0 0
        %5313 = vmatprep.mubr.bf16.mxu0 0
        %5314 = vmatmul.mubr.bf16.gmra.mrb[0].mxu0 %v5279
        %v5315 = vpop.f32.mrb[0].mxu0
        %v5316 = vadd.f32 0.0, %v5315
        %v5317 = vpop.f32.mrb[0].mxu0
        %v5318 = vpop.f32.mrb[0].mxu0
        %v5319 = vadd.f32 0.0, %v5318
        %v5320 = vpop.f32.mrb[0].mxu0
        %5321 = vdwg.mxu0
        %5322 = vrot.lane.b32.xlu0 %v4453, 64
        %v5323 = vpop.permute.xlu0 %5322
        %v5326 = vsel %vm4855, %v5038, 0
        %5328 = vmatprep.subr.bf16.mxu0 0
        %5329 = vmatpush1.bf16.msra.mxu0 %v5323
        %5330 = vmatprep.subr.bf16.mxu0 0
        %5331 = vmatpush1.bf16.msra.mxu0 0
        %5332 = vmatprep.subr.bf16.mxu0 0
        %5333 = vmatpush1.bf16.msra.mxu0 0
        %5334 = vmatprep.subr.bf16.mxu0 0
        %5335 = vmatpush1.bf16.msra.mxu0 0
        %5336 = vmatprep.subr.bf16.mxu0 0
        %5337 = vmatpush1.bf16.msra.mxu0 0
        %5338 = vmatprep.subr.bf16.mxu0 0
        %5339 = vmatpush1.bf16.msra.mxu0 0
        %5340 = vmatprep.subr.bf16.mxu0 0
        %5341 = vmatpush1.bf16.msra.mxu0 0
        %5342 = vmatprep.subr.bf16.mxu0 0
        %5343 = vmatpush1.bf16.msra.mxu0 0
        %5344 = vmatprep.subr.bf16.mxu0 0
        %5345 = vmatpush1.bf16.msra.mxu0 0
        %5346 = vmatprep.subr.bf16.mxu0 0
        %5347 = vmatpush1.bf16.msra.mxu0 0
        %5348 = vmatprep.subr.bf16.mxu0 0
        %5349 = vmatpush1.bf16.msra.mxu0 0
        %5350 = vmatprep.subr.bf16.mxu0 0
        %5351 = vmatpush1.bf16.msra.mxu0 0
        %5352 = vmatprep.subr.bf16.mxu0 0
        %5353 = vmatpush1.bf16.msra.mxu0 0
        %5354 = vmatprep.subr.bf16.mxu0 0
        %5355 = vmatpush1.bf16.msra.mxu0 0
        %5356 = vmatprep.subr.bf16.mxu0 0
        %5357 = vmatpush1.bf16.msra.mxu0 0
        %5358 = vmatprep.subr.bf16.mxu0 0
        %5359 = vmatpush1.bf16.msra.mxu0 0
        %5360 = vmatprep.mubr.bf16.mxu0 0
        %5361 = vmatmul.mubr.bf16.gmra.mrb[0].mxu0 %v5326
        %v5362 = vpop.f32.mrb[0].mxu0
        %v5363 = vadd.f32 0.0, %v5362
        %v5364 = vpop.f32.mrb[0].mxu0
        %v5365 = vpop.f32.mrb[0].mxu0
        %v5366 = vadd.f32 0.0, %v5365
        %v5367 = vpop.f32.mrb[0].mxu0
        %5368 = vdwg.mxu0
        %5369 = vrot.lane.b32.xlu0 %v4454, 64
        %v5370 = vpop.permute.xlu0 %5369
        %v5373 = vsel %vm4855, %v5039, 0
        %5375 = vmatprep.subr.bf16.mxu0 0
        %5376 = vmatpush1.bf16.msra.mxu0 %v5370
        %5377 = vmatprep.subr.bf16.mxu0 0
        %5378 = vmatpush1.bf16.msra.mxu0 0
        %5379 = vmatprep.subr.bf16.mxu0 0
        %5380 = vmatpush1.bf16.msra.mxu0 0
        %5381 = vmatprep.subr.bf16.mxu0 0
        %5382 = vmatpush1.bf16.msra.mxu0 0
        %5383 = vmatprep.subr.bf16.mxu0 0
        %5384 = vmatpush1.bf16.msra.mxu0 0
        %5385 = vmatprep.subr.bf16.mxu0 0
        %5386 = vmatpush1.bf16.msra.mxu0 0
        %5387 = vmatprep.subr.bf16.mxu0 0
        %5388 = vmatpush1.bf16.msra.mxu0 0
        %5389 = vmatprep.subr.bf16.mxu0 0
        %5390 = vmatpush1.bf16.msra.mxu0 0
        %5391 = vmatprep.subr.bf16.mxu0 0
        %5392 = vmatpush1.bf16.msra.mxu0 0
        %5393 = vmatprep.subr.bf16.mxu0 0
        %5394 = vmatpush1.bf16.msra.mxu0 0
        %5395 = vmatprep.subr.bf16.mxu0 0
        %5396 = vmatpush1.bf16.msra.mxu0 0
        %5397 = vmatprep.subr.bf16.mxu0 0
        %5398 = vmatpush1.bf16.msra.mxu0 0
        %5399 = vmatprep.subr.bf16.mxu0 0
        %5400 = vmatpush1.bf16.msra.mxu0 0
        %5401 = vmatprep.subr.bf16.mxu0 0
        %5402 = vmatpush1.bf16.msra.mxu0 0
        %5403 = vmatprep.subr.bf16.mxu0 0
        %5404 = vmatpush1.bf16.msra.mxu0 0
        %5405 = vmatprep.subr.bf16.mxu0 0
        %5406 = vmatpush1.bf16.msra.mxu0 0
        %5407 = vmatprep.mubr.bf16.mxu0 0
        %5408 = vmatmul.mubr.bf16.gmra.mrb[0].mxu0 %v5373
        %v5409 = vpop.f32.mrb[0].mxu0
        %v5410 = vadd.f32 0.0, %v5409
        %v5411 = vpop.f32.mrb[0].mxu0
        %v5412 = vpop.f32.mrb[0].mxu0
        %v5413 = vadd.f32 0.0, %v5412
        %v5414 = vpop.f32.mrb[0].mxu0
        %5415 = vdwg.mxu0
        %v5416 = vpack.c.bf16 %v5084, %v5081
        %v5417 = vpack.c.bf16 %v5131, %v5128
        %v5418 = vpack.c.bf16 %v5178, %v5175
        %v5419 = vpack.c.bf16 %v5225, %v5222
        %v5420 = vpack.c.bf16 %v5272, %v5269
        %v5421 = vpack.c.bf16 %v5319, %v5316
        %v5422 = vpack.c.bf16 %v5366, %v5363
        %v5423 = vpack.c.bf16 %v5413, %v5410
        %v5424 = vld [vmem:[%s956] sm:$0xf]
        %v5425 = vld [vmem:[%s956 + $0x4] sm:$0xf]
        %v5426 = vld [vmem:[%s956 + $0x8] sm:$0xf]
        %v5427 = vld [vmem:[%s956 + $0xc] sm:$0xf]
        %v5428 = vld [vmem:[%s964] sm:$0x1]
        %v5430 = vlaneseq
        %v5431 = vshrl.u32 %v5430, 7
        %v5432 = vsub.s32 0, %v5431
        %v5433 = vrot.slane %v5428, %v5432
        %v5439 = vunpack.c.l.b16 %v5424
        %v5440 = vunpack.c.l.b16 %v5425
        %v5441 = vunpack.c.l.b16 %v5426
        %v5442 = vunpack.c.l.b16 %v5427
        %v5443 = vpack.c.b16 %v5440, %v5439
        %v5444 = vpack.c.b16 %v5442, %v5441
        %v5448 = vsel %vm1191, %v5416, 0
        %v5451 = vsel %vm1191, %v5417, 0
        %v5454 = vsel %vm1191, %v5418, 0
        %v5457 = vsel %vm1191, %v5419, 0
        %v5460 = vsel %vm1191, %v5420, 0
        %v5463 = vsel %vm1191, %v5421, 0
        %v5466 = vsel %vm1191, %v5422, 0
        %v5469 = vsel %vm1191, %v5423, 0
        %5471 = vmatprep.subr.bf16.mxu0 0
        %5472 = vmatpush1.bf16.msra.mxu0 %v5443
        %5473 = vmatprep.subr.bf16.mxu0 0
        %5474 = vmatpush1.bf16.msra.mxu0 %v5444
        %5475 = vmatprep.subr.bf16.mxu0 0
        %5476 = vmatpush1.bf16.msra.mxu0 0
        %5477 = vmatprep.subr.bf16.mxu0 0
        %5478 = vmatpush1.bf16.msra.mxu0 0
        %5479 = vmatprep.subr.bf16.mxu0 0
        %5480 = vmatpush1.bf16.msra.mxu0 0
        %5481 = vmatprep.subr.bf16.mxu0 0
        %5482 = vmatpush1.bf16.msra.mxu0 0
        %5483 = vmatprep.subr.bf16.mxu0 0
        %5484 = vmatpush1.bf16.msra.mxu0 0
        %5485 = vmatprep.subr.bf16.mxu0 0
        %5486 = vmatpush1.bf16.msra.mxu0 0
        %5487 = vmatprep.subr.bf16.mxu0 0
        %5488 = vmatpush1.bf16.msra.mxu0 0
        %5489 = vmatprep.subr.bf16.mxu0 0
        %5490 = vmatpush1.bf16.msra.mxu0 0
        %5491 = vmatprep.subr.bf16.mxu0 0
        %5492 = vmatpush1.bf16.msra.mxu0 0
        %5493 = vmatprep.subr.bf16.mxu0 0
        %5494 = vmatpush1.bf16.msra.mxu0 0
        %5495 = vmatprep.subr.bf16.mxu0 0
        %5496 = vmatpush1.bf16.msra.mxu0 0
        %5497 = vmatprep.subr.bf16.mxu0 0
        %5498 = vmatpush1.bf16.msra.mxu0 0
        %5499 = vmatprep.subr.bf16.mxu0 0
        %5500 = vmatpush1.bf16.msra.mxu0 0
        %5501 = vmatprep.subr.bf16.mxu0 0
        %5502 = vmatpush1.bf16.msra.mxu0 0
        %5503 = vmatprep.mubr.bf16.mxu0 0
        %5504 = vmatmul.mubr.bf16.gmra.mrb[0].mxu0 %v5448
        %v5505 = vpop.f32.mrb[0].mxu0
        %v5506 = vadd.f32 %v5433, %v5505
        %v5507 = vpop.f32.mrb[0].mxu0
        %v5508 = vpop.f32.mrb[0].mxu0
        %v5509 = vadd.f32 %v5433, %v5508
        %v5510 = vpop.f32.mrb[0].mxu0
        %5511 = vmatprep.mubr.bf16.mxu0 0
        %5512 = vmatmul.mubr.bf16.gmra.mrb[0].mxu0 %v5451
        %v5513 = vpop.f32.mrb[0].mxu0
        %v5514 = vadd.f32 %v5433, %v5513
        %v5515 = vpop.f32.mrb[0].mxu0
        %v5516 = vpop.f32.mrb[0].mxu0
        %v5517 = vadd.f32 %v5433, %v5516
        %v5518 = vpop.f32.mrb[0].mxu0
        %5519 = vmatprep.mubr.bf16.mxu0 0
        %5520 = vmatmul.mubr.bf16.gmra.mrb[0].mxu0 %v5454
        %v5521 = vpop.f32.mrb[0].mxu0
        %v5522 = vadd.f32 %v5433, %v5521
        %v5523 = vpop.f32.mrb[0].mxu0
        %v5524 = vpop.f32.mrb[0].mxu0
        %v5525 = vadd.f32 %v5433, %v5524
        %v5526 = vpop.f32.mrb[0].mxu0
        %5527 = vmatprep.mubr.bf16.mxu0 0
        %5528 = vmatmul.mubr.bf16.gmra.mrb[0].mxu0 %v5457
        %v5529 = vpop.f32.mrb[0].mxu0
        %v5530 = vadd.f32 %v5433, %v5529
        %v5531 = vpop.f32.mrb[0].mxu0
        %v5532 = vpop.f32.mrb[0].mxu0
        %v5533 = vadd.f32 %v5433, %v5532
        %v5534 = vpop.f32.mrb[0].mxu0
        %5535 = vmatprep.mubr.bf16.mxu0 0
        %5536 = vmatmul.mubr.bf16.gmra.mrb[0].mxu0 %v5460
        %v5537 = vpop.f32.mrb[0].mxu0
        %v5538 = vadd.f32 %v5433, %v5537
        %v5539 = vpop.f32.mrb[0].mxu0
        %v5540 = vpop.f32.mrb[0].mxu0
        %v5541 = vadd.f32 %v5433, %v5540
        %v5542 = vpop.f32.mrb[0].mxu0
        %5543 = vmatprep.mubr.bf16.mxu0 0
        %5544 = vmatmul.mubr.bf16.gmra.mrb[0].mxu0 %v5463
        %v5545 = vpop.f32.mrb[0].mxu0
        %v5546 = vadd.f32 %v5433, %v5545
        %v5547 = vpop.f32.mrb[0].mxu0
        %v5548 = vpop.f32.mrb[0].mxu0
        %v5549 = vadd.f32 %v5433, %v5548
        %v5550 = vpop.f32.mrb[0].mxu0
        %5551 = vmatprep.mubr.bf16.mxu0 0
        %5552 = vmatmul.mubr.bf16.gmra.mrb[0].mxu0 %v5466
        %v5553 = vpop.f32.mrb[0].mxu0
        %v5554 = vadd.f32 %v5433, %v5553
        %v5555 = vpop.f32.mrb[0].mxu0
        %v5556 = vpop.f32.mrb[0].mxu0
        %v5557 = vadd.f32 %v5433, %v5556
        %v5558 = vpop.f32.mrb[0].mxu0
        %5559 = vmatprep.mubr.bf16.mxu0 0
        %5560 = vmatmul.mubr.bf16.gmra.mrb[0].mxu0 %v5469
        %v5561 = vpop.f32.mrb[0].mxu0
        %v5562 = vadd.f32 %v5433, %v5561
        %v5563 = vpop.f32.mrb[0].mxu0
        %v5564 = vpop.f32.mrb[0].mxu0
        %v5565 = vadd.f32 %v5433, %v5564
        %v5566 = vpop.f32.mrb[0].mxu0
        %5567 = vdwg.mxu0
        %v5568 = vadd.f32 %v5506, %v1173
        %v5569 = vadd.f32 %v5509, %v1174
        %v5570 = vadd.f32 %v5514, %v1175
        %v5571 = vadd.f32 %v5517, %v1176
        %v5572 = vadd.f32 %v5522, %v1177
        %v5573 = vadd.f32 %v5525, %v1178
        %v5574 = vadd.f32 %v5530, %v1179
        %v5575 = vadd.f32 %v5533, %v1180
        %v5576 = vadd.f32 %v5538, %v1181
        %v5577 = vadd.f32 %v5541, %v1182
        %v5578 = vadd.f32 %v5546, %v1183
        %v5579 = vadd.f32 %v5549, %v1184
        %v5580 = vadd.f32 %v5554, %v1185
        %v5581 = vadd.f32 %v5557, %v1186
        %v5582 = vadd.f32 %v5562, %v1187
        %v5583 = vadd.f32 %v5565, %v1188
        %v5584 = vld [vmem:[%s972] sm:$0x1]
        %v5585 = vld [vmem:[%s980] sm:$0x1]
        %v5586 = vsel %vm1191, %v5568, 0.0
        %5587 = vadd.xlane.f32.xlu0 %v5586
        %v5588 = vpop.xlane.xlu0 %5587
        %v5589 = vsel %vm1191, %v5569, 0.0
        %5590 = vadd.xlane.f32.xlu0 %v5589
        %v5591 = vpop.xlane.xlu0 %5590
        %v5592 = vsel %vm1191, %v5570, 0.0
        %5593 = vadd.xlane.f32.xlu0 %v5592
        %v5594 = vpop.xlane.xlu0 %5593
        %v5595 = vsel %vm1191, %v5571, 0.0
        %5596 = vadd.xlane.f32.xlu0 %v5595
        %v5597 = vpop.xlane.xlu0 %5596
        %v5598 = vsel %vm1191, %v5572, 0.0
        %5599 = vadd.xlane.f32.xlu0 %v5598
        %v5600 = vpop.xlane.xlu0 %5599
        %v5601 = vsel %vm1191, %v5573, 0.0
        %5602 = vadd.xlane.f32.xlu0 %v5601
        %v5603 = vpop.xlane.xlu0 %5602
        %v5604 = vsel %vm1191, %v5574, 0.0
        %5605 = vadd.xlane.f32.xlu0 %v5604
        %v5606 = vpop.xlane.xlu0 %5605
        %v5607 = vsel %vm1191, %v5575, 0.0
        %5608 = vadd.xlane.f32.xlu0 %v5607
        %v5609 = vpop.xlane.xlu0 %5608
        %v5610 = vsel %vm1191, %v5576, 0.0
        %5611 = vadd.xlane.f32.xlu0 %v5610
        %v5612 = vpop.xlane.xlu0 %5611
        %v5613 = vsel %vm1191, %v5577, 0.0
        %5614 = vadd.xlane.f32.xlu0 %v5613
        %v5615 = vpop.xlane.xlu0 %5614
        %v5616 = vsel %vm1191, %v5578, 0.0
        %5617 = vadd.xlane.f32.xlu0 %v5616
        %v5618 = vpop.xlane.xlu0 %5617
        %v5619 = vsel %vm1191, %v5579, 0.0
        %5620 = vadd.xlane.f32.xlu0 %v5619
        %v5621 = vpop.xlane.xlu0 %5620
        %v5622 = vsel %vm1191, %v5580, 0.0
        %5623 = vadd.xlane.f32.xlu0 %v5622
        %v5624 = vpop.xlane.xlu0 %5623
        %v5625 = vsel %vm1191, %v5581, 0.0
        %5626 = vadd.xlane.f32.xlu0 %v5625
        %v5627 = vpop.xlane.xlu0 %5626
        %v5628 = vsel %vm1191, %v5582, 0.0
        %5629 = vadd.xlane.f32.xlu0 %v5628
        %v5630 = vpop.xlane.xlu0 %5629
        %v5631 = vsel %vm1191, %v5583, 0.0
        %5632 = vadd.xlane.f32.xlu0 %v5631
        %v5633 = vpop.xlane.xlu0 %5632
        %v5634 = vmul.f32 %v5588, %v1240
        %v5635 = vmul.f32 %v5591, %v1240
        %v5636 = vmul.f32 %v5594, %v1240
        %v5637 = vmul.f32 %v5597, %v1240
        %v5638 = vmul.f32 %v5600, %v1240
        %v5639 = vmul.f32 %v5603, %v1240
        %v5640 = vmul.f32 %v5606, %v1240
        %v5641 = vmul.f32 %v5609, %v1240
        %v5642 = vmul.f32 %v5612, %v1240
        %v5643 = vmul.f32 %v5615, %v1240
        %v5644 = vmul.f32 %v5618, %v1240
        %v5645 = vmul.f32 %v5621, %v1240
        %v5646 = vmul.f32 %v5624, %v1240
        %v5647 = vmul.f32 %v5627, %v1240
        %v5648 = vmul.f32 %v5630, %v1240
        %v5649 = vmul.f32 %v5633, %v1240
        %v5650 = vsub.f32 %v5568, %v5634
        %v5651 = vsub.f32 %v5569, %v5635
        %v5652 = vsub.f32 %v5570, %v5636
        %v5653 = vsub.f32 %v5571, %v5637
        %v5654 = vsub.f32 %v5572, %v5638
        %v5655 = vsub.f32 %v5573, %v5639
        %v5656 = vsub.f32 %v5574, %v5640
        %v5657 = vsub.f32 %v5575, %v5641
        %v5658 = vsub.f32 %v5576, %v5642
        %v5659 = vsub.f32 %v5577, %v5643
        %v5660 = vsub.f32 %v5578, %v5644
        %v5661 = vsub.f32 %v5579, %v5645
        %v5662 = vsub.f32 %v5580, %v5646
        %v5663 = vsub.f32 %v5581, %v5647
        %v5664 = vsub.f32 %v5582, %v5648
        %v5665 = vsub.f32 %v5583, %v5649
        %v5666 = vmul.f32 %v5650, %v5650
        %v5667 = vmul.f32 %v5651, %v5651
        %v5668 = vmul.f32 %v5652, %v5652
        %v5669 = vmul.f32 %v5653, %v5653
        %v5670 = vmul.f32 %v5654, %v5654
        %v5671 = vmul.f32 %v5655, %v5655
        %v5672 = vmul.f32 %v5656, %v5656
        %v5673 = vmul.f32 %v5657, %v5657
        %v5674 = vmul.f32 %v5658, %v5658
        %v5675 = vmul.f32 %v5659, %v5659
        %v5676 = vmul.f32 %v5660, %v5660
        %v5677 = vmul.f32 %v5661, %v5661
        %v5678 = vmul.f32 %v5662, %v5662
        %v5679 = vmul.f32 %v5663, %v5663
        %v5680 = vmul.f32 %v5664, %v5664
        %v5681 = vmul.f32 %v5665, %v5665
        %v5682 = vsel %vm1191, %v5666, 0.0
        %5683 = vadd.xlane.f32.xlu0 %v5682
        %v5684 = vpop.xlane.xlu0 %5683
        %v5685 = vsel %vm1191, %v5667, 0.0
        %5686 = vadd.xlane.f32.xlu0 %v5685
        %v5687 = vpop.xlane.xlu0 %5686
        %v5688 = vsel %vm1191, %v5668, 0.0
        %5689 = vadd.xlane.f32.xlu0 %v5688
        %v5690 = vpop.xlane.xlu0 %5689
        %v5691 = vsel %vm1191, %v5669, 0.0
        %5692 = vadd.xlane.f32.xlu0 %v5691
        %v5693 = vpop.xlane.xlu0 %5692
        %v5694 = vsel %vm1191, %v5670, 0.0
        %5695 = vadd.xlane.f32.xlu0 %v5694
        %v5696 = vpop.xlane.xlu0 %5695
        %v5697 = vsel %vm1191, %v5671, 0.0
        %5698 = vadd.xlane.f32.xlu0 %v5697
        %v5699 = vpop.xlane.xlu0 %5698
        %v5700 = vsel %vm1191, %v5672, 0.0
        %5701 = vadd.xlane.f32.xlu0 %v5700
        %v5702 = vpop.xlane.xlu0 %5701
        %v5703 = vsel %vm1191, %v5673, 0.0
        %5704 = vadd.xlane.f32.xlu0 %v5703
        %v5705 = vpop.xlane.xlu0 %5704
        %v5706 = vsel %vm1191, %v5674, 0.0
        %5707 = vadd.xlane.f32.xlu0 %v5706
        %v5708 = vpop.xlane.xlu0 %5707
        %v5709 = vsel %vm1191, %v5675, 0.0
        %5710 = vadd.xlane.f32.xlu0 %v5709
        %v5711 = vpop.xlane.xlu0 %5710
        %v5712 = vsel %vm1191, %v5676, 0.0
        %5713 = vadd.xlane.f32.xlu0 %v5712
        %v5714 = vpop.xlane.xlu0 %5713
        %v5715 = vsel %vm1191, %v5677, 0.0
        %5716 = vadd.xlane.f32.xlu0 %v5715
        %v5717 = vpop.xlane.xlu0 %5716
        %v5718 = vsel %vm1191, %v5678, 0.0
        %5719 = vadd.xlane.f32.xlu0 %v5718
        %v5720 = vpop.xlane.xlu0 %5719
        %v5721 = vsel %vm1191, %v5679, 0.0
        %5722 = vadd.xlane.f32.xlu0 %v5721
        %v5723 = vpop.xlane.xlu0 %5722
        %v5724 = vsel %vm1191, %v5680, 0.0
        %5725 = vadd.xlane.f32.xlu0 %v5724
        %v5726 = vpop.xlane.xlu0 %5725
        %v5727 = vsel %vm1191, %v5681, 0.0
        %5728 = vadd.xlane.f32.xlu0 %v5727
        %v5729 = vpop.xlane.xlu0 %5728
        %v5730 = vmul.f32 %v5684, %v1240
        %v5731 = vmul.f32 %v5687, %v1240
        %v5732 = vmul.f32 %v5690, %v1240
        %v5733 = vmul.f32 %v5693, %v1240
        %v5734 = vmul.f32 %v5696, %v1240
        %v5735 = vmul.f32 %v5699, %v1240
        %v5736 = vmul.f32 %v5702, %v1240
        %v5737 = vmul.f32 %v5705, %v1240
        %v5738 = vmul.f32 %v5708, %v1240
        %v5739 = vmul.f32 %v5711, %v1240
        %v5740 = vmul.f32 %v5714, %v1240
        %v5741 = vmul.f32 %v5717, %v1240
        %v5742 = vmul.f32 %v5720, %v1240
        %v5743 = vmul.f32 %v5723, %v1240
        %v5744 = vmul.f32 %v5726, %v1240
        %v5745 = vmul.f32 %v5729, %v1240
        %v5746 = vadd.f32 %v5730, 1e-05
        %v5747 = vadd.f32 %v5731, 1e-05
        %v5748 = vadd.f32 %v5732, 1e-05
        %v5749 = vadd.f32 %v5733, 1e-05
        %v5750 = vadd.f32 %v5734, 1e-05
        %v5751 = vadd.f32 %v5735, 1e-05
        %v5752 = vadd.f32 %v5736, 1e-05
        %v5753 = vadd.f32 %v5737, 1e-05
        %v5754 = vadd.f32 %v5738, 1e-05
        %v5755 = vadd.f32 %v5739, 1e-05
        %v5756 = vadd.f32 %v5740, 1e-05
        %v5757 = vadd.f32 %v5741, 1e-05
        %v5758 = vadd.f32 %v5742, 1e-05
        %v5759 = vadd.f32 %v5743, 1e-05
        %v5760 = vadd.f32 %v5744, 1e-05
        %v5761 = vadd.f32 %v5745, 1e-05
        %v5762 = vrsqrt.pop %v5746
        %v5763 = vrsqrt.pop %v5747
        %v5764 = vrsqrt.pop %v5748
        %v5765 = vrsqrt.pop %v5749
        %v5766 = vrsqrt.pop %v5750
        %v5767 = vrsqrt.pop %v5751
        %v5768 = vrsqrt.pop %v5752
        %v5769 = vrsqrt.pop %v5753
        %v5770 = vrsqrt.pop %v5754
        %v5771 = vrsqrt.pop %v5755
        %v5772 = vrsqrt.pop %v5756
        %v5773 = vrsqrt.pop %v5757
        %v5774 = vrsqrt.pop %v5758
        %v5775 = vrsqrt.pop %v5759
        %v5776 = vrsqrt.pop %v5760
        %v5777 = vrsqrt.pop %v5761
        %v5778 = vmul.f32 %v5650, %v5762
        %v5779 = vmul.f32 %v5651, %v5763
        %v5780 = vmul.f32 %v5652, %v5764
        %v5781 = vmul.f32 %v5653, %v5765
        %v5782 = vmul.f32 %v5654, %v5766
        %v5783 = vmul.f32 %v5655, %v5767
        %v5784 = vmul.f32 %v5656, %v5768
        %v5785 = vmul.f32 %v5657, %v5769
        %v5786 = vmul.f32 %v5658, %v5770
        %v5787 = vmul.f32 %v5659, %v5771
        %v5788 = vmul.f32 %v5660, %v5772
        %v5789 = vmul.f32 %v5661, %v5773
        %v5790 = vmul.f32 %v5662, %v5774
        %v5791 = vmul.f32 %v5663, %v5775
        %v5792 = vmul.f32 %v5664, %v5776
        %v5793 = vmul.f32 %v5665, %v5777
        %v5795 = vlaneseq
        %v5796 = vshrl.u32 %v5795, 7
        %v5797 = vsub.s32 0, %v5796
        %v5798 = vrot.slane %v5584, %v5797
        %v5800 = vmul.f32 %v5778, %v5798
        %v5801 = vmul.f32 %v5779, %v5798
        %v5802 = vmul.f32 %v5780, %v5798
        %v5803 = vmul.f32 %v5781, %v5798
        %v5804 = vmul.f32 %v5782, %v5798
        %v5805 = vmul.f32 %v5783, %v5798
        %v5806 = vmul.f32 %v5784, %v5798
        %v5807 = vmul.f32 %v5785, %v5798
        %v5808 = vmul.f32 %v5786, %v5798
        %v5809 = vmul.f32 %v5787, %v5798
        %v5810 = vmul.f32 %v5788, %v5798
        %v5811 = vmul.f32 %v5789, %v5798
        %v5812 = vmul.f32 %v5790, %v5798
        %v5813 = vmul.f32 %v5791, %v5798
        %v5814 = vmul.f32 %v5792, %v5798
        %v5815 = vmul.f32 %v5793, %v5798
        %v5817 = vlaneseq
        %v5818 = vshrl.u32 %v5817, 7
        %v5819 = vsub.s32 0, %v5818
        %v5820 = vrot.slane %v5585, %v5819
        %v5822 = vadd.f32 %v5800, %v5820
        %v5823 = vadd.f32 %v5801, %v5820
        %v5824 = vadd.f32 %v5802, %v5820
        %v5825 = vadd.f32 %v5803, %v5820
        %v5826 = vadd.f32 %v5804, %v5820
        %v5827 = vadd.f32 %v5805, %v5820
        %v5828 = vadd.f32 %v5806, %v5820
        %v5829 = vadd.f32 %v5807, %v5820
        %v5830 = vadd.f32 %v5808, %v5820
        %v5831 = vadd.f32 %v5809, %v5820
        %v5832 = vadd.f32 %v5810, %v5820
        %v5833 = vadd.f32 %v5811, %v5820
        %v5834 = vadd.f32 %v5812, %v5820
        %v5835 = vadd.f32 %v5813, %v5820
        %v5836 = vadd.f32 %v5814, %v5820
        %v5837 = vadd.f32 %v5815, %v5820
        %v5838 = vpack.c.bf16 %v5823, %v5822
        %v5839 = vpack.c.bf16 %v5825, %v5824
        %v5840 = vpack.c.bf16 %v5827, %v5826
        %v5841 = vpack.c.bf16 %v5829, %v5828
        %v5842 = vpack.c.bf16 %v5831, %v5830
        %v5843 = vpack.c.bf16 %v5833, %v5832
        %v5844 = vpack.c.bf16 %v5835, %v5834
        %v5845 = vpack.c.bf16 %v5837, %v5836
        %v5846 = vld [vmem:[%s989] sm:$0xf]
        %v5847 = vld [vmem:[%s989 + $0x4] sm:$0xf]
        %v5848 = vld [vmem:[%s989 + $0x8] sm:$0xf]
        %v5849 = vld [vmem:[%s989 + $0xc] sm:$0xf]
        %v5850 = vld [vmem:[%s997] sm:$0x1]
        %v5852 = vlaneseq
        %v5853 = vshrl.u32 %v5852, 7
        %v5854 = vsub.s32 0, %v5853
        %v5855 = vrot.slane %v5850, %v5854
        %v5861 = vunpack.c.l.b16 %v5846
        %v5862 = vunpack.c.l.b16 %v5847
        %v5863 = vunpack.c.l.b16 %v5848
        %v5864 = vunpack.c.l.b16 %v5849
        %v5865 = vpack.c.b16 %v5862, %v5861
        %v5866 = vpack.c.b16 %v5864, %v5863
        %v5870 = vsel %vm1191, %v5838, 0
        %v5873 = vsel %vm1191, %v5839, 0
        %v5876 = vsel %vm1191, %v5840, 0
        %v5879 = vsel %vm1191, %v5841, 0
        %v5882 = vsel %vm1191, %v5842, 0
        %v5885 = vsel %vm1191, %v5843, 0
        %v5888 = vsel %vm1191, %v5844, 0
        %v5891 = vsel %vm1191, %v5845, 0
        %5893 = vmatprep.subr.bf16.mxu0 0
        %5894 = vmatpush1.bf16.msra.mxu0 %v5865
        %5895 = vmatprep.subr.bf16.mxu0 0
        %5896 = vmatpush1.bf16.msra.mxu0 %v5866
        %5897 = vmatprep.subr.bf16.mxu0 0
        %5898 = vmatpush1.bf16.msra.mxu0 0
        %5899 = vmatprep.subr.bf16.mxu0 0
        %5900 = vmatpush1.bf16.msra.mxu0 0
        %5901 = vmatprep.subr.bf16.mxu0 0
        %5902 = vmatpush1.bf16.msra.mxu0 0
        %5903 = vmatprep.subr.bf16.mxu0 0
        %5904 = vmatpush1.bf16.msra.mxu0 0
        %5905 = vmatprep.subr.bf16.mxu0 0
        %5906 = vmatpush1.bf16.msra.mxu0 0
        %5907 = vmatprep.subr.bf16.mxu0 0
        %5908 = vmatpush1.bf16.msra.mxu0 0
        %5909 = vmatprep.subr.bf16.mxu0 0
        %5910 = vmatpush1.bf16.msra.mxu0 0
        %5911 = vmatprep.subr.bf16.mxu0 0
        %5912 = vmatpush1.bf16.msra.mxu0 0
        %5913 = vmatprep.subr.bf16.mxu0 0
        %5914 = vmatpush1.bf16.msra.mxu0 0
        %5915 = vmatprep.subr.bf16.mxu0 0
        %5916 = vmatpush1.bf16.msra.mxu0 0
        %5917 = vmatprep.subr.bf16.mxu0 0
        %5918 = vmatpush1.bf16.msra.mxu0 0
        %5919 = vmatprep.subr.bf16.mxu0 0
        %5920 = vmatpush1.bf16.msra.mxu0 0
        %5921 = vmatprep.subr.bf16.mxu0 0
        %5922 = vmatpush1.bf16.msra.mxu0 0
        %5923 = vmatprep.subr.bf16.mxu0 0
        %5924 = vmatpush1.bf16.msra.mxu0 0
        %5925 = vmatprep.mubr.bf16.mxu0 0
        %5926 = vmatmul.mubr.bf16.gmra.mrb[0].mxu0 %v5870
        %v5927 = vpop.f32.mrb[0].mxu0
        %v5928 = vadd.f32 %v5855, %v5927
        %v5929 = vpop.f32.mrb[0].mxu0
        %v5930 = vpop.f32.mrb[0].mxu0
        %v5931 = vadd.f32 %v5855, %v5930
        %v5932 = vpop.f32.mrb[0].mxu0
        %5933 = vmatprep.mubr.bf16.mxu0 0
        %5934 = vmatmul.mubr.bf16.gmra.mrb[0].mxu0 %v5873
        %v5935 = vpop.f32.mrb[0].mxu0
        %v5936 = vadd.f32 %v5855, %v5935
        %v5937 = vpop.f32.mrb[0].mxu0
        %v5938 = vpop.f32.mrb[0].mxu0
        %v5939 = vadd.f32 %v5855, %v5938
        %v5940 = vpop.f32.mrb[0].mxu0
        %5941 = vmatprep.mubr.bf16.mxu0 0
        %5942 = vmatmul.mubr.bf16.gmra.mrb[0].mxu0 %v5876
        %v5943 = vpop.f32.mrb[0].mxu0
        %v5944 = vadd.f32 %v5855, %v5943
        %v5945 = vpop.f32.mrb[0].mxu0
        %v5946 = vpop.f32.mrb[0].mxu0
        %v5947 = vadd.f32 %v5855, %v5946
        %v5948 = vpop.f32.mrb[0].mxu0
        %5949 = vmatprep.mubr.bf16.mxu0 0
        %5950 = vmatmul.mubr.bf16.gmra.mrb[0].mxu0 %v5879
        %v5951 = vpop.f32.mrb[0].mxu0
        %v5952 = vadd.f32 %v5855, %v5951
        %v5953 = vpop.f32.mrb[0].mxu0
        %v5954 = vpop.f32.mrb[0].mxu0
        %v5955 = vadd.f32 %v5855, %v5954
        %v5956 = vpop.f32.mrb[0].mxu0
        %5957 = vmatprep.mubr.bf16.mxu0 0
        %5958 = vmatmul.mubr.bf16.gmra.mrb[0].mxu0 %v5882
        %v5959 = vpop.f32.mrb[0].mxu0
        %v5960 = vadd.f32 %v5855, %v5959
        %v5961 = vpop.f32.mrb[0].mxu0
        %v5962 = vpop.f32.mrb[0].mxu0
        %v5963 = vadd.f32 %v5855, %v5962
        %v5964 = vpop.f32.mrb[0].mxu0
        %5965 = vmatprep.mubr.bf16.mxu0 0
        %5966 = vmatmul.mubr.bf16.gmra.mrb[0].mxu0 %v5885
        %v5967 = vpop.f32.mrb[0].mxu0
        %v5968 = vadd.f32 %v5855, %v5967
        %v5969 = vpop.f32.mrb[0].mxu0
        %v5970 = vpop.f32.mrb[0].mxu0
        %v5971 = vadd.f32 %v5855, %v5970
        %v5972 = vpop.f32.mrb[0].mxu0
        %5973 = vmatprep.mubr.bf16.mxu0 0
        %5974 = vmatmul.mubr.bf16.gmra.mrb[0].mxu0 %v5888
        %v5975 = vpop.f32.mrb[0].mxu0
        %v5976 = vadd.f32 %v5855, %v5975
        %v5977 = vpop.f32.mrb[0].mxu0
        %v5978 = vpop.f32.mrb[0].mxu0
        %v5979 = vadd.f32 %v5855, %v5978
        %v5980 = vpop.f32.mrb[0].mxu0
        %5981 = vmatprep.mubr.bf16.mxu0 0
        %5982 = vmatmul.mubr.bf16.gmra.mrb[0].mxu0 %v5891
        %v5983 = vpop.f32.mrb[0].mxu0
        %v5984 = vadd.f32 %v5855, %v5983
        %v5985 = vpop.f32.mrb[0].mxu0
        %v5986 = vpop.f32.mrb[0].mxu0
        %v5987 = vadd.f32 %v5855, %v5986
        %v5988 = vpop.f32.mrb[0].mxu0
        %5989 = vdwg.mxu0
        %v5990 = vmul.f32 %v5928, 0.5
        %v5991 = vmul.f32 %v5931, 0.5
        %v5992 = vmul.f32 %v5936, 0.5
        %v5993 = vmul.f32 %v5939, 0.5
        %v5994 = vmul.f32 %v5944, 0.5
        %v5995 = vmul.f32 %v5947, 0.5
        %v5996 = vmul.f32 %v5952, 0.5
        %v5997 = vmul.f32 %v5955, 0.5
        %v5998 = vmul.f32 %v5960, 0.5
        %v5999 = vmul.f32 %v5963, 0.5
        %v6000 = vmul.f32 %v5968, 0.5
        %v6001 = vmul.f32 %v5971, 0.5
        %v6002 = vmul.f32 %v5976, 0.5
        %v6003 = vmul.f32 %v5979, 0.5
        %v6004 = vmul.f32 %v5984, 0.5
        %v6005 = vmul.f32 %v5987, 0.5
        %v6006 = vmul.f32 %v5928, 0.70710677
        %v6007 = vmul.f32 %v5931, 0.70710677
        %v6008 = vmul.f32 %v5936, 0.70710677
        %v6009 = vmul.f32 %v5939, 0.70710677
        %v6010 = vmul.f32 %v5944, 0.70710677
        %v6011 = vmul.f32 %v5947, 0.70710677
        %v6012 = vmul.f32 %v5952, 0.70710677
        %v6013 = vmul.f32 %v5955, 0.70710677
        %v6014 = vmul.f32 %v5960, 0.70710677
        %v6015 = vmul.f32 %v5963, 0.70710677
        %v6016 = vmul.f32 %v5968, 0.70710677
        %v6017 = vmul.f32 %v5971, 0.70710677
        %v6018 = vmul.f32 %v5976, 0.70710677
        %v6019 = vmul.f32 %v5979, 0.70710677
        %v6020 = vmul.f32 %v5984, 0.70710677
        %v6021 = vmul.f32 %v5987, 0.70710677
        %v6022 = verf.f32.pop %v6006
        %v6023 = verf.f32.pop %v6007
        %v6024 = verf.f32.pop %v6008
        %v6025 = verf.f32.pop %v6009
        %v6026 = verf.f32.pop %v6010
        %v6027 = verf.f32.pop %v6011
        %v6028 = verf.f32.pop %v6012
        %v6029 = verf.f32.pop %v6013
        %v6030 = verf.f32.pop %v6014
        %v6031 = verf.f32.pop %v6015
        %v6032 = verf.f32.pop %v6016
        %v6033 = verf.f32.pop %v6017
        %v6034 = verf.f32.pop %v6018
        %v6035 = verf.f32.pop %v6019
        %v6036 = verf.f32.pop %v6020
        %v6037 = verf.f32.pop %v6021
        %v6038 = vadd.f32 %v6022, 1.0
        %v6039 = vadd.f32 %v6023, 1.0
        %v6040 = vadd.f32 %v6024, 1.0
        %v6041 = vadd.f32 %v6025, 1.0
        %v6042 = vadd.f32 %v6026, 1.0
        %v6043 = vadd.f32 %v6027, 1.0
        %v6044 = vadd.f32 %v6028, 1.0
        %v6045 = vadd.f32 %v6029, 1.0
        %v6046 = vadd.f32 %v6030, 1.0
        %v6047 = vadd.f32 %v6031, 1.0
        %v6048 = vadd.f32 %v6032, 1.0
        %v6049 = vadd.f32 %v6033, 1.0
        %v6050 = vadd.f32 %v6034, 1.0
        %v6051 = vadd.f32 %v6035, 1.0
        %v6052 = vadd.f32 %v6036, 1.0
        %v6053 = vadd.f32 %v6037, 1.0
        %v6054 = vmul.f32 %v5990, %v6038
        %v6055 = vmul.f32 %v5991, %v6039
        %v6056 = vmul.f32 %v5992, %v6040
        %v6057 = vmul.f32 %v5993, %v6041
        %v6058 = vmul.f32 %v5994, %v6042
        %v6059 = vmul.f32 %v5995, %v6043
        %v6060 = vmul.f32 %v5996, %v6044
        %v6061 = vmul.f32 %v5997, %v6045
        %v6062 = vmul.f32 %v5998, %v6046
        %v6063 = vmul.f32 %v5999, %v6047
        %v6064 = vmul.f32 %v6000, %v6048
        %v6065 = vmul.f32 %v6001, %v6049
        %v6066 = vmul.f32 %v6002, %v6050
        %v6067 = vmul.f32 %v6003, %v6051
        %v6068 = vmul.f32 %v6004, %v6052
        %v6069 = vmul.f32 %v6005, %v6053
        %v6070 = vpack.c.bf16 %v6055, %v6054
        %v6071 = vpack.c.bf16 %v6057, %v6056
        %v6072 = vpack.c.bf16 %v6059, %v6058
        %v6073 = vpack.c.bf16 %v6061, %v6060
        %v6074 = vpack.c.bf16 %v6063, %v6062
        %v6075 = vpack.c.bf16 %v6065, %v6064
        %v6076 = vpack.c.bf16 %v6067, %v6066
        %v6077 = vpack.c.bf16 %v6069, %v6068
        %v6078 = vld [vmem:[%s1006] sm:$0xf]
        %v6079 = vld [vmem:[%s1006 + $0x4] sm:$0xf]
        %v6080 = vld [vmem:[%s1006 + $0x8] sm:$0xf]
        %v6081 = vld [vmem:[%s1006 + $0xc] sm:$0xf]
        %v6082 = vld [vmem:[%s1006 + $0x10] sm:$0xf]
        %v6083 = vld [vmem:[%s1006 + $0x14] sm:$0xf]
        %v6084 = vld [vmem:[%s1006 + $0x18] sm:$0xf]
        %v6085 = vld [vmem:[%s1006 + $0x1c] sm:$0xf]
        %v6086 = vld [vmem:[%s1014] sm:$0x1]
        %v6088 = vlaneseq
        %v6089 = vshrl.u32 %v6088, 7
        %v6090 = vsub.s32 0, %v6089
        %v6091 = vrot.slane %v6086, %v6090
        %v6101 = vunpack.c.l.b16 %v6078
        %v6102 = vunpack.c.l.b16 %v6079
        %v6103 = vunpack.c.l.b16 %v6080
        %v6104 = vunpack.c.l.b16 %v6081
        %v6105 = vunpack.c.l.b16 %v6082
        %v6106 = vunpack.c.l.b16 %v6083
        %v6107 = vunpack.c.l.b16 %v6084
        %v6108 = vunpack.c.l.b16 %v6085
        %v6109 = vpack.c.b16 %v6102, %v6101
        %v6110 = vpack.c.b16 %v6104, %v6103
        %v6111 = vpack.c.b16 %v6106, %v6105
        %v6112 = vpack.c.b16 %v6108, %v6107
        %vm6117 = vcmask 523264
        %v6119 = vsel %vm6117, %v6070, 0
        %v6122 = vsel %vm6117, %v6071, 0
        %v6125 = vsel %vm6117, %v6072, 0
        %v6128 = vsel %vm6117, %v6073, 0
        %v6131 = vsel %vm6117, %v6074, 0
        %v6134 = vsel %vm6117, %v6075, 0
        %v6137 = vsel %vm6117, %v6076, 0
        %v6140 = vsel %vm6117, %v6077, 0
        %6142 = vmatprep.subr.bf16.mxu0 0
        %6143 = vmatpush1.bf16.msra.mxu0 %v6109
        %6144 = vmatprep.subr.bf16.mxu0 0
        %6145 = vmatpush1.bf16.msra.mxu0 %v6110
        %6146 = vmatprep.subr.bf16.mxu0 0
        %6147 = vmatpush1.bf16.msra.mxu0 %v6111
        %6148 = vmatprep.subr.bf16.mxu0 0
        %6149 = vmatpush1.bf16.msra.mxu0 %v6112
        %6150 = vmatprep.subr.bf16.mxu0 0
        %6151 = vmatpush1.bf16.msra.mxu0 0
        %6152 = vmatprep.subr.bf16.mxu0 0
        %6153 = vmatpush1.bf16.msra.mxu0 0
        %6154 = vmatprep.subr.bf16.mxu0 0
        %6155 = vmatpush1.bf16.msra.mxu0 0
        %6156 = vmatprep.subr.bf16.mxu0 0
        %6157 = vmatpush1.bf16.msra.mxu0 0
        %6158 = vmatprep.subr.bf16.mxu0 0
        %6159 = vmatpush1.bf16.msra.mxu0 0
        %6160 = vmatprep.subr.bf16.mxu0 0
        %6161 = vmatpush1.bf16.msra.mxu0 0
        %6162 = vmatprep.subr.bf16.mxu0 0
        %6163 = vmatpush1.bf16.msra.mxu0 0
        %6164 = vmatprep.subr.bf16.mxu0 0
        %6165 = vmatpush1.bf16.msra.mxu0 0
        %6166 = vmatprep.subr.bf16.mxu0 0
        %6167 = vmatpush1.bf16.msra.mxu0 0
        %6168 = vmatprep.subr.bf16.mxu0 0
        %6169 = vmatpush1.bf16.msra.mxu0 0
        %6170 = vmatprep.subr.bf16.mxu0 0
        %6171 = vmatpush1.bf16.msra.mxu0 0
        %6172 = vmatprep.subr.bf16.mxu0 0
        %6173 = vmatpush1.bf16.msra.mxu0 0
        %6174 = vmatprep.mubr.bf16.mxu0 0
        %6175 = vmatmul.mubr.bf16.gmra.mrb[0].mxu0 %v6119
        %v6176 = vpop.f32.mrb[0].mxu0
        %v6177 = vadd.f32 %v6091, %v6176
        %v6178 = vpop.f32.mrb[0].mxu0
        %v6179 = vpop.f32.mrb[0].mxu0
        %v6180 = vadd.f32 %v6091, %v6179
        %v6181 = vpop.f32.mrb[0].mxu0
        %6182 = vmatprep.mubr.bf16.mxu0 0
        %6183 = vmatmul.mubr.bf16.gmra.mrb[0].mxu0 %v6122
        %v6184 = vpop.f32.mrb[0].mxu0
        %v6185 = vadd.f32 %v6091, %v6184
        %v6186 = vpop.f32.mrb[0].mxu0
        %v6187 = vpop.f32.mrb[0].mxu0
        %v6188 = vadd.f32 %v6091, %v6187
        %v6189 = vpop.f32.mrb[0].mxu0
        %6190 = vmatprep.mubr.bf16.mxu0 0
        %6191 = vmatmul.mubr.bf16.gmra.mrb[0].mxu0 %v6125
        %v6192 = vpop.f32.mrb[0].mxu0
        %v6193 = vadd.f32 %v6091, %v6192
        %v6194 = vpop.f32.mrb[0].mxu0
        %v6195 = vpop.f32.mrb[0].mxu0
        %v6196 = vadd.f32 %v6091, %v6195
        %v6197 = vpop.f32.mrb[0].mxu0
        %6198 = vmatprep.mubr.bf16.mxu0 0
        %6199 = vmatmul.mubr.bf16.gmra.mrb[0].mxu0 %v6128
        %v6200 = vpop.f32.mrb[0].mxu0
        %v6201 = vadd.f32 %v6091, %v6200
        %v6202 = vpop.f32.mrb[0].mxu0
        %v6203 = vpop.f32.mrb[0].mxu0
        %v6204 = vadd.f32 %v6091, %v6203
        %v6205 = vpop.f32.mrb[0].mxu0
        %6206 = vmatprep.mubr.bf16.mxu0 0
        %6207 = vmatmul.mubr.bf16.gmra.mrb[0].mxu0 %v6131
        %v6208 = vpop.f32.mrb[0].mxu0
        %v6209 = vadd.f32 %v6091, %v6208
        %v6210 = vpop.f32.mrb[0].mxu0
        %v6211 = vpop.f32.mrb[0].mxu0
        %v6212 = vadd.f32 %v6091, %v6211
        %v6213 = vpop.f32.mrb[0].mxu0
        %6214 = vmatprep.mubr.bf16.mxu0 0
        %6215 = vmatmul.mubr.bf16.gmra.mrb[0].mxu0 %v6134
        %v6216 = vpop.f32.mrb[0].mxu0
        %v6217 = vadd.f32 %v6091, %v6216
        %v6218 = vpop.f32.mrb[0].mxu0
        %v6219 = vpop.f32.mrb[0].mxu0
        %v6220 = vadd.f32 %v6091, %v6219
        %v6221 = vpop.f32.mrb[0].mxu0
        %6222 = vmatprep.mubr.bf16.mxu0 0
        %6223 = vmatmul.mubr.bf16.gmra.mrb[0].mxu0 %v6137
        %v6224 = vpop.f32.mrb[0].mxu0
        %v6225 = vadd.f32 %v6091, %v6224
        %v6226 = vpop.f32.mrb[0].mxu0
        %v6227 = vpop.f32.mrb[0].mxu0
        %v6228 = vadd.f32 %v6091, %v6227
        %v6229 = vpop.f32.mrb[0].mxu0
        %6230 = vmatprep.mubr.bf16.mxu0 0
        %6231 = vmatmul.mubr.bf16.gmra.mrb[0].mxu0 %v6140
        %v6232 = vpop.f32.mrb[0].mxu0
        %v6233 = vadd.f32 %v6091, %v6232
        %v6234 = vpop.f32.mrb[0].mxu0
        %v6235 = vpop.f32.mrb[0].mxu0
        %v6236 = vadd.f32 %v6091, %v6235
        %v6237 = vpop.f32.mrb[0].mxu0
        %6238 = vdwg.mxu0
        %v6239 = vadd.f32 %v6177, %v5568
        %v6240 = vadd.f32 %v6180, %v5569
        %v6241 = vadd.f32 %v6185, %v5570
        %v6242 = vadd.f32 %v6188, %v5571
        %v6243 = vadd.f32 %v6193, %v5572
        %v6244 = vadd.f32 %v6196, %v5573
        %v6245 = vadd.f32 %v6201, %v5574
        %v6246 = vadd.f32 %v6204, %v5575
        %v6247 = vadd.f32 %v6209, %v5576
        %v6248 = vadd.f32 %v6212, %v5577
        %v6249 = vadd.f32 %v6217, %v5578
        %v6250 = vadd.f32 %v6220, %v5579
        %v6251 = vadd.f32 %v6225, %v5580
        %v6252 = vadd.f32 %v6228, %v5581
        %v6253 = vadd.f32 %v6233, %v5582
        %v6254 = vadd.f32 %v6236, %v5583
        %6255 = vst.msk [vmem:[#allocation2] sm:$0xff] %vm1191, %v6239
        %6256 = vst.msk [vmem:[#allocation2 + $0x8] sm:$0xff] %vm1191, %v6240
        %6257 = vst.msk [vmem:[#allocation2 + $0x10] sm:$0xff] %vm1191, %v6241
        %6258 = vst.msk [vmem:[#allocation2 + $0x18] sm:$0xff] %vm1191, %v6242
        %6259 = vst.msk [vmem:[#allocation2 + $0x20] sm:$0xff] %vm1191, %v6243
        %6260 = vst.msk [vmem:[#allocation2 + $0x28] sm:$0xff] %vm1191, %v6244
        %6261 = vst.msk [vmem:[#allocation2 + $0x30] sm:$0xff] %vm1191, %v6245
        %6262 = vst.msk [vmem:[#allocation2 + $0x38] sm:$0xff] %vm1191, %v6246
        %6263 = vst.msk [vmem:[#allocation2 + $0x40] sm:$0xff] %vm1191, %v6247
        %6264 = vst.msk [vmem:[#allocation2 + $0x48] sm:$0xff] %vm1191, %v6248
        %6265 = vst.msk [vmem:[#allocation2 + $0x50] sm:$0xff] %vm1191, %v6249
        %6266 = vst.msk [vmem:[#allocation2 + $0x58] sm:$0xff] %vm1191, %v6250
        %6267 = vst.msk [vmem:[#allocation2 + $0x60] sm:$0xff] %vm1191, %v6251
        %6268 = vst.msk [vmem:[#allocation2 + $0x68] sm:$0xff] %vm1191, %v6252
        %6269 = vst.msk [vmem:[#allocation2 + $0x70] sm:$0xff] %vm1191, %v6253
        %6270 = vst.msk [vmem:[#allocation2 + $0x78] sm:$0xff] %vm1191, %v6254
        %p6271 = scmp.eq.s32.totalorder %s63, 1
        // Predicated region
        $region161: #{tpu_custom_call.1} parent=87 // pred_check
          %p6272 = pneg %p6271
        $region162: #{tpu_custom_call.1} parent=87 // pred_check_branch
          %6274 = sbr.rel (%p6272) target = $region164
        $region163: #{tpu_custom_call.1} parent=87 // pred_region
          %6275 = vst.msk [vmem:[%s1134] sm:$0xff] %vm1191, %v6239
          %6276 = vst.msk [vmem:[%s1134 + $0x8] sm:$0xff] %vm1191, %v6240
          %6277 = vst.msk [vmem:[%s1134 + $0x10] sm:$0xff] %vm1191, %v6241
          %6278 = vst.msk [vmem:[%s1134 + $0x18] sm:$0xff] %vm1191, %v6242
          %6279 = vst.msk [vmem:[%s1134 + $0x20] sm:$0xff] %vm1191, %v6243
          %6280 = vst.msk [vmem:[%s1134 + $0x28] sm:$0xff] %vm1191, %v6244
          %6281 = vst.msk [vmem:[%s1134 + $0x30] sm:$0xff] %vm1191, %v6245
          %6282 = vst.msk [vmem:[%s1134 + $0x38] sm:$0xff] %vm1191, %v6246
          %6283 = vst.msk [vmem:[%s1134 + $0x40] sm:$0xff] %vm1191, %v6247
          %6284 = vst.msk [vmem:[%s1134 + $0x48] sm:$0xff] %vm1191, %v6248
          %6285 = vst.msk [vmem:[%s1134 + $0x50] sm:$0xff] %vm1191, %v6249
          %6286 = vst.msk [vmem:[%s1134 + $0x58] sm:$0xff] %vm1191, %v6250
          %6287 = vst.msk [vmem:[%s1134 + $0x60] sm:$0xff] %vm1191, %v6251
          %6288 = vst.msk [vmem:[%s1134 + $0x68] sm:$0xff] %vm1191, %v6252
          %6289 = vst.msk [vmem:[%s1134 + $0x70] sm:$0xff] %vm1191, %v6253
          %6290 = vst.msk [vmem:[%s1134 + $0x78] sm:$0xff] %vm1191, %v6254
        $region164: #{tpu_custom_call.1} parent=87 // pred_fallthru
          _
        %s6291 = sand.u32 %s520, 1
        %s6292 = scalar_lea.sflag [#allocation5], %s6291
        %s6293 = sand.u32 %s520, 1
        %s6294 = smul.addr %s6293, 128
        %s6295 = scalar_lea.vmem [#allocation30], %s6294
        // Predicated region
        $region165: #{tpu_custom_call.1} parent=87 // pred_check
          %p6296 = pneg %p530
        $region166: #{tpu_custom_call.1} parent=87 // pred_check_branch
          %6298 = sbr.rel (%p6296) target = $region168
        $region167: #{tpu_custom_call.1} parent=87 // pred_region
          %s6300 = ssub.s32 2048, 2048
          %6301 = vsyncadd %s6292, %s6300
          %s6302 = smul.addr %s62, 16
          %s6303 = smul.addr %s6302, 128
          %s6304 = scalar_lea.hbm %s17, %s6303
          %s6305 = sshll.u32 %s6295, 4
          %s6306 = int_to_ptr.vmem [resolvable:$true] %s6305
          %6311 = dma.vmem_to_hbm [thread:$0]  %s6306, 2048, %s6304, %s6292, 128, 128, 8
        $region168: #{tpu_custom_call.1} parent=87 // pred_fallthru
          _
      $region88: #{tpu_custom_call.1} parent=5 // pred_fallthru
        _
      %p6312 = scmp.le.s32.totalorder 2, %s53
      // Predicated region
      $region169: #{tpu_custom_call.1} parent=5 // pred_check
        %p6313 = pneg %p6312
      $region170: #{tpu_custom_call.1} parent=5 // pred_check_branch
        %6315 = sbr.rel (%p6313) target = $region172
      $region171: #{tpu_custom_call.1} parent=5 // pred_region
        %s6316 = ssub.s32 %s53, 2
        // Predicated region
        $region173: #{tpu_custom_call.1} parent=171 // pred_check
          %p6317 = pneg %p536
        $region174: #{tpu_custom_call.1} parent=171 // pred_check_branch
          %6319 = sbr.rel (%p6317) target = $region176
        $region175: #{tpu_custom_call.1} parent=171 // pred_region
          %s6320 = sand.u32 %s521, 1
          %s6321 = scalar_lea.sflag [#allocation5], %s6320
          %s6322 = sand.u32 %s521, 1
          %s6323 = smul.addr %s6322, 128
          %s6324 = scalar_lea.vmem [#allocation30], %s6323
          %6325 = dma.done %s6321, 2048
        $region176: #{tpu_custom_call.1} parent=171 // pred_fallthru
          _
      $region172: #{tpu_custom_call.1} parent=5 // pred_fallthru
        _
    $region6: #{tpu_custom_call.1} parent=1 // loop_footer
      %s57 = sadd.s32 1, %s53
    $region7: #{tpu_custom_call.1} parent=1 // loop_footer_branch
      %52 = sbr.rel target = $region3
    $region8: #{tpu_custom_call.1} parent=1 // loop_exit
      _
    %6326 = vsyncpa [#allocation4], 1
    %s6327 = scalar_lea.sflag [#allocation4], 1
    %6328 = vsyncpa %s6327, 1
    %6329 = vsyncpa [#allocation7], 1
    %s6330 = scalar_lea.sflag [#allocation7], 1
    %6331 = vsyncpa %s6330, 1
    %6332 = vsyncpa [#allocation10], 1
    %s6333 = scalar_lea.sflag [#allocation10], 1
    %6334 = vsyncpa %s6333, 1
    %6335 = vsyncpa [#allocation13], 1
    %s6336 = scalar_lea.sflag [#allocation13], 1
    %6337 = vsyncpa %s6336, 1
    %6338 = vsyncpa [#allocation16], 1
    %s6339 = scalar_lea.sflag [#allocation16], 1
    %6340 = vsyncpa %s6339, 1
    %6341 = vsyncpa [#allocation19], 1
    %s6342 = scalar_lea.sflag [#allocation19], 1
    %6343 = vsyncpa %s6342, 1
    %6344 = vsyncpa [#allocation22], 1
    %s6345 = scalar_lea.sflag [#allocation22], 1
    %6346 = vsyncpa %s6345, 1
    %6347 = vsyncpa [#allocation25], 1
    %s6348 = scalar_lea.sflag [#allocation25], 1
    %6349 = vsyncpa %s6348, 1
    %6350 = vsyncpa [#allocation28], 1
    %s6351 = scalar_lea.sflag [#allocation28], 1
    %6352 = vsyncpa %s6351, 1
    %6353 = vsyncpa [#allocation5], 1
    %s6354 = scalar_lea.sflag [#allocation5], 1
    %6355 = vsyncpa %s6354, 1

</llo_original>
